<compile_context>
chip_gen: v5e
topology: v5e:2x2
jax: 0.10.0
libtpu: 0.0.40
codegen_flags: <defaults>
</compile_context>

<pallas_src>
import functools
import math

import jax
import jax.numpy as jnp
from jax import lax
from jax.experimental import pallas as pl
from jax.experimental.pallas import tpu as pltpu

C_IN = 128    # deconv1/deconv2 channels (fixed by the module)
C_MID = 64    # deconv3 output channels
C_OUT = 3     # est_normal output channels


def _pm(q, k):
    """Map (output parity q, 3x3 tap k) -> (source parity p, sub-map row offset d)."""
    v = q + k - 1
    p = v % 2
    return p, (v - p) // 2


# ----------------------------------------------------------------------------
# Fused kernel: one batch image per grid step, everything in VMEM.
# ----------------------------------------------------------------------------
def _fused_regressor_kernel(x_ref, w1_ref, b1_ref, w2_ref, b2_ref, wt_ref,
                            w3_ref, o_ref, xpad, ypad, p_scr, p4_scr, *, h, w):
    hw = h * w

    # Zero the padded activation buffers (their borders implement conv padding).
    xpad[...] = jnp.zeros_like(xpad)
    ypad[...] = jnp.zeros_like(ypad)

    # Input image into the padded buffer interior (f32).
    xpad[1:h + 1, 1:w + 1, :] = x_ref[0]

    def build_im2col_3x3():
        # 3x3 im2col of xpad's current contents -> p_scr (hw, 9*C_IN) bf16.
        for ty in range(3):
            for tx in range(3):
                t = 3 * ty + tx
                patch = xpad[ty:ty + h, tx:tx + w, :].reshape(hw, C_IN)
                p_scr[:, t * C_IN:(t + 1) * C_IN] = patch.astype(jnp.bfloat16)

    def conv_layer(w_mat_ref, b_ref):
        # Conv2d(128,128,3,1,1) + bias + LeakyReLU(0.1), written back into xpad.
        build_im2col_3x3()
        acc = jnp.dot(p_scr[...], w_mat_ref[...],
                      preferred_element_type=jnp.float32)       # (hw, 128) f32
        acc = acc + b_ref[...]                                   # (1, 128) f32
        acc = jnp.maximum(acc, 0.1 * acc)                        # LeakyReLU(0.1)
        xpad[1:h + 1, 1:w + 1, :] = acc.reshape(h, w, C_IN)

    # deconv1 / deconv2
    conv_layer(w1_ref, b1_ref)
    conv_layer(w2_ref, b2_ref)

    # deconv3: ConvTranspose2d(128,64,4,2,1) via sub-pixel decomposition.
    # One matmul produces the 4 output-parity sub-maps as 4*64 channels.
    build_im2col_3x3()
    a3 = jnp.dot(p_scr[...], wt_ref[...],
                 preferred_element_type=jnp.float32)             # (hw, 256) f32
    a3 = jnp.maximum(a3, 0.1 * a3)                               # LeakyReLU, no bias
    for q in range(4):                                           # q = 2*py + px
        blk = a3[:, q * C_MID:(q + 1) * C_MID]
        ypad[q, 1:h + 1, 1:w + 1, :] = blk.reshape(h, w, C_MID)

    # est_normal: 3x3 conv (64 -> 3) on the (virtual) 2Hx2W map, decomposed by
    # output parity so the interleave never needs to be materialized.  The 36
    # tap patches are packed into one (4*hw, 9*64) im2col and a single matmul.
    for qy in range(2):
        for qx in range(2):
            q4 = 2 * qy + qx
            for ky in range(3):
                for kx in range(3):
                    py, dy = _pm(qy, ky)
                    px, dx = _pm(qx, kx)
                    src = ypad[2 * py + px,
                               1 + dy:1 + dy + h,
                               1 + dx:1 + dx + w, :].reshape(hw, C_MID)
                    t = 3 * ky + kx
                    p4_scr[q4 * hw:(q4 + 1) * hw,
                           t * C_MID:(t + 1) * C_MID] = src.astype(jnp.bfloat16)

    z = jnp.dot(p4_scr[...], w3_ref[...],
                preferred_element_type=jnp.float32)              # (4*hw, 3) f32

    # L2 normalize over the 3 channels (torch F.normalize, eps=1e-12), via rsqrt.
    ss = jnp.sum(z * z, axis=-1, keepdims=True)
    z = z * lax.rsqrt(jnp.maximum(ss, 1e-24))

    o_ref[0] = z.astype(o_ref.dtype)


def _run_fused(xh, w1m, b1m, w2m, b2m, wtm, w3m, *, h, w):
    n = xh.shape[0]
    hw = h * w
    kern = functools.partial(_fused_regressor_kernel, h=h, w=w)
    return pl.pallas_call(
        kern,
        out_shape=jax.ShapeDtypeStruct((n, 4 * hw, C_OUT), jnp.float32),
        grid=(n,),
        in_specs=[
            pl.BlockSpec((1, h, w, C_IN), lambda i: (i, 0, 0, 0)),
            pl.BlockSpec((9 * C_IN, C_IN), lambda i: (0, 0)),
            pl.BlockSpec((1, C_IN), lambda i: (0, 0)),
            pl.BlockSpec((9 * C_IN, C_IN), lambda i: (0, 0)),
            pl.BlockSpec((1, C_IN), lambda i: (0, 0)),
            pl.BlockSpec((9 * C_IN, 4 * C_MID), lambda i: (0, 0)),
            pl.BlockSpec((9 * C_MID, C_OUT), lambda i: (0, 0)),
        ],
        out_specs=pl.BlockSpec((1, 4 * hw, C_OUT), lambda i: (i, 0, 0)),
        scratch_shapes=[
            pltpu.VMEM((h + 2, w + 2, C_IN), jnp.float32),       # padded act (L1/L2/L3 in)
            pltpu.VMEM((4, h + 2, w + 2, C_MID), jnp.float32),   # padded parity sub-maps
            pltpu.VMEM((hw, 9 * C_IN), jnp.bfloat16),            # im2col (layers 1-3)
            pltpu.VMEM((4 * hw, 9 * C_MID), jnp.bfloat16),       # im2col (est_normal)
        ],
        compiler_params=pltpu.CompilerParams(
            dimension_semantics=("parallel",)),
    )(xh, w1m, b1m, w2m, b2m, wtm, w3m)


# ----------------------------------------------------------------------------
# Parameter init and one-time weight re-layout (hoisted out of the forward).
# ----------------------------------------------------------------------------
def init_params(key):
    k1, k2, k3, k4, k5, k6 = jax.random.split(key, 6)

    def kaiming(k, shape, fan_in):
        return jax.random.normal(k, shape, jnp.float32) * math.sqrt(2.0 / fan_in)

    # Conv2d weights: (Cout, Cin, kh, kw); ConvTranspose2d: (Cin, Cout, kh, kw).
    w1 = kaiming(k1, (C_IN, C_IN, 3, 3), C_IN * 9)
    b1 = 0.01 * jax.random.normal(k2, (C_IN,), jnp.float32)
    w2 = kaiming(k3, (C_IN, C_IN, 3, 3), C_IN * 9)
    b2 = 0.01 * jax.random.normal(k4, (C_IN,), jnp.float32)
    wt = kaiming(k5, (C_IN, C_MID, 4, 4), C_IN * 16)
    w3 = kaiming(k6, (C_OUT, C_MID, 3, 3), C_MID * 9)
    return w1, b1, w2, b2, wt, w3


def _conv3x3_to_mat(wc):
    # (Cout, Cin, 3, 3) -> (9*Cin, Cout), tap-major (ky, kx) row blocks.
    cout, cin, kh, kw = wc.shape
    return jnp.transpose(wc, (2, 3, 1, 0)).reshape(kh * kw * cin, cout)


def _deconv_to_parity_mat(wt):
    # ConvTranspose2d(128,64,4,2,1) weight (Cin,Cout,4,4) -> (9*Cin, 4*Cout):
    # column block q = 2*py+px is the parity-(py,px) sub-kernel, zero-padded to
    # the shared 3x3 tap layout used by the im2col matrix.
    cin, cout = wt.shape[0], wt.shape[1]
    m = jnp.zeros((9 * cin, 4 * cout), wt.dtype)
    for py in range(2):
        for px in range(2):
            q = 2 * py + px
            for dy in range(2):
                for dx in range(2):
                    ty, tx = py + dy, px + dx
                    ky, kx = 3 - py - 2 * dy, 3 - px - 2 * dx
                    t = 3 * ty + tx
                    m = m.at[t * cin:(t + 1) * cin,
                             q * cout:(q + 1) * cout].set(wt[:, :, ky, kx])
    return m


def prepare_params(params):
    """One-time re-layout of the PyTorch-shaped weights into matmul matrices."""
    w1, b1, w2, b2, wt, w3 = params
    return (
        _conv3x3_to_mat(w1).astype(jnp.bfloat16),
        b1.reshape(1, C_IN).astype(jnp.float32),
        _conv3x3_to_mat(w2).astype(jnp.bfloat16),
        b2.reshape(1, C_IN).astype(jnp.float32),
        _deconv_to_parity_mat(wt).astype(jnp.bfloat16),
        _conv3x3_to_mat(w3).astype(jnp.bfloat16),
    )


# ----------------------------------------------------------------------------
# Forward pass equivalent to Regressor.forward(x, shape).
# ----------------------------------------------------------------------------
@functools.partial(jax.jit, static_argnames=("shape",))
def regressor_forward(x, shape, prepared):
    n, c, h, w = shape
    w1m, b1m, w2m, b2m, wtm, w3m = prepared

    x = jnp.reshape(x, (n, c, h, w))                          # x.view(shape)
    xh = jnp.transpose(x, (0, 2, 3, 1))                       # NCHW -> NHWC
    out = _run_fused(xh, w1m, b1m, w2m, b2m, wtm, w3m, h=h, w=w)

    # out: (n, 4*h*w, 3) grouped as (qy, qx, m, n); de-interleave to NCHW.
    out = out.reshape(n, 2, 2, h, w, C_OUT)
    out = jnp.transpose(out, (0, 5, 3, 1, 4, 2))              # (n, 3, h, 2, w, 2)
    return out.reshape(n, C_OUT, 2 * h, 2 * w)


# ----------------------------------------------------------------------------
# Pure-JAX reference (XLA convs) matching the kernel's bf16-operand precision.
# ----------------------------------------------------------------------------
def reference_forward(x, shape, params):
    n, c, h, w = shape
    w1, b1, w2, b2, wt, w3 = params
    o = jnp.transpose(jnp.reshape(x, (n, c, h, w)), (0, 2, 3, 1))

    def conv3x3(o, wc, b, leaky):
        f = jnp.transpose(wc, (2, 3, 1, 0)).astype(jnp.bfloat16)
        y = lax.conv_general_dilated(
            o.astype(jnp.bfloat16), f, (1, 1), [(1, 1), (1, 1)],
            dimension_numbers=("NHWC", "HWIO", "NHWC"),
            preferred_element_type=jnp.float32)
        if b is not None:
            y = y + b
        if leaky:
            y = jnp.maximum(y, 0.1 * y)
        return y

    o = conv3x3(o, w1, b1, True)
    o = conv3x3(o, w2, b2, True)
    ft = jnp.transpose(wt, (2, 3, 0, 1))[::-1, ::-1].astype(jnp.bfloat16)
    o = lax.conv_general_dilated(
        o.astype(jnp.bfloat16), ft, (1, 1), [(2, 2), (2, 2)],
        lhs_dilation=(2, 2),
        dimension_numbers=("NHWC", "HWIO", "NHWC"),
        preferred_element_type=jnp.float32)
    o = jnp.maximum(o, 0.1 * o)
    o = conv3x3(o, w3, None, False)
    nrm = jnp.sqrt(jnp.sum(o * o, axis=-1, keepdims=True))
    o = o / jnp.maximum(nrm, 1e-12)
    return jnp.transpose(o, (0, 3, 1, 2))


if __name__ == "__main__":
    key = jax.random.PRNGKey(0)
    kx, kp = jax.random.split(key)

    # Channel widths are fixed by the module (128 in, 3 out); small spatial size.
    N, C, H, W = 2, C_IN, 8, 8
    x = jax.random.normal(kx, (N, C, H, W), jnp.float32)
    params = init_params(kp)
    prepared = prepare_params(params)        # one-time weight re-layout

    normal = regressor_forward(x, (N, C, H, W), prepared)
    jax.block_until_ready(normal)

    assert normal.shape == (N, 3, 2 * H, 2 * W), normal.shape
    assert bool(jnp.all(jnp.isfinite(normal)))

    # unit-norm check over the channel axis
    norms = jnp.sqrt(jnp.sum(normal * normal, axis=1))
    assert bool(jnp.all(jnp.abs(norms - 1.0) < 1e-3))

    # correctness vs a pure-JAX reference using the same bf16-operand precision
    ref = reference_forward(x, (N, C, H, W), params)
    max_err = float(jnp.max(jnp.abs(normal - ref)))
    assert max_err < 2e-2, f"max abs err vs reference: {max_err}"

    print("KERNEL_OK")
</pallas_src>

<mosaic_0001>
module attributes {stable_mosaic.version = 11 : i64} {
  func.func @_fused_regressor_kernel(%arg0: i32, %arg1: memref<1x8x8x128xf32, #tpu.memory_space<vmem>>, %arg2: memref<1152x128xbf16, #tpu.memory_space<vmem>>, %arg3: memref<1x128xf32, #tpu.memory_space<vmem>>, %arg4: memref<1152x128xbf16, #tpu.memory_space<vmem>>, %arg5: memref<1x128xf32, #tpu.memory_space<vmem>>, %arg6: memref<1152x256xbf16, #tpu.memory_space<vmem>>, %arg7: memref<576x3xbf16, #tpu.memory_space<vmem>>, %arg8: memref<1x256x3xf32, #tpu.memory_space<vmem>>, %arg9: memref<10x10x128xf32, #tpu.memory_space<vmem>>, %arg10: memref<4x10x10x64xf32, #tpu.memory_space<vmem>>, %arg11: memref<64x1152xbf16, #tpu.memory_space<vmem>>, %arg12: memref<256x576xbf16, #tpu.memory_space<vmem>>) attributes {dimension_semantics = [#tpu.dimension_semantics<parallel>], iteration_bounds = array<i64: 2>, scalar_prefetch = 0 : i64, scratch_operands = 4 : i64, tpu.core_type = #tpu.core_type<tc>, window_params = [{transform_indices = @transform_0, window_bounds = array<i64: 1, 8, 8, 128>}, {pipeline_mode = #tpu.pipeline_mode<synchronous>, transform_indices = @transform_1, window_bounds = array<i64: 1152, 128>}, {pipeline_mode = #tpu.pipeline_mode<synchronous>, transform_indices = @transform_2, window_bounds = array<i64: 1, 128>}, {pipeline_mode = #tpu.pipeline_mode<synchronous>, transform_indices = @transform_3, window_bounds = array<i64: 1152, 128>}, {pipeline_mode = #tpu.pipeline_mode<synchronous>, transform_indices = @transform_4, window_bounds = array<i64: 1, 128>}, {pipeline_mode = #tpu.pipeline_mode<synchronous>, transform_indices = @transform_5, window_bounds = array<i64: 1152, 256>}, {pipeline_mode = #tpu.pipeline_mode<synchronous>, transform_indices = @transform_6, window_bounds = array<i64: 576, 3>}, {transform_indices = @transform_7, window_bounds = array<i64: 1, 256, 3>}]} {
    %cst = arith.constant 0.000000e+00 : f32
    %0 = vector.broadcast %cst : f32 to vector<10x10x128xf32>
    %c0 = arith.constant 0 : index
    %c0_0 = arith.constant 0 : index
    %c0_1 = arith.constant 0 : index
    %1 = vector.load %arg9[%c0, %c0_0, %c0_1] : memref<10x10x128xf32, #tpu.memory_space<vmem>>, vector<10x10x128xf32>
    tpu.vector_store %arg9[%c0, %c0_0, %c0_1], %0 {strides = array<i32>} : memref<10x10x128xf32, #tpu.memory_space<vmem>>, vector<10x10x128xf32>,
    %cst_2 = arith.constant 0.000000e+00 : f32
    %2 = vector.broadcast %cst_2 : f32 to vector<4x10x10x64xf32>
    %c0_3 = arith.constant 0 : index
    %c0_4 = arith.constant 0 : index
    %c0_5 = arith.constant 0 : index
    %c0_6 = arith.constant 0 : index
    %3 = vector.load %arg10[%c0_3, %c0_4, %c0_5, %c0_6] : memref<4x10x10x64xf32, #tpu.memory_space<vmem>>, vector<4x10x10x64xf32>
    tpu.vector_store %arg10[%c0_3, %c0_4, %c0_5, %c0_6], %2 {strides = array<i32>} : memref<4x10x10x64xf32, #tpu.memory_space<vmem>>, vector<4x10x10x64xf32>,
    %c0_7 = arith.constant 0 : index
    %c0_8 = arith.constant 0 : index
    %c0_9 = arith.constant 0 : index
    %c0_10 = arith.constant 0 : index
    %4 = vector.load %arg1[%c0_7, %c0_8, %c0_9, %c0_10] : memref<1x8x8x128xf32, #tpu.memory_space<vmem>>, vector<1x8x8x128xf32>
    %5 = vector.shape_cast %4 : vector<1x8x8x128xf32> to vector<8x8x128xf32>
    %c1 = arith.constant 1 : index
    %c1_11 = arith.constant 1 : index
    %c0_12 = arith.constant 0 : index
    %6 = vector.load %arg9[%c1, %c1_11, %c0_12] : memref<10x10x128xf32, #tpu.memory_space<vmem>>, vector<8x8x128xf32>
    tpu.vector_store %arg9[%c1, %c1_11, %c0_12], %5 {strides = array<i32>} : memref<10x10x128xf32, #tpu.memory_space<vmem>>, vector<8x8x128xf32>,
    %c0_13 = arith.constant 0 : index
    %c0_14 = arith.constant 0 : index
    %c0_15 = arith.constant 0 : index
    %7 = vector.load %arg9[%c0_13, %c0_14, %c0_15] : memref<10x10x128xf32, #tpu.memory_space<vmem>>, vector<8x8x128xf32>
    %8 = vector.shape_cast %7 : vector<8x8x128xf32> to vector<64x128xf32>
    %9 = arith.truncf %8 : vector<64x128xf32> to vector<64x128xbf16>
    %c0_16 = arith.constant 0 : index
    %c0_17 = arith.constant 0 : index
    %10 = vector.load %arg11[%c0_16, %c0_17] : memref<64x1152xbf16, #tpu.memory_space<vmem>>, vector<64x128xbf16>
    tpu.vector_store %arg11[%c0_16, %c0_17], %9 {strides = array<i32>} : memref<64x1152xbf16, #tpu.memory_space<vmem>>, vector<64x128xbf16>,
    %c0_18 = arith.constant 0 : index
    %c1_19 = arith.constant 1 : index
    %c0_20 = arith.constant 0 : index
    %11 = vector.load %arg9[%c0_18, %c1_19, %c0_20] : memref<10x10x128xf32, #tpu.memory_space<vmem>>, vector<8x8x128xf32>
    %12 = vector.shape_cast %11 : vector<8x8x128xf32> to vector<64x128xf32>
    %13 = arith.truncf %12 : vector<64x128xf32> to vector<64x128xbf16>
    %c0_21 = arith.constant 0 : index
    %c128 = arith.constant 128 : index
    %14 = vector.load %arg11[%c0_21, %c128] : memref<64x1152xbf16, #tpu.memory_space<vmem>>, vector<64x128xbf16>
    tpu.vector_store %arg11[%c0_21, %c128], %13 {strides = array<i32>} : memref<64x1152xbf16, #tpu.memory_space<vmem>>, vector<64x128xbf16>,
    %c0_22 = arith.constant 0 : index
    %c2 = arith.constant 2 : index
    %c0_23 = arith.constant 0 : index
    %15 = vector.load %arg9[%c0_22, %c2, %c0_23] : memref<10x10x128xf32, #tpu.memory_space<vmem>>, vector<8x8x128xf32>
    %16 = vector.shape_cast %15 : vector<8x8x128xf32> to vector<64x128xf32>
    %17 = arith.truncf %16 : vector<64x128xf32> to vector<64x128xbf16>
    %c0_24 = arith.constant 0 : index
    %c256 = arith.constant 256 : index
    %18 = vector.load %arg11[%c0_24, %c256] : memref<64x1152xbf16, #tpu.memory_space<vmem>>, vector<64x128xbf16>
    tpu.vector_store %arg11[%c0_24, %c256], %17 {strides = array<i32>} : memref<64x1152xbf16, #tpu.memory_space<vmem>>, vector<64x128xbf16>,
    %c1_25 = arith.constant 1 : index
    %c0_26 = arith.constant 0 : index
    %c0_27 = arith.constant 0 : index
    %19 = vector.load %arg9[%c1_25, %c0_26, %c0_27] : memref<10x10x128xf32, #tpu.memory_space<vmem>>, vector<8x8x128xf32>
    %20 = vector.shape_cast %19 : vector<8x8x128xf32> to vector<64x128xf32>
    %21 = arith.truncf %20 : vector<64x128xf32> to vector<64x128xbf16>
    %c0_28 = arith.constant 0 : index
    %c384 = arith.constant 384 : index
    %22 = vector.load %arg11[%c0_28, %c384] : memref<64x1152xbf16, #tpu.memory_space<vmem>>, vector<64x128xbf16>
    tpu.vector_store %arg11[%c0_28, %c384], %21 {strides = array<i32>} : memref<64x1152xbf16, #tpu.memory_space<vmem>>, vector<64x128xbf16>,
    %c1_29 = arith.constant 1 : index
    %c1_30 = arith.constant 1 : index
    %c0_31 = arith.constant 0 : index
    %23 = vector.load %arg9[%c1_29, %c1_30, %c0_31] : memref<10x10x128xf32, #tpu.memory_space<vmem>>, vector<8x8x128xf32>
    %24 = vector.shape_cast %23 : vector<8x8x128xf32> to vector<64x128xf32>
    %25 = arith.truncf %24 : vector<64x128xf32> to vector<64x128xbf16>
    %c0_32 = arith.constant 0 : index
    %c512 = arith.constant 512 : index
    %26 = vector.load %arg11[%c0_32, %c512] : memref<64x1152xbf16, #tpu.memory_space<vmem>>, vector<64x128xbf16>
    tpu.vector_store %arg11[%c0_32, %c512], %25 {strides = array<i32>} : memref<64x1152xbf16, #tpu.memory_space<vmem>>, vector<64x128xbf16>,
    %c1_33 = arith.constant 1 : index
    %c2_34 = arith.constant 2 : index
    %c0_35 = arith.constant 0 : index
    %27 = vector.load %arg9[%c1_33, %c2_34, %c0_35] : memref<10x10x128xf32, #tpu.memory_space<vmem>>, vector<8x8x128xf32>
    %28 = vector.shape_cast %27 : vector<8x8x128xf32> to vector<64x128xf32>
    %29 = arith.truncf %28 : vector<64x128xf32> to vector<64x128xbf16>
    %c0_36 = arith.constant 0 : index
    %c640 = arith.constant 640 : index
    %30 = vector.load %arg11[%c0_36, %c640] : memref<64x1152xbf16, #tpu.memory_space<vmem>>, vector<64x128xbf16>
    tpu.vector_store %arg11[%c0_36, %c640], %29 {strides = array<i32>} : memref<64x1152xbf16, #tpu.memory_space<vmem>>, vector<64x128xbf16>,
    %c2_37 = arith.constant 2 : index
    %c0_38 = arith.constant 0 : index
    %c0_39 = arith.constant 0 : index
    %31 = vector.load %arg9[%c2_37, %c0_38, %c0_39] : memref<10x10x128xf32, #tpu.memory_space<vmem>>, vector<8x8x128xf32>
    %32 = vector.shape_cast %31 : vector<8x8x128xf32> to vector<64x128xf32>
    %33 = arith.truncf %32 : vector<64x128xf32> to vector<64x128xbf16>
    %c0_40 = arith.constant 0 : index
    %c768 = arith.constant 768 : index
    %34 = vector.load %arg11[%c0_40, %c768] : memref<64x1152xbf16, #tpu.memory_space<vmem>>, vector<64x128xbf16>
    tpu.vector_store %arg11[%c0_40, %c768], %33 {strides = array<i32>} : memref<64x1152xbf16, #tpu.memory_space<vmem>>, vector<64x128xbf16>,
    %c2_41 = arith.constant 2 : index
    %c1_42 = arith.constant 1 : index
    %c0_43 = arith.constant 0 : index
    %35 = vector.load %arg9[%c2_41, %c1_42, %c0_43] : memref<10x10x128xf32, #tpu.memory_space<vmem>>, vector<8x8x128xf32>
    %36 = vector.shape_cast %35 : vector<8x8x128xf32> to vector<64x128xf32>
    %37 = arith.truncf %36 : vector<64x128xf32> to vector<64x128xbf16>
    %c0_44 = arith.constant 0 : index
    %c896 = arith.constant 896 : index
    %38 = vector.load %arg11[%c0_44, %c896] : memref<64x1152xbf16, #tpu.memory_space<vmem>>, vector<64x128xbf16>
    tpu.vector_store %arg11[%c0_44, %c896], %37 {strides = array<i32>} : memref<64x1152xbf16, #tpu.memory_space<vmem>>, vector<64x128xbf16>,
    %c2_45 = arith.constant 2 : index
    %c2_46 = arith.constant 2 : index
    %c0_47 = arith.constant 0 : index
    %39 = vector.load %arg9[%c2_45, %c2_46, %c0_47] : memref<10x10x128xf32, #tpu.memory_space<vmem>>, vector<8x8x128xf32>
    %40 = vector.shape_cast %39 : vector<8x8x128xf32> to vector<64x128xf32>
    %41 = arith.truncf %40 : vector<64x128xf32> to vector<64x128xbf16>
    %c0_48 = arith.constant 0 : index
    %c1024 = arith.constant 1024 : index
    %42 = vector.load %arg11[%c0_48, %c1024] : memref<64x1152xbf16, #tpu.memory_space<vmem>>, vector<64x128xbf16>
    tpu.vector_store %arg11[%c0_48, %c1024], %41 {strides = array<i32>} : memref<64x1152xbf16, #tpu.memory_space<vmem>>, vector<64x128xbf16>,
    %c0_49 = arith.constant 0 : index
    %c0_50 = arith.constant 0 : index
    %43 = vector.load %arg11[%c0_49, %c0_50] : memref<64x1152xbf16, #tpu.memory_space<vmem>>, vector<64x1152xbf16>
    %c0_51 = arith.constant 0 : index
    %c0_52 = arith.constant 0 : index
    %44 = vector.load %arg2[%c0_51, %c0_52] : memref<1152x128xbf16, #tpu.memory_space<vmem>>, vector<1152x128xbf16>
    %cst_53 = arith.constant dense<0.000000e+00> : vector<64x128xf32>
    %45 = tpu.matmul %43, %44, %cst_53 {dimension_numbers = #tpu.dot_dimension_numbers<[1], [0], [0], [1], [0, 0, 1, 1], [], []>} : vector<64x1152xbf16>, vector<1152x128xbf16>, vector<64x128xf32> -> vector<64x128xf32>
    %c0_54 = arith.constant 0 : index
    %c0_55 = arith.constant 0 : index
    %46 = vector.load %arg3[%c0_54, %c0_55] : memref<1x128xf32, #tpu.memory_space<vmem>>, vector<1x128xf32>
    %47 = vector.broadcast %46 : vector<1x128xf32> to vector<64x128xf32>
    %48 = arith.addf %45, %47 : vector<64x128xf32>
    %cst_56 = arith.constant 1.000000e-01 : f32
    %49 = vector.broadcast %cst_56 : f32 to vector<64x128xf32>
    %50 = arith.mulf %49, %48 : vector<64x128xf32>
    %51 = arith.maximumf %48, %50 : vector<64x128xf32>
    %52 = vector.shape_cast %51 : vector<64x128xf32> to vector<8x8x128xf32>
    %c1_57 = arith.constant 1 : index
    %c1_58 = arith.constant 1 : index
    %c0_59 = arith.constant 0 : index
    %53 = vector.load %arg9[%c1_57, %c1_58, %c0_59] : memref<10x10x128xf32, #tpu.memory_space<vmem>>, vector<8x8x128xf32>
    tpu.vector_store %arg9[%c1_57, %c1_58, %c0_59], %52 {strides = array<i32>} : memref<10x10x128xf32, #tpu.memory_space<vmem>>, vector<8x8x128xf32>,
    %c0_60 = arith.constant 0 : index
    %c0_61 = arith.constant 0 : index
    %c0_62 = arith.constant 0 : index
    %54 = vector.load %arg9[%c0_60, %c0_61, %c0_62] : memref<10x10x128xf32, #tpu.memory_space<vmem>>, vector<8x8x128xf32>
    %55 = vector.shape_cast %54 : vector<8x8x128xf32> to vector<64x128xf32>
    %56 = arith.truncf %55 : vector<64x128xf32> to vector<64x128xbf16>
    %c0_63 = arith.constant 0 : index
    %c0_64 = arith.constant 0 : index
    %57 = vector.load %arg11[%c0_63, %c0_64] : memref<64x1152xbf16, #tpu.memory_space<vmem>>, vector<64x128xbf16>
    tpu.vector_store %arg11[%c0_63, %c0_64], %56 {strides = array<i32>} : memref<64x1152xbf16, #tpu.memory_space<vmem>>, vector<64x128xbf16>,
    %c0_65 = arith.constant 0 : index
    %c1_66 = arith.constant 1 : index
    %c0_67 = arith.constant 0 : index
    %58 = vector.load %arg9[%c0_65, %c1_66, %c0_67] : memref<10x10x128xf32, #tpu.memory_space<vmem>>, vector<8x8x128xf32>
    %59 = vector.shape_cast %58 : vector<8x8x128xf32> to vector<64x128xf32>
    %60 = arith.truncf %59 : vector<64x128xf32> to vector<64x128xbf16>
    %c0_68 = arith.constant 0 : index
    %c128_69 = arith.constant 128 : index
    %61 = vector.load %arg11[%c0_68, %c128_69] : memref<64x1152xbf16, #tpu.memory_space<vmem>>, vector<64x128xbf16>
    tpu.vector_store %arg11[%c0_68, %c128_69], %60 {strides = array<i32>} : memref<64x1152xbf16, #tpu.memory_space<vmem>>, vector<64x128xbf16>,
    %c0_70 = arith.constant 0 : index
    %c2_71 = arith.constant 2 : index
    %c0_72 = arith.constant 0 : index
    %62 = vector.load %arg9[%c0_70, %c2_71, %c0_72] : memref<10x10x128xf32, #tpu.memory_space<vmem>>, vector<8x8x128xf32>
    %63 = vector.shape_cast %62 : vector<8x8x128xf32> to vector<64x128xf32>
    %64 = arith.truncf %63 : vector<64x128xf32> to vector<64x128xbf16>
    %c0_73 = arith.constant 0 : index
    %c256_74 = arith.constant 256 : index
    %65 = vector.load %arg11[%c0_73, %c256_74] : memref<64x1152xbf16, #tpu.memory_space<vmem>>, vector<64x128xbf16>
    tpu.vector_store %arg11[%c0_73, %c256_74], %64 {strides = array<i32>} : memref<64x1152xbf16, #tpu.memory_space<vmem>>, vector<64x128xbf16>,
    %c1_75 = arith.constant 1 : index
    %c0_76 = arith.constant 0 : index
    %c0_77 = arith.constant 0 : index
    %66 = vector.load %arg9[%c1_75, %c0_76, %c0_77] : memref<10x10x128xf32, #tpu.memory_space<vmem>>, vector<8x8x128xf32>
    %67 = vector.shape_cast %66 : vector<8x8x128xf32> to vector<64x128xf32>
    %68 = arith.truncf %67 : vector<64x128xf32> to vector<64x128xbf16>
    %c0_78 = arith.constant 0 : index
    %c384_79 = arith.constant 384 : index
    %69 = vector.load %arg11[%c0_78, %c384_79] : memref<64x1152xbf16, #tpu.memory_space<vmem>>, vector<64x128xbf16>
    tpu.vector_store %arg11[%c0_78, %c384_79], %68 {strides = array<i32>} : memref<64x1152xbf16, #tpu.memory_space<vmem>>, vector<64x128xbf16>,
    %c1_80 = arith.constant 1 : index
    %c1_81 = arith.constant 1 : index
    %c0_82 = arith.constant 0 : index
    %70 = vector.load %arg9[%c1_80, %c1_81, %c0_82] : memref<10x10x128xf32, #tpu.memory_space<vmem>>, vector<8x8x128xf32>
    %71 = vector.shape_cast %70 : vector<8x8x128xf32> to vector<64x128xf32>
    %72 = arith.truncf %71 : vector<64x128xf32> to vector<64x128xbf16>
    %c0_83 = arith.constant 0 : index
    %c512_84 = arith.constant 512 : index
    %73 = vector.load %arg11[%c0_83, %c512_84] : memref<64x1152xbf16, #tpu.memory_space<vmem>>, vector<64x128xbf16>
    tpu.vector_store %arg11[%c0_83, %c512_84], %72 {strides = array<i32>} : memref<64x1152xbf16, #tpu.memory_space<vmem>>, vector<64x128xbf16>,
    %c1_85 = arith.constant 1 : index
    %c2_86 = arith.constant 2 : index
    %c0_87 = arith.constant 0 : index
    %74 = vector.load %arg9[%c1_85, %c2_86, %c0_87] : memref<10x10x128xf32, #tpu.memory_space<vmem>>, vector<8x8x128xf32>
    %75 = vector.shape_cast %74 : vector<8x8x128xf32> to vector<64x128xf32>
    %76 = arith.truncf %75 : vector<64x128xf32> to vector<64x128xbf16>
    %c0_88 = arith.constant 0 : index
    %c640_89 = arith.constant 640 : index
    %77 = vector.load %arg11[%c0_88, %c640_89] : memref<64x1152xbf16, #tpu.memory_space<vmem>>, vector<64x128xbf16>
    tpu.vector_store %arg11[%c0_88, %c640_89], %76 {strides = array<i32>} : memref<64x1152xbf16, #tpu.memory_space<vmem>>, vector<64x128xbf16>,
    %c2_90 = arith.constant 2 : index
    %c0_91 = arith.constant 0 : index
    %c0_92 = arith.constant 0 : index
    %78 = vector.load %arg9[%c2_90, %c0_91, %c0_92] : memref<10x10x128xf32, #tpu.memory_space<vmem>>, vector<8x8x128xf32>
    %79 = vector.shape_cast %78 : vector<8x8x128xf32> to vector<64x128xf32>
    %80 = arith.truncf %79 : vector<64x128xf32> to vector<64x128xbf16>
    %c0_93 = arith.constant 0 : index
    %c768_94 = arith.constant 768 : index
    %81 = vector.load %arg11[%c0_93, %c768_94] : memref<64x1152xbf16, #tpu.memory_space<vmem>>, vector<64x128xbf16>
    tpu.vector_store %arg11[%c0_93, %c768_94], %80 {strides = array<i32>} : memref<64x1152xbf16, #tpu.memory_space<vmem>>, vector<64x128xbf16>,
    %c2_95 = arith.constant 2 : index
    %c1_96 = arith.constant 1 : index
    %c0_97 = arith.constant 0 : index
    %82 = vector.load %arg9[%c2_95, %c1_96, %c0_97] : memref<10x10x128xf32, #tpu.memory_space<vmem>>, vector<8x8x128xf32>
    %83 = vector.shape_cast %82 : vector<8x8x128xf32> to vector<64x128xf32>
    %84 = arith.truncf %83 : vector<64x128xf32> to vector<64x128xbf16>
    %c0_98 = arith.constant 0 : index
    %c896_99 = arith.constant 896 : index
    %85 = vector.load %arg11[%c0_98, %c896_99] : memref<64x1152xbf16, #tpu.memory_space<vmem>>, vector<64x128xbf16>
    tpu.vector_store %arg11[%c0_98, %c896_99], %84 {strides = array<i32>} : memref<64x1152xbf16, #tpu.memory_space<vmem>>, vector<64x128xbf16>,
    %c2_100 = arith.constant 2 : index
    %c2_101 = arith.constant 2 : index
    %c0_102 = arith.constant 0 : index
    %86 = vector.load %arg9[%c2_100, %c2_101, %c0_102] : memref<10x10x128xf32, #tpu.memory_space<vmem>>, vector<8x8x128xf32>
    %87 = vector.shape_cast %86 : vector<8x8x128xf32> to vector<64x128xf32>
    %88 = arith.truncf %87 : vector<64x128xf32> to vector<64x128xbf16>
    %c0_103 = arith.constant 0 : index
    %c1024_104 = arith.constant 1024 : index
    %89 = vector.load %arg11[%c0_103, %c1024_104] : memref<64x1152xbf16, #tpu.memory_space<vmem>>, vector<64x128xbf16>
    tpu.vector_store %arg11[%c0_103, %c1024_104], %88 {strides = array<i32>} : memref<64x1152xbf16, #tpu.memory_space<vmem>>, vector<64x128xbf16>,
    %c0_105 = arith.constant 0 : index
    %c0_106 = arith.constant 0 : index
    %90 = vector.load %arg11[%c0_105, %c0_106] : memref<64x1152xbf16, #tpu.memory_space<vmem>>, vector<64x1152xbf16>
    %c0_107 = arith.constant 0 : index
    %c0_108 = arith.constant 0 : index
    %91 = vector.load %arg4[%c0_107, %c0_108] : memref<1152x128xbf16, #tpu.memory_space<vmem>>, vector<1152x128xbf16>
    %cst_109 = arith.constant dense<0.000000e+00> : vector<64x128xf32>
    %92 = tpu.matmul %90, %91, %cst_109 {dimension_numbers = #tpu.dot_dimension_numbers<[1], [0], [0], [1], [0, 0, 1, 1], [], []>} : vector<64x1152xbf16>, vector<1152x128xbf16>, vector<64x128xf32> -> vector<64x128xf32>
    %c0_110 = arith.constant 0 : index
    %c0_111 = arith.constant 0 : index
    %93 = vector.load %arg5[%c0_110, %c0_111] : memref<1x128xf32, #tpu.memory_space<vmem>>, vector<1x128xf32>
    %94 = vector.broadcast %93 : vector<1x128xf32> to vector<64x128xf32>
    %95 = arith.addf %92, %94 : vector<64x128xf32>
    %cst_112 = arith.constant 1.000000e-01 : f32
    %96 = vector.broadcast %cst_112 : f32 to vector<64x128xf32>
    %97 = arith.mulf %96, %95 : vector<64x128xf32>
    %98 = arith.maximumf %95, %97 : vector<64x128xf32>
    %99 = vector.shape_cast %98 : vector<64x128xf32> to vector<8x8x128xf32>
    %c1_113 = arith.constant 1 : index
    %c1_114 = arith.constant 1 : index
    %c0_115 = arith.constant 0 : index
    %100 = vector.load %arg9[%c1_113, %c1_114, %c0_115] : memref<10x10x128xf32, #tpu.memory_space<vmem>>, vector<8x8x128xf32>
    tpu.vector_store %arg9[%c1_113, %c1_114, %c0_115], %99 {strides = array<i32>} : memref<10x10x128xf32, #tpu.memory_space<vmem>>, vector<8x8x128xf32>,
    %c0_116 = arith.constant 0 : index
    %c0_117 = arith.constant 0 : index
    %c0_118 = arith.constant 0 : index
    %101 = vector.load %arg9[%c0_116, %c0_117, %c0_118] : memref<10x10x128xf32, #tpu.memory_space<vmem>>, vector<8x8x128xf32>
    %102 = vector.shape_cast %101 : vector<8x8x128xf32> to vector<64x128xf32>
    %103 = arith.truncf %102 : vector<64x128xf32> to vector<64x128xbf16>
    %c0_119 = arith.constant 0 : index
    %c0_120 = arith.constant 0 : index
    %104 = vector.load %arg11[%c0_119, %c0_120] : memref<64x1152xbf16, #tpu.memory_space<vmem>>, vector<64x128xbf16>
    tpu.vector_store %arg11[%c0_119, %c0_120], %103 {strides = array<i32>} : memref<64x1152xbf16, #tpu.memory_space<vmem>>, vector<64x128xbf16>,
    %c0_121 = arith.constant 0 : index
    %c1_122 = arith.constant 1 : index
    %c0_123 = arith.constant 0 : index
    %105 = vector.load %arg9[%c0_121, %c1_122, %c0_123] : memref<10x10x128xf32, #tpu.memory_space<vmem>>, vector<8x8x128xf32>
    %106 = vector.shape_cast %105 : vector<8x8x128xf32> to vector<64x128xf32>
    %107 = arith.truncf %106 : vector<64x128xf32> to vector<64x128xbf16>
    %c0_124 = arith.constant 0 : index
    %c128_125 = arith.constant 128 : index
    %108 = vector.load %arg11[%c0_124, %c128_125] : memref<64x1152xbf16, #tpu.memory_space<vmem>>, vector<64x128xbf16>
    tpu.vector_store %arg11[%c0_124, %c128_125], %107 {strides = array<i32>} : memref<64x1152xbf16, #tpu.memory_space<vmem>>, vector<64x128xbf16>,
    %c0_126 = arith.constant 0 : index
    %c2_127 = arith.constant 2 : index
    %c0_128 = arith.constant 0 : index
    %109 = vector.load %arg9[%c0_126, %c2_127, %c0_128] : memref<10x10x128xf32, #tpu.memory_space<vmem>>, vector<8x8x128xf32>
    %110 = vector.shape_cast %109 : vector<8x8x128xf32> to vector<64x128xf32>
    %111 = arith.truncf %110 : vector<64x128xf32> to vector<64x128xbf16>
    %c0_129 = arith.constant 0 : index
    %c256_130 = arith.constant 256 : index
    %112 = vector.load %arg11[%c0_129, %c256_130] : memref<64x1152xbf16, #tpu.memory_space<vmem>>, vector<64x128xbf16>
    tpu.vector_store %arg11[%c0_129, %c256_130], %111 {strides = array<i32>} : memref<64x1152xbf16, #tpu.memory_space<vmem>>, vector<64x128xbf16>,
    %c1_131 = arith.constant 1 : index
    %c0_132 = arith.constant 0 : index
    %c0_133 = arith.constant 0 : index
    %113 = vector.load %arg9[%c1_131, %c0_132, %c0_133] : memref<10x10x128xf32, #tpu.memory_space<vmem>>, vector<8x8x128xf32>
    %114 = vector.shape_cast %113 : vector<8x8x128xf32> to vector<64x128xf32>
    %115 = arith.truncf %114 : vector<64x128xf32> to vector<64x128xbf16>
    %c0_134 = arith.constant 0 : index
    %c384_135 = arith.constant 384 : index
    %116 = vector.load %arg11[%c0_134, %c384_135] : memref<64x1152xbf16, #tpu.memory_space<vmem>>, vector<64x128xbf16>
    tpu.vector_store %arg11[%c0_134, %c384_135], %115 {strides = array<i32>} : memref<64x1152xbf16, #tpu.memory_space<vmem>>, vector<64x128xbf16>,
    %c1_136 = arith.constant 1 : index
    %c1_137 = arith.constant 1 : index
    %c0_138 = arith.constant 0 : index
    %117 = vector.load %arg9[%c1_136, %c1_137, %c0_138] : memref<10x10x128xf32, #tpu.memory_space<vmem>>, vector<8x8x128xf32>
    %118 = vector.shape_cast %117 : vector<8x8x128xf32> to vector<64x128xf32>
    %119 = arith.truncf %118 : vector<64x128xf32> to vector<64x128xbf16>
    %c0_139 = arith.constant 0 : index
    %c512_140 = arith.constant 512 : index
    %120 = vector.load %arg11[%c0_139, %c512_140] : memref<64x1152xbf16, #tpu.memory_space<vmem>>, vector<64x128xbf16>
    tpu.vector_store %arg11[%c0_139, %c512_140], %119 {strides = array<i32>} : memref<64x1152xbf16, #tpu.memory_space<vmem>>, vector<64x128xbf16>,
    %c1_141 = arith.constant 1 : index
    %c2_142 = arith.constant 2 : index
    %c0_143 = arith.constant 0 : index
    %121 = vector.load %arg9[%c1_141, %c2_142, %c0_143] : memref<10x10x128xf32, #tpu.memory_space<vmem>>, vector<8x8x128xf32>
    %122 = vector.shape_cast %121 : vector<8x8x128xf32> to vector<64x128xf32>
    %123 = arith.truncf %122 : vector<64x128xf32> to vector<64x128xbf16>
    %c0_144 = arith.constant 0 : index
    %c640_145 = arith.constant 640 : index
    %124 = vector.load %arg11[%c0_144, %c640_145] : memref<64x1152xbf16, #tpu.memory_space<vmem>>, vector<64x128xbf16>
    tpu.vector_store %arg11[%c0_144, %c640_145], %123 {strides = array<i32>} : memref<64x1152xbf16, #tpu.memory_space<vmem>>, vector<64x128xbf16>,
    %c2_146 = arith.constant 2 : index
    %c0_147 = arith.constant 0 : index
    %c0_148 = arith.constant 0 : index
    %125 = vector.load %arg9[%c2_146, %c0_147, %c0_148] : memref<10x10x128xf32, #tpu.memory_space<vmem>>, vector<8x8x128xf32>
    %126 = vector.shape_cast %125 : vector<8x8x128xf32> to vector<64x128xf32>
    %127 = arith.truncf %126 : vector<64x128xf32> to vector<64x128xbf16>
    %c0_149 = arith.constant 0 : index
    %c768_150 = arith.constant 768 : index
    %128 = vector.load %arg11[%c0_149, %c768_150] : memref<64x1152xbf16, #tpu.memory_space<vmem>>, vector<64x128xbf16>
    tpu.vector_store %arg11[%c0_149, %c768_150], %127 {strides = array<i32>} : memref<64x1152xbf16, #tpu.memory_space<vmem>>, vector<64x128xbf16>,
    %c2_151 = arith.constant 2 : index
    %c1_152 = arith.constant 1 : index
    %c0_153 = arith.constant 0 : index
    %129 = vector.load %arg9[%c2_151, %c1_152, %c0_153] : memref<10x10x128xf32, #tpu.memory_space<vmem>>, vector<8x8x128xf32>
    %130 = vector.shape_cast %129 : vector<8x8x128xf32> to vector<64x128xf32>
    %131 = arith.truncf %130 : vector<64x128xf32> to vector<64x128xbf16>
    %c0_154 = arith.constant 0 : index
    %c896_155 = arith.constant 896 : index
    %132 = vector.load %arg11[%c0_154, %c896_155] : memref<64x1152xbf16, #tpu.memory_space<vmem>>, vector<64x128xbf16>
    tpu.vector_store %arg11[%c0_154, %c896_155], %131 {strides = array<i32>} : memref<64x1152xbf16, #tpu.memory_space<vmem>>, vector<64x128xbf16>,
    %c2_156 = arith.constant 2 : index
    %c2_157 = arith.constant 2 : index
    %c0_158 = arith.constant 0 : index
    %133 = vector.load %arg9[%c2_156, %c2_157, %c0_158] : memref<10x10x128xf32, #tpu.memory_space<vmem>>, vector<8x8x128xf32>
    %134 = vector.shape_cast %133 : vector<8x8x128xf32> to vector<64x128xf32>
    %135 = arith.truncf %134 : vector<64x128xf32> to vector<64x128xbf16>
    %c0_159 = arith.constant 0 : index
    %c1024_160 = arith.constant 1024 : index
    %136 = vector.load %arg11[%c0_159, %c1024_160] : memref<64x1152xbf16, #tpu.memory_space<vmem>>, vector<64x128xbf16>
    tpu.vector_store %arg11[%c0_159, %c1024_160], %135 {strides = array<i32>} : memref<64x1152xbf16, #tpu.memory_space<vmem>>, vector<64x128xbf16>,
    %c0_161 = arith.constant 0 : index
    %c0_162 = arith.constant 0 : index
    %137 = vector.load %arg11[%c0_161, %c0_162] : memref<64x1152xbf16, #tpu.memory_space<vmem>>, vector<64x1152xbf16>
    %c0_163 = arith.constant 0 : index
    %c0_164 = arith.constant 0 : index
    %138 = vector.load %arg6[%c0_163, %c0_164] : memref<1152x256xbf16, #tpu.memory_space<vmem>>, vector<1152x256xbf16>
    %cst_165 = arith.constant dense<0.000000e+00> : vector<64x256xf32>
    %139 = tpu.matmul %137, %138, %cst_165 {dimension_numbers = #tpu.dot_dimension_numbers<[1], [0], [0], [1], [0, 0, 1, 1], [], []>} : vector<64x1152xbf16>, vector<1152x256xbf16>, vector<64x256xf32> -> vector<64x256xf32>
    %cst_166 = arith.constant 1.000000e-01 : f32
    %140 = vector.broadcast %cst_166 : f32 to vector<64x256xf32>
    %141 = arith.mulf %140, %139 : vector<64x256xf32>
    %142 = arith.maximumf %139, %141 : vector<64x256xf32>
    %143 = vector.extract_strided_slice %142 {offsets = [0, 0], sizes = [64, 64], strides = [1, 1]} : vector<64x256xf32> to vector<64x64xf32>
    %144 = vector.shape_cast %143 : vector<64x64xf32> to vector<8x8x64xf32>
    %c0_167 = arith.constant 0 : index
    %c1_168 = arith.constant 1 : index
    %c1_169 = arith.constant 1 : index
    %c0_170 = arith.constant 0 : index
    %145 = vector.load %arg10[%c0_167, %c1_168, %c1_169, %c0_170] : memref<4x10x10x64xf32, #tpu.memory_space<vmem>>, vector<1x8x8x64xf32>
    %146 = vector.shape_cast %145 : vector<1x8x8x64xf32> to vector<8x8x64xf32>
    %147 = vector.shape_cast %144 : vector<8x8x64xf32> to vector<1x8x8x64xf32>
    tpu.vector_store %arg10[%c0_167, %c1_168, %c1_169, %c0_170], %147 {strides = array<i32>} : memref<4x10x10x64xf32, #tpu.memory_space<vmem>>, vector<1x8x8x64xf32>,
    %148 = vector.extract_strided_slice %142 {offsets = [0, 64], sizes = [64, 64], strides = [1, 1]} : vector<64x256xf32> to vector<64x64xf32>
    %149 = vector.shape_cast %148 : vector<64x64xf32> to vector<8x8x64xf32>
    %c1_171 = arith.constant 1 : index
    %c1_172 = arith.constant 1 : index
    %c1_173 = arith.constant 1 : index
    %c0_174 = arith.constant 0 : index
    %150 = vector.load %arg10[%c1_171, %c1_172, %c1_173, %c0_174] : memref<4x10x10x64xf32, #tpu.memory_space<vmem>>, vector<1x8x8x64xf32>
    %151 = vector.shape_cast %150 : vector<1x8x8x64xf32> to vector<8x8x64xf32>
    %152 = vector.shape_cast %149 : vector<8x8x64xf32> to vector<1x8x8x64xf32>
    tpu.vector_store %arg10[%c1_171, %c1_172, %c1_173, %c0_174], %152 {strides = array<i32>} : memref<4x10x10x64xf32, #tpu.memory_space<vmem>>, vector<1x8x8x64xf32>,
    %153 = vector.extract_strided_slice %142 {offsets = [0, 128], sizes = [64, 64], strides = [1, 1]} : vector<64x256xf32> to vector<64x64xf32>
    %154 = vector.shape_cast %153 : vector<64x64xf32> to vector<8x8x64xf32>
    %c2_175 = arith.constant 2 : index
    %c1_176 = arith.constant 1 : index
    %c1_177 = arith.constant 1 : index
    %c0_178 = arith.constant 0 : index
    %155 = vector.load %arg10[%c2_175, %c1_176, %c1_177, %c0_178] : memref<4x10x10x64xf32, #tpu.memory_space<vmem>>, vector<1x8x8x64xf32>
    %156 = vector.shape_cast %155 : vector<1x8x8x64xf32> to vector<8x8x64xf32>
    %157 = vector.shape_cast %154 : vector<8x8x64xf32> to vector<1x8x8x64xf32>
    tpu.vector_store %arg10[%c2_175, %c1_176, %c1_177, %c0_178], %157 {strides = array<i32>} : memref<4x10x10x64xf32, #tpu.memory_space<vmem>>, vector<1x8x8x64xf32>,
    %158 = vector.extract_strided_slice %142 {offsets = [0, 192], sizes = [64, 64], strides = [1, 1]} : vector<64x256xf32> to vector<64x64xf32>
    %159 = vector.shape_cast %158 : vector<64x64xf32> to vector<8x8x64xf32>
    %c3 = arith.constant 3 : index
    %c1_179 = arith.constant 1 : index
    %c1_180 = arith.constant 1 : index
    %c0_181 = arith.constant 0 : index
    %160 = vector.load %arg10[%c3, %c1_179, %c1_180, %c0_181] : memref<4x10x10x64xf32, #tpu.memory_space<vmem>>, vector<1x8x8x64xf32>
    %161 = vector.shape_cast %160 : vector<1x8x8x64xf32> to vector<8x8x64xf32>
    %162 = vector.shape_cast %159 : vector<8x8x64xf32> to vector<1x8x8x64xf32>
    tpu.vector_store %arg10[%c3, %c1_179, %c1_180, %c0_181], %162 {strides = array<i32>} : memref<4x10x10x64xf32, #tpu.memory_space<vmem>>, vector<1x8x8x64xf32>,
    %c3_182 = arith.constant 3 : index
    %c0_183 = arith.constant 0 : index
    %c0_184 = arith.constant 0 : index
    %c0_185 = arith.constant 0 : index
    %163 = vector.load %arg10[%c3_182, %c0_183, %c0_184, %c0_185] : memref<4x10x10x64xf32, #tpu.memory_space<vmem>>, vector<1x8x8x64xf32>
    %164 = vector.shape_cast %163 : vector<1x8x8x64xf32> to vector<8x8x64xf32>
    %165 = vector.shape_cast %164 : vector<8x8x64xf32> to vector<64x64xf32>
    %166 = arith.truncf %165 : vector<64x64xf32> to vector<64x64xbf16>
    %c0_186 = arith.constant 0 : index
    %c0_187 = arith.constant 0 : index
    %167 = vector.load %arg12[%c0_186, %c0_187] : memref<256x576xbf16, #tpu.memory_space<vmem>>, vector<64x64xbf16>
    tpu.vector_store %arg12[%c0_186, %c0_187], %166 {strides = array<i32>} : memref<256x576xbf16, #tpu.memory_space<vmem>>, vector<64x64xbf16>,
    %c2_188 = arith.constant 2 : index
    %c0_189 = arith.constant 0 : index
    %c1_190 = arith.constant 1 : index
    %c0_191 = arith.constant 0 : index
    %168 = vector.load %arg10[%c2_188, %c0_189, %c1_190, %c0_191] : memref<4x10x10x64xf32, #tpu.memory_space<vmem>>, vector<1x8x8x64xf32>
    %169 = vector.shape_cast %168 : vector<1x8x8x64xf32> to vector<8x8x64xf32>
    %170 = vector.shape_cast %169 : vector<8x8x64xf32> to vector<64x64xf32>
    %171 = arith.truncf %170 : vector<64x64xf32> to vector<64x64xbf16>
    %c0_192 = arith.constant 0 : index
    %c64 = arith.constant 64 : index
    %172 = vector.load %arg12[%c0_192, %c64] : memref<256x576xbf16, #tpu.memory_space<vmem>>, vector<64x64xbf16>
    tpu.vector_store %arg12[%c0_192, %c64], %171 {strides = array<i32>} : memref<256x576xbf16, #tpu.memory_space<vmem>>, vector<64x64xbf16>,
    %c3_193 = arith.constant 3 : index
    %c0_194 = arith.constant 0 : index
    %c1_195 = arith.constant 1 : index
    %c0_196 = arith.constant 0 : index
    %173 = vector.load %arg10[%c3_193, %c0_194, %c1_195, %c0_196] : memref<4x10x10x64xf32, #tpu.memory_space<vmem>>, vector<1x8x8x64xf32>
    %174 = vector.shape_cast %173 : vector<1x8x8x64xf32> to vector<8x8x64xf32>
    %175 = vector.shape_cast %174 : vector<8x8x64xf32> to vector<64x64xf32>
    %176 = arith.truncf %175 : vector<64x64xf32> to vector<64x64xbf16>
    %c0_197 = arith.constant 0 : index
    %c128_198 = arith.constant 128 : index
    %177 = vector.load %arg12[%c0_197, %c128_198] : memref<256x576xbf16, #tpu.memory_space<vmem>>, vector<64x64xbf16>
    tpu.vector_store %arg12[%c0_197, %c128_198], %176 {strides = array<i32>} : memref<256x576xbf16, #tpu.memory_space<vmem>>, vector<64x64xbf16>,
    %c1_199 = arith.constant 1 : index
    %c1_200 = arith.constant 1 : index
    %c0_201 = arith.constant 0 : index
    %c0_202 = arith.constant 0 : index
    %178 = vector.load %arg10[%c1_199, %c1_200, %c0_201, %c0_202] : memref<4x10x10x64xf32, #tpu.memory_space<vmem>>, vector<1x8x8x64xf32>
    %179 = vector.shape_cast %178 : vector<1x8x8x64xf32> to vector<8x8x64xf32>
    %180 = vector.shape_cast %179 : vector<8x8x64xf32> to vector<64x64xf32>
    %181 = arith.truncf %180 : vector<64x64xf32> to vector<64x64xbf16>
    %c0_203 = arith.constant 0 : index
    %c192 = arith.constant 192 : index
    %182 = vector.load %arg12[%c0_203, %c192] : memref<256x576xbf16, #tpu.memory_space<vmem>>, vector<64x64xbf16>
    tpu.vector_store %arg12[%c0_203, %c192], %181 {strides = array<i32>} : memref<256x576xbf16, #tpu.memory_space<vmem>>, vector<64x64xbf16>,
    %c0_204 = arith.constant 0 : index
    %c1_205 = arith.constant 1 : index
    %c1_206 = arith.constant 1 : index
    %c0_207 = arith.constant 0 : index
    %183 = vector.load %arg10[%c0_204, %c1_205, %c1_206, %c0_207] : memref<4x10x10x64xf32, #tpu.memory_space<vmem>>, vector<1x8x8x64xf32>
    %184 = vector.shape_cast %183 : vector<1x8x8x64xf32> to vector<8x8x64xf32>
    %185 = vector.shape_cast %184 : vector<8x8x64xf32> to vector<64x64xf32>
    %186 = arith.truncf %185 : vector<64x64xf32> to vector<64x64xbf16>
    %c0_208 = arith.constant 0 : index
    %c256_209 = arith.constant 256 : index
    %187 = vector.load %arg12[%c0_208, %c256_209] : memref<256x576xbf16, #tpu.memory_space<vmem>>, vector<64x64xbf16>
    tpu.vector_store %arg12[%c0_208, %c256_209], %186 {strides = array<i32>} : memref<256x576xbf16, #tpu.memory_space<vmem>>, vector<64x64xbf16>,
    %c1_210 = arith.constant 1 : index
    %c1_211 = arith.constant 1 : index
    %c1_212 = arith.constant 1 : index
    %c0_213 = arith.constant 0 : index
    %188 = vector.load %arg10[%c1_210, %c1_211, %c1_212, %c0_213] : memref<4x10x10x64xf32, #tpu.memory_space<vmem>>, vector<1x8x8x64xf32>
    %189 = vector.shape_cast %188 : vector<1x8x8x64xf32> to vector<8x8x64xf32>
    %190 = vector.shape_cast %189 : vector<8x8x64xf32> to vector<64x64xf32>
    %191 = arith.truncf %190 : vector<64x64xf32> to vector<64x64xbf16>
    %c0_214 = arith.constant 0 : index
    %c320 = arith.constant 320 : index
    %192 = vector.load %arg12[%c0_214, %c320] : memref<256x576xbf16, #tpu.memory_space<vmem>>, vector<64x64xbf16>
    tpu.vector_store %arg12[%c0_214, %c320], %191 {strides = array<i32>} : memref<256x576xbf16, #tpu.memory_space<vmem>>, vector<64x64xbf16>,
    %c3_215 = arith.constant 3 : index
    %c1_216 = arith.constant 1 : index
    %c0_217 = arith.constant 0 : index
    %c0_218 = arith.constant 0 : index
    %193 = vector.load %arg10[%c3_215, %c1_216, %c0_217, %c0_218] : memref<4x10x10x64xf32, #tpu.memory_space<vmem>>, vector<1x8x8x64xf32>
    %194 = vector.shape_cast %193 : vector<1x8x8x64xf32> to vector<8x8x64xf32>
    %195 = vector.shape_cast %194 : vector<8x8x64xf32> to vector<64x64xf32>
    %196 = arith.truncf %195 : vector<64x64xf32> to vector<64x64xbf16>
    %c0_219 = arith.constant 0 : index
    %c384_220 = arith.constant 384 : index
    %197 = vector.load %arg12[%c0_219, %c384_220] : memref<256x576xbf16, #tpu.memory_space<vmem>>, vector<64x64xbf16>
    tpu.vector_store %arg12[%c0_219, %c384_220], %196 {strides = array<i32>} : memref<256x576xbf16, #tpu.memory_space<vmem>>, vector<64x64xbf16>,
    %c2_221 = arith.constant 2 : index
    %c1_222 = arith.constant 1 : index
    %c1_223 = arith.constant 1 : index
    %c0_224 = arith.constant 0 : index
    %198 = vector.load %arg10[%c2_221, %c1_222, %c1_223, %c0_224] : memref<4x10x10x64xf32, #tpu.memory_space<vmem>>, vector<1x8x8x64xf32>
    %199 = vector.shape_cast %198 : vector<1x8x8x64xf32> to vector<8x8x64xf32>
    %200 = vector.shape_cast %199 : vector<8x8x64xf32> to vector<64x64xf32>
    %201 = arith.truncf %200 : vector<64x64xf32> to vector<64x64xbf16>
    %c0_225 = arith.constant 0 : index
    %c448 = arith.constant 448 : index
    %202 = vector.load %arg12[%c0_225, %c448] : memref<256x576xbf16, #tpu.memory_space<vmem>>, vector<64x64xbf16>
    tpu.vector_store %arg12[%c0_225, %c448], %201 {strides = array<i32>} : memref<256x576xbf16, #tpu.memory_space<vmem>>, vector<64x64xbf16>,
    %c3_226 = arith.constant 3 : index
    %c1_227 = arith.constant 1 : index
    %c1_228 = arith.constant 1 : index
    %c0_229 = arith.constant 0 : index
    %203 = vector.load %arg10[%c3_226, %c1_227, %c1_228, %c0_229] : memref<4x10x10x64xf32, #tpu.memory_space<vmem>>, vector<1x8x8x64xf32>
    %204 = vector.shape_cast %203 : vector<1x8x8x64xf32> to vector<8x8x64xf32>
    %205 = vector.shape_cast %204 : vector<8x8x64xf32> to vector<64x64xf32>
    %206 = arith.truncf %205 : vector<64x64xf32> to vector<64x64xbf16>
    %c0_230 = arith.constant 0 : index
    %c512_231 = arith.constant 512 : index
    %207 = vector.load %arg12[%c0_230, %c512_231] : memref<256x576xbf16, #tpu.memory_space<vmem>>, vector<64x64xbf16>
    tpu.vector_store %arg12[%c0_230, %c512_231], %206 {strides = array<i32>} : memref<256x576xbf16, #tpu.memory_space<vmem>>, vector<64x64xbf16>,
    %c2_232 = arith.constant 2 : index
    %c0_233 = arith.constant 0 : index
    %c1_234 = arith.constant 1 : index
    %c0_235 = arith.constant 0 : index
    %208 = vector.load %arg10[%c2_232, %c0_233, %c1_234, %c0_235] : memref<4x10x10x64xf32, #tpu.memory_space<vmem>>, vector<1x8x8x64xf32>
    %209 = vector.shape_cast %208 : vector<1x8x8x64xf32> to vector<8x8x64xf32>
    %210 = vector.shape_cast %209 : vector<8x8x64xf32> to vector<64x64xf32>
    %211 = arith.truncf %210 : vector<64x64xf32> to vector<64x64xbf16>
    %c64_236 = arith.constant 64 : index
    %c0_237 = arith.constant 0 : index
    %212 = vector.load %arg12[%c64_236, %c0_237] : memref<256x576xbf16, #tpu.memory_space<vmem>>, vector<64x64xbf16>
    tpu.vector_store %arg12[%c64_236, %c0_237], %211 {strides = array<i32>} : memref<256x576xbf16, #tpu.memory_space<vmem>>, vector<64x64xbf16>,
    %c3_238 = arith.constant 3 : index
    %c0_239 = arith.constant 0 : index
    %c1_240 = arith.constant 1 : index
    %c0_241 = arith.constant 0 : index
    %213 = vector.load %arg10[%c3_238, %c0_239, %c1_240, %c0_241] : memref<4x10x10x64xf32, #tpu.memory_space<vmem>>, vector<1x8x8x64xf32>
    %214 = vector.shape_cast %213 : vector<1x8x8x64xf32> to vector<8x8x64xf32>
    %215 = vector.shape_cast %214 : vector<8x8x64xf32> to vector<64x64xf32>
    %216 = arith.truncf %215 : vector<64x64xf32> to vector<64x64xbf16>
    %c64_242 = arith.constant 64 : index
    %c64_243 = arith.constant 64 : index
    %217 = vector.load %arg12[%c64_242, %c64_243] : memref<256x576xbf16, #tpu.memory_space<vmem>>, vector<64x64xbf16>
    tpu.vector_store %arg12[%c64_242, %c64_243], %216 {strides = array<i32>} : memref<256x576xbf16, #tpu.memory_space<vmem>>, vector<64x64xbf16>,
    %c2_244 = arith.constant 2 : index
    %c0_245 = arith.constant 0 : index
    %c2_246 = arith.constant 2 : index
    %c0_247 = arith.constant 0 : index
    %218 = vector.load %arg10[%c2_244, %c0_245, %c2_246, %c0_247] : memref<4x10x10x64xf32, #tpu.memory_space<vmem>>, vector<1x8x8x64xf32>
    %219 = vector.shape_cast %218 : vector<1x8x8x64xf32> to vector<8x8x64xf32>
    %220 = vector.shape_cast %219 : vector<8x8x64xf32> to vector<64x64xf32>
    %221 = arith.truncf %220 : vector<64x64xf32> to vector<64x64xbf16>
    %c64_248 = arith.constant 64 : index
    %c128_249 = arith.constant 128 : index
    %222 = vector.load %arg12[%c64_248, %c128_249] : memref<256x576xbf16, #tpu.memory_space<vmem>>, vector<64x64xbf16>
    tpu.vector_store %arg12[%c64_248, %c128_249], %221 {strides = array<i32>} : memref<256x576xbf16, #tpu.memory_space<vmem>>, vector<64x64xbf16>,
    %c0_250 = arith.constant 0 : index
    %c1_251 = arith.constant 1 : index
    %c1_252 = arith.constant 1 : index
    %c0_253 = arith.constant 0 : index
    %223 = vector.load %arg10[%c0_250, %c1_251, %c1_252, %c0_253] : memref<4x10x10x64xf32, #tpu.memory_space<vmem>>, vector<1x8x8x64xf32>
    %224 = vector.shape_cast %223 : vector<1x8x8x64xf32> to vector<8x8x64xf32>
    %225 = vector.shape_cast %224 : vector<8x8x64xf32> to vector<64x64xf32>
    %226 = arith.truncf %225 : vector<64x64xf32> to vector<64x64xbf16>
    %c64_254 = arith.constant 64 : index
    %c192_255 = arith.constant 192 : index
    %227 = vector.load %arg12[%c64_254, %c192_255] : memref<256x576xbf16, #tpu.memory_space<vmem>>, vector<64x64xbf16>
    tpu.vector_store %arg12[%c64_254, %c192_255], %226 {strides = array<i32>} : memref<256x576xbf16, #tpu.memory_space<vmem>>, vector<64x64xbf16>,
    %c1_256 = arith.constant 1 : index
    %c1_257 = arith.constant 1 : index
    %c1_258 = arith.constant 1 : index
    %c0_259 = arith.constant 0 : index
    %228 = vector.load %arg10[%c1_256, %c1_257, %c1_258, %c0_259] : memref<4x10x10x64xf32, #tpu.memory_space<vmem>>, vector<1x8x8x64xf32>
    %229 = vector.shape_cast %228 : vector<1x8x8x64xf32> to vector<8x8x64xf32>
    %230 = vector.shape_cast %229 : vector<8x8x64xf32> to vector<64x64xf32>
    %231 = arith.truncf %230 : vector<64x64xf32> to vector<64x64xbf16>
    %c64_260 = arith.constant 64 : index
    %c256_261 = arith.constant 256 : index
    %232 = vector.load %arg12[%c64_260, %c256_261] : memref<256x576xbf16, #tpu.memory_space<vmem>>, vector<64x64xbf16>
    tpu.vector_store %arg12[%c64_260, %c256_261], %231 {strides = array<i32>} : memref<256x576xbf16, #tpu.memory_space<vmem>>, vector<64x64xbf16>,
    %c0_262 = arith.constant 0 : index
    %c1_263 = arith.constant 1 : index
    %c2_264 = arith.constant 2 : index
    %c0_265 = arith.constant 0 : index
    %233 = vector.load %arg10[%c0_262, %c1_263, %c2_264, %c0_265] : memref<4x10x10x64xf32, #tpu.memory_space<vmem>>, vector<1x8x8x64xf32>
    %234 = vector.shape_cast %233 : vector<1x8x8x64xf32> to vector<8x8x64xf32>
    %235 = vector.shape_cast %234 : vector<8x8x64xf32> to vector<64x64xf32>
    %236 = arith.truncf %235 : vector<64x64xf32> to vector<64x64xbf16>
    %c64_266 = arith.constant 64 : index
    %c320_267 = arith.constant 320 : index
    %237 = vector.load %arg12[%c64_266, %c320_267] : memref<256x576xbf16, #tpu.memory_space<vmem>>, vector<64x64xbf16>
    tpu.vector_store %arg12[%c64_266, %c320_267], %236 {strides = array<i32>} : memref<256x576xbf16, #tpu.memory_space<vmem>>, vector<64x64xbf16>,
    %c2_268 = arith.constant 2 : index
    %c1_269 = arith.constant 1 : index
    %c1_270 = arith.constant 1 : index
    %c0_271 = arith.constant 0 : index
    %238 = vector.load %arg10[%c2_268, %c1_269, %c1_270, %c0_271] : memref<4x10x10x64xf32, #tpu.memory_space<vmem>>, vector<1x8x8x64xf32>
    %239 = vector.shape_cast %238 : vector<1x8x8x64xf32> to vector<8x8x64xf32>
    %240 = vector.shape_cast %239 : vector<8x8x64xf32> to vector<64x64xf32>
    %241 = arith.truncf %240 : vector<64x64xf32> to vector<64x64xbf16>
    %c64_272 = arith.constant 64 : index
    %c384_273 = arith.constant 384 : index
    %242 = vector.load %arg12[%c64_272, %c384_273] : memref<256x576xbf16, #tpu.memory_space<vmem>>, vector<64x64xbf16>
    tpu.vector_store %arg12[%c64_272, %c384_273], %241 {strides = array<i32>} : memref<256x576xbf16, #tpu.memory_space<vmem>>, vector<64x64xbf16>,
    %c3_274 = arith.constant 3 : index
    %c1_275 = arith.constant 1 : index
    %c1_276 = arith.constant 1 : index
    %c0_277 = arith.constant 0 : index
    %243 = vector.load %arg10[%c3_274, %c1_275, %c1_276, %c0_277] : memref<4x10x10x64xf32, #tpu.memory_space<vmem>>, vector<1x8x8x64xf32>
    %244 = vector.shape_cast %243 : vector<1x8x8x64xf32> to vector<8x8x64xf32>
    %245 = vector.shape_cast %244 : vector<8x8x64xf32> to vector<64x64xf32>
    %246 = arith.truncf %245 : vector<64x64xf32> to vector<64x64xbf16>
    %c64_278 = arith.constant 64 : index
    %c448_279 = arith.constant 448 : index
    %247 = vector.load %arg12[%c64_278, %c448_279] : memref<256x576xbf16, #tpu.memory_space<vmem>>, vector<64x64xbf16>
    tpu.vector_store %arg12[%c64_278, %c448_279], %246 {strides = array<i32>} : memref<256x576xbf16, #tpu.memory_space<vmem>>, vector<64x64xbf16>,
    %c2_280 = arith.constant 2 : index
    %c1_281 = arith.constant 1 : index
    %c2_282 = arith.constant 2 : index
    %c0_283 = arith.constant 0 : index
    %248 = vector.load %arg10[%c2_280, %c1_281, %c2_282, %c0_283] : memref<4x10x10x64xf32, #tpu.memory_space<vmem>>, vector<1x8x8x64xf32>
    %249 = vector.shape_cast %248 : vector<1x8x8x64xf32> to vector<8x8x64xf32>
    %250 = vector.shape_cast %249 : vector<8x8x64xf32> to vector<64x64xf32>
    %251 = arith.truncf %250 : vector<64x64xf32> to vector<64x64xbf16>
    %c64_284 = arith.constant 64 : index
    %c512_285 = arith.constant 512 : index
    %252 = vector.load %arg12[%c64_284, %c512_285] : memref<256x576xbf16, #tpu.memory_space<vmem>>, vector<64x64xbf16>
    tpu.vector_store %arg12[%c64_284, %c512_285], %251 {strides = array<i32>} : memref<256x576xbf16, #tpu.memory_space<vmem>>, vector<64x64xbf16>,
    %c1_286 = arith.constant 1 : index
    %c1_287 = arith.constant 1 : index
    %c0_288 = arith.constant 0 : index
    %c0_289 = arith.constant 0 : index
    %253 = vector.load %arg10[%c1_286, %c1_287, %c0_288, %c0_289] : memref<4x10x10x64xf32, #tpu.memory_space<vmem>>, vector<1x8x8x64xf32>
    %254 = vector.shape_cast %253 : vector<1x8x8x64xf32> to vector<8x8x64xf32>
    %255 = vector.shape_cast %254 : vector<8x8x64xf32> to vector<64x64xf32>
    %256 = arith.truncf %255 : vector<64x64xf32> to vector<64x64xbf16>
    %c128_290 = arith.constant 128 : index
    %c0_291 = arith.constant 0 : index
    %257 = vector.load %arg12[%c128_290, %c0_291] : memref<256x576xbf16, #tpu.memory_space<vmem>>, vector<64x64xbf16>
    tpu.vector_store %arg12[%c128_290, %c0_291], %256 {strides = array<i32>} : memref<256x576xbf16, #tpu.memory_space<vmem>>, vector<64x64xbf16>,
    %c0_292 = arith.constant 0 : index
    %c1_293 = arith.constant 1 : index
    %c1_294 = arith.constant 1 : index
    %c0_295 = arith.constant 0 : index
    %258 = vector.load %arg10[%c0_292, %c1_293, %c1_294, %c0_295] : memref<4x10x10x64xf32, #tpu.memory_space<vmem>>, vector<1x8x8x64xf32>
    %259 = vector.shape_cast %258 : vector<1x8x8x64xf32> to vector<8x8x64xf32>
    %260 = vector.shape_cast %259 : vector<8x8x64xf32> to vector<64x64xf32>
    %261 = arith.truncf %260 : vector<64x64xf32> to vector<64x64xbf16>
    %c128_296 = arith.constant 128 : index
    %c64_297 = arith.constant 64 : index
    %262 = vector.load %arg12[%c128_296, %c64_297] : memref<256x576xbf16, #tpu.memory_space<vmem>>, vector<64x64xbf16>
    tpu.vector_store %arg12[%c128_296, %c64_297], %261 {strides = array<i32>} : memref<256x576xbf16, #tpu.memory_space<vmem>>, vector<64x64xbf16>,
    %c1_298 = arith.constant 1 : index
    %c1_299 = arith.constant 1 : index
    %c1_300 = arith.constant 1 : index
    %c0_301 = arith.constant 0 : index
    %263 = vector.load %arg10[%c1_298, %c1_299, %c1_300, %c0_301] : memref<4x10x10x64xf32, #tpu.memory_space<vmem>>, vector<1x8x8x64xf32>
    %264 = vector.shape_cast %263 : vector<1x8x8x64xf32> to vector<8x8x64xf32>
    %265 = vector.shape_cast %264 : vector<8x8x64xf32> to vector<64x64xf32>
    %266 = arith.truncf %265 : vector<64x64xf32> to vector<64x64xbf16>
    %c128_302 = arith.constant 128 : index
    %c128_303 = arith.constant 128 : index
    %267 = vector.load %arg12[%c128_302, %c128_303] : memref<256x576xbf16, #tpu.memory_space<vmem>>, vector<64x64xbf16>
    tpu.vector_store %arg12[%c128_302, %c128_303], %266 {strides = array<i32>} : memref<256x576xbf16, #tpu.memory_space<vmem>>, vector<64x64xbf16>,
    %c3_304 = arith.constant 3 : index
    %c1_305 = arith.constant 1 : index
    %c0_306 = arith.constant 0 : index
    %c0_307 = arith.constant 0 : index
    %268 = vector.load %arg10[%c3_304, %c1_305, %c0_306, %c0_307] : memref<4x10x10x64xf32, #tpu.memory_space<vmem>>, vector<1x8x8x64xf32>
    %269 = vector.shape_cast %268 : vector<1x8x8x64xf32> to vector<8x8x64xf32>
    %270 = vector.shape_cast %269 : vector<8x8x64xf32> to vector<64x64xf32>
    %271 = arith.truncf %270 : vector<64x64xf32> to vector<64x64xbf16>
    %c128_308 = arith.constant 128 : index
    %c192_309 = arith.constant 192 : index
    %272 = vector.load %arg12[%c128_308, %c192_309] : memref<256x576xbf16, #tpu.memory_space<vmem>>, vector<64x64xbf16>
    tpu.vector_store %arg12[%c128_308, %c192_309], %271 {strides = array<i32>} : memref<256x576xbf16, #tpu.memory_space<vmem>>, vector<64x64xbf16>,
    %c2_310 = arith.constant 2 : index
    %c1_311 = arith.constant 1 : index
    %c1_312 = arith.constant 1 : index
    %c0_313 = arith.constant 0 : index
    %273 = vector.load %arg10[%c2_310, %c1_311, %c1_312, %c0_313] : memref<4x10x10x64xf32, #tpu.memory_space<vmem>>, vector<1x8x8x64xf32>
    %274 = vector.shape_cast %273 : vector<1x8x8x64xf32> to vector<8x8x64xf32>
    %275 = vector.shape_cast %274 : vector<8x8x64xf32> to vector<64x64xf32>
    %276 = arith.truncf %275 : vector<64x64xf32> to vector<64x64xbf16>
    %c128_314 = arith.constant 128 : index
    %c256_315 = arith.constant 256 : index
    %277 = vector.load %arg12[%c128_314, %c256_315] : memref<256x576xbf16, #tpu.memory_space<vmem>>, vector<64x64xbf16>
    tpu.vector_store %arg12[%c128_314, %c256_315], %276 {strides = array<i32>} : memref<256x576xbf16, #tpu.memory_space<vmem>>, vector<64x64xbf16>,
    %c3_316 = arith.constant 3 : index
    %c1_317 = arith.constant 1 : index
    %c1_318 = arith.constant 1 : index
    %c0_319 = arith.constant 0 : index
    %278 = vector.load %arg10[%c3_316, %c1_317, %c1_318, %c0_319] : memref<4x10x10x64xf32, #tpu.memory_space<vmem>>, vector<1x8x8x64xf32>
    %279 = vector.shape_cast %278 : vector<1x8x8x64xf32> to vector<8x8x64xf32>
    %280 = vector.shape_cast %279 : vector<8x8x64xf32> to vector<64x64xf32>
    %281 = arith.truncf %280 : vector<64x64xf32> to vector<64x64xbf16>
    %c128_320 = arith.constant 128 : index
    %c320_321 = arith.constant 320 : index
    %282 = vector.load %arg12[%c128_320, %c320_321] : memref<256x576xbf16, #tpu.memory_space<vmem>>, vector<64x64xbf16>
    tpu.vector_store %arg12[%c128_320, %c320_321], %281 {strides = array<i32>} : memref<256x576xbf16, #tpu.memory_space<vmem>>, vector<64x64xbf16>,
    %c1_322 = arith.constant 1 : index
    %c2_323 = arith.constant 2 : index
    %c0_324 = arith.constant 0 : index
    %c0_325 = arith.constant 0 : index
    %283 = vector.load %arg10[%c1_322, %c2_323, %c0_324, %c0_325] : memref<4x10x10x64xf32, #tpu.memory_space<vmem>>, vector<1x8x8x64xf32>
    %284 = vector.shape_cast %283 : vector<1x8x8x64xf32> to vector<8x8x64xf32>
    %285 = vector.shape_cast %284 : vector<8x8x64xf32> to vector<64x64xf32>
    %286 = arith.truncf %285 : vector<64x64xf32> to vector<64x64xbf16>
    %c128_326 = arith.constant 128 : index
    %c384_327 = arith.constant 384 : index
    %287 = vector.load %arg12[%c128_326, %c384_327] : memref<256x576xbf16, #tpu.memory_space<vmem>>, vector<64x64xbf16>
    tpu.vector_store %arg12[%c128_326, %c384_327], %286 {strides = array<i32>} : memref<256x576xbf16, #tpu.memory_space<vmem>>, vector<64x64xbf16>,
    %c0_328 = arith.constant 0 : index
    %c2_329 = arith.constant 2 : index
    %c1_330 = arith.constant 1 : index
    %c0_331 = arith.constant 0 : index
    %288 = vector.load %arg10[%c0_328, %c2_329, %c1_330, %c0_331] : memref<4x10x10x64xf32, #tpu.memory_space<vmem>>, vector<1x8x8x64xf32>
    %289 = vector.shape_cast %288 : vector<1x8x8x64xf32> to vector<8x8x64xf32>
    %290 = vector.shape_cast %289 : vector<8x8x64xf32> to vector<64x64xf32>
    %291 = arith.truncf %290 : vector<64x64xf32> to vector<64x64xbf16>
    %c128_332 = arith.constant 128 : index
    %c448_333 = arith.constant 448 : index
    %292 = vector.load %arg12[%c128_332, %c448_333] : memref<256x576xbf16, #tpu.memory_space<vmem>>, vector<64x64xbf16>
    tpu.vector_store %arg12[%c128_332, %c448_333], %291 {strides = array<i32>} : memref<256x576xbf16, #tpu.memory_space<vmem>>, vector<64x64xbf16>,
    %c1_334 = arith.constant 1 : index
    %c2_335 = arith.constant 2 : index
    %c1_336 = arith.constant 1 : index
    %c0_337 = arith.constant 0 : index
    %293 = vector.load %arg10[%c1_334, %c2_335, %c1_336, %c0_337] : memref<4x10x10x64xf32, #tpu.memory_space<vmem>>, vector<1x8x8x64xf32>
    %294 = vector.shape_cast %293 : vector<1x8x8x64xf32> to vector<8x8x64xf32>
    %295 = vector.shape_cast %294 : vector<8x8x64xf32> to vector<64x64xf32>
    %296 = arith.truncf %295 : vector<64x64xf32> to vector<64x64xbf16>
    %c128_338 = arith.constant 128 : index
    %c512_339 = arith.constant 512 : index
    %297 = vector.load %arg12[%c128_338, %c512_339] : memref<256x576xbf16, #tpu.memory_space<vmem>>, vector<64x64xbf16>
    tpu.vector_store %arg12[%c128_338, %c512_339], %296 {strides = array<i32>} : memref<256x576xbf16, #tpu.memory_space<vmem>>, vector<64x64xbf16>,
    %c0_340 = arith.constant 0 : index
    %c1_341 = arith.constant 1 : index
    %c1_342 = arith.constant 1 : index
    %c0_343 = arith.constant 0 : index
    %298 = vector.load %arg10[%c0_340, %c1_341, %c1_342, %c0_343] : memref<4x10x10x64xf32, #tpu.memory_space<vmem>>, vector<1x8x8x64xf32>
    %299 = vector.shape_cast %298 : vector<1x8x8x64xf32> to vector<8x8x64xf32>
    %300 = vector.shape_cast %299 : vector<8x8x64xf32> to vector<64x64xf32>
    %301 = arith.truncf %300 : vector<64x64xf32> to vector<64x64xbf16>
    %c192_344 = arith.constant 192 : index
    %c0_345 = arith.constant 0 : index
    %302 = vector.load %arg12[%c192_344, %c0_345] : memref<256x576xbf16, #tpu.memory_space<vmem>>, vector<64x64xbf16>
    tpu.vector_store %arg12[%c192_344, %c0_345], %301 {strides = array<i32>} : memref<256x576xbf16, #tpu.memory_space<vmem>>, vector<64x64xbf16>,
    %c1_346 = arith.constant 1 : index
    %c1_347 = arith.constant 1 : index
    %c1_348 = arith.constant 1 : index
    %c0_349 = arith.constant 0 : index
    %303 = vector.load %arg10[%c1_346, %c1_347, %c1_348, %c0_349] : memref<4x10x10x64xf32, #tpu.memory_space<vmem>>, vector<1x8x8x64xf32>
    %304 = vector.shape_cast %303 : vector<1x8x8x64xf32> to vector<8x8x64xf32>
    %305 = vector.shape_cast %304 : vector<8x8x64xf32> to vector<64x64xf32>
    %306 = arith.truncf %305 : vector<64x64xf32> to vector<64x64xbf16>
    %c192_350 = arith.constant 192 : index
    %c64_351 = arith.constant 64 : index
    %307 = vector.load %arg12[%c192_350, %c64_351] : memref<256x576xbf16, #tpu.memory_space<vmem>>, vector<64x64xbf16>
    tpu.vector_store %arg12[%c192_350, %c64_351], %306 {strides = array<i32>} : memref<256x576xbf16, #tpu.memory_space<vmem>>, vector<64x64xbf16>,
    %c0_352 = arith.constant 0 : index
    %c1_353 = arith.constant 1 : index
    %c2_354 = arith.constant 2 : index
    %c0_355 = arith.constant 0 : index
    %308 = vector.load %arg10[%c0_352, %c1_353, %c2_354, %c0_355] : memref<4x10x10x64xf32, #tpu.memory_space<vmem>>, vector<1x8x8x64xf32>
    %309 = vector.shape_cast %308 : vector<1x8x8x64xf32> to vector<8x8x64xf32>
    %310 = vector.shape_cast %309 : vector<8x8x64xf32> to vector<64x64xf32>
    %311 = arith.truncf %310 : vector<64x64xf32> to vector<64x64xbf16>
    %c192_356 = arith.constant 192 : index
    %c128_357 = arith.constant 128 : index
    %312 = vector.load %arg12[%c192_356, %c128_357] : memref<256x576xbf16, #tpu.memory_space<vmem>>, vector<64x64xbf16>
    tpu.vector_store %arg12[%c192_356, %c128_357], %311 {strides = array<i32>} : memref<256x576xbf16, #tpu.memory_space<vmem>>, vector<64x64xbf16>,
    %c2_358 = arith.constant 2 : index
    %c1_359 = arith.constant 1 : index
    %c1_360 = arith.constant 1 : index
    %c0_361 = arith.constant 0 : index
    %313 = vector.load %arg10[%c2_358, %c1_359, %c1_360, %c0_361] : memref<4x10x10x64xf32, #tpu.memory_space<vmem>>, vector<1x8x8x64xf32>
    %314 = vector.shape_cast %313 : vector<1x8x8x64xf32> to vector<8x8x64xf32>
    %315 = vector.shape_cast %314 : vector<8x8x64xf32> to vector<64x64xf32>
    %316 = arith.truncf %315 : vector<64x64xf32> to vector<64x64xbf16>
    %c192_362 = arith.constant 192 : index
    %c192_363 = arith.constant 192 : index
    %317 = vector.load %arg12[%c192_362, %c192_363] : memref<256x576xbf16, #tpu.memory_space<vmem>>, vector<64x64xbf16>
    tpu.vector_store %arg12[%c192_362, %c192_363], %316 {strides = array<i32>} : memref<256x576xbf16, #tpu.memory_space<vmem>>, vector<64x64xbf16>,
    %c3_364 = arith.constant 3 : index
    %c1_365 = arith.constant 1 : index
    %c1_366 = arith.constant 1 : index
    %c0_367 = arith.constant 0 : index
    %318 = vector.load %arg10[%c3_364, %c1_365, %c1_366, %c0_367] : memref<4x10x10x64xf32, #tpu.memory_space<vmem>>, vector<1x8x8x64xf32>
    %319 = vector.shape_cast %318 : vector<1x8x8x64xf32> to vector<8x8x64xf32>
    %320 = vector.shape_cast %319 : vector<8x8x64xf32> to vector<64x64xf32>
    %321 = arith.truncf %320 : vector<64x64xf32> to vector<64x64xbf16>
    %c192_368 = arith.constant 192 : index
    %c256_369 = arith.constant 256 : index
    %322 = vector.load %arg12[%c192_368, %c256_369] : memref<256x576xbf16, #tpu.memory_space<vmem>>, vector<64x64xbf16>
    tpu.vector_store %arg12[%c192_368, %c256_369], %321 {strides = array<i32>} : memref<256x576xbf16, #tpu.memory_space<vmem>>, vector<64x64xbf16>,
    %c2_370 = arith.constant 2 : index
    %c1_371 = arith.constant 1 : index
    %c2_372 = arith.constant 2 : index
    %c0_373 = arith.constant 0 : index
    %323 = vector.load %arg10[%c2_370, %c1_371, %c2_372, %c0_373] : memref<4x10x10x64xf32, #tpu.memory_space<vmem>>, vector<1x8x8x64xf32>
    %324 = vector.shape_cast %323 : vector<1x8x8x64xf32> to vector<8x8x64xf32>
    %325 = vector.shape_cast %324 : vector<8x8x64xf32> to vector<64x64xf32>
    %326 = arith.truncf %325 : vector<64x64xf32> to vector<64x64xbf16>
    %c192_374 = arith.constant 192 : index
    %c320_375 = arith.constant 320 : index
    %327 = vector.load %arg12[%c192_374, %c320_375] : memref<256x576xbf16, #tpu.memory_space<vmem>>, vector<64x64xbf16>
    tpu.vector_store %arg12[%c192_374, %c320_375], %326 {strides = array<i32>} : memref<256x576xbf16, #tpu.memory_space<vmem>>, vector<64x64xbf16>,
    %c0_376 = arith.constant 0 : index
    %c2_377 = arith.constant 2 : index
    %c1_378 = arith.constant 1 : index
    %c0_379 = arith.constant 0 : index
    %328 = vector.load %arg10[%c0_376, %c2_377, %c1_378, %c0_379] : memref<4x10x10x64xf32, #tpu.memory_space<vmem>>, vector<1x8x8x64xf32>
    %329 = vector.shape_cast %328 : vector<1x8x8x64xf32> to vector<8x8x64xf32>
    %330 = vector.shape_cast %329 : vector<8x8x64xf32> to vector<64x64xf32>
    %331 = arith.truncf %330 : vector<64x64xf32> to vector<64x64xbf16>
    %c192_380 = arith.constant 192 : index
    %c384_381 = arith.constant 384 : index
    %332 = vector.load %arg12[%c192_380, %c384_381] : memref<256x576xbf16, #tpu.memory_space<vmem>>, vector<64x64xbf16>
    tpu.vector_store %arg12[%c192_380, %c384_381], %331 {strides = array<i32>} : memref<256x576xbf16, #tpu.memory_space<vmem>>, vector<64x64xbf16>,
    %c1_382 = arith.constant 1 : index
    %c2_383 = arith.constant 2 : index
    %c1_384 = arith.constant 1 : index
    %c0_385 = arith.constant 0 : index
    %333 = vector.load %arg10[%c1_382, %c2_383, %c1_384, %c0_385] : memref<4x10x10x64xf32, #tpu.memory_space<vmem>>, vector<1x8x8x64xf32>
    %334 = vector.shape_cast %333 : vector<1x8x8x64xf32> to vector<8x8x64xf32>
    %335 = vector.shape_cast %334 : vector<8x8x64xf32> to vector<64x64xf32>
    %336 = arith.truncf %335 : vector<64x64xf32> to vector<64x64xbf16>
    %c192_386 = arith.constant 192 : index
    %c448_387 = arith.constant 448 : index
    %337 = vector.load %arg12[%c192_386, %c448_387] : memref<256x576xbf16, #tpu.memory_space<vmem>>, vector<64x64xbf16>
    tpu.vector_store %arg12[%c192_386, %c448_387], %336 {strides = array<i32>} : memref<256x576xbf16, #tpu.memory_space<vmem>>, vector<64x64xbf16>,
    %c0_388 = arith.constant 0 : index
    %c2_389 = arith.constant 2 : index
    %c2_390 = arith.constant 2 : index
    %c0_391 = arith.constant 0 : index
    %338 = vector.load %arg10[%c0_388, %c2_389, %c2_390, %c0_391] : memref<4x10x10x64xf32, #tpu.memory_space<vmem>>, vector<1x8x8x64xf32>
    %339 = vector.shape_cast %338 : vector<1x8x8x64xf32> to vector<8x8x64xf32>
    %340 = vector.shape_cast %339 : vector<8x8x64xf32> to vector<64x64xf32>
    %341 = arith.truncf %340 : vector<64x64xf32> to vector<64x64xbf16>
    %c192_392 = arith.constant 192 : index
    %c512_393 = arith.constant 512 : index
    %342 = vector.load %arg12[%c192_392, %c512_393] : memref<256x576xbf16, #tpu.memory_space<vmem>>, vector<64x64xbf16>
    tpu.vector_store %arg12[%c192_392, %c512_393], %341 {strides = array<i32>} : memref<256x576xbf16, #tpu.memory_space<vmem>>, vector<64x64xbf16>,
    %c0_394 = arith.constant 0 : index
    %c0_395 = arith.constant 0 : index
    %343 = vector.load %arg12[%c0_394, %c0_395] : memref<256x576xbf16, #tpu.memory_space<vmem>>, vector<256x576xbf16>
    %c0_396 = arith.constant 0 : index
    %c0_397 = arith.constant 0 : index
    %344 = vector.load %arg7[%c0_396, %c0_397] : memref<576x3xbf16, #tpu.memory_space<vmem>>, vector<576x3xbf16>
    %cst_398 = arith.constant dense<0.000000e+00> : vector<256x3xf32>
    %345 = tpu.matmul %343, %344, %cst_398 {dimension_numbers = #tpu.dot_dimension_numbers<[1], [0], [0], [1], [0, 0, 1, 1], [], []>} : vector<256x576xbf16>, vector<576x3xbf16>, vector<256x3xf32> -> vector<256x3xf32>
    %346 = arith.mulf %345, %345 : vector<256x3xf32>
    %cst_399 = arith.constant dense<0.000000e+00> : vector<256xf32>
    %347 = vector.multi_reduction <add>, %346, %cst_399 [1] : vector<256x3xf32> to vector<256xf32>
    %348 = vector.shape_cast %347 : vector<256xf32> to vector<256x1xf32>
    %cst_400 = arith.constant 1.000000e-24 : f32
    %349 = vector.broadcast %cst_400 : f32 to vector<256x1xf32>
    %350 = arith.maximumf %348, %349 : vector<256x1xf32>
    %351 = math.rsqrt %350 : vector<256x1xf32>
    %352 = vector.broadcast %351 : vector<256x1xf32> to vector<256x3xf32>
    %353 = arith.mulf %345, %352 : vector<256x3xf32>
    %c0_401 = arith.constant 0 : index
    %c0_402 = arith.constant 0 : index
    %c0_403 = arith.constant 0 : index
    %354 = vector.load %arg8[%c0_401, %c0_402, %c0_403] : memref<1x256x3xf32, #tpu.memory_space<vmem>>, vector<1x256x3xf32>
    %355 = vector.shape_cast %354 : vector<1x256x3xf32> to vector<256x3xf32>
    %356 = vector.shape_cast %353 : vector<256x3xf32> to vector<1x256x3xf32>
    tpu.vector_store %arg8[%c0_401, %c0_402, %c0_403], %356 {strides = array<i32>} : memref<1x256x3xf32, #tpu.memory_space<vmem>>, vector<1x256x3xf32>,
    return
  }
  func.func @transform_0(%arg0: i32) -> (i32, i32, i32, i32) {
    %c0_i32 = arith.constant 0 : i32
    %c0_i32_0 = arith.constant 0 : i32
    %c0_i32_1 = arith.constant 0 : i32
    %c0_i32_2 = arith.constant 0 : i32
    return %arg0, %c0_i32, %c0_i32_0, %c0_i32_1 : i32, i32, i32, i32
  }
  func.func @transform_1(%arg0: i32) -> (i32, i32) {
    %c0_i32 = arith.constant 0 : i32
    %c0_i32_0 = arith.constant 0 : i32
    %c0_i32_1 = arith.constant 0 : i32
    return %c0_i32, %c0_i32_0 : i32, i32
  }
  func.func @transform_2(%arg0: i32) -> (i32, i32) {
    %c0_i32 = arith.constant 0 : i32
    %c0_i32_0 = arith.constant 0 : i32
    %c0_i32_1 = arith.constant 0 : i32
    return %c0_i32, %c0_i32_0 : i32, i32
  }
  func.func @transform_3(%arg0: i32) -> (i32, i32) {
    %c0_i32 = arith.constant 0 : i32
    %c0_i32_0 = arith.constant 0 : i32
    %c0_i32_1 = arith.constant 0 : i32
    return %c0_i32, %c0_i32_0 : i32, i32
  }
  func.func @transform_4(%arg0: i32) -> (i32, i32) {
    %c0_i32 = arith.constant 0 : i32
    %c0_i32_0 = arith.constant 0 : i32
    %c0_i32_1 = arith.constant 0 : i32
    return %c0_i32, %c0_i32_0 : i32, i32
  }
  func.func @transform_5(%arg0: i32) -> (i32, i32) {
    %c0_i32 = arith.constant 0 : i32
    %c0_i32_0 = arith.constant 0 : i32
    %c0_i32_1 = arith.constant 0 : i32
    return %c0_i32, %c0_i32_0 : i32, i32
  }
  func.func @transform_6(%arg0: i32) -> (i32, i32) {
    %c0_i32 = arith.constant 0 : i32
    %c0_i32_0 = arith.constant 0 : i32
    %c0_i32_1 = arith.constant 0 : i32
    return %c0_i32, %c0_i32_0 : i32, i32
  }
  func.func @transform_7(%arg0: i32) -> (i32, i32, i32) {
    %c0_i32 = arith.constant 0 : i32
    %c0_i32_0 = arith.constant 0 : i32
    %c0_i32_1 = arith.constant 0 : i32
    return %arg0, %c0_i32, %c0_i32_0 : i32, i32, i32
  }
}

</mosaic_0001>

<llo_original>
// kernel: regressor_forward.1
$region0: #{regressor_forward.1}
  #allocation0 [shape = 'u32[]', space=smem, size = 0x4, offset = 0x4, fixed_abs, tag = 'smem constant byte address 0x4 - core index']
  #allocation1 [shape = 'u32[72,128]{1,0:T(1,128)}', space=vmem, size = 0x9000, scoped, tag = 'internal scratch']
  #allocation2 [shape = 'f32[10,10,128]{2,1,0:T(8,128)}', space=vmem, size = 0x14000, scoped, tag = 'scratch operand']
  #allocation3 [shape = 'f32[4,10,10,64]{3,2,1,0:T(8,128)}', space=vmem, size = 0x50000, scoped, tag = 'scratch operand']
  #allocation4 [shape = 'bf16[64,1152]{1,0:T(8,128)(2,1)}', space=vmem, size = 0x24000, scoped, tag = 'scratch operand']
  #allocation5 [shape = 'bf16[256,576]{1,0:T(8,128)(2,1)}', space=vmem, size = 0x50000, scoped, tag = 'scratch operand']
  %s0 = inlined_call_operand.vmem [shape: f32[2,8,8,128], index: 0, kind: input, shape index: {}]
  %s1 = inlined_call_operand.hbm [shape: bf16[1152,128], index: 1, kind: input, shape index: {}]
  %s2 = inlined_call_operand.vmem [shape: f32[1,128], index: 2, kind: input, shape index: {}]
  %s3 = inlined_call_operand.hbm [shape: bf16[1152,128], index: 3, kind: input, shape index: {}]
  %s4 = inlined_call_operand.vmem [shape: f32[1,128], index: 4, kind: input, shape index: {}]
  %s5 = inlined_call_operand.hbm [shape: bf16[1152,256], index: 5, kind: input, shape index: {}]
  %s6 = inlined_call_operand.vmem [shape: bf16[576,3], index: 6, kind: input, shape index: {}]
  %s7 = inlined_call_operand.vmem [shape: f32[2,256,3], index: 7, kind: output, shape index: {}]
  %s8 = sld [smem:[#allocation0]]
  $region73: #{regressor_forward.1} parent=0
    _
  %s10 = ssub.s32 1, %s8
  %s11 = scalar_select 0, %s10, %s8
  $region1: #{regressor_forward.1} parent=0
    #allocation6 [shape = 'u8[294912]{0}', space=vmem, size = 0x48000, scoped, tag = 'input window, operand 1, single buffered']
    #allocation7 [shape = 's32[2]{0}', space=sflag, size = 0x8, scoped, tag = 'scoped memory for regressor_forward.1']
    #allocation8 [shape = 'u8[294912]{0}', space=vmem, size = 0x48000, scoped, tag = 'input window, operand 3, single buffered']
    #allocation9 [shape = 's32[1]{0}', space=sflag, size = 0x4, scoped, tag = 'scoped memory for regressor_forward.1']
    #allocation10 [shape = 'u8[589824]{0}', space=vmem, size = 0x90000, scoped, tag = 'input window, operand 5, single buffered']
    %12 = vsyncpa [#allocation7], 0
    %13 = vsyncpa [#allocation9], 0
    loop: start=0, step=1, limit=4
    $region2: #{regressor_forward.1} parent=1 // loop_pre_header
      _
    $region3: #{regressor_forward.1} parent=1 // loop_header
      %s15 = sphi 0, %s19
      %p16 = scmp.ge.s32.totalorder %s15, 4
      %s25 = sphi 0, %s27
      %s28 = sphi 0, %s25
      %s29 = sphi 0, %s28
      %s45 = sphi 0, %s29
      %s49 = sphi 0, %s49
      %s51 = sphi 0, %s49
      %s52 = sphi 0, %s51
      %s66 = sphi 0, %s52
      %s70 = sphi 0, %s70
      %s72 = sphi 0, %s70
      %s73 = sphi 0, %s72
      %s87 = sphi 0, %s73
      %s91 = sphi 0, %s91
      %s93 = sphi 0, %s91
      %s94 = sphi 0, %s93
      %s108 = sphi 0, %s94
      %s112 = sphi 0, %s112
      %s114 = sphi 0, %s112
      %s115 = sphi 0, %s114
      %s129 = sphi 0, %s115
      %s133 = sphi 0, %s133
      %s135 = sphi 0, %s133
      %s136 = sphi 0, %s135
      %s150 = sphi 0, %s136
      %s154 = sphi 0, %s154
      %s156 = sphi 0, %s154
      %s157 = sphi 0, %s156
      %s171 = sphi 0, %s157
      %s177 = sphi 0, %s179
      %s180 = sphi 0, %s177
      %s181 = sphi 0, %s180
      %s197 = sphi 0, %s181
    $region4: #{regressor_forward.1} parent=1 // loop_header_branch
      %18 = sbr.rel (%p16) target = $region8
    $region5: #{regressor_forward.1} parent=1 // loop_body
      %s20 = ssub.s32 %s15, 1
      %s21 = ssub.s32 %s15, 2
      %s22 = sadd.s32 %s15, 1
      %s23 = ssub.s32 %s15, %s22
      %p24 = scmp.eq.s32.totalorder %s23, 0
      %s26 = sadd.s32 %s25, 1
      %s27 = scalar_select %p24, %s25, %s26
      %p30 = pneg %p24
      %p31 = scmp.eq.s32.totalorder %s15, 1
      %p32 = por %p30, %p31
      %p33 = scmp.ne.s32.totalorder %s25, %s28
      %p34 = scmp.eq.s32.totalorder %s15, 0
      %p35 = por %p33, %p34
      %p36 = scmp.ne.s32.totalorder %s25, %s28
      %p37 = scmp.eq.s32.totalorder %s20, 1
      %p38 = por %p36, %p37
      %p39 = scmp.ne.s32.totalorder %s28, %s29
      %p40 = scmp.eq.s32.totalorder %s20, 0
      %p41 = por %p39, %p40
      %p42 = scmp.ne.s32.totalorder %s28, %s29
      %p43 = scmp.eq.s32.totalorder %s21, 1
      %p44 = por %p42, %p43
      %p46 = scmp.ne.s32.totalorder %s29, %s45
      %p47 = scmp.eq.s32.totalorder %s21, 0
      %p48 = por %p46, %p47
      %s50 = sadd.s32 %s49, 1
      %p53 = scmp.eq.s32.totalorder %s15, 1
      %p54 = scmp.ne.s32.totalorder %s49, %s51
      %p55 = scmp.eq.s32.totalorder %s15, 0
      %p56 = por %p54, %p55
      %p57 = scmp.ne.s32.totalorder %s49, %s51
      %p58 = scmp.eq.s32.totalorder %s20, 1
      %p59 = por %p57, %p58
      %p60 = scmp.ne.s32.totalorder %s51, %s52
      %p61 = scmp.eq.s32.totalorder %s20, 0
      %p62 = por %p60, %p61
      %p63 = scmp.ne.s32.totalorder %s51, %s52
      %p64 = scmp.eq.s32.totalorder %s21, 1
      %p65 = por %p63, %p64
      %p67 = scmp.ne.s32.totalorder %s52, %s66
      %p68 = scmp.eq.s32.totalorder %s21, 0
      %p69 = por %p67, %p68
      %s71 = sadd.s32 %s70, 1
      %p74 = scmp.eq.s32.totalorder %s15, 1
      %p75 = scmp.ne.s32.totalorder %s70, %s72
      %p76 = scmp.eq.s32.totalorder %s15, 0
      %p77 = por %p75, %p76
      %p78 = scmp.ne.s32.totalorder %s70, %s72
      %p79 = scmp.eq.s32.totalorder %s20, 1
      %p80 = por %p78, %p79
      %p81 = scmp.ne.s32.totalorder %s72, %s73
      %p82 = scmp.eq.s32.totalorder %s20, 0
      %p83 = por %p81, %p82
      %p84 = scmp.ne.s32.totalorder %s72, %s73
      %p85 = scmp.eq.s32.totalorder %s21, 1
      %p86 = por %p84, %p85
      %p88 = scmp.ne.s32.totalorder %s73, %s87
      %p89 = scmp.eq.s32.totalorder %s21, 0
      %p90 = por %p88, %p89
      %s92 = sadd.s32 %s91, 1
      %p95 = scmp.eq.s32.totalorder %s15, 1
      %p96 = scmp.ne.s32.totalorder %s91, %s93
      %p97 = scmp.eq.s32.totalorder %s15, 0
      %p98 = por %p96, %p97
      %p99 = scmp.ne.s32.totalorder %s91, %s93
      %p100 = scmp.eq.s32.totalorder %s20, 1
      %p101 = por %p99, %p100
      %p102 = scmp.ne.s32.totalorder %s93, %s94
      %p103 = scmp.eq.s32.totalorder %s20, 0
      %p104 = por %p102, %p103
      %p105 = scmp.ne.s32.totalorder %s93, %s94
      %p106 = scmp.eq.s32.totalorder %s21, 1
      %p107 = por %p105, %p106
      %p109 = scmp.ne.s32.totalorder %s94, %s108
      %p110 = scmp.eq.s32.totalorder %s21, 0
      %p111 = por %p109, %p110
      %s113 = sadd.s32 %s112, 1
      %p116 = scmp.eq.s32.totalorder %s15, 1
      %p117 = scmp.ne.s32.totalorder %s112, %s114
      %p118 = scmp.eq.s32.totalorder %s15, 0
      %p119 = por %p117, %p118
      %p120 = scmp.ne.s32.totalorder %s112, %s114
      %p121 = scmp.eq.s32.totalorder %s20, 1
      %p122 = por %p120, %p121
      %p123 = scmp.ne.s32.totalorder %s114, %s115
      %p124 = scmp.eq.s32.totalorder %s20, 0
      %p125 = por %p123, %p124
      %p126 = scmp.ne.s32.totalorder %s114, %s115
      %p127 = scmp.eq.s32.totalorder %s21, 1
      %p128 = por %p126, %p127
      %p130 = scmp.ne.s32.totalorder %s115, %s129
      %p131 = scmp.eq.s32.totalorder %s21, 0
      %p132 = por %p130, %p131
      %s134 = sadd.s32 %s133, 1
      %p137 = scmp.eq.s32.totalorder %s15, 1
      %p138 = scmp.ne.s32.totalorder %s133, %s135
      %p139 = scmp.eq.s32.totalorder %s15, 0
      %p140 = por %p138, %p139
      %p141 = scmp.ne.s32.totalorder %s133, %s135
      %p142 = scmp.eq.s32.totalorder %s20, 1
      %p143 = por %p141, %p142
      %p144 = scmp.ne.s32.totalorder %s135, %s136
      %p145 = scmp.eq.s32.totalorder %s20, 0
      %p146 = por %p144, %p145
      %p147 = scmp.ne.s32.totalorder %s135, %s136
      %p148 = scmp.eq.s32.totalorder %s21, 1
      %p149 = por %p147, %p148
      %p151 = scmp.ne.s32.totalorder %s136, %s150
      %p152 = scmp.eq.s32.totalorder %s21, 0
      %p153 = por %p151, %p152
      %s155 = sadd.s32 %s154, 1
      %p158 = scmp.eq.s32.totalorder %s15, 1
      %p159 = scmp.ne.s32.totalorder %s154, %s156
      %p160 = scmp.eq.s32.totalorder %s15, 0
      %p161 = por %p159, %p160
      %p162 = scmp.ne.s32.totalorder %s154, %s156
      %p163 = scmp.eq.s32.totalorder %s20, 1
      %p164 = por %p162, %p163
      %p165 = scmp.ne.s32.totalorder %s156, %s157
      %p166 = scmp.eq.s32.totalorder %s20, 0
      %p167 = por %p165, %p166
      %p168 = scmp.ne.s32.totalorder %s156, %s157
      %p169 = scmp.eq.s32.totalorder %s21, 1
      %p170 = por %p168, %p169
      %p172 = scmp.ne.s32.totalorder %s157, %s171
      %p173 = scmp.eq.s32.totalorder %s21, 0
      %p174 = por %p172, %p173
      %s175 = ssub.s32 %s15, %s22
      %p176 = scmp.eq.s32.totalorder %s175, 0
      %s178 = sadd.s32 %s177, 1
      %s179 = scalar_select %p176, %s177, %s178
      %p182 = pneg %p176
      %p183 = scmp.eq.s32.totalorder %s15, 1
      %p184 = por %p182, %p183
      %p185 = scmp.ne.s32.totalorder %s177, %s180
      %p186 = scmp.eq.s32.totalorder %s15, 0
      %p187 = por %p185, %p186
      %p188 = scmp.ne.s32.totalorder %s177, %s180
      %p189 = scmp.eq.s32.totalorder %s20, 1
      %p190 = por %p188, %p189
      %p191 = scmp.ne.s32.totalorder %s180, %s181
      %p192 = scmp.eq.s32.totalorder %s20, 0
      %p193 = por %p191, %p192
      %p194 = scmp.ne.s32.totalorder %s180, %s181
      %p195 = scmp.eq.s32.totalorder %s21, 1
      %p196 = por %p194, %p195
      %p198 = scmp.ne.s32.totalorder %s181, %s197
      %p199 = scmp.eq.s32.totalorder %s21, 0
      %p200 = por %p198, %p199
      %p201 = scmp.le.s32.totalorder 1, %s15
      %p202 = scmp.lt.s32.totalorder %s15, 3
      %p203 = pnand %p201, %p202
      %p204 = pneg %p203
      // Predicated region
      $region9: #{regressor_forward.1} parent=5 // pred_check
        _
      $region10: #{regressor_forward.1} parent=5 // pred_check_branch
        %206 = sbr.rel (%p203) target = $region12
      $region11: #{regressor_forward.1} parent=5 // pred_region
        %s207 = ssub.s32 %s15, 1
        // Predicated region
        $region13: #{regressor_forward.1} parent=11 // pred_check
          %p208 = pneg %p62
        $region14: #{regressor_forward.1} parent=11 // pred_check_branch
          %210 = sbr.rel (%p208) target = $region16
        $region15: #{regressor_forward.1} parent=11 // pred_region
          %212 = vsyncadd [#allocation7], 0
          %s213 = sshll.u32 %s1, 4
          %s214 = int_to_ptr.hbm [resolvable:$true] %s213
          %s215 = sshll.u32 [#allocation6], 4
          %s216 = int_to_ptr.vmem [resolvable:$true] %s215
          %221 = dma.hbm_to_vmem [thread:$0]  %s214, 9216, %s216, [#allocation7], 64, 64, 4
        $region16: #{regressor_forward.1} parent=11 // pred_fallthru
          _
        // Predicated region
        $region17: #{regressor_forward.1} parent=11 // pred_check
          %p222 = pneg %p83
        $region18: #{regressor_forward.1} parent=11 // pred_check_branch
          %224 = sbr.rel (%p222) target = $region20
        $region19: #{regressor_forward.1} parent=11 // pred_region
          _
        $region20: #{regressor_forward.1} parent=11 // pred_fallthru
          _
        // Predicated region
        $region21: #{regressor_forward.1} parent=11 // pred_check
          %p225 = pneg %p104
        $region22: #{regressor_forward.1} parent=11 // pred_check_branch
          %227 = sbr.rel (%p225) target = $region24
        $region23: #{regressor_forward.1} parent=11 // pred_region
          %229 = vsyncadd [#allocation9], 0
          %s230 = sshll.u32 %s3, 4
          %s231 = int_to_ptr.hbm [resolvable:$true] %s230
          %s232 = sshll.u32 [#allocation8], 4
          %s233 = int_to_ptr.vmem [resolvable:$true] %s232
          %238 = dma.hbm_to_vmem [thread:$0]  %s231, 9216, %s233, [#allocation9], 64, 64, 4
        $region24: #{regressor_forward.1} parent=11 // pred_fallthru
          _
        // Predicated region
        $region25: #{regressor_forward.1} parent=11 // pred_check
          %p239 = pneg %p125
        $region26: #{regressor_forward.1} parent=11 // pred_check_branch
          %241 = sbr.rel (%p239) target = $region28
        $region27: #{regressor_forward.1} parent=11 // pred_region
          _
        $region28: #{regressor_forward.1} parent=11 // pred_fallthru
          _
        // Predicated region
        $region29: #{regressor_forward.1} parent=11 // pred_check
          %p242 = pneg %p146
        $region30: #{regressor_forward.1} parent=11 // pred_check_branch
          %244 = sbr.rel (%p242) target = $region32
        $region31: #{regressor_forward.1} parent=11 // pred_region
          %246 = vsyncadd [#allocation9], 0
          %s247 = sshll.u32 %s5, 4
          %s248 = int_to_ptr.hbm [resolvable:$true] %s247
          %s249 = sshll.u32 [#allocation10], 4
          %s250 = int_to_ptr.vmem [resolvable:$true] %s249
          %255 = dma.hbm_to_vmem [thread:$0]  %s248, 18432, %s250, [#allocation9], 128, 128, 8
        $region32: #{regressor_forward.1} parent=11 // pred_fallthru
          _
        // Predicated region
        $region33: #{regressor_forward.1} parent=11 // pred_check
          %p256 = pneg %p167
        $region34: #{regressor_forward.1} parent=11 // pred_check_branch
          %258 = sbr.rel (%p256) target = $region36
        $region35: #{regressor_forward.1} parent=11 // pred_region
          _
        $region36: #{regressor_forward.1} parent=11 // pred_fallthru
          _
      $region12: #{regressor_forward.1} parent=5 // pred_fallthru
        _
      %p259 = scmp.lt.s32.totalorder %s15, 2
      // Predicated region
      $region37: #{regressor_forward.1} parent=5 // pred_check
        %p260 = pneg %p259
      $region38: #{regressor_forward.1} parent=5 // pred_check_branch
        %262 = sbr.rel (%p260) target = $region40
      $region39: #{regressor_forward.1} parent=5 // pred_region
        // Predicated region
        $region41: #{regressor_forward.1} parent=39 // pred_check
          %p263 = pneg %p35
        $region42: #{regressor_forward.1} parent=39 // pred_check_branch
          %265 = sbr.rel (%p263) target = $region44
        $region43: #{regressor_forward.1} parent=39 // pred_region
          %p266 = scmp.lt.s32.totalorder %s15, 1
          %s267 = scalar_select %p266, %s15, 1
          %s268 = smul.addr %s267, 8
          %s269 = smul.addr %s268, 8
          %s270 = scalar_lea.vmem %s0, %s269
        $region44: #{regressor_forward.1} parent=39 // pred_fallthru
          _
      $region40: #{regressor_forward.1} parent=5 // pred_fallthru
        _
      %p271 = scmp.le.s32.totalorder 1, %s15
      %p272 = scmp.lt.s32.totalorder %s15, 3
      %p273 = pnand %p271, %p272
      %p274 = pneg %p273
      // Predicated region
      $region45: #{regressor_forward.1} parent=5 // pred_check
        _
      $region46: #{regressor_forward.1} parent=5 // pred_check_branch
        %276 = sbr.rel (%p273) target = $region48
      $region47: #{regressor_forward.1} parent=5 // pred_region
        %s277 = ssub.s32 %s15, 1
        // Predicated region
        $region49: #{regressor_forward.1} parent=47 // pred_check
          %p278 = pneg %p62
        $region50: #{regressor_forward.1} parent=47 // pred_check_branch
          %280 = sbr.rel (%p278) target = $region52
        $region51: #{regressor_forward.1} parent=47 // pred_region
          %282 = dma.done [#allocation7], 9216
        $region52: #{regressor_forward.1} parent=47 // pred_fallthru
          _
        // Predicated region
        $region53: #{regressor_forward.1} parent=47 // pred_check
          %p283 = pneg %p104
        $region54: #{regressor_forward.1} parent=47 // pred_check_branch
          %285 = sbr.rel (%p283) target = $region56
        $region55: #{regressor_forward.1} parent=47 // pred_region
          %287 = dma.done [#allocation9], 9216
        $region56: #{regressor_forward.1} parent=47 // pred_fallthru
          _
        // Predicated region
        $region57: #{regressor_forward.1} parent=47 // pred_check
          %p288 = pneg %p146
        $region58: #{regressor_forward.1} parent=47 // pred_check_branch
          %290 = sbr.rel (%p288) target = $region60
        $region59: #{regressor_forward.1} parent=47 // pred_region
          %292 = dma.done [#allocation9], 18432
        $region60: #{regressor_forward.1} parent=47 // pred_fallthru
          _
        %p293 = scmp.lt.s32.totalorder %s20, 1
        %s294 = scalar_select %p293, %s20, 1
        %s295 = smul.addr %s294, 8
        %s296 = smul.addr %s295, 8
        %s297 = scalar_lea.vmem %s0, %s296
        %p298 = pneg %p41
        %p299 = pneg %p38
        %p300 = pneg %p62
        %p301 = pneg %p59
        %p302 = pneg %p83
        %p303 = pneg %p80
        %p304 = pneg %p104
        %p305 = pneg %p101
        %p306 = pneg %p125
        %p307 = pneg %p122
        %p308 = pneg %p146
        %p309 = pneg %p143
        %p310 = pneg %p167
        %p311 = pneg %p164
        %p312 = pneg %p193
        %p313 = pneg %p190
        %p314 = scmp.lt.s32.totalorder %s20, 1
        %s315 = scalar_select %p314, %s20, 1
        %s316 = smul.addr %s315, 32
        %s317 = smul.addr %s316, 8
        %s318 = scalar_lea.vmem %s7, %s317
        %p319 = scmp.lt.s32.totalorder %s20, 1
        %s320 = scalar_select %p319, %s20, 1
        %s321 = smul.addr %s320, 8
        %s322 = smul.addr %s321, 8
        %s323 = scalar_lea.vmem %s0, %s322
        %p324 = scmp.lt.s32.totalorder %s20, 1
        %s325 = scalar_select %p324, %s20, 1
        %s326 = smul.addr %s325, 32
        %s327 = smul.addr %s326, 8
        %s328 = scalar_lea.vmem %s7, %s327
        %330 = vst [vmem:[#allocation2] sm:$0xff] 0.0
        %331 = vst [vmem:[#allocation2 + $0x8] sm:$0x3] 0.0
        %332 = vst [vmem:[#allocation2 + $0x10] sm:$0xff] 0.0
        %333 = vst [vmem:[#allocation2 + $0x18] sm:$0x3] 0.0
        %334 = vst [vmem:[#allocation2 + $0x20] sm:$0xff] 0.0
        %335 = vst [vmem:[#allocation2 + $0x28] sm:$0x3] 0.0
        %336 = vst [vmem:[#allocation2 + $0x30] sm:$0xff] 0.0
        %337 = vst [vmem:[#allocation2 + $0x38] sm:$0x3] 0.0
        %338 = vst [vmem:[#allocation2 + $0x40] sm:$0xff] 0.0
        %339 = vst [vmem:[#allocation2 + $0x48] sm:$0x3] 0.0
        %340 = vst [vmem:[#allocation2 + $0x50] sm:$0xff] 0.0
        %341 = vst [vmem:[#allocation2 + $0x58] sm:$0x3] 0.0
        %342 = vst [vmem:[#allocation2 + $0x60] sm:$0xff] 0.0
        %343 = vst [vmem:[#allocation2 + $0x68] sm:$0x3] 0.0
        %344 = vst [vmem:[#allocation2 + $0x70] sm:$0xff] 0.0
        %345 = vst [vmem:[#allocation2 + $0x78] sm:$0x3] 0.0
        %346 = vst [vmem:[#allocation2 + $0x80] sm:$0xff] 0.0
        %347 = vst [vmem:[#allocation2 + $0x88] sm:$0x3] 0.0
        %348 = vst [vmem:[#allocation2 + $0x90] sm:$0xff] 0.0
        %349 = vst [vmem:[#allocation2 + $0x98] sm:$0x3] 0.0
        %vm350 = vcmask 523264
        %351 = vst.msk [vmem:[#allocation3] sm:$0xff] %vm350, 0.0
        %vm352 = vcmask 517120
        %353 = vst.msk [vmem:[#allocation3 + $0x8] sm:$0x3] %vm352, 0.0
        %354 = vst.msk [vmem:[#allocation3 + $0x10] sm:$0xff] %vm350, 0.0
        %355 = vst.msk [vmem:[#allocation3 + $0x18] sm:$0x3] %vm352, 0.0
        %356 = vst.msk [vmem:[#allocation3 + $0x20] sm:$0xff] %vm350, 0.0
        %357 = vst.msk [vmem:[#allocation3 + $0x28] sm:$0x3] %vm352, 0.0
        %358 = vst.msk [vmem:[#allocation3 + $0x30] sm:$0xff] %vm350, 0.0
        %359 = vst.msk [vmem:[#allocation3 + $0x38] sm:$0x3] %vm352, 0.0
        %360 = vst.msk [vmem:[#allocation3 + $0x40] sm:$0xff] %vm350, 0.0
        %361 = vst.msk [vmem:[#allocation3 + $0x48] sm:$0x3] %vm352, 0.0
        %362 = vst.msk [vmem:[#allocation3 + $0x50] sm:$0xff] %vm350, 0.0
        %363 = vst.msk [vmem:[#allocation3 + $0x58] sm:$0x3] %vm352, 0.0
        %364 = vst.msk [vmem:[#allocation3 + $0x60] sm:$0xff] %vm350, 0.0
        %365 = vst.msk [vmem:[#allocation3 + $0x68] sm:$0x3] %vm352, 0.0
        %366 = vst.msk [vmem:[#allocation3 + $0x70] sm:$0xff] %vm350, 0.0
        %367 = vst.msk [vmem:[#allocation3 + $0x78] sm:$0x3] %vm352, 0.0
        %368 = vst.msk [vmem:[#allocation3 + $0x80] sm:$0xff] %vm350, 0.0
        %369 = vst.msk [vmem:[#allocation3 + $0x88] sm:$0x3] %vm352, 0.0
        %370 = vst.msk [vmem:[#allocation3 + $0x90] sm:$0xff] %vm350, 0.0
        %371 = vst.msk [vmem:[#allocation3 + $0x98] sm:$0x3] %vm352, 0.0
        %372 = vst.msk [vmem:[#allocation3 + $0xa0] sm:$0xff] %vm350, 0.0
        %373 = vst.msk [vmem:[#allocation3 + $0xa8] sm:$0x3] %vm352, 0.0
        %374 = vst.msk [vmem:[#allocation3 + $0xb0] sm:$0xff] %vm350, 0.0
        %375 = vst.msk [vmem:[#allocation3 + $0xb8] sm:$0x3] %vm352, 0.0
        %376 = vst.msk [vmem:[#allocation3 + $0xc0] sm:$0xff] %vm350, 0.0
        %377 = vst.msk [vmem:[#allocation3 + $0xc8] sm:$0x3] %vm352, 0.0
        %378 = vst.msk [vmem:[#allocation3 + $0xd0] sm:$0xff] %vm350, 0.0
        %379 = vst.msk [vmem:[#allocation3 + $0xd8] sm:$0x3] %vm352, 0.0
        %380 = vst.msk [vmem:[#allocation3 + $0xe0] sm:$0xff] %vm350, 0.0
        %381 = vst.msk [vmem:[#allocation3 + $0xe8] sm:$0x3] %vm352, 0.0
        %382 = vst.msk [vmem:[#allocation3 + $0xf0] sm:$0xff] %vm350, 0.0
        %383 = vst.msk [vmem:[#allocation3 + $0xf8] sm:$0x3] %vm352, 0.0
        %384 = vst.msk [vmem:[#allocation3 + $0x100] sm:$0xff] %vm350, 0.0
        %385 = vst.msk [vmem:[#allocation3 + $0x108] sm:$0x3] %vm352, 0.0
        %386 = vst.msk [vmem:[#allocation3 + $0x110] sm:$0xff] %vm350, 0.0
        %387 = vst.msk [vmem:[#allocation3 + $0x118] sm:$0x3] %vm352, 0.0
        %388 = vst.msk [vmem:[#allocation3 + $0x120] sm:$0xff] %vm350, 0.0
        %389 = vst.msk [vmem:[#allocation3 + $0x128] sm:$0x3] %vm352, 0.0
        %390 = vst.msk [vmem:[#allocation3 + $0x130] sm:$0xff] %vm350, 0.0
        %391 = vst.msk [vmem:[#allocation3 + $0x138] sm:$0x3] %vm352, 0.0
        %392 = vst.msk [vmem:[#allocation3 + $0x140] sm:$0xff] %vm350, 0.0
        %393 = vst.msk [vmem:[#allocation3 + $0x148] sm:$0x3] %vm352, 0.0
        %394 = vst.msk [vmem:[#allocation3 + $0x150] sm:$0xff] %vm350, 0.0
        %395 = vst.msk [vmem:[#allocation3 + $0x158] sm:$0x3] %vm352, 0.0
        %396 = vst.msk [vmem:[#allocation3 + $0x160] sm:$0xff] %vm350, 0.0
        %397 = vst.msk [vmem:[#allocation3 + $0x168] sm:$0x3] %vm352, 0.0
        %398 = vst.msk [vmem:[#allocation3 + $0x170] sm:$0xff] %vm350, 0.0
        %399 = vst.msk [vmem:[#allocation3 + $0x178] sm:$0x3] %vm352, 0.0
        %400 = vst.msk [vmem:[#allocation3 + $0x180] sm:$0xff] %vm350, 0.0
        %401 = vst.msk [vmem:[#allocation3 + $0x188] sm:$0x3] %vm352, 0.0
        %402 = vst.msk [vmem:[#allocation3 + $0x190] sm:$0xff] %vm350, 0.0
        %403 = vst.msk [vmem:[#allocation3 + $0x198] sm:$0x3] %vm352, 0.0
        %404 = vst.msk [vmem:[#allocation3 + $0x1a0] sm:$0xff] %vm350, 0.0
        %405 = vst.msk [vmem:[#allocation3 + $0x1a8] sm:$0x3] %vm352, 0.0
        %406 = vst.msk [vmem:[#allocation3 + $0x1b0] sm:$0xff] %vm350, 0.0
        %407 = vst.msk [vmem:[#allocation3 + $0x1b8] sm:$0x3] %vm352, 0.0
        %408 = vst.msk [vmem:[#allocation3 + $0x1c0] sm:$0xff] %vm350, 0.0
        %409 = vst.msk [vmem:[#allocation3 + $0x1c8] sm:$0x3] %vm352, 0.0
        %410 = vst.msk [vmem:[#allocation3 + $0x1d0] sm:$0xff] %vm350, 0.0
        %411 = vst.msk [vmem:[#allocation3 + $0x1d8] sm:$0x3] %vm352, 0.0
        %412 = vst.msk [vmem:[#allocation3 + $0x1e0] sm:$0xff] %vm350, 0.0
        %413 = vst.msk [vmem:[#allocation3 + $0x1e8] sm:$0x3] %vm352, 0.0
        %414 = vst.msk [vmem:[#allocation3 + $0x1f0] sm:$0xff] %vm350, 0.0
        %415 = vst.msk [vmem:[#allocation3 + $0x1f8] sm:$0x3] %vm352, 0.0
        %416 = vst.msk [vmem:[#allocation3 + $0x200] sm:$0xff] %vm350, 0.0
        %417 = vst.msk [vmem:[#allocation3 + $0x208] sm:$0x3] %vm352, 0.0
        %418 = vst.msk [vmem:[#allocation3 + $0x210] sm:$0xff] %vm350, 0.0
        %419 = vst.msk [vmem:[#allocation3 + $0x218] sm:$0x3] %vm352, 0.0
        %420 = vst.msk [vmem:[#allocation3 + $0x220] sm:$0xff] %vm350, 0.0
        %421 = vst.msk [vmem:[#allocation3 + $0x228] sm:$0x3] %vm352, 0.0
        %422 = vst.msk [vmem:[#allocation3 + $0x230] sm:$0xff] %vm350, 0.0
        %423 = vst.msk [vmem:[#allocation3 + $0x238] sm:$0x3] %vm352, 0.0
        %424 = vst.msk [vmem:[#allocation3 + $0x240] sm:$0xff] %vm350, 0.0
        %425 = vst.msk [vmem:[#allocation3 + $0x248] sm:$0x3] %vm352, 0.0
        %426 = vst.msk [vmem:[#allocation3 + $0x250] sm:$0xff] %vm350, 0.0
        %427 = vst.msk [vmem:[#allocation3 + $0x258] sm:$0x3] %vm352, 0.0
        %428 = vst.msk [vmem:[#allocation3 + $0x260] sm:$0xff] %vm350, 0.0
        %429 = vst.msk [vmem:[#allocation3 + $0x268] sm:$0x3] %vm352, 0.0
        %430 = vst.msk [vmem:[#allocation3 + $0x270] sm:$0xff] %vm350, 0.0
        %431 = vst.msk [vmem:[#allocation3 + $0x278] sm:$0x3] %vm352, 0.0
        %v432 = vld [vmem:[%s323] sm:$0xff]
        %v433 = vld [vmem:[%s323 + $0x8] sm:$0xff]
        %v434 = vld [vmem:[%s323 + $0x10] sm:$0xff]
        %v435 = vld [vmem:[%s323 + $0x18] sm:$0xff]
        %v436 = vld [vmem:[%s323 + $0x20] sm:$0xff]
        %v437 = vld [vmem:[%s323 + $0x28] sm:$0xff]
        %v438 = vld [vmem:[%s323 + $0x30] sm:$0xff]
        %v439 = vld [vmem:[%s323 + $0x38] sm:$0xff]
        %s440 = scalar_lea.vmem [#allocation2], 16
        %441 = vst [vmem:[%s440 + $0x1] sm:$0xff] %v432
        %442 = vst [vmem:[%s440 + $0x11] sm:$0xff] %v433
        %443 = vst [vmem:[%s440 + $0x21] sm:$0xff] %v434
        %444 = vst [vmem:[%s440 + $0x31] sm:$0xff] %v435
        %445 = vst [vmem:[%s440 + $0x41] sm:$0xff] %v436
        %446 = vst [vmem:[%s440 + $0x51] sm:$0xff] %v437
        %447 = vst [vmem:[%s440 + $0x61] sm:$0xff] %v438
        %448 = vst [vmem:[%s440 + $0x71] sm:$0xff] %v439
        %v449 = vld [vmem:[#allocation2] sm:$0xff]
        %v450 = vld [vmem:[#allocation2 + $0x10] sm:$0xff]
        %v451 = vld [vmem:[#allocation2 + $0x20] sm:$0xff]
        %v452 = vld [vmem:[#allocation2 + $0x30] sm:$0xff]
        %v453 = vld [vmem:[#allocation2 + $0x40] sm:$0xff]
        %v454 = vld [vmem:[#allocation2 + $0x50] sm:$0xff]
        %v455 = vld [vmem:[#allocation2 + $0x60] sm:$0xff]
        %v456 = vld [vmem:[#allocation2 + $0x70] sm:$0xff]
        %v457 = vpack.c.bf16 %v449, %v449
        %v458 = vpack.c.bf16 %v450, %v450
        %v459 = vpack.c.bf16 %v451, %v451
        %v460 = vpack.c.bf16 %v452, %v452
        %v461 = vpack.c.bf16 %v453, %v453
        %v462 = vpack.c.bf16 %v454, %v454
        %v463 = vpack.c.bf16 %v455, %v455
        %v464 = vpack.c.bf16 %v456, %v456
        %465 = vst [vmem:[#allocation4] sm:$0xf] %v457
        %466 = vst [vmem:[#allocation4 + $0x24] sm:$0xf] %v458
        %467 = vst [vmem:[#allocation4 + $0x48] sm:$0xf] %v459
        %468 = vst [vmem:[#allocation4 + $0x6c] sm:$0xf] %v460
        %469 = vst [vmem:[#allocation4 + $0x90] sm:$0xf] %v461
        %470 = vst [vmem:[#allocation4 + $0xb4] sm:$0xf] %v462
        %471 = vst [vmem:[#allocation4 + $0xd8] sm:$0xf] %v463
        %472 = vst [vmem:[#allocation4 + $0xfc] sm:$0xf] %v464
        %v473 = vld [vmem:[#allocation2 + $0x1] sm:$0xff]
        %v474 = vld [vmem:[#allocation2 + $0x11] sm:$0xff]
        %v475 = vld [vmem:[#allocation2 + $0x21] sm:$0xff]
        %v476 = vld [vmem:[#allocation2 + $0x31] sm:$0xff]
        %v477 = vld [vmem:[#allocation2 + $0x41] sm:$0xff]
        %v478 = vld [vmem:[#allocation2 + $0x51] sm:$0xff]
        %v479 = vld [vmem:[#allocation2 + $0x61] sm:$0xff]
        %v480 = vld [vmem:[#allocation2 + $0x71] sm:$0xff]
        %v481 = vpack.c.bf16 %v473, %v473
        %v482 = vpack.c.bf16 %v474, %v474
        %v483 = vpack.c.bf16 %v475, %v475
        %v484 = vpack.c.bf16 %v476, %v476
        %v485 = vpack.c.bf16 %v477, %v477
        %v486 = vpack.c.bf16 %v478, %v478
        %v487 = vpack.c.bf16 %v479, %v479
        %v488 = vpack.c.bf16 %v480, %v480
        %489 = vst [vmem:[#allocation4 + $0x4] sm:$0xf] %v481
        %490 = vst [vmem:[#allocation4 + $0x28] sm:$0xf] %v482
        %491 = vst [vmem:[#allocation4 + $0x4c] sm:$0xf] %v483
        %492 = vst [vmem:[#allocation4 + $0x70] sm:$0xf] %v484
        %493 = vst [vmem:[#allocation4 + $0x94] sm:$0xf] %v485
        %494 = vst [vmem:[#allocation4 + $0xb8] sm:$0xf] %v486
        %495 = vst [vmem:[#allocation4 + $0xdc] sm:$0xf] %v487
        %496 = vst [vmem:[#allocation4 + $0x100] sm:$0xf] %v488
        %v497 = vld [vmem:[#allocation2 + $0x2] sm:$0xff]
        %v498 = vld [vmem:[#allocation2 + $0x12] sm:$0xff]
        %v499 = vld [vmem:[#allocation2 + $0x22] sm:$0xff]
        %v500 = vld [vmem:[#allocation2 + $0x32] sm:$0xff]
        %v501 = vld [vmem:[#allocation2 + $0x42] sm:$0xff]
        %v502 = vld [vmem:[#allocation2 + $0x52] sm:$0xff]
        %v503 = vld [vmem:[#allocation2 + $0x62] sm:$0xff]
        %v504 = vld [vmem:[#allocation2 + $0x72] sm:$0xff]
        %v505 = vpack.c.bf16 %v497, %v497
        %v506 = vpack.c.bf16 %v498, %v498
        %v507 = vpack.c.bf16 %v499, %v499
        %v508 = vpack.c.bf16 %v500, %v500
        %v509 = vpack.c.bf16 %v501, %v501
        %v510 = vpack.c.bf16 %v502, %v502
        %v511 = vpack.c.bf16 %v503, %v503
        %v512 = vpack.c.bf16 %v504, %v504
        %513 = vst [vmem:[#allocation4 + $0x8] sm:$0xf] %v505
        %514 = vst [vmem:[#allocation4 + $0x2c] sm:$0xf] %v506
        %515 = vst [vmem:[#allocation4 + $0x50] sm:$0xf] %v507
        %516 = vst [vmem:[#allocation4 + $0x74] sm:$0xf] %v508
        %517 = vst [vmem:[#allocation4 + $0x98] sm:$0xf] %v509
        %518 = vst [vmem:[#allocation4 + $0xbc] sm:$0xf] %v510
        %519 = vst [vmem:[#allocation4 + $0xe0] sm:$0xf] %v511
        %520 = vst [vmem:[#allocation4 + $0x104] sm:$0xf] %v512
        %v521 = vld [vmem:[%s440] sm:$0xff]
        %v522 = vld [vmem:[%s440 + $0x10] sm:$0xff]
        %v523 = vld [vmem:[%s440 + $0x20] sm:$0xff]
        %v524 = vld [vmem:[%s440 + $0x30] sm:$0xff]
        %v525 = vld [vmem:[%s440 + $0x40] sm:$0xff]
        %v526 = vld [vmem:[%s440 + $0x50] sm:$0xff]
        %v527 = vld [vmem:[%s440 + $0x60] sm:$0xff]
        %v528 = vld [vmem:[%s440 + $0x70] sm:$0xff]
        %v529 = vpack.c.bf16 %v521, %v521
        %v530 = vpack.c.bf16 %v522, %v522
        %v531 = vpack.c.bf16 %v523, %v523
        %v532 = vpack.c.bf16 %v524, %v524
        %v533 = vpack.c.bf16 %v525, %v525
        %v534 = vpack.c.bf16 %v526, %v526
        %v535 = vpack.c.bf16 %v527, %v527
        %v536 = vpack.c.bf16 %v528, %v528
        %537 = vst [vmem:[#allocation4 + $0xc] sm:$0xf] %v529
        %538 = vst [vmem:[#allocation4 + $0x30] sm:$0xf] %v530
        %539 = vst [vmem:[#allocation4 + $0x54] sm:$0xf] %v531
        %540 = vst [vmem:[#allocation4 + $0x78] sm:$0xf] %v532
        %541 = vst [vmem:[#allocation4 + $0x9c] sm:$0xf] %v533
        %542 = vst [vmem:[#allocation4 + $0xc0] sm:$0xf] %v534
        %543 = vst [vmem:[#allocation4 + $0xe4] sm:$0xf] %v535
        %544 = vst [vmem:[#allocation4 + $0x108] sm:$0xf] %v536
        %v545 = vld [vmem:[%s440 + $0x1] sm:$0xff]
        %v546 = vld [vmem:[%s440 + $0x11] sm:$0xff]
        %v547 = vld [vmem:[%s440 + $0x21] sm:$0xff]
        %v548 = vld [vmem:[%s440 + $0x31] sm:$0xff]
        %v549 = vld [vmem:[%s440 + $0x41] sm:$0xff]
        %v550 = vld [vmem:[%s440 + $0x51] sm:$0xff]
        %v551 = vld [vmem:[%s440 + $0x61] sm:$0xff]
        %v552 = vld [vmem:[%s440 + $0x71] sm:$0xff]
        %v553 = vpack.c.bf16 %v545, %v545
        %v554 = vpack.c.bf16 %v546, %v546
        %v555 = vpack.c.bf16 %v547, %v547
        %v556 = vpack.c.bf16 %v548, %v548
        %v557 = vpack.c.bf16 %v549, %v549
        %v558 = vpack.c.bf16 %v550, %v550
        %v559 = vpack.c.bf16 %v551, %v551
        %v560 = vpack.c.bf16 %v552, %v552
        %561 = vst [vmem:[#allocation4 + $0x10] sm:$0xf] %v553
        %562 = vst [vmem:[#allocation4 + $0x34] sm:$0xf] %v554
        %563 = vst [vmem:[#allocation4 + $0x58] sm:$0xf] %v555
        %564 = vst [vmem:[#allocation4 + $0x7c] sm:$0xf] %v556
        %565 = vst [vmem:[#allocation4 + $0xa0] sm:$0xf] %v557
        %566 = vst [vmem:[#allocation4 + $0xc4] sm:$0xf] %v558
        %567 = vst [vmem:[#allocation4 + $0xe8] sm:$0xf] %v559
        %568 = vst [vmem:[#allocation4 + $0x10c] sm:$0xf] %v560
        %v569 = vld [vmem:[%s440 + $0x2] sm:$0xff]
        %v570 = vld [vmem:[%s440 + $0x12] sm:$0xff]
        %v571 = vld [vmem:[%s440 + $0x22] sm:$0xff]
        %v572 = vld [vmem:[%s440 + $0x32] sm:$0xff]
        %v573 = vld [vmem:[%s440 + $0x42] sm:$0xff]
        %v574 = vld [vmem:[%s440 + $0x52] sm:$0xff]
        %v575 = vld [vmem:[%s440 + $0x62] sm:$0xff]
        %v576 = vld [vmem:[%s440 + $0x72] sm:$0xff]
        %v577 = vpack.c.bf16 %v569, %v569
        %v578 = vpack.c.bf16 %v570, %v570
        %v579 = vpack.c.bf16 %v571, %v571
        %v580 = vpack.c.bf16 %v572, %v572
        %v581 = vpack.c.bf16 %v573, %v573
        %v582 = vpack.c.bf16 %v574, %v574
        %v583 = vpack.c.bf16 %v575, %v575
        %v584 = vpack.c.bf16 %v576, %v576
        %585 = vst [vmem:[#allocation4 + $0x14] sm:$0xf] %v577
        %586 = vst [vmem:[#allocation4 + $0x38] sm:$0xf] %v578
        %587 = vst [vmem:[#allocation4 + $0x5c] sm:$0xf] %v579
        %588 = vst [vmem:[#allocation4 + $0x80] sm:$0xf] %v580
        %589 = vst [vmem:[#allocation4 + $0xa4] sm:$0xf] %v581
        %590 = vst [vmem:[#allocation4 + $0xc8] sm:$0xf] %v582
        %591 = vst [vmem:[#allocation4 + $0xec] sm:$0xf] %v583
        %592 = vst [vmem:[#allocation4 + $0x110] sm:$0xf] %v584
        %s593 = scalar_lea.vmem [#allocation2], 32
        %v594 = vld [vmem:[%s593] sm:$0xff]
        %v595 = vld [vmem:[%s593 + $0x10] sm:$0xff]
        %v596 = vld [vmem:[%s593 + $0x20] sm:$0xff]
        %v597 = vld [vmem:[%s593 + $0x30] sm:$0xff]
        %v598 = vld [vmem:[%s593 + $0x40] sm:$0xff]
        %v599 = vld [vmem:[%s593 + $0x50] sm:$0xff]
        %v600 = vld [vmem:[%s593 + $0x60] sm:$0xff]
        %v601 = vld [vmem:[%s593 + $0x70] sm:$0xff]
        %v602 = vpack.c.bf16 %v594, %v594
        %v603 = vpack.c.bf16 %v595, %v595
        %v604 = vpack.c.bf16 %v596, %v596
        %v605 = vpack.c.bf16 %v597, %v597
        %v606 = vpack.c.bf16 %v598, %v598
        %v607 = vpack.c.bf16 %v599, %v599
        %v608 = vpack.c.bf16 %v600, %v600
        %v609 = vpack.c.bf16 %v601, %v601
        %610 = vst [vmem:[#allocation4 + $0x18] sm:$0xf] %v602
        %611 = vst [vmem:[#allocation4 + $0x3c] sm:$0xf] %v603
        %612 = vst [vmem:[#allocation4 + $0x60] sm:$0xf] %v604
        %613 = vst [vmem:[#allocation4 + $0x84] sm:$0xf] %v605
        %614 = vst [vmem:[#allocation4 + $0xa8] sm:$0xf] %v606
        %615 = vst [vmem:[#allocation4 + $0xcc] sm:$0xf] %v607
        %616 = vst [vmem:[#allocation4 + $0xf0] sm:$0xf] %v608
        %617 = vst [vmem:[#allocation4 + $0x114] sm:$0xf] %v609
        %v618 = vld [vmem:[%s593 + $0x1] sm:$0xff]
        %v619 = vld [vmem:[%s593 + $0x11] sm:$0xff]
        %v620 = vld [vmem:[%s593 + $0x21] sm:$0xff]
        %v621 = vld [vmem:[%s593 + $0x31] sm:$0xff]
        %v622 = vld [vmem:[%s593 + $0x41] sm:$0xff]
        %v623 = vld [vmem:[%s593 + $0x51] sm:$0xff]
        %v624 = vld [vmem:[%s593 + $0x61] sm:$0xff]
        %v625 = vld [vmem:[%s593 + $0x71] sm:$0xff]
        %v626 = vpack.c.bf16 %v618, %v618
        %v627 = vpack.c.bf16 %v619, %v619
        %v628 = vpack.c.bf16 %v620, %v620
        %v629 = vpack.c.bf16 %v621, %v621
        %v630 = vpack.c.bf16 %v622, %v622
        %v631 = vpack.c.bf16 %v623, %v623
        %v632 = vpack.c.bf16 %v624, %v624
        %v633 = vpack.c.bf16 %v625, %v625
        %634 = vst [vmem:[#allocation4 + $0x1c] sm:$0xf] %v626
        %635 = vst [vmem:[#allocation4 + $0x40] sm:$0xf] %v627
        %636 = vst [vmem:[#allocation4 + $0x64] sm:$0xf] %v628
        %637 = vst [vmem:[#allocation4 + $0x88] sm:$0xf] %v629
        %638 = vst [vmem:[#allocation4 + $0xac] sm:$0xf] %v630
        %639 = vst [vmem:[#allocation4 + $0xd0] sm:$0xf] %v631
        %640 = vst [vmem:[#allocation4 + $0xf4] sm:$0xf] %v632
        %641 = vst [vmem:[#allocation4 + $0x118] sm:$0xf] %v633
        %v642 = vld [vmem:[%s593 + $0x2] sm:$0xff]
        %v643 = vld [vmem:[%s593 + $0x12] sm:$0xff]
        %v644 = vld [vmem:[%s593 + $0x22] sm:$0xff]
        %v645 = vld [vmem:[%s593 + $0x32] sm:$0xff]
        %v646 = vld [vmem:[%s593 + $0x42] sm:$0xff]
        %v647 = vld [vmem:[%s593 + $0x52] sm:$0xff]
        %v648 = vld [vmem:[%s593 + $0x62] sm:$0xff]
        %v649 = vld [vmem:[%s593 + $0x72] sm:$0xff]
        %v650 = vpack.c.bf16 %v642, %v642
        %v651 = vpack.c.bf16 %v643, %v643
        %v652 = vpack.c.bf16 %v644, %v644
        %v653 = vpack.c.bf16 %v645, %v645
        %v654 = vpack.c.bf16 %v646, %v646
        %v655 = vpack.c.bf16 %v647, %v647
        %v656 = vpack.c.bf16 %v648, %v648
        %v657 = vpack.c.bf16 %v649, %v649
        %658 = vst [vmem:[#allocation4 + $0x20] sm:$0xf] %v650
        %659 = vst [vmem:[#allocation4 + $0x44] sm:$0xf] %v651
        %660 = vst [vmem:[#allocation4 + $0x68] sm:$0xf] %v652
        %661 = vst [vmem:[#allocation4 + $0x8c] sm:$0xf] %v653
        %662 = vst [vmem:[#allocation4 + $0xb0] sm:$0xf] %v654
        %663 = vst [vmem:[#allocation4 + $0xd4] sm:$0xf] %v655
        %664 = vst [vmem:[#allocation4 + $0xf8] sm:$0xf] %v656
        %665 = vst [vmem:[#allocation4 + $0x11c] sm:$0xf] %v657
        %v666 = vld [vmem:[#allocation4] sm:$0xff]
        %v667 = vld [vmem:[#allocation4 + $0x8] sm:$0xff]
        %v668 = vld [vmem:[#allocation4 + $0x10] sm:$0xff]
        %v669 = vld [vmem:[#allocation4 + $0x18] sm:$0xff]
        %v670 = vld [vmem:[#allocation4 + $0x20] sm:$0xf]
        %v671 = vld [vmem:[#allocation4 + $0x24] sm:$0xff]
        %v672 = vld [vmem:[#allocation4 + $0x2c] sm:$0xff]
        %v673 = vld [vmem:[#allocation4 + $0x34] sm:$0xff]
        %v674 = vld [vmem:[#allocation4 + $0x3c] sm:$0xff]
        %v675 = vld [vmem:[#allocation4 + $0x44] sm:$0xf]
        %v676 = vld [vmem:[#allocation4 + $0x48] sm:$0xff]
        %v677 = vld [vmem:[#allocation4 + $0x50] sm:$0xff]
        %v678 = vld [vmem:[#allocation4 + $0x58] sm:$0xff]
        %v679 = vld [vmem:[#allocation4 + $0x60] sm:$0xff]
        %v680 = vld [vmem:[#allocation4 + $0x68] sm:$0xf]
        %v681 = vld [vmem:[#allocation4 + $0x6c] sm:$0xff]
        %v682 = vld [vmem:[#allocation4 + $0x74] sm:$0xff]
        %v683 = vld [vmem:[#allocation4 + $0x7c] sm:$0xff]
        %v684 = vld [vmem:[#allocation4 + $0x84] sm:$0xff]
        %v685 = vld [vmem:[#allocation4 + $0x8c] sm:$0xf]
        %v686 = vld [vmem:[#allocation4 + $0x90] sm:$0xff]
        %v687 = vld [vmem:[#allocation4 + $0x98] sm:$0xff]
        %v688 = vld [vmem:[#allocation4 + $0xa0] sm:$0xff]
        %v689 = vld [vmem:[#allocation4 + $0xa8] sm:$0xff]
        %v690 = vld [vmem:[#allocation4 + $0xb0] sm:$0xf]
        %v691 = vld [vmem:[#allocation4 + $0xb4] sm:$0xff]
        %v692 = vld [vmem:[#allocation4 + $0xbc] sm:$0xff]
        %v693 = vld [vmem:[#allocation4 + $0xc4] sm:$0xff]
        %v694 = vld [vmem:[#allocation4 + $0xcc] sm:$0xff]
        %v695 = vld [vmem:[#allocation4 + $0xd4] sm:$0xf]
        %v696 = vld [vmem:[#allocation4 + $0xd8] sm:$0xff]
        %v697 = vld [vmem:[#allocation4 + $0xe0] sm:$0xff]
        %v698 = vld [vmem:[#allocation4 + $0xe8] sm:$0xff]
        %v699 = vld [vmem:[#allocation4 + $0xf0] sm:$0xff]
        %v700 = vld [vmem:[#allocation4 + $0xf8] sm:$0xf]
        %v701 = vld [vmem:[#allocation4 + $0xfc] sm:$0xff]
        %v702 = vld [vmem:[#allocation4 + $0x104] sm:$0xff]
        %v703 = vld [vmem:[#allocation4 + $0x10c] sm:$0xff]
        %v704 = vld [vmem:[#allocation4 + $0x114] sm:$0xff]
        %v705 = vld [vmem:[#allocation4 + $0x11c] sm:$0xf]
        %v706 = vld [vmem:[#allocation6] sm:$0xf]
        %v707 = vld [vmem:[#allocation6 + $0x4] sm:$0xf]
        %v708 = vld [vmem:[#allocation6 + $0x8] sm:$0xf]
        %v709 = vld [vmem:[#allocation6 + $0xc] sm:$0xf]
        %v710 = vld [vmem:[#allocation6 + $0x10] sm:$0xf]
        %v711 = vld [vmem:[#allocation6 + $0x14] sm:$0xf]
        %v712 = vld [vmem:[#allocation6 + $0x18] sm:$0xf]
        %v713 = vld [vmem:[#allocation6 + $0x1c] sm:$0xf]
        %v714 = vld [vmem:[#allocation6 + $0x20] sm:$0xf]
        %v715 = vld [vmem:[#allocation6 + $0x24] sm:$0xf]
        %v716 = vld [vmem:[#allocation6 + $0x28] sm:$0xf]
        %v717 = vld [vmem:[#allocation6 + $0x2c] sm:$0xf]
        %v718 = vld [vmem:[#allocation6 + $0x30] sm:$0xf]
        %v719 = vld [vmem:[#allocation6 + $0x34] sm:$0xf]
        %v720 = vld [vmem:[#allocation6 + $0x38] sm:$0xf]
        %v721 = vld [vmem:[#allocation6 + $0x3c] sm:$0xf]
        %v722 = vld [vmem:[#allocation6 + $0x40] sm:$0xf]
        %v723 = vld [vmem:[#allocation6 + $0x44] sm:$0xf]
        %v724 = vld [vmem:[#allocation6 + $0x48] sm:$0xf]
        %v725 = vld [vmem:[#allocation6 + $0x4c] sm:$0xf]
        %v726 = vld [vmem:[#allocation6 + $0x50] sm:$0xf]
        %v727 = vld [vmem:[#allocation6 + $0x54] sm:$0xf]
        %v728 = vld [vmem:[#allocation6 + $0x58] sm:$0xf]
        %v729 = vld [vmem:[#allocation6 + $0x5c] sm:$0xf]
        %v730 = vld [vmem:[#allocation6 + $0x60] sm:$0xf]
        %v731 = vld [vmem:[#allocation6 + $0x64] sm:$0xf]
        %v732 = vld [vmem:[#allocation6 + $0x68] sm:$0xf]
        %v733 = vld [vmem:[#allocation6 + $0x6c] sm:$0xf]
        %v734 = vld [vmem:[#allocation6 + $0x70] sm:$0xf]
        %v735 = vld [vmem:[#allocation6 + $0x74] sm:$0xf]
        %v736 = vld [vmem:[#allocation6 + $0x78] sm:$0xf]
        %v737 = vld [vmem:[#allocation6 + $0x7c] sm:$0xf]
        %v738 = vld [vmem:[#allocation6 + $0x80] sm:$0xf]
        %v739 = vld [vmem:[#allocation6 + $0x84] sm:$0xf]
        %v740 = vld [vmem:[#allocation6 + $0x88] sm:$0xf]
        %v741 = vld [vmem:[#allocation6 + $0x8c] sm:$0xf]
        %v742 = vld [vmem:[#allocation6 + $0x90] sm:$0xf]
        %v743 = vld [vmem:[#allocation6 + $0x94] sm:$0xf]
        %v744 = vld [vmem:[#allocation6 + $0x98] sm:$0xf]
        %v745 = vld [vmem:[#allocation6 + $0x9c] sm:$0xf]
        %v746 = vld [vmem:[#allocation6 + $0xa0] sm:$0xf]
        %v747 = vld [vmem:[#allocation6 + $0xa4] sm:$0xf]
        %v748 = vld [vmem:[#allocation6 + $0xa8] sm:$0xf]
        %v749 = vld [vmem:[#allocation6 + $0xac] sm:$0xf]
        %v750 = vld [vmem:[#allocation6 + $0xb0] sm:$0xf]
        %v751 = vld [vmem:[#allocation6 + $0xb4] sm:$0xf]
        %v752 = vld [vmem:[#allocation6 + $0xb8] sm:$0xf]
        %v753 = vld [vmem:[#allocation6 + $0xbc] sm:$0xf]
        %v754 = vld [vmem:[#allocation6 + $0xc0] sm:$0xf]
        %v755 = vld [vmem:[#allocation6 + $0xc4] sm:$0xf]
        %v756 = vld [vmem:[#allocation6 + $0xc8] sm:$0xf]
        %v757 = vld [vmem:[#allocation6 + $0xcc] sm:$0xf]
        %v758 = vld [vmem:[#allocation6 + $0xd0] sm:$0xf]
        %v759 = vld [vmem:[#allocation6 + $0xd4] sm:$0xf]
        %v760 = vld [vmem:[#allocation6 + $0xd8] sm:$0xf]
        %v761 = vld [vmem:[#allocation6 + $0xdc] sm:$0xf]
        %v762 = vld [vmem:[#allocation6 + $0xe0] sm:$0xf]
        %v763 = vld [vmem:[#allocation6 + $0xe4] sm:$0xf]
        %v764 = vld [vmem:[#allocation6 + $0xe8] sm:$0xf]
        %v765 = vld [vmem:[#allocation6 + $0xec] sm:$0xf]
        %v766 = vld [vmem:[#allocation6 + $0xf0] sm:$0xf]
        %v767 = vld [vmem:[#allocation6 + $0xf4] sm:$0xf]
        %v768 = vld [vmem:[#allocation6 + $0xf8] sm:$0xf]
        %v769 = vld [vmem:[#allocation6 + $0xfc] sm:$0xf]
        %v770 = vld [vmem:[#allocation6 + $0x100] sm:$0xf]
        %v771 = vld [vmem:[#allocation6 + $0x104] sm:$0xf]
        %v772 = vld [vmem:[#allocation6 + $0x108] sm:$0xf]
        %v773 = vld [vmem:[#allocation6 + $0x10c] sm:$0xf]
        %v774 = vld [vmem:[#allocation6 + $0x110] sm:$0xf]
        %v775 = vld [vmem:[#allocation6 + $0x114] sm:$0xf]
        %v776 = vld [vmem:[#allocation6 + $0x118] sm:$0xf]
        %v777 = vld [vmem:[#allocation6 + $0x11c] sm:$0xf]
        %v778 = vld [vmem:[#allocation6 + $0x120] sm:$0xf]
        %v779 = vld [vmem:[#allocation6 + $0x124] sm:$0xf]
        %v780 = vld [vmem:[#allocation6 + $0x128] sm:$0xf]
        %v781 = vld [vmem:[#allocation6 + $0x12c] sm:$0xf]
        %v782 = vld [vmem:[#allocation6 + $0x130] sm:$0xf]
        %v783 = vld [vmem:[#allocation6 + $0x134] sm:$0xf]
        %v784 = vld [vmem:[#allocation6 + $0x138] sm:$0xf]
        %v785 = vld [vmem:[#allocation6 + $0x13c] sm:$0xf]
        %v786 = vld [vmem:[#allocation6 + $0x140] sm:$0xf]
        %v787 = vld [vmem:[#allocation6 + $0x144] sm:$0xf]
        %v788 = vld [vmem:[#allocation6 + $0x148] sm:$0xf]
        %v789 = vld [vmem:[#allocation6 + $0x14c] sm:$0xf]
        %v790 = vld [vmem:[#allocation6 + $0x150] sm:$0xf]
        %v791 = vld [vmem:[#allocation6 + $0x154] sm:$0xf]
        %v792 = vld [vmem:[#allocation6 + $0x158] sm:$0xf]
        %v793 = vld [vmem:[#allocation6 + $0x15c] sm:$0xf]
        %v794 = vld [vmem:[#allocation6 + $0x160] sm:$0xf]
        %v795 = vld [vmem:[#allocation6 + $0x164] sm:$0xf]
        %v796 = vld [vmem:[#allocation6 + $0x168] sm:$0xf]
        %v797 = vld [vmem:[#allocation6 + $0x16c] sm:$0xf]
        %v798 = vld [vmem:[#allocation6 + $0x170] sm:$0xf]
        %v799 = vld [vmem:[#allocation6 + $0x174] sm:$0xf]
        %v800 = vld [vmem:[#allocation6 + $0x178] sm:$0xf]
        %v801 = vld [vmem:[#allocation6 + $0x17c] sm:$0xf]
        %v802 = vld [vmem:[#allocation6 + $0x180] sm:$0xf]
        %v803 = vld [vmem:[#allocation6 + $0x184] sm:$0xf]
        %v804 = vld [vmem:[#allocation6 + $0x188] sm:$0xf]
        %v805 = vld [vmem:[#allocation6 + $0x18c] sm:$0xf]
        %v806 = vld [vmem:[#allocation6 + $0x190] sm:$0xf]
        %v807 = vld [vmem:[#allocation6 + $0x194] sm:$0xf]
        %v808 = vld [vmem:[#allocation6 + $0x198] sm:$0xf]
        %v809 = vld [vmem:[#allocation6 + $0x19c] sm:$0xf]
        %v810 = vld [vmem:[#allocation6 + $0x1a0] sm:$0xf]
        %v811 = vld [vmem:[#allocation6 + $0x1a4] sm:$0xf]
        %v812 = vld [vmem:[#allocation6 + $0x1a8] sm:$0xf]
        %v813 = vld [vmem:[#allocation6 + $0x1ac] sm:$0xf]
        %v814 = vld [vmem:[#allocation6 + $0x1b0] sm:$0xf]
        %v815 = vld [vmem:[#allocation6 + $0x1b4] sm:$0xf]
        %v816 = vld [vmem:[#allocation6 + $0x1b8] sm:$0xf]
        %v817 = vld [vmem:[#allocation6 + $0x1bc] sm:$0xf]
        %v818 = vld [vmem:[#allocation6 + $0x1c0] sm:$0xf]
        %v819 = vld [vmem:[#allocation6 + $0x1c4] sm:$0xf]
        %v820 = vld [vmem:[#allocation6 + $0x1c8] sm:$0xf]
        %v821 = vld [vmem:[#allocation6 + $0x1cc] sm:$0xf]
        %v822 = vld [vmem:[#allocation6 + $0x1d0] sm:$0xf]
        %v823 = vld [vmem:[#allocation6 + $0x1d4] sm:$0xf]
        %v824 = vld [vmem:[#allocation6 + $0x1d8] sm:$0xf]
        %v825 = vld [vmem:[#allocation6 + $0x1dc] sm:$0xf]
        %v826 = vld [vmem:[#allocation6 + $0x1e0] sm:$0xf]
        %v827 = vld [vmem:[#allocation6 + $0x1e4] sm:$0xf]
        %v828 = vld [vmem:[#allocation6 + $0x1e8] sm:$0xf]
        %v829 = vld [vmem:[#allocation6 + $0x1ec] sm:$0xf]
        %v830 = vld [vmem:[#allocation6 + $0x1f0] sm:$0xf]
        %v831 = vld [vmem:[#allocation6 + $0x1f4] sm:$0xf]
        %v832 = vld [vmem:[#allocation6 + $0x1f8] sm:$0xf]
        %v833 = vld [vmem:[#allocation6 + $0x1fc] sm:$0xf]
        %v834 = vld [vmem:[#allocation6 + $0x200] sm:$0xf]
        %v835 = vld [vmem:[#allocation6 + $0x204] sm:$0xf]
        %v836 = vld [vmem:[#allocation6 + $0x208] sm:$0xf]
        %v837 = vld [vmem:[#allocation6 + $0x20c] sm:$0xf]
        %v838 = vld [vmem:[#allocation6 + $0x210] sm:$0xf]
        %v839 = vld [vmem:[#allocation6 + $0x214] sm:$0xf]
        %v840 = vld [vmem:[#allocation6 + $0x218] sm:$0xf]
        %v841 = vld [vmem:[#allocation6 + $0x21c] sm:$0xf]
        %v842 = vld [vmem:[#allocation6 + $0x220] sm:$0xf]
        %v843 = vld [vmem:[#allocation6 + $0x224] sm:$0xf]
        %v844 = vld [vmem:[#allocation6 + $0x228] sm:$0xf]
        %v845 = vld [vmem:[#allocation6 + $0x22c] sm:$0xf]
        %v846 = vld [vmem:[#allocation6 + $0x230] sm:$0xf]
        %v847 = vld [vmem:[#allocation6 + $0x234] sm:$0xf]
        %v848 = vld [vmem:[#allocation6 + $0x238] sm:$0xf]
        %v849 = vld [vmem:[#allocation6 + $0x23c] sm:$0xf]
        %v850 = vld [vmem:[%s2] sm:$0x1]
        %v852 = vperm.slane %v850, 0
        %v894 = vunpack.c.l.b16 %v666
        %v895 = vunpack.c.h.b16 %v666
        %v896 = vunpack.c.l.b16 %v667
        %v897 = vunpack.c.h.b16 %v667
        %v898 = vunpack.c.l.b16 %v668
        %v899 = vunpack.c.h.b16 %v668
        %v900 = vunpack.c.l.b16 %v669
        %v901 = vunpack.c.h.b16 %v669
        %v902 = vunpack.c.l.b16 %v670
        %v903 = vunpack.c.l.b16 %v671
        %v904 = vunpack.c.h.b16 %v671
        %v905 = vunpack.c.l.b16 %v672
        %v906 = vunpack.c.h.b16 %v672
        %v907 = vunpack.c.l.b16 %v673
        %v908 = vunpack.c.h.b16 %v673
        %v909 = vunpack.c.l.b16 %v674
        %v910 = vunpack.c.h.b16 %v674
        %v911 = vunpack.c.l.b16 %v675
        %v912 = vunpack.c.l.b16 %v676
        %v913 = vunpack.c.h.b16 %v676
        %v914 = vunpack.c.l.b16 %v677
        %v915 = vunpack.c.h.b16 %v677
        %v916 = vunpack.c.l.b16 %v678
        %v917 = vunpack.c.h.b16 %v678
        %v918 = vunpack.c.l.b16 %v679
        %v919 = vunpack.c.h.b16 %v679
        %v920 = vunpack.c.l.b16 %v680
        %v921 = vunpack.c.l.b16 %v681
        %v922 = vunpack.c.h.b16 %v681
        %v923 = vunpack.c.l.b16 %v682
        %v924 = vunpack.c.h.b16 %v682
        %v925 = vunpack.c.l.b16 %v683
        %v926 = vunpack.c.h.b16 %v683
        %v927 = vunpack.c.l.b16 %v684
        %v928 = vunpack.c.h.b16 %v684
        %v929 = vunpack.c.l.b16 %v685
        %v930 = vunpack.c.l.b16 %v686
        %v931 = vunpack.c.h.b16 %v686
        %v932 = vunpack.c.l.b16 %v687
        %v933 = vunpack.c.h.b16 %v687
        %v934 = vunpack.c.l.b16 %v688
        %v935 = vunpack.c.h.b16 %v688
        %v936 = vunpack.c.l.b16 %v689
        %v937 = vunpack.c.h.b16 %v689
        %v938 = vunpack.c.l.b16 %v690
        %v939 = vunpack.c.l.b16 %v691
        %v940 = vunpack.c.h.b16 %v691
        %v941 = vunpack.c.l.b16 %v692
        %v942 = vunpack.c.h.b16 %v692
        %v943 = vunpack.c.l.b16 %v693
        %v944 = vunpack.c.h.b16 %v693
        %v945 = vunpack.c.l.b16 %v694
        %v946 = vunpack.c.h.b16 %v694
        %v947 = vunpack.c.l.b16 %v695
        %v948 = vunpack.c.l.b16 %v696
        %v949 = vunpack.c.h.b16 %v696
        %v950 = vunpack.c.l.b16 %v697
        %v951 = vunpack.c.h.b16 %v697
        %v952 = vunpack.c.l.b16 %v698
        %v953 = vunpack.c.h.b16 %v698
        %v954 = vunpack.c.l.b16 %v699
        %v955 = vunpack.c.h.b16 %v699
        %v956 = vunpack.c.l.b16 %v700
        %v957 = vunpack.c.l.b16 %v701
        %v958 = vunpack.c.h.b16 %v701
        %v959 = vunpack.c.l.b16 %v702
        %v960 = vunpack.c.h.b16 %v702
        %v961 = vunpack.c.l.b16 %v703
        %v962 = vunpack.c.h.b16 %v703
        %v963 = vunpack.c.l.b16 %v704
        %v964 = vunpack.c.h.b16 %v704
        %v965 = vunpack.c.l.b16 %v705
        %v966 = vpack.c.b16 %v903, %v894
        %v967 = vpack.c.b16 %v904, %v895
        %v968 = vpack.c.b16 %v905, %v896
        %v969 = vpack.c.b16 %v906, %v897
        %v970 = vpack.c.b16 %v907, %v898
        %v971 = vpack.c.b16 %v908, %v899
        %v972 = vpack.c.b16 %v909, %v900
        %v973 = vpack.c.b16 %v910, %v901
        %v974 = vpack.c.b16 %v911, %v902
        %v975 = vpack.c.b16 %v921, %v912
        %v976 = vpack.c.b16 %v922, %v913
        %v977 = vpack.c.b16 %v923, %v914
        %v978 = vpack.c.b16 %v924, %v915
        %v979 = vpack.c.b16 %v925, %v916
        %v980 = vpack.c.b16 %v926, %v917
        %v981 = vpack.c.b16 %v927, %v918
        %v982 = vpack.c.b16 %v928, %v919
        %v983 = vpack.c.b16 %v929, %v920
        %v984 = vpack.c.b16 %v939, %v930
        %v985 = vpack.c.b16 %v940, %v931
        %v986 = vpack.c.b16 %v941, %v932
        %v987 = vpack.c.b16 %v942, %v933
        %v988 = vpack.c.b16 %v943, %v934
        %v989 = vpack.c.b16 %v944, %v935
        %v990 = vpack.c.b16 %v945, %v936
        %v991 = vpack.c.b16 %v946, %v937
        %v992 = vpack.c.b16 %v947, %v938
        %v993 = vpack.c.b16 %v957, %v948
        %v994 = vpack.c.b16 %v958, %v949
        %v995 = vpack.c.b16 %v959, %v950
        %v996 = vpack.c.b16 %v960, %v951
        %v997 = vpack.c.b16 %v961, %v952
        %v998 = vpack.c.b16 %v962, %v953
        %v999 = vpack.c.b16 %v963, %v954
        %v1000 = vpack.c.b16 %v964, %v955
        %v1001 = vpack.c.b16 %v965, %v956
        %v1182 = vunpack.c.l.b16 %v706
        %v1183 = vunpack.c.l.b16 %v707
        %v1184 = vunpack.c.l.b16 %v708
        %v1185 = vunpack.c.l.b16 %v709
        %v1186 = vunpack.c.l.b16 %v710
        %v1187 = vunpack.c.l.b16 %v711
        %v1188 = vunpack.c.l.b16 %v712
        %v1189 = vunpack.c.l.b16 %v713
        %v1190 = vunpack.c.l.b16 %v714
        %v1191 = vunpack.c.l.b16 %v715
        %v1192 = vunpack.c.l.b16 %v716
        %v1193 = vunpack.c.l.b16 %v717
        %v1194 = vunpack.c.l.b16 %v718
        %v1195 = vunpack.c.l.b16 %v719
        %v1196 = vunpack.c.l.b16 %v720
        %v1197 = vunpack.c.l.b16 %v721
        %v1198 = vunpack.c.l.b16 %v722
        %v1199 = vunpack.c.l.b16 %v723
        %v1200 = vunpack.c.l.b16 %v724
        %v1201 = vunpack.c.l.b16 %v725
        %v1202 = vunpack.c.l.b16 %v726
        %v1203 = vunpack.c.l.b16 %v727
        %v1204 = vunpack.c.l.b16 %v728
        %v1205 = vunpack.c.l.b16 %v729
        %v1206 = vunpack.c.l.b16 %v730
        %v1207 = vunpack.c.l.b16 %v731
        %v1208 = vunpack.c.l.b16 %v732
        %v1209 = vunpack.c.l.b16 %v733
        %v1210 = vunpack.c.l.b16 %v734
        %v1211 = vunpack.c.l.b16 %v735
        %v1212 = vunpack.c.l.b16 %v736
        %v1213 = vunpack.c.l.b16 %v737
        %v1214 = vunpack.c.l.b16 %v738
        %v1215 = vunpack.c.l.b16 %v739
        %v1216 = vunpack.c.l.b16 %v740
        %v1217 = vunpack.c.l.b16 %v741
        %v1218 = vunpack.c.l.b16 %v742
        %v1219 = vunpack.c.l.b16 %v743
        %v1220 = vunpack.c.l.b16 %v744
        %v1221 = vunpack.c.l.b16 %v745
        %v1222 = vunpack.c.l.b16 %v746
        %v1223 = vunpack.c.l.b16 %v747
        %v1224 = vunpack.c.l.b16 %v748
        %v1225 = vunpack.c.l.b16 %v749
        %v1226 = vunpack.c.l.b16 %v750
        %v1227 = vunpack.c.l.b16 %v751
        %v1228 = vunpack.c.l.b16 %v752
        %v1229 = vunpack.c.l.b16 %v753
        %v1230 = vunpack.c.l.b16 %v754
        %v1231 = vunpack.c.l.b16 %v755
        %v1232 = vunpack.c.l.b16 %v756
        %v1233 = vunpack.c.l.b16 %v757
        %v1234 = vunpack.c.l.b16 %v758
        %v1235 = vunpack.c.l.b16 %v759
        %v1236 = vunpack.c.l.b16 %v760
        %v1237 = vunpack.c.l.b16 %v761
        %v1238 = vunpack.c.l.b16 %v762
        %v1239 = vunpack.c.l.b16 %v763
        %v1240 = vunpack.c.l.b16 %v764
        %v1241 = vunpack.c.l.b16 %v765
        %v1242 = vunpack.c.l.b16 %v766
        %v1243 = vunpack.c.l.b16 %v767
        %v1244 = vunpack.c.l.b16 %v768
        %v1245 = vunpack.c.l.b16 %v769
        %v1246 = vunpack.c.l.b16 %v770
        %v1247 = vunpack.c.l.b16 %v771
        %v1248 = vunpack.c.l.b16 %v772
        %v1249 = vunpack.c.l.b16 %v773
        %v1250 = vunpack.c.l.b16 %v774
        %v1251 = vunpack.c.l.b16 %v775
        %v1252 = vunpack.c.l.b16 %v776
        %v1253 = vunpack.c.l.b16 %v777
        %v1254 = vunpack.c.l.b16 %v778
        %v1255 = vunpack.c.l.b16 %v779
        %v1256 = vunpack.c.l.b16 %v780
        %v1257 = vunpack.c.l.b16 %v781
        %v1258 = vunpack.c.l.b16 %v782
        %v1259 = vunpack.c.l.b16 %v783
        %v1260 = vunpack.c.l.b16 %v784
        %v1261 = vunpack.c.l.b16 %v785
        %v1262 = vunpack.c.l.b16 %v786
        %v1263 = vunpack.c.l.b16 %v787
        %v1264 = vunpack.c.l.b16 %v788
        %v1265 = vunpack.c.l.b16 %v789
        %v1266 = vunpack.c.l.b16 %v790
        %v1267 = vunpack.c.l.b16 %v791
        %v1268 = vunpack.c.l.b16 %v792
        %v1269 = vunpack.c.l.b16 %v793
        %v1270 = vunpack.c.l.b16 %v794
        %v1271 = vunpack.c.l.b16 %v795
        %v1272 = vunpack.c.l.b16 %v796
        %v1273 = vunpack.c.l.b16 %v797
        %v1274 = vunpack.c.l.b16 %v798
        %v1275 = vunpack.c.l.b16 %v799
        %v1276 = vunpack.c.l.b16 %v800
        %v1277 = vunpack.c.l.b16 %v801
        %v1278 = vunpack.c.l.b16 %v802
        %v1279 = vunpack.c.l.b16 %v803
        %v1280 = vunpack.c.l.b16 %v804
        %v1281 = vunpack.c.l.b16 %v805
        %v1282 = vunpack.c.l.b16 %v806
        %v1283 = vunpack.c.l.b16 %v807
        %v1284 = vunpack.c.l.b16 %v808
        %v1285 = vunpack.c.l.b16 %v809
        %v1286 = vunpack.c.l.b16 %v810
        %v1287 = vunpack.c.l.b16 %v811
        %v1288 = vunpack.c.l.b16 %v812
        %v1289 = vunpack.c.l.b16 %v813
        %v1290 = vunpack.c.l.b16 %v814
        %v1291 = vunpack.c.l.b16 %v815
        %v1292 = vunpack.c.l.b16 %v816
        %v1293 = vunpack.c.l.b16 %v817
        %v1294 = vunpack.c.l.b16 %v818
        %v1295 = vunpack.c.l.b16 %v819
        %v1296 = vunpack.c.l.b16 %v820
        %v1297 = vunpack.c.l.b16 %v821
        %v1298 = vunpack.c.l.b16 %v822
        %v1299 = vunpack.c.l.b16 %v823
        %v1300 = vunpack.c.l.b16 %v824
        %v1301 = vunpack.c.l.b16 %v825
        %v1302 = vunpack.c.l.b16 %v826
        %v1303 = vunpack.c.l.b16 %v827
        %v1304 = vunpack.c.l.b16 %v828
        %v1305 = vunpack.c.l.b16 %v829
        %v1306 = vunpack.c.l.b16 %v830
        %v1307 = vunpack.c.l.b16 %v831
        %v1308 = vunpack.c.l.b16 %v832
        %v1309 = vunpack.c.l.b16 %v833
        %v1310 = vunpack.c.l.b16 %v834
        %v1311 = vunpack.c.l.b16 %v835
        %v1312 = vunpack.c.l.b16 %v836
        %v1313 = vunpack.c.l.b16 %v837
        %v1314 = vunpack.c.l.b16 %v838
        %v1315 = vunpack.c.l.b16 %v839
        %v1316 = vunpack.c.l.b16 %v840
        %v1317 = vunpack.c.l.b16 %v841
        %v1318 = vunpack.c.l.b16 %v842
        %v1319 = vunpack.c.l.b16 %v843
        %v1320 = vunpack.c.l.b16 %v844
        %v1321 = vunpack.c.l.b16 %v845
        %v1322 = vunpack.c.l.b16 %v846
        %v1323 = vunpack.c.l.b16 %v847
        %v1324 = vunpack.c.l.b16 %v848
        %v1325 = vunpack.c.l.b16 %v849
        %v1326 = vpack.c.b16 %v1183, %v1182
        %v1327 = vpack.c.b16 %v1185, %v1184
        %v1328 = vpack.c.b16 %v1187, %v1186
        %v1329 = vpack.c.b16 %v1189, %v1188
        %v1330 = vpack.c.b16 %v1191, %v1190
        %v1331 = vpack.c.b16 %v1193, %v1192
        %v1332 = vpack.c.b16 %v1195, %v1194
        %v1333 = vpack.c.b16 %v1197, %v1196
        %v1334 = vpack.c.b16 %v1199, %v1198
        %v1335 = vpack.c.b16 %v1201, %v1200
        %v1336 = vpack.c.b16 %v1203, %v1202
        %v1337 = vpack.c.b16 %v1205, %v1204
        %v1338 = vpack.c.b16 %v1207, %v1206
        %v1339 = vpack.c.b16 %v1209, %v1208
        %v1340 = vpack.c.b16 %v1211, %v1210
        %v1341 = vpack.c.b16 %v1213, %v1212
        %v1342 = vpack.c.b16 %v1215, %v1214
        %v1343 = vpack.c.b16 %v1217, %v1216
        %v1344 = vpack.c.b16 %v1219, %v1218
        %v1345 = vpack.c.b16 %v1221, %v1220
        %v1346 = vpack.c.b16 %v1223, %v1222
        %v1347 = vpack.c.b16 %v1225, %v1224
        %v1348 = vpack.c.b16 %v1227, %v1226
        %v1349 = vpack.c.b16 %v1229, %v1228
        %v1350 = vpack.c.b16 %v1231, %v1230
        %v1351 = vpack.c.b16 %v1233, %v1232
        %v1352 = vpack.c.b16 %v1235, %v1234
        %v1353 = vpack.c.b16 %v1237, %v1236
        %v1354 = vpack.c.b16 %v1239, %v1238
        %v1355 = vpack.c.b16 %v1241, %v1240
        %v1356 = vpack.c.b16 %v1243, %v1242
        %v1357 = vpack.c.b16 %v1245, %v1244
        %v1358 = vpack.c.b16 %v1247, %v1246
        %v1359 = vpack.c.b16 %v1249, %v1248
        %v1360 = vpack.c.b16 %v1251, %v1250
        %v1361 = vpack.c.b16 %v1253, %v1252
        %v1362 = vpack.c.b16 %v1255, %v1254
        %v1363 = vpack.c.b16 %v1257, %v1256
        %v1364 = vpack.c.b16 %v1259, %v1258
        %v1365 = vpack.c.b16 %v1261, %v1260
        %v1366 = vpack.c.b16 %v1263, %v1262
        %v1367 = vpack.c.b16 %v1265, %v1264
        %v1368 = vpack.c.b16 %v1267, %v1266
        %v1369 = vpack.c.b16 %v1269, %v1268
        %v1370 = vpack.c.b16 %v1271, %v1270
        %v1371 = vpack.c.b16 %v1273, %v1272
        %v1372 = vpack.c.b16 %v1275, %v1274
        %v1373 = vpack.c.b16 %v1277, %v1276
        %v1374 = vpack.c.b16 %v1279, %v1278
        %v1375 = vpack.c.b16 %v1281, %v1280
        %v1376 = vpack.c.b16 %v1283, %v1282
        %v1377 = vpack.c.b16 %v1285, %v1284
        %v1378 = vpack.c.b16 %v1287, %v1286
        %v1379 = vpack.c.b16 %v1289, %v1288
        %v1380 = vpack.c.b16 %v1291, %v1290
        %v1381 = vpack.c.b16 %v1293, %v1292
        %v1382 = vpack.c.b16 %v1295, %v1294
        %v1383 = vpack.c.b16 %v1297, %v1296
        %v1384 = vpack.c.b16 %v1299, %v1298
        %v1385 = vpack.c.b16 %v1301, %v1300
        %v1386 = vpack.c.b16 %v1303, %v1302
        %v1387 = vpack.c.b16 %v1305, %v1304
        %v1388 = vpack.c.b16 %v1307, %v1306
        %v1389 = vpack.c.b16 %v1309, %v1308
        %v1390 = vpack.c.b16 %v1311, %v1310
        %v1391 = vpack.c.b16 %v1313, %v1312
        %v1392 = vpack.c.b16 %v1315, %v1314
        %v1393 = vpack.c.b16 %v1317, %v1316
        %v1394 = vpack.c.b16 %v1319, %v1318
        %v1395 = vpack.c.b16 %v1321, %v1320
        %v1396 = vpack.c.b16 %v1323, %v1322
        %v1397 = vpack.c.b16 %v1325, %v1324
        %1470 = vmatpush.bf16.msra.mxu0 %v1333
        %1471 = vmatpush.bf16.msra.mxu0 %v1332
        %1472 = vmatpush.bf16.msra.mxu0 %v1331
        %1473 = vmatpush.bf16.msra.mxu0 %v1330
        %1474 = vmatpush.bf16.msra.mxu0 %v1329
        %1475 = vmatpush.bf16.msra.mxu0 %v1328
        %1476 = vmatpush.bf16.msra.mxu0 %v1327
        %1477 = vmatpush.bf16.msra.mxu0 %v1326
        %1478 = vmatmul.bf16.gmra.mxu0 %v966
        %v1479 = vpop.f32.mrf.mxu0
        %v1480 = vadd.f32 %v852, %v1479
        %v1481 = vpop.f32.mrf.mxu0
        %v1482 = vadd.f32 %v852, %v1481
        %1483 = vmatmul.bf16.gmra.mxu0 %v975
        %v1484 = vpop.f32.mrf.mxu0
        %v1485 = vadd.f32 %v852, %v1484
        %v1486 = vpop.f32.mrf.mxu0
        %v1487 = vadd.f32 %v852, %v1486
        %1488 = vmatmul.bf16.gmra.mxu0 %v984
        %v1489 = vpop.f32.mrf.mxu0
        %v1490 = vadd.f32 %v852, %v1489
        %v1491 = vpop.f32.mrf.mxu0
        %v1492 = vadd.f32 %v852, %v1491
        %1493 = vmatmul.bf16.gmra.mxu0 %v993
        %v1494 = vpop.f32.mrf.mxu0
        %v1495 = vadd.f32 %v852, %v1494
        %v1496 = vpop.f32.mrf.mxu0
        %v1497 = vadd.f32 %v852, %v1496
        %1498 = vdwg.mxu0
        %1499 = vmatpush.bf16.msra.mxu0 %v1341
        %1500 = vmatpush.bf16.msra.mxu0 %v1340
        %1501 = vmatpush.bf16.msra.mxu0 %v1339
        %1502 = vmatpush.bf16.msra.mxu0 %v1338
        %1503 = vmatpush.bf16.msra.mxu0 %v1337
        %1504 = vmatpush.bf16.msra.mxu0 %v1336
        %1505 = vmatpush.bf16.msra.mxu0 %v1335
        %1506 = vmatpush.bf16.msra.mxu0 %v1334
        %1507 = vmatmul.bf16.gmra.mxu0 %v967
        %v1508 = vpop.f32.mrf.mxu0
        %v1509 = vadd.f32 %v1480, %v1508
        %v1510 = vpop.f32.mrf.mxu0
        %v1511 = vadd.f32 %v1482, %v1510
        %1512 = vmatmul.bf16.gmra.mxu0 %v976
        %v1513 = vpop.f32.mrf.mxu0
        %v1514 = vadd.f32 %v1485, %v1513
        %v1515 = vpop.f32.mrf.mxu0
        %v1516 = vadd.f32 %v1487, %v1515
        %1517 = vmatmul.bf16.gmra.mxu0 %v985
        %v1518 = vpop.f32.mrf.mxu0
        %v1519 = vadd.f32 %v1490, %v1518
        %v1520 = vpop.f32.mrf.mxu0
        %v1521 = vadd.f32 %v1492, %v1520
        %1522 = vmatmul.bf16.gmra.mxu0 %v994
        %v1523 = vpop.f32.mrf.mxu0
        %v1524 = vadd.f32 %v1495, %v1523
        %v1525 = vpop.f32.mrf.mxu0
        %v1526 = vadd.f32 %v1497, %v1525
        %1527 = vdwg.mxu0
        %1528 = vmatpush.bf16.msra.mxu0 %v1349
        %1529 = vmatpush.bf16.msra.mxu0 %v1348
        %1530 = vmatpush.bf16.msra.mxu0 %v1347
        %1531 = vmatpush.bf16.msra.mxu0 %v1346
        %1532 = vmatpush.bf16.msra.mxu0 %v1345
        %1533 = vmatpush.bf16.msra.mxu0 %v1344
        %1534 = vmatpush.bf16.msra.mxu0 %v1343
        %1535 = vmatpush.bf16.msra.mxu0 %v1342
        %1536 = vmatmul.bf16.gmra.mxu0 %v968
        %v1537 = vpop.f32.mrf.mxu0
        %v1538 = vadd.f32 %v1509, %v1537
        %v1539 = vpop.f32.mrf.mxu0
        %v1540 = vadd.f32 %v1511, %v1539
        %1541 = vmatmul.bf16.gmra.mxu0 %v977
        %v1542 = vpop.f32.mrf.mxu0
        %v1543 = vadd.f32 %v1514, %v1542
        %v1544 = vpop.f32.mrf.mxu0
        %v1545 = vadd.f32 %v1516, %v1544
        %1546 = vmatmul.bf16.gmra.mxu0 %v986
        %v1547 = vpop.f32.mrf.mxu0
        %v1548 = vadd.f32 %v1519, %v1547
        %v1549 = vpop.f32.mrf.mxu0
        %v1550 = vadd.f32 %v1521, %v1549
        %1551 = vmatmul.bf16.gmra.mxu0 %v995
        %v1552 = vpop.f32.mrf.mxu0
        %v1553 = vadd.f32 %v1524, %v1552
        %v1554 = vpop.f32.mrf.mxu0
        %v1555 = vadd.f32 %v1526, %v1554
        %1556 = vdwg.mxu0
        %1557 = vmatpush.bf16.msra.mxu0 %v1357
        %1558 = vmatpush.bf16.msra.mxu0 %v1356
        %1559 = vmatpush.bf16.msra.mxu0 %v1355
        %1560 = vmatpush.bf16.msra.mxu0 %v1354
        %1561 = vmatpush.bf16.msra.mxu0 %v1353
        %1562 = vmatpush.bf16.msra.mxu0 %v1352
        %1563 = vmatpush.bf16.msra.mxu0 %v1351
        %1564 = vmatpush.bf16.msra.mxu0 %v1350
        %1565 = vmatmul.bf16.gmra.mxu0 %v969
        %v1566 = vpop.f32.mrf.mxu0
        %v1567 = vadd.f32 %v1538, %v1566
        %v1568 = vpop.f32.mrf.mxu0
        %v1569 = vadd.f32 %v1540, %v1568
        %1570 = vmatmul.bf16.gmra.mxu0 %v978
        %v1571 = vpop.f32.mrf.mxu0
        %v1572 = vadd.f32 %v1543, %v1571
        %v1573 = vpop.f32.mrf.mxu0
        %v1574 = vadd.f32 %v1545, %v1573
        %1575 = vmatmul.bf16.gmra.mxu0 %v987
        %v1576 = vpop.f32.mrf.mxu0
        %v1577 = vadd.f32 %v1548, %v1576
        %v1578 = vpop.f32.mrf.mxu0
        %v1579 = vadd.f32 %v1550, %v1578
        %1580 = vmatmul.bf16.gmra.mxu0 %v996
        %v1581 = vpop.f32.mrf.mxu0
        %v1582 = vadd.f32 %v1553, %v1581
        %v1583 = vpop.f32.mrf.mxu0
        %v1584 = vadd.f32 %v1555, %v1583
        %1585 = vdwg.mxu0
        %1586 = vmatpush.bf16.msra.mxu0 %v1365
        %1587 = vmatpush.bf16.msra.mxu0 %v1364
        %1588 = vmatpush.bf16.msra.mxu0 %v1363
        %1589 = vmatpush.bf16.msra.mxu0 %v1362
        %1590 = vmatpush.bf16.msra.mxu0 %v1361
        %1591 = vmatpush.bf16.msra.mxu0 %v1360
        %1592 = vmatpush.bf16.msra.mxu0 %v1359
        %1593 = vmatpush.bf16.msra.mxu0 %v1358
        %1594 = vmatmul.bf16.gmra.mxu0 %v970
        %v1595 = vpop.f32.mrf.mxu0
        %v1596 = vadd.f32 %v1567, %v1595
        %v1597 = vpop.f32.mrf.mxu0
        %v1598 = vadd.f32 %v1569, %v1597
        %1599 = vmatmul.bf16.gmra.mxu0 %v979
        %v1600 = vpop.f32.mrf.mxu0
        %v1601 = vadd.f32 %v1572, %v1600
        %v1602 = vpop.f32.mrf.mxu0
        %v1603 = vadd.f32 %v1574, %v1602
        %1604 = vmatmul.bf16.gmra.mxu0 %v988
        %v1605 = vpop.f32.mrf.mxu0
        %v1606 = vadd.f32 %v1577, %v1605
        %v1607 = vpop.f32.mrf.mxu0
        %v1608 = vadd.f32 %v1579, %v1607
        %1609 = vmatmul.bf16.gmra.mxu0 %v997
        %v1610 = vpop.f32.mrf.mxu0
        %v1611 = vadd.f32 %v1582, %v1610
        %v1612 = vpop.f32.mrf.mxu0
        %v1613 = vadd.f32 %v1584, %v1612
        %1614 = vdwg.mxu0
        %1615 = vmatpush.bf16.msra.mxu0 %v1373
        %1616 = vmatpush.bf16.msra.mxu0 %v1372
        %1617 = vmatpush.bf16.msra.mxu0 %v1371
        %1618 = vmatpush.bf16.msra.mxu0 %v1370
        %1619 = vmatpush.bf16.msra.mxu0 %v1369
        %1620 = vmatpush.bf16.msra.mxu0 %v1368
        %1621 = vmatpush.bf16.msra.mxu0 %v1367
        %1622 = vmatpush.bf16.msra.mxu0 %v1366
        %1623 = vmatmul.bf16.gmra.mxu0 %v971
        %v1624 = vpop.f32.mrf.mxu0
        %v1625 = vadd.f32 %v1596, %v1624
        %v1626 = vpop.f32.mrf.mxu0
        %v1627 = vadd.f32 %v1598, %v1626
        %1628 = vmatmul.bf16.gmra.mxu0 %v980
        %v1629 = vpop.f32.mrf.mxu0
        %v1630 = vadd.f32 %v1601, %v1629
        %v1631 = vpop.f32.mrf.mxu0
        %v1632 = vadd.f32 %v1603, %v1631
        %1633 = vmatmul.bf16.gmra.mxu0 %v989
        %v1634 = vpop.f32.mrf.mxu0
        %v1635 = vadd.f32 %v1606, %v1634
        %v1636 = vpop.f32.mrf.mxu0
        %v1637 = vadd.f32 %v1608, %v1636
        %1638 = vmatmul.bf16.gmra.mxu0 %v998
        %v1639 = vpop.f32.mrf.mxu0
        %v1640 = vadd.f32 %v1611, %v1639
        %v1641 = vpop.f32.mrf.mxu0
        %v1642 = vadd.f32 %v1613, %v1641
        %1643 = vdwg.mxu0
        %1644 = vmatpush.bf16.msra.mxu0 %v1381
        %1645 = vmatpush.bf16.msra.mxu0 %v1380
        %1646 = vmatpush.bf16.msra.mxu0 %v1379
        %1647 = vmatpush.bf16.msra.mxu0 %v1378
        %1648 = vmatpush.bf16.msra.mxu0 %v1377
        %1649 = vmatpush.bf16.msra.mxu0 %v1376
        %1650 = vmatpush.bf16.msra.mxu0 %v1375
        %1651 = vmatpush.bf16.msra.mxu0 %v1374
        %1652 = vmatmul.bf16.gmra.mxu0 %v972
        %v1653 = vpop.f32.mrf.mxu0
        %v1654 = vadd.f32 %v1625, %v1653
        %v1655 = vpop.f32.mrf.mxu0
        %v1656 = vadd.f32 %v1627, %v1655
        %1657 = vmatmul.bf16.gmra.mxu0 %v981
        %v1658 = vpop.f32.mrf.mxu0
        %v1659 = vadd.f32 %v1630, %v1658
        %v1660 = vpop.f32.mrf.mxu0
        %v1661 = vadd.f32 %v1632, %v1660
        %1662 = vmatmul.bf16.gmra.mxu0 %v990
        %v1663 = vpop.f32.mrf.mxu0
        %v1664 = vadd.f32 %v1635, %v1663
        %v1665 = vpop.f32.mrf.mxu0
        %v1666 = vadd.f32 %v1637, %v1665
        %1667 = vmatmul.bf16.gmra.mxu0 %v999
        %v1668 = vpop.f32.mrf.mxu0
        %v1669 = vadd.f32 %v1640, %v1668
        %v1670 = vpop.f32.mrf.mxu0
        %v1671 = vadd.f32 %v1642, %v1670
        %1672 = vdwg.mxu0
        %1673 = vmatpush.bf16.msra.mxu0 %v1389
        %1674 = vmatpush.bf16.msra.mxu0 %v1388
        %1675 = vmatpush.bf16.msra.mxu0 %v1387
        %1676 = vmatpush.bf16.msra.mxu0 %v1386
        %1677 = vmatpush.bf16.msra.mxu0 %v1385
        %1678 = vmatpush.bf16.msra.mxu0 %v1384
        %1679 = vmatpush.bf16.msra.mxu0 %v1383
        %1680 = vmatpush.bf16.msra.mxu0 %v1382
        %1681 = vmatmul.bf16.gmra.mxu0 %v973
        %v1682 = vpop.f32.mrf.mxu0
        %v1683 = vadd.f32 %v1654, %v1682
        %v1684 = vpop.f32.mrf.mxu0
        %v1685 = vadd.f32 %v1656, %v1684
        %1686 = vmatmul.bf16.gmra.mxu0 %v982
        %v1687 = vpop.f32.mrf.mxu0
        %v1688 = vadd.f32 %v1659, %v1687
        %v1689 = vpop.f32.mrf.mxu0
        %v1690 = vadd.f32 %v1661, %v1689
        %1691 = vmatmul.bf16.gmra.mxu0 %v991
        %v1692 = vpop.f32.mrf.mxu0
        %v1693 = vadd.f32 %v1664, %v1692
        %v1694 = vpop.f32.mrf.mxu0
        %v1695 = vadd.f32 %v1666, %v1694
        %1696 = vmatmul.bf16.gmra.mxu0 %v1000
        %v1697 = vpop.f32.mrf.mxu0
        %v1698 = vadd.f32 %v1669, %v1697
        %v1699 = vpop.f32.mrf.mxu0
        %v1700 = vadd.f32 %v1671, %v1699
        %1701 = vdwg.mxu0
        %1702 = vmatpush.bf16.msra.mxu0 %v1397
        %1703 = vmatpush.bf16.msra.mxu0 %v1396
        %1704 = vmatpush.bf16.msra.mxu0 %v1395
        %1705 = vmatpush.bf16.msra.mxu0 %v1394
        %1706 = vmatpush.bf16.msra.mxu0 %v1393
        %1707 = vmatpush.bf16.msra.mxu0 %v1392
        %1708 = vmatpush.bf16.msra.mxu0 %v1391
        %1709 = vmatpush.bf16.msra.mxu0 %v1390
        %1710 = vmatmul.bf16.gmra.mxu0 %v974
        %v1711 = vpop.f32.mrf.mxu0
        %v1712 = vadd.f32 %v1683, %v1711
        %v1713 = vpop.f32.mrf.mxu0
        %v1714 = vadd.f32 %v1685, %v1713
        %1715 = vmatmul.bf16.gmra.mxu0 %v983
        %v1716 = vpop.f32.mrf.mxu0
        %v1717 = vadd.f32 %v1688, %v1716
        %v1718 = vpop.f32.mrf.mxu0
        %v1719 = vadd.f32 %v1690, %v1718
        %1720 = vmatmul.bf16.gmra.mxu0 %v992
        %v1721 = vpop.f32.mrf.mxu0
        %v1722 = vadd.f32 %v1693, %v1721
        %v1723 = vpop.f32.mrf.mxu0
        %v1724 = vadd.f32 %v1695, %v1723
        %1725 = vmatmul.bf16.gmra.mxu0 %v1001
        %v1726 = vpop.f32.mrf.mxu0
        %v1727 = vadd.f32 %v1698, %v1726
        %v1728 = vpop.f32.mrf.mxu0
        %v1729 = vadd.f32 %v1700, %v1728
        %1730 = vdwg.mxu0
        %v1731 = vmul.f32 %v1712, 0.1
        %v1732 = vmul.f32 %v1714, 0.1
        %v1733 = vmul.f32 %v1717, 0.1
        %v1734 = vmul.f32 %v1719, 0.1
        %v1735 = vmul.f32 %v1722, 0.1
        %v1736 = vmul.f32 %v1724, 0.1
        %v1737 = vmul.f32 %v1727, 0.1
        %v1738 = vmul.f32 %v1729, 0.1
        %v1739 = vmax.f32 %v1712, %v1731
        %v1740 = vmax.f32 %v1714, %v1732
        %v1741 = vmax.f32 %v1717, %v1733
        %v1742 = vmax.f32 %v1719, %v1734
        %v1743 = vmax.f32 %v1722, %v1735
        %v1744 = vmax.f32 %v1724, %v1736
        %v1745 = vmax.f32 %v1727, %v1737
        %v1746 = vmax.f32 %v1729, %v1738
        %1747 = vst [vmem:[%s440 + $0x1] sm:$0xff] %v1739
        %1748 = vst [vmem:[%s440 + $0x11] sm:$0xff] %v1740
        %1749 = vst [vmem:[%s440 + $0x21] sm:$0xff] %v1741
        %1750 = vst [vmem:[%s440 + $0x31] sm:$0xff] %v1742
        %1751 = vst [vmem:[%s440 + $0x41] sm:$0xff] %v1743
        %1752 = vst [vmem:[%s440 + $0x51] sm:$0xff] %v1744
        %1753 = vst [vmem:[%s440 + $0x61] sm:$0xff] %v1745
        %1754 = vst [vmem:[%s440 + $0x71] sm:$0xff] %v1746
        %v1755 = vld [vmem:[#allocation2] sm:$0xff]
        %v1756 = vld [vmem:[#allocation2 + $0x10] sm:$0xff]
        %v1757 = vld [vmem:[#allocation2 + $0x20] sm:$0xff]
        %v1758 = vld [vmem:[#allocation2 + $0x30] sm:$0xff]
        %v1759 = vld [vmem:[#allocation2 + $0x40] sm:$0xff]
        %v1760 = vld [vmem:[#allocation2 + $0x50] sm:$0xff]
        %v1761 = vld [vmem:[#allocation2 + $0x60] sm:$0xff]
        %v1762 = vld [vmem:[#allocation2 + $0x70] sm:$0xff]
        %v1763 = vpack.c.bf16 %v1755, %v1755
        %v1764 = vpack.c.bf16 %v1756, %v1756
        %v1765 = vpack.c.bf16 %v1757, %v1757
        %v1766 = vpack.c.bf16 %v1758, %v1758
        %v1767 = vpack.c.bf16 %v1759, %v1759
        %v1768 = vpack.c.bf16 %v1760, %v1760
        %v1769 = vpack.c.bf16 %v1761, %v1761
        %v1770 = vpack.c.bf16 %v1762, %v1762
        %1771 = vst [vmem:[#allocation4] sm:$0xf] %v1763
        %1772 = vst [vmem:[#allocation4 + $0x24] sm:$0xf] %v1764
        %1773 = vst [vmem:[#allocation4 + $0x48] sm:$0xf] %v1765
        %1774 = vst [vmem:[#allocation4 + $0x6c] sm:$0xf] %v1766
        %1775 = vst [vmem:[#allocation4 + $0x90] sm:$0xf] %v1767
        %1776 = vst [vmem:[#allocation4 + $0xb4] sm:$0xf] %v1768
        %1777 = vst [vmem:[#allocation4 + $0xd8] sm:$0xf] %v1769
        %1778 = vst [vmem:[#allocation4 + $0xfc] sm:$0xf] %v1770
        %v1779 = vld [vmem:[#allocation2 + $0x1] sm:$0xff]
        %v1780 = vld [vmem:[#allocation2 + $0x11] sm:$0xff]
        %v1781 = vld [vmem:[#allocation2 + $0x21] sm:$0xff]
        %v1782 = vld [vmem:[#allocation2 + $0x31] sm:$0xff]
        %v1783 = vld [vmem:[#allocation2 + $0x41] sm:$0xff]
        %v1784 = vld [vmem:[#allocation2 + $0x51] sm:$0xff]
        %v1785 = vld [vmem:[#allocation2 + $0x61] sm:$0xff]
        %v1786 = vld [vmem:[#allocation2 + $0x71] sm:$0xff]
        %v1787 = vpack.c.bf16 %v1779, %v1779
        %v1788 = vpack.c.bf16 %v1780, %v1780
        %v1789 = vpack.c.bf16 %v1781, %v1781
        %v1790 = vpack.c.bf16 %v1782, %v1782
        %v1791 = vpack.c.bf16 %v1783, %v1783
        %v1792 = vpack.c.bf16 %v1784, %v1784
        %v1793 = vpack.c.bf16 %v1785, %v1785
        %v1794 = vpack.c.bf16 %v1786, %v1786
        %1795 = vst [vmem:[#allocation4 + $0x4] sm:$0xf] %v1787
        %1796 = vst [vmem:[#allocation4 + $0x28] sm:$0xf] %v1788
        %1797 = vst [vmem:[#allocation4 + $0x4c] sm:$0xf] %v1789
        %1798 = vst [vmem:[#allocation4 + $0x70] sm:$0xf] %v1790
        %1799 = vst [vmem:[#allocation4 + $0x94] sm:$0xf] %v1791
        %1800 = vst [vmem:[#allocation4 + $0xb8] sm:$0xf] %v1792
        %1801 = vst [vmem:[#allocation4 + $0xdc] sm:$0xf] %v1793
        %1802 = vst [vmem:[#allocation4 + $0x100] sm:$0xf] %v1794
        %v1803 = vld [vmem:[#allocation2 + $0x2] sm:$0xff]
        %v1804 = vld [vmem:[#allocation2 + $0x12] sm:$0xff]
        %v1805 = vld [vmem:[#allocation2 + $0x22] sm:$0xff]
        %v1806 = vld [vmem:[#allocation2 + $0x32] sm:$0xff]
        %v1807 = vld [vmem:[#allocation2 + $0x42] sm:$0xff]
        %v1808 = vld [vmem:[#allocation2 + $0x52] sm:$0xff]
        %v1809 = vld [vmem:[#allocation2 + $0x62] sm:$0xff]
        %v1810 = vld [vmem:[#allocation2 + $0x72] sm:$0xff]
        %v1811 = vpack.c.bf16 %v1803, %v1803
        %v1812 = vpack.c.bf16 %v1804, %v1804
        %v1813 = vpack.c.bf16 %v1805, %v1805
        %v1814 = vpack.c.bf16 %v1806, %v1806
        %v1815 = vpack.c.bf16 %v1807, %v1807
        %v1816 = vpack.c.bf16 %v1808, %v1808
        %v1817 = vpack.c.bf16 %v1809, %v1809
        %v1818 = vpack.c.bf16 %v1810, %v1810
        %1819 = vst [vmem:[#allocation4 + $0x8] sm:$0xf] %v1811
        %1820 = vst [vmem:[#allocation4 + $0x2c] sm:$0xf] %v1812
        %1821 = vst [vmem:[#allocation4 + $0x50] sm:$0xf] %v1813
        %1822 = vst [vmem:[#allocation4 + $0x74] sm:$0xf] %v1814
        %1823 = vst [vmem:[#allocation4 + $0x98] sm:$0xf] %v1815
        %1824 = vst [vmem:[#allocation4 + $0xbc] sm:$0xf] %v1816
        %1825 = vst [vmem:[#allocation4 + $0xe0] sm:$0xf] %v1817
        %1826 = vst [vmem:[#allocation4 + $0x104] sm:$0xf] %v1818
        %v1827 = vld [vmem:[%s440] sm:$0xff]
        %v1828 = vld [vmem:[%s440 + $0x10] sm:$0xff]
        %v1829 = vld [vmem:[%s440 + $0x20] sm:$0xff]
        %v1830 = vld [vmem:[%s440 + $0x30] sm:$0xff]
        %v1831 = vld [vmem:[%s440 + $0x40] sm:$0xff]
        %v1832 = vld [vmem:[%s440 + $0x50] sm:$0xff]
        %v1833 = vld [vmem:[%s440 + $0x60] sm:$0xff]
        %v1834 = vld [vmem:[%s440 + $0x70] sm:$0xff]
        %v1835 = vpack.c.bf16 %v1827, %v1827
        %v1836 = vpack.c.bf16 %v1828, %v1828
        %v1837 = vpack.c.bf16 %v1829, %v1829
        %v1838 = vpack.c.bf16 %v1830, %v1830
        %v1839 = vpack.c.bf16 %v1831, %v1831
        %v1840 = vpack.c.bf16 %v1832, %v1832
        %v1841 = vpack.c.bf16 %v1833, %v1833
        %v1842 = vpack.c.bf16 %v1834, %v1834
        %1843 = vst [vmem:[#allocation4 + $0xc] sm:$0xf] %v1835
        %1844 = vst [vmem:[#allocation4 + $0x30] sm:$0xf] %v1836
        %1845 = vst [vmem:[#allocation4 + $0x54] sm:$0xf] %v1837
        %1846 = vst [vmem:[#allocation4 + $0x78] sm:$0xf] %v1838
        %1847 = vst [vmem:[#allocation4 + $0x9c] sm:$0xf] %v1839
        %1848 = vst [vmem:[#allocation4 + $0xc0] sm:$0xf] %v1840
        %1849 = vst [vmem:[#allocation4 + $0xe4] sm:$0xf] %v1841
        %1850 = vst [vmem:[#allocation4 + $0x108] sm:$0xf] %v1842
        %v1851 = vld [vmem:[%s440 + $0x1] sm:$0xff]
        %v1852 = vld [vmem:[%s440 + $0x11] sm:$0xff]
        %v1853 = vld [vmem:[%s440 + $0x21] sm:$0xff]
        %v1854 = vld [vmem:[%s440 + $0x31] sm:$0xff]
        %v1855 = vld [vmem:[%s440 + $0x41] sm:$0xff]
        %v1856 = vld [vmem:[%s440 + $0x51] sm:$0xff]
        %v1857 = vld [vmem:[%s440 + $0x61] sm:$0xff]
        %v1858 = vld [vmem:[%s440 + $0x71] sm:$0xff]
        %v1859 = vpack.c.bf16 %v1851, %v1851
        %v1860 = vpack.c.bf16 %v1852, %v1852
        %v1861 = vpack.c.bf16 %v1853, %v1853
        %v1862 = vpack.c.bf16 %v1854, %v1854
        %v1863 = vpack.c.bf16 %v1855, %v1855
        %v1864 = vpack.c.bf16 %v1856, %v1856
        %v1865 = vpack.c.bf16 %v1857, %v1857
        %v1866 = vpack.c.bf16 %v1858, %v1858
        %1867 = vst [vmem:[#allocation4 + $0x10] sm:$0xf] %v1859
        %1868 = vst [vmem:[#allocation4 + $0x34] sm:$0xf] %v1860
        %1869 = vst [vmem:[#allocation4 + $0x58] sm:$0xf] %v1861
        %1870 = vst [vmem:[#allocation4 + $0x7c] sm:$0xf] %v1862
        %1871 = vst [vmem:[#allocation4 + $0xa0] sm:$0xf] %v1863
        %1872 = vst [vmem:[#allocation4 + $0xc4] sm:$0xf] %v1864
        %1873 = vst [vmem:[#allocation4 + $0xe8] sm:$0xf] %v1865
        %1874 = vst [vmem:[#allocation4 + $0x10c] sm:$0xf] %v1866
        %v1875 = vld [vmem:[%s440 + $0x2] sm:$0xff]
        %v1876 = vld [vmem:[%s440 + $0x12] sm:$0xff]
        %v1877 = vld [vmem:[%s440 + $0x22] sm:$0xff]
        %v1878 = vld [vmem:[%s440 + $0x32] sm:$0xff]
        %v1879 = vld [vmem:[%s440 + $0x42] sm:$0xff]
        %v1880 = vld [vmem:[%s440 + $0x52] sm:$0xff]
        %v1881 = vld [vmem:[%s440 + $0x62] sm:$0xff]
        %v1882 = vld [vmem:[%s440 + $0x72] sm:$0xff]
        %v1883 = vpack.c.bf16 %v1875, %v1875
        %v1884 = vpack.c.bf16 %v1876, %v1876
        %v1885 = vpack.c.bf16 %v1877, %v1877
        %v1886 = vpack.c.bf16 %v1878, %v1878
        %v1887 = vpack.c.bf16 %v1879, %v1879
        %v1888 = vpack.c.bf16 %v1880, %v1880
        %v1889 = vpack.c.bf16 %v1881, %v1881
        %v1890 = vpack.c.bf16 %v1882, %v1882
        %1891 = vst [vmem:[#allocation4 + $0x14] sm:$0xf] %v1883
        %1892 = vst [vmem:[#allocation4 + $0x38] sm:$0xf] %v1884
        %1893 = vst [vmem:[#allocation4 + $0x5c] sm:$0xf] %v1885
        %1894 = vst [vmem:[#allocation4 + $0x80] sm:$0xf] %v1886
        %1895 = vst [vmem:[#allocation4 + $0xa4] sm:$0xf] %v1887
        %1896 = vst [vmem:[#allocation4 + $0xc8] sm:$0xf] %v1888
        %1897 = vst [vmem:[#allocation4 + $0xec] sm:$0xf] %v1889
        %1898 = vst [vmem:[#allocation4 + $0x110] sm:$0xf] %v1890
        %v1899 = vld [vmem:[%s593] sm:$0xff]
        %v1900 = vld [vmem:[%s593 + $0x10] sm:$0xff]
        %v1901 = vld [vmem:[%s593 + $0x20] sm:$0xff]
        %v1902 = vld [vmem:[%s593 + $0x30] sm:$0xff]
        %v1903 = vld [vmem:[%s593 + $0x40] sm:$0xff]
        %v1904 = vld [vmem:[%s593 + $0x50] sm:$0xff]
        %v1905 = vld [vmem:[%s593 + $0x60] sm:$0xff]
        %v1906 = vld [vmem:[%s593 + $0x70] sm:$0xff]
        %v1907 = vpack.c.bf16 %v1899, %v1899
        %v1908 = vpack.c.bf16 %v1900, %v1900
        %v1909 = vpack.c.bf16 %v1901, %v1901
        %v1910 = vpack.c.bf16 %v1902, %v1902
        %v1911 = vpack.c.bf16 %v1903, %v1903
        %v1912 = vpack.c.bf16 %v1904, %v1904
        %v1913 = vpack.c.bf16 %v1905, %v1905
        %v1914 = vpack.c.bf16 %v1906, %v1906
        %1915 = vst [vmem:[#allocation4 + $0x18] sm:$0xf] %v1907
        %1916 = vst [vmem:[#allocation4 + $0x3c] sm:$0xf] %v1908
        %1917 = vst [vmem:[#allocation4 + $0x60] sm:$0xf] %v1909
        %1918 = vst [vmem:[#allocation4 + $0x84] sm:$0xf] %v1910
        %1919 = vst [vmem:[#allocation4 + $0xa8] sm:$0xf] %v1911
        %1920 = vst [vmem:[#allocation4 + $0xcc] sm:$0xf] %v1912
        %1921 = vst [vmem:[#allocation4 + $0xf0] sm:$0xf] %v1913
        %1922 = vst [vmem:[#allocation4 + $0x114] sm:$0xf] %v1914
        %v1923 = vld [vmem:[%s593 + $0x1] sm:$0xff]
        %v1924 = vld [vmem:[%s593 + $0x11] sm:$0xff]
        %v1925 = vld [vmem:[%s593 + $0x21] sm:$0xff]
        %v1926 = vld [vmem:[%s593 + $0x31] sm:$0xff]
        %v1927 = vld [vmem:[%s593 + $0x41] sm:$0xff]
        %v1928 = vld [vmem:[%s593 + $0x51] sm:$0xff]
        %v1929 = vld [vmem:[%s593 + $0x61] sm:$0xff]
        %v1930 = vld [vmem:[%s593 + $0x71] sm:$0xff]
        %v1931 = vpack.c.bf16 %v1923, %v1923
        %v1932 = vpack.c.bf16 %v1924, %v1924
        %v1933 = vpack.c.bf16 %v1925, %v1925
        %v1934 = vpack.c.bf16 %v1926, %v1926
        %v1935 = vpack.c.bf16 %v1927, %v1927
        %v1936 = vpack.c.bf16 %v1928, %v1928
        %v1937 = vpack.c.bf16 %v1929, %v1929
        %v1938 = vpack.c.bf16 %v1930, %v1930
        %1939 = vst [vmem:[#allocation4 + $0x1c] sm:$0xf] %v1931
        %1940 = vst [vmem:[#allocation4 + $0x40] sm:$0xf] %v1932
        %1941 = vst [vmem:[#allocation4 + $0x64] sm:$0xf] %v1933
        %1942 = vst [vmem:[#allocation4 + $0x88] sm:$0xf] %v1934
        %1943 = vst [vmem:[#allocation4 + $0xac] sm:$0xf] %v1935
        %1944 = vst [vmem:[#allocation4 + $0xd0] sm:$0xf] %v1936
        %1945 = vst [vmem:[#allocation4 + $0xf4] sm:$0xf] %v1937
        %1946 = vst [vmem:[#allocation4 + $0x118] sm:$0xf] %v1938
        %v1947 = vld [vmem:[%s593 + $0x2] sm:$0xff]
        %v1948 = vld [vmem:[%s593 + $0x12] sm:$0xff]
        %v1949 = vld [vmem:[%s593 + $0x22] sm:$0xff]
        %v1950 = vld [vmem:[%s593 + $0x32] sm:$0xff]
        %v1951 = vld [vmem:[%s593 + $0x42] sm:$0xff]
        %v1952 = vld [vmem:[%s593 + $0x52] sm:$0xff]
        %v1953 = vld [vmem:[%s593 + $0x62] sm:$0xff]
        %v1954 = vld [vmem:[%s593 + $0x72] sm:$0xff]
        %v1955 = vpack.c.bf16 %v1947, %v1947
        %v1956 = vpack.c.bf16 %v1948, %v1948
        %v1957 = vpack.c.bf16 %v1949, %v1949
        %v1958 = vpack.c.bf16 %v1950, %v1950
        %v1959 = vpack.c.bf16 %v1951, %v1951
        %v1960 = vpack.c.bf16 %v1952, %v1952
        %v1961 = vpack.c.bf16 %v1953, %v1953
        %v1962 = vpack.c.bf16 %v1954, %v1954
        %1963 = vst [vmem:[#allocation4 + $0x20] sm:$0xf] %v1955
        %1964 = vst [vmem:[#allocation4 + $0x44] sm:$0xf] %v1956
        %1965 = vst [vmem:[#allocation4 + $0x68] sm:$0xf] %v1957
        %1966 = vst [vmem:[#allocation4 + $0x8c] sm:$0xf] %v1958
        %1967 = vst [vmem:[#allocation4 + $0xb0] sm:$0xf] %v1959
        %1968 = vst [vmem:[#allocation4 + $0xd4] sm:$0xf] %v1960
        %1969 = vst [vmem:[#allocation4 + $0xf8] sm:$0xf] %v1961
        %1970 = vst [vmem:[#allocation4 + $0x11c] sm:$0xf] %v1962
        %v1971 = vld [vmem:[#allocation4] sm:$0xff]
        %v1972 = vld [vmem:[#allocation4 + $0x8] sm:$0xff]
        %v1973 = vld [vmem:[#allocation4 + $0x10] sm:$0xff]
        %v1974 = vld [vmem:[#allocation4 + $0x18] sm:$0xff]
        %v1975 = vld [vmem:[#allocation4 + $0x20] sm:$0xf]
        %v1976 = vld [vmem:[#allocation4 + $0x24] sm:$0xff]
        %v1977 = vld [vmem:[#allocation4 + $0x2c] sm:$0xff]
        %v1978 = vld [vmem:[#allocation4 + $0x34] sm:$0xff]
        %v1979 = vld [vmem:[#allocation4 + $0x3c] sm:$0xff]
        %v1980 = vld [vmem:[#allocation4 + $0x44] sm:$0xf]
        %v1981 = vld [vmem:[#allocation4 + $0x48] sm:$0xff]
        %v1982 = vld [vmem:[#allocation4 + $0x50] sm:$0xff]
        %v1983 = vld [vmem:[#allocation4 + $0x58] sm:$0xff]
        %v1984 = vld [vmem:[#allocation4 + $0x60] sm:$0xff]
        %v1985 = vld [vmem:[#allocation4 + $0x68] sm:$0xf]
        %v1986 = vld [vmem:[#allocation4 + $0x6c] sm:$0xff]
        %v1987 = vld [vmem:[#allocation4 + $0x74] sm:$0xff]
        %v1988 = vld [vmem:[#allocation4 + $0x7c] sm:$0xff]
        %v1989 = vld [vmem:[#allocation4 + $0x84] sm:$0xff]
        %v1990 = vld [vmem:[#allocation4 + $0x8c] sm:$0xf]
        %v1991 = vld [vmem:[#allocation4 + $0x90] sm:$0xff]
        %v1992 = vld [vmem:[#allocation4 + $0x98] sm:$0xff]
        %v1993 = vld [vmem:[#allocation4 + $0xa0] sm:$0xff]
        %v1994 = vld [vmem:[#allocation4 + $0xa8] sm:$0xff]
        %v1995 = vld [vmem:[#allocation4 + $0xb0] sm:$0xf]
        %v1996 = vld [vmem:[#allocation4 + $0xb4] sm:$0xff]
        %v1997 = vld [vmem:[#allocation4 + $0xbc] sm:$0xff]
        %v1998 = vld [vmem:[#allocation4 + $0xc4] sm:$0xff]
        %v1999 = vld [vmem:[#allocation4 + $0xcc] sm:$0xff]
        %v2000 = vld [vmem:[#allocation4 + $0xd4] sm:$0xf]
        %v2001 = vld [vmem:[#allocation4 + $0xd8] sm:$0xff]
        %v2002 = vld [vmem:[#allocation4 + $0xe0] sm:$0xff]
        %v2003 = vld [vmem:[#allocation4 + $0xe8] sm:$0xff]
        %v2004 = vld [vmem:[#allocation4 + $0xf0] sm:$0xff]
        %v2005 = vld [vmem:[#allocation4 + $0xf8] sm:$0xf]
        %v2006 = vld [vmem:[#allocation4 + $0xfc] sm:$0xff]
        %v2007 = vld [vmem:[#allocation4 + $0x104] sm:$0xff]
        %v2008 = vld [vmem:[#allocation4 + $0x10c] sm:$0xff]
        %v2009 = vld [vmem:[#allocation4 + $0x114] sm:$0xff]
        %v2010 = vld [vmem:[#allocation4 + $0x11c] sm:$0xf]
        %v2011 = vld [vmem:[#allocation8] sm:$0xf]
        %v2012 = vld [vmem:[#allocation8 + $0x4] sm:$0xf]
        %v2013 = vld [vmem:[#allocation8 + $0x8] sm:$0xf]
        %v2014 = vld [vmem:[#allocation8 + $0xc] sm:$0xf]
        %v2015 = vld [vmem:[#allocation8 + $0x10] sm:$0xf]
        %v2016 = vld [vmem:[#allocation8 + $0x14] sm:$0xf]
        %v2017 = vld [vmem:[#allocation8 + $0x18] sm:$0xf]
        %v2018 = vld [vmem:[#allocation8 + $0x1c] sm:$0xf]
        %v2019 = vld [vmem:[#allocation8 + $0x20] sm:$0xf]
        %v2020 = vld [vmem:[#allocation8 + $0x24] sm:$0xf]
        %v2021 = vld [vmem:[#allocation8 + $0x28] sm:$0xf]
        %v2022 = vld [vmem:[#allocation8 + $0x2c] sm:$0xf]
        %v2023 = vld [vmem:[#allocation8 + $0x30] sm:$0xf]
        %v2024 = vld [vmem:[#allocation8 + $0x34] sm:$0xf]
        %v2025 = vld [vmem:[#allocation8 + $0x38] sm:$0xf]
        %v2026 = vld [vmem:[#allocation8 + $0x3c] sm:$0xf]
        %v2027 = vld [vmem:[#allocation8 + $0x40] sm:$0xf]
        %v2028 = vld [vmem:[#allocation8 + $0x44] sm:$0xf]
        %v2029 = vld [vmem:[#allocation8 + $0x48] sm:$0xf]
        %v2030 = vld [vmem:[#allocation8 + $0x4c] sm:$0xf]
        %v2031 = vld [vmem:[#allocation8 + $0x50] sm:$0xf]
        %v2032 = vld [vmem:[#allocation8 + $0x54] sm:$0xf]
        %v2033 = vld [vmem:[#allocation8 + $0x58] sm:$0xf]
        %v2034 = vld [vmem:[#allocation8 + $0x5c] sm:$0xf]
        %v2035 = vld [vmem:[#allocation8 + $0x60] sm:$0xf]
        %v2036 = vld [vmem:[#allocation8 + $0x64] sm:$0xf]
        %v2037 = vld [vmem:[#allocation8 + $0x68] sm:$0xf]
        %v2038 = vld [vmem:[#allocation8 + $0x6c] sm:$0xf]
        %v2039 = vld [vmem:[#allocation8 + $0x70] sm:$0xf]
        %v2040 = vld [vmem:[#allocation8 + $0x74] sm:$0xf]
        %v2041 = vld [vmem:[#allocation8 + $0x78] sm:$0xf]
        %v2042 = vld [vmem:[#allocation8 + $0x7c] sm:$0xf]
        %v2043 = vld [vmem:[#allocation8 + $0x80] sm:$0xf]
        %v2044 = vld [vmem:[#allocation8 + $0x84] sm:$0xf]
        %v2045 = vld [vmem:[#allocation8 + $0x88] sm:$0xf]
        %v2046 = vld [vmem:[#allocation8 + $0x8c] sm:$0xf]
        %v2047 = vld [vmem:[#allocation8 + $0x90] sm:$0xf]
        %v2048 = vld [vmem:[#allocation8 + $0x94] sm:$0xf]
        %v2049 = vld [vmem:[#allocation8 + $0x98] sm:$0xf]
        %v2050 = vld [vmem:[#allocation8 + $0x9c] sm:$0xf]
        %v2051 = vld [vmem:[#allocation8 + $0xa0] sm:$0xf]
        %v2052 = vld [vmem:[#allocation8 + $0xa4] sm:$0xf]
        %v2053 = vld [vmem:[#allocation8 + $0xa8] sm:$0xf]
        %v2054 = vld [vmem:[#allocation8 + $0xac] sm:$0xf]
        %v2055 = vld [vmem:[#allocation8 + $0xb0] sm:$0xf]
        %v2056 = vld [vmem:[#allocation8 + $0xb4] sm:$0xf]
        %v2057 = vld [vmem:[#allocation8 + $0xb8] sm:$0xf]
        %v2058 = vld [vmem:[#allocation8 + $0xbc] sm:$0xf]
        %v2059 = vld [vmem:[#allocation8 + $0xc0] sm:$0xf]
        %v2060 = vld [vmem:[#allocation8 + $0xc4] sm:$0xf]
        %v2061 = vld [vmem:[#allocation8 + $0xc8] sm:$0xf]
        %v2062 = vld [vmem:[#allocation8 + $0xcc] sm:$0xf]
        %v2063 = vld [vmem:[#allocation8 + $0xd0] sm:$0xf]
        %v2064 = vld [vmem:[#allocation8 + $0xd4] sm:$0xf]
        %v2065 = vld [vmem:[#allocation8 + $0xd8] sm:$0xf]
        %v2066 = vld [vmem:[#allocation8 + $0xdc] sm:$0xf]
        %v2067 = vld [vmem:[#allocation8 + $0xe0] sm:$0xf]
        %v2068 = vld [vmem:[#allocation8 + $0xe4] sm:$0xf]
        %v2069 = vld [vmem:[#allocation8 + $0xe8] sm:$0xf]
        %v2070 = vld [vmem:[#allocation8 + $0xec] sm:$0xf]
        %v2071 = vld [vmem:[#allocation8 + $0xf0] sm:$0xf]
        %v2072 = vld [vmem:[#allocation8 + $0xf4] sm:$0xf]
        %v2073 = vld [vmem:[#allocation8 + $0xf8] sm:$0xf]
        %v2074 = vld [vmem:[#allocation8 + $0xfc] sm:$0xf]
        %v2075 = vld [vmem:[#allocation8 + $0x100] sm:$0xf]
        %v2076 = vld [vmem:[#allocation8 + $0x104] sm:$0xf]
        %v2077 = vld [vmem:[#allocation8 + $0x108] sm:$0xf]
        %v2078 = vld [vmem:[#allocation8 + $0x10c] sm:$0xf]
        %v2079 = vld [vmem:[#allocation8 + $0x110] sm:$0xf]
        %v2080 = vld [vmem:[#allocation8 + $0x114] sm:$0xf]
        %v2081 = vld [vmem:[#allocation8 + $0x118] sm:$0xf]
        %v2082 = vld [vmem:[#allocation8 + $0x11c] sm:$0xf]
        %v2083 = vld [vmem:[#allocation8 + $0x120] sm:$0xf]
        %v2084 = vld [vmem:[#allocation8 + $0x124] sm:$0xf]
        %v2085 = vld [vmem:[#allocation8 + $0x128] sm:$0xf]
        %v2086 = vld [vmem:[#allocation8 + $0x12c] sm:$0xf]
        %v2087 = vld [vmem:[#allocation8 + $0x130] sm:$0xf]
        %v2088 = vld [vmem:[#allocation8 + $0x134] sm:$0xf]
        %v2089 = vld [vmem:[#allocation8 + $0x138] sm:$0xf]
        %v2090 = vld [vmem:[#allocation8 + $0x13c] sm:$0xf]
        %v2091 = vld [vmem:[#allocation8 + $0x140] sm:$0xf]
        %v2092 = vld [vmem:[#allocation8 + $0x144] sm:$0xf]
        %v2093 = vld [vmem:[#allocation8 + $0x148] sm:$0xf]
        %v2094 = vld [vmem:[#allocation8 + $0x14c] sm:$0xf]
        %v2095 = vld [vmem:[#allocation8 + $0x150] sm:$0xf]
        %v2096 = vld [vmem:[#allocation8 + $0x154] sm:$0xf]
        %v2097 = vld [vmem:[#allocation8 + $0x158] sm:$0xf]
        %v2098 = vld [vmem:[#allocation8 + $0x15c] sm:$0xf]
        %v2099 = vld [vmem:[#allocation8 + $0x160] sm:$0xf]
        %v2100 = vld [vmem:[#allocation8 + $0x164] sm:$0xf]
        %v2101 = vld [vmem:[#allocation8 + $0x168] sm:$0xf]
        %v2102 = vld [vmem:[#allocation8 + $0x16c] sm:$0xf]
        %v2103 = vld [vmem:[#allocation8 + $0x170] sm:$0xf]
        %v2104 = vld [vmem:[#allocation8 + $0x174] sm:$0xf]
        %v2105 = vld [vmem:[#allocation8 + $0x178] sm:$0xf]
        %v2106 = vld [vmem:[#allocation8 + $0x17c] sm:$0xf]
        %v2107 = vld [vmem:[#allocation8 + $0x180] sm:$0xf]
        %v2108 = vld [vmem:[#allocation8 + $0x184] sm:$0xf]
        %v2109 = vld [vmem:[#allocation8 + $0x188] sm:$0xf]
        %v2110 = vld [vmem:[#allocation8 + $0x18c] sm:$0xf]
        %v2111 = vld [vmem:[#allocation8 + $0x190] sm:$0xf]
        %v2112 = vld [vmem:[#allocation8 + $0x194] sm:$0xf]
        %v2113 = vld [vmem:[#allocation8 + $0x198] sm:$0xf]
        %v2114 = vld [vmem:[#allocation8 + $0x19c] sm:$0xf]
        %v2115 = vld [vmem:[#allocation8 + $0x1a0] sm:$0xf]
        %v2116 = vld [vmem:[#allocation8 + $0x1a4] sm:$0xf]
        %v2117 = vld [vmem:[#allocation8 + $0x1a8] sm:$0xf]
        %v2118 = vld [vmem:[#allocation8 + $0x1ac] sm:$0xf]
        %v2119 = vld [vmem:[#allocation8 + $0x1b0] sm:$0xf]
        %v2120 = vld [vmem:[#allocation8 + $0x1b4] sm:$0xf]
        %v2121 = vld [vmem:[#allocation8 + $0x1b8] sm:$0xf]
        %v2122 = vld [vmem:[#allocation8 + $0x1bc] sm:$0xf]
        %v2123 = vld [vmem:[#allocation8 + $0x1c0] sm:$0xf]
        %v2124 = vld [vmem:[#allocation8 + $0x1c4] sm:$0xf]
        %v2125 = vld [vmem:[#allocation8 + $0x1c8] sm:$0xf]
        %v2126 = vld [vmem:[#allocation8 + $0x1cc] sm:$0xf]
        %v2127 = vld [vmem:[#allocation8 + $0x1d0] sm:$0xf]
        %v2128 = vld [vmem:[#allocation8 + $0x1d4] sm:$0xf]
        %v2129 = vld [vmem:[#allocation8 + $0x1d8] sm:$0xf]
        %v2130 = vld [vmem:[#allocation8 + $0x1dc] sm:$0xf]
        %v2131 = vld [vmem:[#allocation8 + $0x1e0] sm:$0xf]
        %v2132 = vld [vmem:[#allocation8 + $0x1e4] sm:$0xf]
        %v2133 = vld [vmem:[#allocation8 + $0x1e8] sm:$0xf]
        %v2134 = vld [vmem:[#allocation8 + $0x1ec] sm:$0xf]
        %v2135 = vld [vmem:[#allocation8 + $0x1f0] sm:$0xf]
        %v2136 = vld [vmem:[#allocation8 + $0x1f4] sm:$0xf]
        %v2137 = vld [vmem:[#allocation8 + $0x1f8] sm:$0xf]
        %v2138 = vld [vmem:[#allocation8 + $0x1fc] sm:$0xf]
        %v2139 = vld [vmem:[#allocation8 + $0x200] sm:$0xf]
        %v2140 = vld [vmem:[#allocation8 + $0x204] sm:$0xf]
        %v2141 = vld [vmem:[#allocation8 + $0x208] sm:$0xf]
        %v2142 = vld [vmem:[#allocation8 + $0x20c] sm:$0xf]
        %v2143 = vld [vmem:[#allocation8 + $0x210] sm:$0xf]
        %v2144 = vld [vmem:[#allocation8 + $0x214] sm:$0xf]
        %v2145 = vld [vmem:[#allocation8 + $0x218] sm:$0xf]
        %v2146 = vld [vmem:[#allocation8 + $0x21c] sm:$0xf]
        %v2147 = vld [vmem:[#allocation8 + $0x220] sm:$0xf]
        %v2148 = vld [vmem:[#allocation8 + $0x224] sm:$0xf]
        %v2149 = vld [vmem:[#allocation8 + $0x228] sm:$0xf]
        %v2150 = vld [vmem:[#allocation8 + $0x22c] sm:$0xf]
        %v2151 = vld [vmem:[#allocation8 + $0x230] sm:$0xf]
        %v2152 = vld [vmem:[#allocation8 + $0x234] sm:$0xf]
        %v2153 = vld [vmem:[#allocation8 + $0x238] sm:$0xf]
        %v2154 = vld [vmem:[#allocation8 + $0x23c] sm:$0xf]
        %v2155 = vld [vmem:[%s4] sm:$0x1]
        %v2157 = vperm.slane %v2155, 0
        %v2199 = vunpack.c.l.b16 %v1971
        %v2200 = vunpack.c.h.b16 %v1971
        %v2201 = vunpack.c.l.b16 %v1972
        %v2202 = vunpack.c.h.b16 %v1972
        %v2203 = vunpack.c.l.b16 %v1973
        %v2204 = vunpack.c.h.b16 %v1973
        %v2205 = vunpack.c.l.b16 %v1974
        %v2206 = vunpack.c.h.b16 %v1974
        %v2207 = vunpack.c.l.b16 %v1975
        %v2208 = vunpack.c.l.b16 %v1976
        %v2209 = vunpack.c.h.b16 %v1976
        %v2210 = vunpack.c.l.b16 %v1977
        %v2211 = vunpack.c.h.b16 %v1977
        %v2212 = vunpack.c.l.b16 %v1978
        %v2213 = vunpack.c.h.b16 %v1978
        %v2214 = vunpack.c.l.b16 %v1979
        %v2215 = vunpack.c.h.b16 %v1979
        %v2216 = vunpack.c.l.b16 %v1980
        %v2217 = vunpack.c.l.b16 %v1981
        %v2218 = vunpack.c.h.b16 %v1981
        %v2219 = vunpack.c.l.b16 %v1982
        %v2220 = vunpack.c.h.b16 %v1982
        %v2221 = vunpack.c.l.b16 %v1983
        %v2222 = vunpack.c.h.b16 %v1983
        %v2223 = vunpack.c.l.b16 %v1984
        %v2224 = vunpack.c.h.b16 %v1984
        %v2225 = vunpack.c.l.b16 %v1985
        %v2226 = vunpack.c.l.b16 %v1986
        %v2227 = vunpack.c.h.b16 %v1986
        %v2228 = vunpack.c.l.b16 %v1987
        %v2229 = vunpack.c.h.b16 %v1987
        %v2230 = vunpack.c.l.b16 %v1988
        %v2231 = vunpack.c.h.b16 %v1988
        %v2232 = vunpack.c.l.b16 %v1989
        %v2233 = vunpack.c.h.b16 %v1989
        %v2234 = vunpack.c.l.b16 %v1990
        %v2235 = vunpack.c.l.b16 %v1991
        %v2236 = vunpack.c.h.b16 %v1991
        %v2237 = vunpack.c.l.b16 %v1992
        %v2238 = vunpack.c.h.b16 %v1992
        %v2239 = vunpack.c.l.b16 %v1993
        %v2240 = vunpack.c.h.b16 %v1993
        %v2241 = vunpack.c.l.b16 %v1994
        %v2242 = vunpack.c.h.b16 %v1994
        %v2243 = vunpack.c.l.b16 %v1995
        %v2244 = vunpack.c.l.b16 %v1996
        %v2245 = vunpack.c.h.b16 %v1996
        %v2246 = vunpack.c.l.b16 %v1997
        %v2247 = vunpack.c.h.b16 %v1997
        %v2248 = vunpack.c.l.b16 %v1998
        %v2249 = vunpack.c.h.b16 %v1998
        %v2250 = vunpack.c.l.b16 %v1999
        %v2251 = vunpack.c.h.b16 %v1999
        %v2252 = vunpack.c.l.b16 %v2000
        %v2253 = vunpack.c.l.b16 %v2001
        %v2254 = vunpack.c.h.b16 %v2001
        %v2255 = vunpack.c.l.b16 %v2002
        %v2256 = vunpack.c.h.b16 %v2002
        %v2257 = vunpack.c.l.b16 %v2003
        %v2258 = vunpack.c.h.b16 %v2003
        %v2259 = vunpack.c.l.b16 %v2004
        %v2260 = vunpack.c.h.b16 %v2004
        %v2261 = vunpack.c.l.b16 %v2005
        %v2262 = vunpack.c.l.b16 %v2006
        %v2263 = vunpack.c.h.b16 %v2006
        %v2264 = vunpack.c.l.b16 %v2007
        %v2265 = vunpack.c.h.b16 %v2007
        %v2266 = vunpack.c.l.b16 %v2008
        %v2267 = vunpack.c.h.b16 %v2008
        %v2268 = vunpack.c.l.b16 %v2009
        %v2269 = vunpack.c.h.b16 %v2009
        %v2270 = vunpack.c.l.b16 %v2010
        %v2271 = vpack.c.b16 %v2208, %v2199
        %v2272 = vpack.c.b16 %v2209, %v2200
        %v2273 = vpack.c.b16 %v2210, %v2201
        %v2274 = vpack.c.b16 %v2211, %v2202
        %v2275 = vpack.c.b16 %v2212, %v2203
        %v2276 = vpack.c.b16 %v2213, %v2204
        %v2277 = vpack.c.b16 %v2214, %v2205
        %v2278 = vpack.c.b16 %v2215, %v2206
        %v2279 = vpack.c.b16 %v2216, %v2207
        %v2280 = vpack.c.b16 %v2226, %v2217
        %v2281 = vpack.c.b16 %v2227, %v2218
        %v2282 = vpack.c.b16 %v2228, %v2219
        %v2283 = vpack.c.b16 %v2229, %v2220
        %v2284 = vpack.c.b16 %v2230, %v2221
        %v2285 = vpack.c.b16 %v2231, %v2222
        %v2286 = vpack.c.b16 %v2232, %v2223
        %v2287 = vpack.c.b16 %v2233, %v2224
        %v2288 = vpack.c.b16 %v2234, %v2225
        %v2289 = vpack.c.b16 %v2244, %v2235
        %v2290 = vpack.c.b16 %v2245, %v2236
        %v2291 = vpack.c.b16 %v2246, %v2237
        %v2292 = vpack.c.b16 %v2247, %v2238
        %v2293 = vpack.c.b16 %v2248, %v2239
        %v2294 = vpack.c.b16 %v2249, %v2240
        %v2295 = vpack.c.b16 %v2250, %v2241
        %v2296 = vpack.c.b16 %v2251, %v2242
        %v2297 = vpack.c.b16 %v2252, %v2243
        %v2298 = vpack.c.b16 %v2262, %v2253
        %v2299 = vpack.c.b16 %v2263, %v2254
        %v2300 = vpack.c.b16 %v2264, %v2255
        %v2301 = vpack.c.b16 %v2265, %v2256
        %v2302 = vpack.c.b16 %v2266, %v2257
        %v2303 = vpack.c.b16 %v2267, %v2258
        %v2304 = vpack.c.b16 %v2268, %v2259
        %v2305 = vpack.c.b16 %v2269, %v2260
        %v2306 = vpack.c.b16 %v2270, %v2261
        %v2487 = vunpack.c.l.b16 %v2011
        %v2488 = vunpack.c.l.b16 %v2012
        %v2489 = vunpack.c.l.b16 %v2013
        %v2490 = vunpack.c.l.b16 %v2014
        %v2491 = vunpack.c.l.b16 %v2015
        %v2492 = vunpack.c.l.b16 %v2016
        %v2493 = vunpack.c.l.b16 %v2017
        %v2494 = vunpack.c.l.b16 %v2018
        %v2495 = vunpack.c.l.b16 %v2019
        %v2496 = vunpack.c.l.b16 %v2020
        %v2497 = vunpack.c.l.b16 %v2021
        %v2498 = vunpack.c.l.b16 %v2022
        %v2499 = vunpack.c.l.b16 %v2023
        %v2500 = vunpack.c.l.b16 %v2024
        %v2501 = vunpack.c.l.b16 %v2025
        %v2502 = vunpack.c.l.b16 %v2026
        %v2503 = vunpack.c.l.b16 %v2027
        %v2504 = vunpack.c.l.b16 %v2028
        %v2505 = vunpack.c.l.b16 %v2029
        %v2506 = vunpack.c.l.b16 %v2030
        %v2507 = vunpack.c.l.b16 %v2031
        %v2508 = vunpack.c.l.b16 %v2032
        %v2509 = vunpack.c.l.b16 %v2033
        %v2510 = vunpack.c.l.b16 %v2034
        %v2511 = vunpack.c.l.b16 %v2035
        %v2512 = vunpack.c.l.b16 %v2036
        %v2513 = vunpack.c.l.b16 %v2037
        %v2514 = vunpack.c.l.b16 %v2038
        %v2515 = vunpack.c.l.b16 %v2039
        %v2516 = vunpack.c.l.b16 %v2040
        %v2517 = vunpack.c.l.b16 %v2041
        %v2518 = vunpack.c.l.b16 %v2042
        %v2519 = vunpack.c.l.b16 %v2043
        %v2520 = vunpack.c.l.b16 %v2044
        %v2521 = vunpack.c.l.b16 %v2045
        %v2522 = vunpack.c.l.b16 %v2046
        %v2523 = vunpack.c.l.b16 %v2047
        %v2524 = vunpack.c.l.b16 %v2048
        %v2525 = vunpack.c.l.b16 %v2049
        %v2526 = vunpack.c.l.b16 %v2050
        %v2527 = vunpack.c.l.b16 %v2051
        %v2528 = vunpack.c.l.b16 %v2052
        %v2529 = vunpack.c.l.b16 %v2053
        %v2530 = vunpack.c.l.b16 %v2054
        %v2531 = vunpack.c.l.b16 %v2055
        %v2532 = vunpack.c.l.b16 %v2056
        %v2533 = vunpack.c.l.b16 %v2057
        %v2534 = vunpack.c.l.b16 %v2058
        %v2535 = vunpack.c.l.b16 %v2059
        %v2536 = vunpack.c.l.b16 %v2060
        %v2537 = vunpack.c.l.b16 %v2061
        %v2538 = vunpack.c.l.b16 %v2062
        %v2539 = vunpack.c.l.b16 %v2063
        %v2540 = vunpack.c.l.b16 %v2064
        %v2541 = vunpack.c.l.b16 %v2065
        %v2542 = vunpack.c.l.b16 %v2066
        %v2543 = vunpack.c.l.b16 %v2067
        %v2544 = vunpack.c.l.b16 %v2068
        %v2545 = vunpack.c.l.b16 %v2069
        %v2546 = vunpack.c.l.b16 %v2070
        %v2547 = vunpack.c.l.b16 %v2071
        %v2548 = vunpack.c.l.b16 %v2072
        %v2549 = vunpack.c.l.b16 %v2073
        %v2550 = vunpack.c.l.b16 %v2074
        %v2551 = vunpack.c.l.b16 %v2075
        %v2552 = vunpack.c.l.b16 %v2076
        %v2553 = vunpack.c.l.b16 %v2077
        %v2554 = vunpack.c.l.b16 %v2078
        %v2555 = vunpack.c.l.b16 %v2079
        %v2556 = vunpack.c.l.b16 %v2080
        %v2557 = vunpack.c.l.b16 %v2081
        %v2558 = vunpack.c.l.b16 %v2082
        %v2559 = vunpack.c.l.b16 %v2083
        %v2560 = vunpack.c.l.b16 %v2084
        %v2561 = vunpack.c.l.b16 %v2085
        %v2562 = vunpack.c.l.b16 %v2086
        %v2563 = vunpack.c.l.b16 %v2087
        %v2564 = vunpack.c.l.b16 %v2088
        %v2565 = vunpack.c.l.b16 %v2089
        %v2566 = vunpack.c.l.b16 %v2090
        %v2567 = vunpack.c.l.b16 %v2091
        %v2568 = vunpack.c.l.b16 %v2092
        %v2569 = vunpack.c.l.b16 %v2093
        %v2570 = vunpack.c.l.b16 %v2094
        %v2571 = vunpack.c.l.b16 %v2095
        %v2572 = vunpack.c.l.b16 %v2096
        %v2573 = vunpack.c.l.b16 %v2097
        %v2574 = vunpack.c.l.b16 %v2098
        %v2575 = vunpack.c.l.b16 %v2099
        %v2576 = vunpack.c.l.b16 %v2100
        %v2577 = vunpack.c.l.b16 %v2101
        %v2578 = vunpack.c.l.b16 %v2102
        %v2579 = vunpack.c.l.b16 %v2103
        %v2580 = vunpack.c.l.b16 %v2104
        %v2581 = vunpack.c.l.b16 %v2105
        %v2582 = vunpack.c.l.b16 %v2106
        %v2583 = vunpack.c.l.b16 %v2107
        %v2584 = vunpack.c.l.b16 %v2108
        %v2585 = vunpack.c.l.b16 %v2109
        %v2586 = vunpack.c.l.b16 %v2110
        %v2587 = vunpack.c.l.b16 %v2111
        %v2588 = vunpack.c.l.b16 %v2112
        %v2589 = vunpack.c.l.b16 %v2113
        %v2590 = vunpack.c.l.b16 %v2114
        %v2591 = vunpack.c.l.b16 %v2115
        %v2592 = vunpack.c.l.b16 %v2116
        %v2593 = vunpack.c.l.b16 %v2117
        %v2594 = vunpack.c.l.b16 %v2118
        %v2595 = vunpack.c.l.b16 %v2119
        %v2596 = vunpack.c.l.b16 %v2120
        %v2597 = vunpack.c.l.b16 %v2121
        %v2598 = vunpack.c.l.b16 %v2122
        %v2599 = vunpack.c.l.b16 %v2123
        %v2600 = vunpack.c.l.b16 %v2124
        %v2601 = vunpack.c.l.b16 %v2125
        %v2602 = vunpack.c.l.b16 %v2126
        %v2603 = vunpack.c.l.b16 %v2127
        %v2604 = vunpack.c.l.b16 %v2128
        %v2605 = vunpack.c.l.b16 %v2129
        %v2606 = vunpack.c.l.b16 %v2130
        %v2607 = vunpack.c.l.b16 %v2131
        %v2608 = vunpack.c.l.b16 %v2132
        %v2609 = vunpack.c.l.b16 %v2133
        %v2610 = vunpack.c.l.b16 %v2134
        %v2611 = vunpack.c.l.b16 %v2135
        %v2612 = vunpack.c.l.b16 %v2136
        %v2613 = vunpack.c.l.b16 %v2137
        %v2614 = vunpack.c.l.b16 %v2138
        %v2615 = vunpack.c.l.b16 %v2139
        %v2616 = vunpack.c.l.b16 %v2140
        %v2617 = vunpack.c.l.b16 %v2141
        %v2618 = vunpack.c.l.b16 %v2142
        %v2619 = vunpack.c.l.b16 %v2143
        %v2620 = vunpack.c.l.b16 %v2144
        %v2621 = vunpack.c.l.b16 %v2145
        %v2622 = vunpack.c.l.b16 %v2146
        %v2623 = vunpack.c.l.b16 %v2147
        %v2624 = vunpack.c.l.b16 %v2148
        %v2625 = vunpack.c.l.b16 %v2149
        %v2626 = vunpack.c.l.b16 %v2150
        %v2627 = vunpack.c.l.b16 %v2151
        %v2628 = vunpack.c.l.b16 %v2152
        %v2629 = vunpack.c.l.b16 %v2153
        %v2630 = vunpack.c.l.b16 %v2154
        %v2631 = vpack.c.b16 %v2488, %v2487
        %v2632 = vpack.c.b16 %v2490, %v2489
        %v2633 = vpack.c.b16 %v2492, %v2491
        %v2634 = vpack.c.b16 %v2494, %v2493
        %v2635 = vpack.c.b16 %v2496, %v2495
        %v2636 = vpack.c.b16 %v2498, %v2497
        %v2637 = vpack.c.b16 %v2500, %v2499
        %v2638 = vpack.c.b16 %v2502, %v2501
        %v2639 = vpack.c.b16 %v2504, %v2503
        %v2640 = vpack.c.b16 %v2506, %v2505
        %v2641 = vpack.c.b16 %v2508, %v2507
        %v2642 = vpack.c.b16 %v2510, %v2509
        %v2643 = vpack.c.b16 %v2512, %v2511
        %v2644 = vpack.c.b16 %v2514, %v2513
        %v2645 = vpack.c.b16 %v2516, %v2515
        %v2646 = vpack.c.b16 %v2518, %v2517
        %v2647 = vpack.c.b16 %v2520, %v2519
        %v2648 = vpack.c.b16 %v2522, %v2521
        %v2649 = vpack.c.b16 %v2524, %v2523
        %v2650 = vpack.c.b16 %v2526, %v2525
        %v2651 = vpack.c.b16 %v2528, %v2527
        %v2652 = vpack.c.b16 %v2530, %v2529
        %v2653 = vpack.c.b16 %v2532, %v2531
        %v2654 = vpack.c.b16 %v2534, %v2533
        %v2655 = vpack.c.b16 %v2536, %v2535
        %v2656 = vpack.c.b16 %v2538, %v2537
        %v2657 = vpack.c.b16 %v2540, %v2539
        %v2658 = vpack.c.b16 %v2542, %v2541
        %v2659 = vpack.c.b16 %v2544, %v2543
        %v2660 = vpack.c.b16 %v2546, %v2545
        %v2661 = vpack.c.b16 %v2548, %v2547
        %v2662 = vpack.c.b16 %v2550, %v2549
        %v2663 = vpack.c.b16 %v2552, %v2551
        %v2664 = vpack.c.b16 %v2554, %v2553
        %v2665 = vpack.c.b16 %v2556, %v2555
        %v2666 = vpack.c.b16 %v2558, %v2557
        %v2667 = vpack.c.b16 %v2560, %v2559
        %v2668 = vpack.c.b16 %v2562, %v2561
        %v2669 = vpack.c.b16 %v2564, %v2563
        %v2670 = vpack.c.b16 %v2566, %v2565
        %v2671 = vpack.c.b16 %v2568, %v2567
        %v2672 = vpack.c.b16 %v2570, %v2569
        %v2673 = vpack.c.b16 %v2572, %v2571
        %v2674 = vpack.c.b16 %v2574, %v2573
        %v2675 = vpack.c.b16 %v2576, %v2575
        %v2676 = vpack.c.b16 %v2578, %v2577
        %v2677 = vpack.c.b16 %v2580, %v2579
        %v2678 = vpack.c.b16 %v2582, %v2581
        %v2679 = vpack.c.b16 %v2584, %v2583
        %v2680 = vpack.c.b16 %v2586, %v2585
        %v2681 = vpack.c.b16 %v2588, %v2587
        %v2682 = vpack.c.b16 %v2590, %v2589
        %v2683 = vpack.c.b16 %v2592, %v2591
        %v2684 = vpack.c.b16 %v2594, %v2593
        %v2685 = vpack.c.b16 %v2596, %v2595
        %v2686 = vpack.c.b16 %v2598, %v2597
        %v2687 = vpack.c.b16 %v2600, %v2599
        %v2688 = vpack.c.b16 %v2602, %v2601
        %v2689 = vpack.c.b16 %v2604, %v2603
        %v2690 = vpack.c.b16 %v2606, %v2605
        %v2691 = vpack.c.b16 %v2608, %v2607
        %v2692 = vpack.c.b16 %v2610, %v2609
        %v2693 = vpack.c.b16 %v2612, %v2611
        %v2694 = vpack.c.b16 %v2614, %v2613
        %v2695 = vpack.c.b16 %v2616, %v2615
        %v2696 = vpack.c.b16 %v2618, %v2617
        %v2697 = vpack.c.b16 %v2620, %v2619
        %v2698 = vpack.c.b16 %v2622, %v2621
        %v2699 = vpack.c.b16 %v2624, %v2623
        %v2700 = vpack.c.b16 %v2626, %v2625
        %v2701 = vpack.c.b16 %v2628, %v2627
        %v2702 = vpack.c.b16 %v2630, %v2629
        %2775 = vmatpush.bf16.msra.mxu0 %v2638
        %2776 = vmatpush.bf16.msra.mxu0 %v2637
        %2777 = vmatpush.bf16.msra.mxu0 %v2636
        %2778 = vmatpush.bf16.msra.mxu0 %v2635
        %2779 = vmatpush.bf16.msra.mxu0 %v2634
        %2780 = vmatpush.bf16.msra.mxu0 %v2633
        %2781 = vmatpush.bf16.msra.mxu0 %v2632
        %2782 = vmatpush.bf16.msra.mxu0 %v2631
        %2783 = vmatmul.bf16.gmra.mxu0 %v2271
        %v2784 = vpop.f32.mrf.mxu0
        %v2785 = vadd.f32 %v2157, %v2784
        %v2786 = vpop.f32.mrf.mxu0
        %v2787 = vadd.f32 %v2157, %v2786
        %2788 = vmatmul.bf16.gmra.mxu0 %v2280
        %v2789 = vpop.f32.mrf.mxu0
        %v2790 = vadd.f32 %v2157, %v2789
        %v2791 = vpop.f32.mrf.mxu0
        %v2792 = vadd.f32 %v2157, %v2791
        %2793 = vmatmul.bf16.gmra.mxu0 %v2289
        %v2794 = vpop.f32.mrf.mxu0
        %v2795 = vadd.f32 %v2157, %v2794
        %v2796 = vpop.f32.mrf.mxu0
        %v2797 = vadd.f32 %v2157, %v2796
        %2798 = vmatmul.bf16.gmra.mxu0 %v2298
        %v2799 = vpop.f32.mrf.mxu0
        %v2800 = vadd.f32 %v2157, %v2799
        %v2801 = vpop.f32.mrf.mxu0
        %v2802 = vadd.f32 %v2157, %v2801
        %2803 = vdwg.mxu0
        %2804 = vmatpush.bf16.msra.mxu0 %v2646
        %2805 = vmatpush.bf16.msra.mxu0 %v2645
        %2806 = vmatpush.bf16.msra.mxu0 %v2644
        %2807 = vmatpush.bf16.msra.mxu0 %v2643
        %2808 = vmatpush.bf16.msra.mxu0 %v2642
        %2809 = vmatpush.bf16.msra.mxu0 %v2641
        %2810 = vmatpush.bf16.msra.mxu0 %v2640
        %2811 = vmatpush.bf16.msra.mxu0 %v2639
        %2812 = vmatmul.bf16.gmra.mxu0 %v2272
        %v2813 = vpop.f32.mrf.mxu0
        %v2814 = vadd.f32 %v2785, %v2813
        %v2815 = vpop.f32.mrf.mxu0
        %v2816 = vadd.f32 %v2787, %v2815
        %2817 = vmatmul.bf16.gmra.mxu0 %v2281
        %v2818 = vpop.f32.mrf.mxu0
        %v2819 = vadd.f32 %v2790, %v2818
        %v2820 = vpop.f32.mrf.mxu0
        %v2821 = vadd.f32 %v2792, %v2820
        %2822 = vmatmul.bf16.gmra.mxu0 %v2290
        %v2823 = vpop.f32.mrf.mxu0
        %v2824 = vadd.f32 %v2795, %v2823
        %v2825 = vpop.f32.mrf.mxu0
        %v2826 = vadd.f32 %v2797, %v2825
        %2827 = vmatmul.bf16.gmra.mxu0 %v2299
        %v2828 = vpop.f32.mrf.mxu0
        %v2829 = vadd.f32 %v2800, %v2828
        %v2830 = vpop.f32.mrf.mxu0
        %v2831 = vadd.f32 %v2802, %v2830
        %2832 = vdwg.mxu0
        %2833 = vmatpush.bf16.msra.mxu0 %v2654
        %2834 = vmatpush.bf16.msra.mxu0 %v2653
        %2835 = vmatpush.bf16.msra.mxu0 %v2652
        %2836 = vmatpush.bf16.msra.mxu0 %v2651
        %2837 = vmatpush.bf16.msra.mxu0 %v2650
        %2838 = vmatpush.bf16.msra.mxu0 %v2649
        %2839 = vmatpush.bf16.msra.mxu0 %v2648
        %2840 = vmatpush.bf16.msra.mxu0 %v2647
        %2841 = vmatmul.bf16.gmra.mxu0 %v2273
        %v2842 = vpop.f32.mrf.mxu0
        %v2843 = vadd.f32 %v2814, %v2842
        %v2844 = vpop.f32.mrf.mxu0
        %v2845 = vadd.f32 %v2816, %v2844
        %2846 = vmatmul.bf16.gmra.mxu0 %v2282
        %v2847 = vpop.f32.mrf.mxu0
        %v2848 = vadd.f32 %v2819, %v2847
        %v2849 = vpop.f32.mrf.mxu0
        %v2850 = vadd.f32 %v2821, %v2849
        %2851 = vmatmul.bf16.gmra.mxu0 %v2291
        %v2852 = vpop.f32.mrf.mxu0
        %v2853 = vadd.f32 %v2824, %v2852
        %v2854 = vpop.f32.mrf.mxu0
        %v2855 = vadd.f32 %v2826, %v2854
        %2856 = vmatmul.bf16.gmra.mxu0 %v2300
        %v2857 = vpop.f32.mrf.mxu0
        %v2858 = vadd.f32 %v2829, %v2857
        %v2859 = vpop.f32.mrf.mxu0
        %v2860 = vadd.f32 %v2831, %v2859
        %2861 = vdwg.mxu0
        %2862 = vmatpush.bf16.msra.mxu0 %v2662
        %2863 = vmatpush.bf16.msra.mxu0 %v2661
        %2864 = vmatpush.bf16.msra.mxu0 %v2660
        %2865 = vmatpush.bf16.msra.mxu0 %v2659
        %2866 = vmatpush.bf16.msra.mxu0 %v2658
        %2867 = vmatpush.bf16.msra.mxu0 %v2657
        %2868 = vmatpush.bf16.msra.mxu0 %v2656
        %2869 = vmatpush.bf16.msra.mxu0 %v2655
        %2870 = vmatmul.bf16.gmra.mxu0 %v2274
        %v2871 = vpop.f32.mrf.mxu0
        %v2872 = vadd.f32 %v2843, %v2871
        %v2873 = vpop.f32.mrf.mxu0
        %v2874 = vadd.f32 %v2845, %v2873
        %2875 = vmatmul.bf16.gmra.mxu0 %v2283
        %v2876 = vpop.f32.mrf.mxu0
        %v2877 = vadd.f32 %v2848, %v2876
        %v2878 = vpop.f32.mrf.mxu0
        %v2879 = vadd.f32 %v2850, %v2878
        %2880 = vmatmul.bf16.gmra.mxu0 %v2292
        %v2881 = vpop.f32.mrf.mxu0
        %v2882 = vadd.f32 %v2853, %v2881
        %v2883 = vpop.f32.mrf.mxu0
        %v2884 = vadd.f32 %v2855, %v2883
        %2885 = vmatmul.bf16.gmra.mxu0 %v2301
        %v2886 = vpop.f32.mrf.mxu0
        %v2887 = vadd.f32 %v2858, %v2886
        %v2888 = vpop.f32.mrf.mxu0
        %v2889 = vadd.f32 %v2860, %v2888
        %2890 = vdwg.mxu0
        %2891 = vmatpush.bf16.msra.mxu0 %v2670
        %2892 = vmatpush.bf16.msra.mxu0 %v2669
        %2893 = vmatpush.bf16.msra.mxu0 %v2668
        %2894 = vmatpush.bf16.msra.mxu0 %v2667
        %2895 = vmatpush.bf16.msra.mxu0 %v2666
        %2896 = vmatpush.bf16.msra.mxu0 %v2665
        %2897 = vmatpush.bf16.msra.mxu0 %v2664
        %2898 = vmatpush.bf16.msra.mxu0 %v2663
        %2899 = vmatmul.bf16.gmra.mxu0 %v2275
        %v2900 = vpop.f32.mrf.mxu0
        %v2901 = vadd.f32 %v2872, %v2900
        %v2902 = vpop.f32.mrf.mxu0
        %v2903 = vadd.f32 %v2874, %v2902
        %2904 = vmatmul.bf16.gmra.mxu0 %v2284
        %v2905 = vpop.f32.mrf.mxu0
        %v2906 = vadd.f32 %v2877, %v2905
        %v2907 = vpop.f32.mrf.mxu0
        %v2908 = vadd.f32 %v2879, %v2907
        %2909 = vmatmul.bf16.gmra.mxu0 %v2293
        %v2910 = vpop.f32.mrf.mxu0
        %v2911 = vadd.f32 %v2882, %v2910
        %v2912 = vpop.f32.mrf.mxu0
        %v2913 = vadd.f32 %v2884, %v2912
        %2914 = vmatmul.bf16.gmra.mxu0 %v2302
        %v2915 = vpop.f32.mrf.mxu0
        %v2916 = vadd.f32 %v2887, %v2915
        %v2917 = vpop.f32.mrf.mxu0
        %v2918 = vadd.f32 %v2889, %v2917
        %2919 = vdwg.mxu0
        %2920 = vmatpush.bf16.msra.mxu0 %v2678
        %2921 = vmatpush.bf16.msra.mxu0 %v2677
        %2922 = vmatpush.bf16.msra.mxu0 %v2676
        %2923 = vmatpush.bf16.msra.mxu0 %v2675
        %2924 = vmatpush.bf16.msra.mxu0 %v2674
        %2925 = vmatpush.bf16.msra.mxu0 %v2673
        %2926 = vmatpush.bf16.msra.mxu0 %v2672
        %2927 = vmatpush.bf16.msra.mxu0 %v2671
        %2928 = vmatmul.bf16.gmra.mxu0 %v2276
        %v2929 = vpop.f32.mrf.mxu0
        %v2930 = vadd.f32 %v2901, %v2929
        %v2931 = vpop.f32.mrf.mxu0
        %v2932 = vadd.f32 %v2903, %v2931
        %2933 = vmatmul.bf16.gmra.mxu0 %v2285
        %v2934 = vpop.f32.mrf.mxu0
        %v2935 = vadd.f32 %v2906, %v2934
        %v2936 = vpop.f32.mrf.mxu0
        %v2937 = vadd.f32 %v2908, %v2936
        %2938 = vmatmul.bf16.gmra.mxu0 %v2294
        %v2939 = vpop.f32.mrf.mxu0
        %v2940 = vadd.f32 %v2911, %v2939
        %v2941 = vpop.f32.mrf.mxu0
        %v2942 = vadd.f32 %v2913, %v2941
        %2943 = vmatmul.bf16.gmra.mxu0 %v2303
        %v2944 = vpop.f32.mrf.mxu0
        %v2945 = vadd.f32 %v2916, %v2944
        %v2946 = vpop.f32.mrf.mxu0
        %v2947 = vadd.f32 %v2918, %v2946
        %2948 = vdwg.mxu0
        %2949 = vmatpush.bf16.msra.mxu0 %v2686
        %2950 = vmatpush.bf16.msra.mxu0 %v2685
        %2951 = vmatpush.bf16.msra.mxu0 %v2684
        %2952 = vmatpush.bf16.msra.mxu0 %v2683
        %2953 = vmatpush.bf16.msra.mxu0 %v2682
        %2954 = vmatpush.bf16.msra.mxu0 %v2681
        %2955 = vmatpush.bf16.msra.mxu0 %v2680
        %2956 = vmatpush.bf16.msra.mxu0 %v2679
        %2957 = vmatmul.bf16.gmra.mxu0 %v2277
        %v2958 = vpop.f32.mrf.mxu0
        %v2959 = vadd.f32 %v2930, %v2958
        %v2960 = vpop.f32.mrf.mxu0
        %v2961 = vadd.f32 %v2932, %v2960
        %2962 = vmatmul.bf16.gmra.mxu0 %v2286
        %v2963 = vpop.f32.mrf.mxu0
        %v2964 = vadd.f32 %v2935, %v2963
        %v2965 = vpop.f32.mrf.mxu0
        %v2966 = vadd.f32 %v2937, %v2965
        %2967 = vmatmul.bf16.gmra.mxu0 %v2295
        %v2968 = vpop.f32.mrf.mxu0
        %v2969 = vadd.f32 %v2940, %v2968
        %v2970 = vpop.f32.mrf.mxu0
        %v2971 = vadd.f32 %v2942, %v2970
        %2972 = vmatmul.bf16.gmra.mxu0 %v2304
        %v2973 = vpop.f32.mrf.mxu0
        %v2974 = vadd.f32 %v2945, %v2973
        %v2975 = vpop.f32.mrf.mxu0
        %v2976 = vadd.f32 %v2947, %v2975
        %2977 = vdwg.mxu0
        %2978 = vmatpush.bf16.msra.mxu0 %v2694
        %2979 = vmatpush.bf16.msra.mxu0 %v2693
        %2980 = vmatpush.bf16.msra.mxu0 %v2692
        %2981 = vmatpush.bf16.msra.mxu0 %v2691
        %2982 = vmatpush.bf16.msra.mxu0 %v2690
        %2983 = vmatpush.bf16.msra.mxu0 %v2689
        %2984 = vmatpush.bf16.msra.mxu0 %v2688
        %2985 = vmatpush.bf16.msra.mxu0 %v2687
        %2986 = vmatmul.bf16.gmra.mxu0 %v2278
        %v2987 = vpop.f32.mrf.mxu0
        %v2988 = vadd.f32 %v2959, %v2987
        %v2989 = vpop.f32.mrf.mxu0
        %v2990 = vadd.f32 %v2961, %v2989
        %2991 = vmatmul.bf16.gmra.mxu0 %v2287
        %v2992 = vpop.f32.mrf.mxu0
        %v2993 = vadd.f32 %v2964, %v2992
        %v2994 = vpop.f32.mrf.mxu0
        %v2995 = vadd.f32 %v2966, %v2994
        %2996 = vmatmul.bf16.gmra.mxu0 %v2296
        %v2997 = vpop.f32.mrf.mxu0
        %v2998 = vadd.f32 %v2969, %v2997
        %v2999 = vpop.f32.mrf.mxu0
        %v3000 = vadd.f32 %v2971, %v2999
        %3001 = vmatmul.bf16.gmra.mxu0 %v2305
        %v3002 = vpop.f32.mrf.mxu0
        %v3003 = vadd.f32 %v2974, %v3002
        %v3004 = vpop.f32.mrf.mxu0
        %v3005 = vadd.f32 %v2976, %v3004
        %3006 = vdwg.mxu0
        %3007 = vmatpush.bf16.msra.mxu0 %v2702
        %3008 = vmatpush.bf16.msra.mxu0 %v2701
        %3009 = vmatpush.bf16.msra.mxu0 %v2700
        %3010 = vmatpush.bf16.msra.mxu0 %v2699
        %3011 = vmatpush.bf16.msra.mxu0 %v2698
        %3012 = vmatpush.bf16.msra.mxu0 %v2697
        %3013 = vmatpush.bf16.msra.mxu0 %v2696
        %3014 = vmatpush.bf16.msra.mxu0 %v2695
        %3015 = vmatmul.bf16.gmra.mxu0 %v2279
        %v3016 = vpop.f32.mrf.mxu0
        %v3017 = vadd.f32 %v2988, %v3016
        %v3018 = vpop.f32.mrf.mxu0
        %v3019 = vadd.f32 %v2990, %v3018
        %3020 = vmatmul.bf16.gmra.mxu0 %v2288
        %v3021 = vpop.f32.mrf.mxu0
        %v3022 = vadd.f32 %v2993, %v3021
        %v3023 = vpop.f32.mrf.mxu0
        %v3024 = vadd.f32 %v2995, %v3023
        %3025 = vmatmul.bf16.gmra.mxu0 %v2297
        %v3026 = vpop.f32.mrf.mxu0
        %v3027 = vadd.f32 %v2998, %v3026
        %v3028 = vpop.f32.mrf.mxu0
        %v3029 = vadd.f32 %v3000, %v3028
        %3030 = vmatmul.bf16.gmra.mxu0 %v2306
        %v3031 = vpop.f32.mrf.mxu0
        %v3032 = vadd.f32 %v3003, %v3031
        %v3033 = vpop.f32.mrf.mxu0
        %v3034 = vadd.f32 %v3005, %v3033
        %3035 = vdwg.mxu0
        %v3036 = vmul.f32 %v3017, 0.1
        %v3037 = vmul.f32 %v3019, 0.1
        %v3038 = vmul.f32 %v3022, 0.1
        %v3039 = vmul.f32 %v3024, 0.1
        %v3040 = vmul.f32 %v3027, 0.1
        %v3041 = vmul.f32 %v3029, 0.1
        %v3042 = vmul.f32 %v3032, 0.1
        %v3043 = vmul.f32 %v3034, 0.1
        %v3044 = vmax.f32 %v3017, %v3036
        %v3045 = vmax.f32 %v3019, %v3037
        %v3046 = vmax.f32 %v3022, %v3038
        %v3047 = vmax.f32 %v3024, %v3039
        %v3048 = vmax.f32 %v3027, %v3040
        %v3049 = vmax.f32 %v3029, %v3041
        %v3050 = vmax.f32 %v3032, %v3042
        %v3051 = vmax.f32 %v3034, %v3043
        %3052 = vst [vmem:[%s440 + $0x1] sm:$0xff] %v3044
        %3053 = vst [vmem:[%s440 + $0x11] sm:$0xff] %v3045
        %3054 = vst [vmem:[%s440 + $0x21] sm:$0xff] %v3046
        %3055 = vst [vmem:[%s440 + $0x31] sm:$0xff] %v3047
        %3056 = vst [vmem:[%s440 + $0x41] sm:$0xff] %v3048
        %3057 = vst [vmem:[%s440 + $0x51] sm:$0xff] %v3049
        %3058 = vst [vmem:[%s440 + $0x61] sm:$0xff] %v3050
        %3059 = vst [vmem:[%s440 + $0x71] sm:$0xff] %v3051
        %v3060 = vld [vmem:[#allocation2] sm:$0xff]
        %v3061 = vld [vmem:[#allocation2 + $0x10] sm:$0xff]
        %v3062 = vld [vmem:[#allocation2 + $0x20] sm:$0xff]
        %v3063 = vld [vmem:[#allocation2 + $0x30] sm:$0xff]
        %v3064 = vld [vmem:[#allocation2 + $0x40] sm:$0xff]
        %v3065 = vld [vmem:[#allocation2 + $0x50] sm:$0xff]
        %v3066 = vld [vmem:[#allocation2 + $0x60] sm:$0xff]
        %v3067 = vld [vmem:[#allocation2 + $0x70] sm:$0xff]
        %v3068 = vpack.c.bf16 %v3060, %v3060
        %v3069 = vpack.c.bf16 %v3061, %v3061
        %v3070 = vpack.c.bf16 %v3062, %v3062
        %v3071 = vpack.c.bf16 %v3063, %v3063
        %v3072 = vpack.c.bf16 %v3064, %v3064
        %v3073 = vpack.c.bf16 %v3065, %v3065
        %v3074 = vpack.c.bf16 %v3066, %v3066
        %v3075 = vpack.c.bf16 %v3067, %v3067
        %3076 = vst [vmem:[#allocation4] sm:$0xf] %v3068
        %3077 = vst [vmem:[#allocation4 + $0x24] sm:$0xf] %v3069
        %3078 = vst [vmem:[#allocation4 + $0x48] sm:$0xf] %v3070
        %3079 = vst [vmem:[#allocation4 + $0x6c] sm:$0xf] %v3071
        %3080 = vst [vmem:[#allocation4 + $0x90] sm:$0xf] %v3072
        %3081 = vst [vmem:[#allocation4 + $0xb4] sm:$0xf] %v3073
        %3082 = vst [vmem:[#allocation4 + $0xd8] sm:$0xf] %v3074
        %3083 = vst [vmem:[#allocation4 + $0xfc] sm:$0xf] %v3075
        %v3084 = vld [vmem:[#allocation2 + $0x1] sm:$0xff]
        %v3085 = vld [vmem:[#allocation2 + $0x11] sm:$0xff]
        %v3086 = vld [vmem:[#allocation2 + $0x21] sm:$0xff]
        %v3087 = vld [vmem:[#allocation2 + $0x31] sm:$0xff]
        %v3088 = vld [vmem:[#allocation2 + $0x41] sm:$0xff]
        %v3089 = vld [vmem:[#allocation2 + $0x51] sm:$0xff]
        %v3090 = vld [vmem:[#allocation2 + $0x61] sm:$0xff]
        %v3091 = vld [vmem:[#allocation2 + $0x71] sm:$0xff]
        %v3092 = vpack.c.bf16 %v3084, %v3084
        %v3093 = vpack.c.bf16 %v3085, %v3085
        %v3094 = vpack.c.bf16 %v3086, %v3086
        %v3095 = vpack.c.bf16 %v3087, %v3087
        %v3096 = vpack.c.bf16 %v3088, %v3088
        %v3097 = vpack.c.bf16 %v3089, %v3089
        %v3098 = vpack.c.bf16 %v3090, %v3090
        %v3099 = vpack.c.bf16 %v3091, %v3091
        %3100 = vst [vmem:[#allocation4 + $0x4] sm:$0xf] %v3092
        %3101 = vst [vmem:[#allocation4 + $0x28] sm:$0xf] %v3093
        %3102 = vst [vmem:[#allocation4 + $0x4c] sm:$0xf] %v3094
        %3103 = vst [vmem:[#allocation4 + $0x70] sm:$0xf] %v3095
        %3104 = vst [vmem:[#allocation4 + $0x94] sm:$0xf] %v3096
        %3105 = vst [vmem:[#allocation4 + $0xb8] sm:$0xf] %v3097
        %3106 = vst [vmem:[#allocation4 + $0xdc] sm:$0xf] %v3098
        %3107 = vst [vmem:[#allocation4 + $0x100] sm:$0xf] %v3099
        %v3108 = vld [vmem:[#allocation2 + $0x2] sm:$0xff]
        %v3109 = vld [vmem:[#allocation2 + $0x12] sm:$0xff]
        %v3110 = vld [vmem:[#allocation2 + $0x22] sm:$0xff]
        %v3111 = vld [vmem:[#allocation2 + $0x32] sm:$0xff]
        %v3112 = vld [vmem:[#allocation2 + $0x42] sm:$0xff]
        %v3113 = vld [vmem:[#allocation2 + $0x52] sm:$0xff]
        %v3114 = vld [vmem:[#allocation2 + $0x62] sm:$0xff]
        %v3115 = vld [vmem:[#allocation2 + $0x72] sm:$0xff]
        %v3116 = vpack.c.bf16 %v3108, %v3108
        %v3117 = vpack.c.bf16 %v3109, %v3109
        %v3118 = vpack.c.bf16 %v3110, %v3110
        %v3119 = vpack.c.bf16 %v3111, %v3111
        %v3120 = vpack.c.bf16 %v3112, %v3112
        %v3121 = vpack.c.bf16 %v3113, %v3113
        %v3122 = vpack.c.bf16 %v3114, %v3114
        %v3123 = vpack.c.bf16 %v3115, %v3115
        %3124 = vst [vmem:[#allocation4 + $0x8] sm:$0xf] %v3116
        %3125 = vst [vmem:[#allocation4 + $0x2c] sm:$0xf] %v3117
        %3126 = vst [vmem:[#allocation4 + $0x50] sm:$0xf] %v3118
        %3127 = vst [vmem:[#allocation4 + $0x74] sm:$0xf] %v3119
        %3128 = vst [vmem:[#allocation4 + $0x98] sm:$0xf] %v3120
        %3129 = vst [vmem:[#allocation4 + $0xbc] sm:$0xf] %v3121
        %3130 = vst [vmem:[#allocation4 + $0xe0] sm:$0xf] %v3122
        %3131 = vst [vmem:[#allocation4 + $0x104] sm:$0xf] %v3123
        %v3132 = vld [vmem:[%s440] sm:$0xff]
        %v3133 = vld [vmem:[%s440 + $0x10] sm:$0xff]
        %v3134 = vld [vmem:[%s440 + $0x20] sm:$0xff]
        %v3135 = vld [vmem:[%s440 + $0x30] sm:$0xff]
        %v3136 = vld [vmem:[%s440 + $0x40] sm:$0xff]
        %v3137 = vld [vmem:[%s440 + $0x50] sm:$0xff]
        %v3138 = vld [vmem:[%s440 + $0x60] sm:$0xff]
        %v3139 = vld [vmem:[%s440 + $0x70] sm:$0xff]
        %v3140 = vpack.c.bf16 %v3132, %v3132
        %v3141 = vpack.c.bf16 %v3133, %v3133
        %v3142 = vpack.c.bf16 %v3134, %v3134
        %v3143 = vpack.c.bf16 %v3135, %v3135
        %v3144 = vpack.c.bf16 %v3136, %v3136
        %v3145 = vpack.c.bf16 %v3137, %v3137
        %v3146 = vpack.c.bf16 %v3138, %v3138
        %v3147 = vpack.c.bf16 %v3139, %v3139
        %3148 = vst [vmem:[#allocation4 + $0xc] sm:$0xf] %v3140
        %3149 = vst [vmem:[#allocation4 + $0x30] sm:$0xf] %v3141
        %3150 = vst [vmem:[#allocation4 + $0x54] sm:$0xf] %v3142
        %3151 = vst [vmem:[#allocation4 + $0x78] sm:$0xf] %v3143
        %3152 = vst [vmem:[#allocation4 + $0x9c] sm:$0xf] %v3144
        %3153 = vst [vmem:[#allocation4 + $0xc0] sm:$0xf] %v3145
        %3154 = vst [vmem:[#allocation4 + $0xe4] sm:$0xf] %v3146
        %3155 = vst [vmem:[#allocation4 + $0x108] sm:$0xf] %v3147
        %v3156 = vld [vmem:[%s440 + $0x1] sm:$0xff]
        %v3157 = vld [vmem:[%s440 + $0x11] sm:$0xff]
        %v3158 = vld [vmem:[%s440 + $0x21] sm:$0xff]
        %v3159 = vld [vmem:[%s440 + $0x31] sm:$0xff]
        %v3160 = vld [vmem:[%s440 + $0x41] sm:$0xff]
        %v3161 = vld [vmem:[%s440 + $0x51] sm:$0xff]
        %v3162 = vld [vmem:[%s440 + $0x61] sm:$0xff]
        %v3163 = vld [vmem:[%s440 + $0x71] sm:$0xff]
        %v3164 = vpack.c.bf16 %v3156, %v3156
        %v3165 = vpack.c.bf16 %v3157, %v3157
        %v3166 = vpack.c.bf16 %v3158, %v3158
        %v3167 = vpack.c.bf16 %v3159, %v3159
        %v3168 = vpack.c.bf16 %v3160, %v3160
        %v3169 = vpack.c.bf16 %v3161, %v3161
        %v3170 = vpack.c.bf16 %v3162, %v3162
        %v3171 = vpack.c.bf16 %v3163, %v3163
        %3172 = vst [vmem:[#allocation4 + $0x10] sm:$0xf] %v3164
        %3173 = vst [vmem:[#allocation4 + $0x34] sm:$0xf] %v3165
        %3174 = vst [vmem:[#allocation4 + $0x58] sm:$0xf] %v3166
        %3175 = vst [vmem:[#allocation4 + $0x7c] sm:$0xf] %v3167
        %3176 = vst [vmem:[#allocation4 + $0xa0] sm:$0xf] %v3168
        %3177 = vst [vmem:[#allocation4 + $0xc4] sm:$0xf] %v3169
        %3178 = vst [vmem:[#allocation4 + $0xe8] sm:$0xf] %v3170
        %3179 = vst [vmem:[#allocation4 + $0x10c] sm:$0xf] %v3171
        %v3180 = vld [vmem:[%s440 + $0x2] sm:$0xff]
        %v3181 = vld [vmem:[%s440 + $0x12] sm:$0xff]
        %v3182 = vld [vmem:[%s440 + $0x22] sm:$0xff]
        %v3183 = vld [vmem:[%s440 + $0x32] sm:$0xff]
        %v3184 = vld [vmem:[%s440 + $0x42] sm:$0xff]
        %v3185 = vld [vmem:[%s440 + $0x52] sm:$0xff]
        %v3186 = vld [vmem:[%s440 + $0x62] sm:$0xff]
        %v3187 = vld [vmem:[%s440 + $0x72] sm:$0xff]
        %v3188 = vpack.c.bf16 %v3180, %v3180
        %v3189 = vpack.c.bf16 %v3181, %v3181
        %v3190 = vpack.c.bf16 %v3182, %v3182
        %v3191 = vpack.c.bf16 %v3183, %v3183
        %v3192 = vpack.c.bf16 %v3184, %v3184
        %v3193 = vpack.c.bf16 %v3185, %v3185
        %v3194 = vpack.c.bf16 %v3186, %v3186
        %v3195 = vpack.c.bf16 %v3187, %v3187
        %3196 = vst [vmem:[#allocation4 + $0x14] sm:$0xf] %v3188
        %3197 = vst [vmem:[#allocation4 + $0x38] sm:$0xf] %v3189
        %3198 = vst [vmem:[#allocation4 + $0x5c] sm:$0xf] %v3190
        %3199 = vst [vmem:[#allocation4 + $0x80] sm:$0xf] %v3191
        %3200 = vst [vmem:[#allocation4 + $0xa4] sm:$0xf] %v3192
        %3201 = vst [vmem:[#allocation4 + $0xc8] sm:$0xf] %v3193
        %3202 = vst [vmem:[#allocation4 + $0xec] sm:$0xf] %v3194
        %3203 = vst [vmem:[#allocation4 + $0x110] sm:$0xf] %v3195
        %v3204 = vld [vmem:[%s593] sm:$0xff]
        %v3205 = vld [vmem:[%s593 + $0x10] sm:$0xff]
        %v3206 = vld [vmem:[%s593 + $0x20] sm:$0xff]
        %v3207 = vld [vmem:[%s593 + $0x30] sm:$0xff]
        %v3208 = vld [vmem:[%s593 + $0x40] sm:$0xff]
        %v3209 = vld [vmem:[%s593 + $0x50] sm:$0xff]
        %v3210 = vld [vmem:[%s593 + $0x60] sm:$0xff]
        %v3211 = vld [vmem:[%s593 + $0x70] sm:$0xff]
        %v3212 = vpack.c.bf16 %v3204, %v3204
        %v3213 = vpack.c.bf16 %v3205, %v3205
        %v3214 = vpack.c.bf16 %v3206, %v3206
        %v3215 = vpack.c.bf16 %v3207, %v3207
        %v3216 = vpack.c.bf16 %v3208, %v3208
        %v3217 = vpack.c.bf16 %v3209, %v3209
        %v3218 = vpack.c.bf16 %v3210, %v3210
        %v3219 = vpack.c.bf16 %v3211, %v3211
        %3220 = vst [vmem:[#allocation4 + $0x18] sm:$0xf] %v3212
        %3221 = vst [vmem:[#allocation4 + $0x3c] sm:$0xf] %v3213
        %3222 = vst [vmem:[#allocation4 + $0x60] sm:$0xf] %v3214
        %3223 = vst [vmem:[#allocation4 + $0x84] sm:$0xf] %v3215
        %3224 = vst [vmem:[#allocation4 + $0xa8] sm:$0xf] %v3216
        %3225 = vst [vmem:[#allocation4 + $0xcc] sm:$0xf] %v3217
        %3226 = vst [vmem:[#allocation4 + $0xf0] sm:$0xf] %v3218
        %3227 = vst [vmem:[#allocation4 + $0x114] sm:$0xf] %v3219
        %v3228 = vld [vmem:[%s593 + $0x1] sm:$0xff]
        %v3229 = vld [vmem:[%s593 + $0x11] sm:$0xff]
        %v3230 = vld [vmem:[%s593 + $0x21] sm:$0xff]
        %v3231 = vld [vmem:[%s593 + $0x31] sm:$0xff]
        %v3232 = vld [vmem:[%s593 + $0x41] sm:$0xff]
        %v3233 = vld [vmem:[%s593 + $0x51] sm:$0xff]
        %v3234 = vld [vmem:[%s593 + $0x61] sm:$0xff]
        %v3235 = vld [vmem:[%s593 + $0x71] sm:$0xff]
        %v3236 = vpack.c.bf16 %v3228, %v3228
        %v3237 = vpack.c.bf16 %v3229, %v3229
        %v3238 = vpack.c.bf16 %v3230, %v3230
        %v3239 = vpack.c.bf16 %v3231, %v3231
        %v3240 = vpack.c.bf16 %v3232, %v3232
        %v3241 = vpack.c.bf16 %v3233, %v3233
        %v3242 = vpack.c.bf16 %v3234, %v3234
        %v3243 = vpack.c.bf16 %v3235, %v3235
        %3244 = vst [vmem:[#allocation4 + $0x1c] sm:$0xf] %v3236
        %3245 = vst [vmem:[#allocation4 + $0x40] sm:$0xf] %v3237
        %3246 = vst [vmem:[#allocation4 + $0x64] sm:$0xf] %v3238
        %3247 = vst [vmem:[#allocation4 + $0x88] sm:$0xf] %v3239
        %3248 = vst [vmem:[#allocation4 + $0xac] sm:$0xf] %v3240
        %3249 = vst [vmem:[#allocation4 + $0xd0] sm:$0xf] %v3241
        %3250 = vst [vmem:[#allocation4 + $0xf4] sm:$0xf] %v3242
        %3251 = vst [vmem:[#allocation4 + $0x118] sm:$0xf] %v3243
        %v3252 = vld [vmem:[%s593 + $0x2] sm:$0xff]
        %v3253 = vld [vmem:[%s593 + $0x12] sm:$0xff]
        %v3254 = vld [vmem:[%s593 + $0x22] sm:$0xff]
        %v3255 = vld [vmem:[%s593 + $0x32] sm:$0xff]
        %v3256 = vld [vmem:[%s593 + $0x42] sm:$0xff]
        %v3257 = vld [vmem:[%s593 + $0x52] sm:$0xff]
        %v3258 = vld [vmem:[%s593 + $0x62] sm:$0xff]
        %v3259 = vld [vmem:[%s593 + $0x72] sm:$0xff]
        %v3260 = vpack.c.bf16 %v3252, %v3252
        %v3261 = vpack.c.bf16 %v3253, %v3253
        %v3262 = vpack.c.bf16 %v3254, %v3254
        %v3263 = vpack.c.bf16 %v3255, %v3255
        %v3264 = vpack.c.bf16 %v3256, %v3256
        %v3265 = vpack.c.bf16 %v3257, %v3257
        %v3266 = vpack.c.bf16 %v3258, %v3258
        %v3267 = vpack.c.bf16 %v3259, %v3259
        %3268 = vst [vmem:[#allocation4 + $0x20] sm:$0xf] %v3260
        %3269 = vst [vmem:[#allocation4 + $0x44] sm:$0xf] %v3261
        %3270 = vst [vmem:[#allocation4 + $0x68] sm:$0xf] %v3262
        %3271 = vst [vmem:[#allocation4 + $0x8c] sm:$0xf] %v3263
        %3272 = vst [vmem:[#allocation4 + $0xb0] sm:$0xf] %v3264
        %3273 = vst [vmem:[#allocation4 + $0xd4] sm:$0xf] %v3265
        %3274 = vst [vmem:[#allocation4 + $0xf8] sm:$0xf] %v3266
        %3275 = vst [vmem:[#allocation4 + $0x11c] sm:$0xf] %v3267
        %v3276 = vld [vmem:[#allocation4] sm:$0xff]
        %v3277 = vld [vmem:[#allocation4 + $0x8] sm:$0xff]
        %v3278 = vld [vmem:[#allocation4 + $0x10] sm:$0xff]
        %v3279 = vld [vmem:[#allocation4 + $0x18] sm:$0xff]
        %v3280 = vld [vmem:[#allocation4 + $0x20] sm:$0xf]
        %v3281 = vld [vmem:[#allocation4 + $0x24] sm:$0xff]
        %v3282 = vld [vmem:[#allocation4 + $0x2c] sm:$0xff]
        %v3283 = vld [vmem:[#allocation4 + $0x34] sm:$0xff]
        %v3284 = vld [vmem:[#allocation4 + $0x3c] sm:$0xff]
        %v3285 = vld [vmem:[#allocation4 + $0x44] sm:$0xf]
        %v3286 = vld [vmem:[#allocation4 + $0x48] sm:$0xff]
        %v3287 = vld [vmem:[#allocation4 + $0x50] sm:$0xff]
        %v3288 = vld [vmem:[#allocation4 + $0x58] sm:$0xff]
        %v3289 = vld [vmem:[#allocation4 + $0x60] sm:$0xff]
        %v3290 = vld [vmem:[#allocation4 + $0x68] sm:$0xf]
        %v3291 = vld [vmem:[#allocation4 + $0x6c] sm:$0xff]
        %v3292 = vld [vmem:[#allocation4 + $0x74] sm:$0xff]
        %v3293 = vld [vmem:[#allocation4 + $0x7c] sm:$0xff]
        %v3294 = vld [vmem:[#allocation4 + $0x84] sm:$0xff]
        %v3295 = vld [vmem:[#allocation4 + $0x8c] sm:$0xf]
        %v3296 = vld [vmem:[#allocation4 + $0x90] sm:$0xff]
        %v3297 = vld [vmem:[#allocation4 + $0x98] sm:$0xff]
        %v3298 = vld [vmem:[#allocation4 + $0xa0] sm:$0xff]
        %v3299 = vld [vmem:[#allocation4 + $0xa8] sm:$0xff]
        %v3300 = vld [vmem:[#allocation4 + $0xb0] sm:$0xf]
        %v3301 = vld [vmem:[#allocation4 + $0xb4] sm:$0xff]
        %v3302 = vld [vmem:[#allocation4 + $0xbc] sm:$0xff]
        %v3303 = vld [vmem:[#allocation4 + $0xc4] sm:$0xff]
        %v3304 = vld [vmem:[#allocation4 + $0xcc] sm:$0xff]
        %v3305 = vld [vmem:[#allocation4 + $0xd4] sm:$0xf]
        %v3306 = vld [vmem:[#allocation4 + $0xd8] sm:$0xff]
        %v3307 = vld [vmem:[#allocation4 + $0xe0] sm:$0xff]
        %v3308 = vld [vmem:[#allocation4 + $0xe8] sm:$0xff]
        %v3309 = vld [vmem:[#allocation4 + $0xf0] sm:$0xff]
        %v3310 = vld [vmem:[#allocation4 + $0xf8] sm:$0xf]
        %v3311 = vld [vmem:[#allocation4 + $0xfc] sm:$0xff]
        %v3312 = vld [vmem:[#allocation4 + $0x104] sm:$0xff]
        %v3313 = vld [vmem:[#allocation4 + $0x10c] sm:$0xff]
        %v3314 = vld [vmem:[#allocation4 + $0x114] sm:$0xff]
        %v3315 = vld [vmem:[#allocation4 + $0x11c] sm:$0xf]
        %v3316 = vld [vmem:[#allocation10] sm:$0xff]
        %v3317 = vld [vmem:[#allocation10 + $0x8] sm:$0xff]
        %v3318 = vld [vmem:[#allocation10 + $0x10] sm:$0xff]
        %v3319 = vld [vmem:[#allocation10 + $0x18] sm:$0xff]
        %v3320 = vld [vmem:[#allocation10 + $0x20] sm:$0xff]
        %v3321 = vld [vmem:[#allocation10 + $0x28] sm:$0xff]
        %v3322 = vld [vmem:[#allocation10 + $0x30] sm:$0xff]
        %v3323 = vld [vmem:[#allocation10 + $0x38] sm:$0xff]
        %v3324 = vld [vmem:[#allocation10 + $0x40] sm:$0xff]
        %v3325 = vld [vmem:[#allocation10 + $0x48] sm:$0xff]
        %v3326 = vld [vmem:[#allocation10 + $0x50] sm:$0xff]
        %v3327 = vld [vmem:[#allocation10 + $0x58] sm:$0xff]
        %v3328 = vld [vmem:[#allocation10 + $0x60] sm:$0xff]
        %v3329 = vld [vmem:[#allocation10 + $0x68] sm:$0xff]
        %v3330 = vld [vmem:[#allocation10 + $0x70] sm:$0xff]
        %v3331 = vld [vmem:[#allocation10 + $0x78] sm:$0xff]
        %v3332 = vld [vmem:[#allocation10 + $0x80] sm:$0xff]
        %v3333 = vld [vmem:[#allocation10 + $0x88] sm:$0xff]
        %v3334 = vld [vmem:[#allocation10 + $0x90] sm:$0xff]
        %v3335 = vld [vmem:[#allocation10 + $0x98] sm:$0xff]
        %v3336 = vld [vmem:[#allocation10 + $0xa0] sm:$0xff]
        %v3337 = vld [vmem:[#allocation10 + $0xa8] sm:$0xff]
        %v3338 = vld [vmem:[#allocation10 + $0xb0] sm:$0xff]
        %v3339 = vld [vmem:[#allocation10 + $0xb8] sm:$0xff]
        %v3340 = vld [vmem:[#allocation10 + $0xc0] sm:$0xff]
        %v3341 = vld [vmem:[#allocation10 + $0xc8] sm:$0xff]
        %v3342 = vld [vmem:[#allocation10 + $0xd0] sm:$0xff]
        %v3343 = vld [vmem:[#allocation10 + $0xd8] sm:$0xff]
        %v3344 = vld [vmem:[#allocation10 + $0xe0] sm:$0xff]
        %v3345 = vld [vmem:[#allocation10 + $0xe8] sm:$0xff]
        %v3346 = vld [vmem:[#allocation10 + $0xf0] sm:$0xff]
        %v3347 = vld [vmem:[#allocation10 + $0xf8] sm:$0xff]
        %v3348 = vld [vmem:[#allocation10 + $0x100] sm:$0xff]
        %v3349 = vld [vmem:[#allocation10 + $0x108] sm:$0xff]
        %v3350 = vld [vmem:[#allocation10 + $0x110] sm:$0xff]
        %v3351 = vld [vmem:[#allocation10 + $0x118] sm:$0xff]
        %v3352 = vld [vmem:[#allocation10 + $0x120] sm:$0xff]
        %v3353 = vld [vmem:[#allocation10 + $0x128] sm:$0xff]
        %v3354 = vld [vmem:[#allocation10 + $0x130] sm:$0xff]
        %v3355 = vld [vmem:[#allocation10 + $0x138] sm:$0xff]
        %v3356 = vld [vmem:[#allocation10 + $0x140] sm:$0xff]
        %v3357 = vld [vmem:[#allocation10 + $0x148] sm:$0xff]
        %v3358 = vld [vmem:[#allocation10 + $0x150] sm:$0xff]
        %v3359 = vld [vmem:[#allocation10 + $0x158] sm:$0xff]
        %v3360 = vld [vmem:[#allocation10 + $0x160] sm:$0xff]
        %v3361 = vld [vmem:[#allocation10 + $0x168] sm:$0xff]
        %v3362 = vld [vmem:[#allocation10 + $0x170] sm:$0xff]
        %v3363 = vld [vmem:[#allocation10 + $0x178] sm:$0xff]
        %v3364 = vld [vmem:[#allocation10 + $0x180] sm:$0xff]
        %v3365 = vld [vmem:[#allocation10 + $0x188] sm:$0xff]
        %v3366 = vld [vmem:[#allocation10 + $0x190] sm:$0xff]
        %v3367 = vld [vmem:[#allocation10 + $0x198] sm:$0xff]
        %v3368 = vld [vmem:[#allocation10 + $0x1a0] sm:$0xff]
        %v3369 = vld [vmem:[#allocation10 + $0x1a8] sm:$0xff]
        %v3370 = vld [vmem:[#allocation10 + $0x1b0] sm:$0xff]
        %v3371 = vld [vmem:[#allocation10 + $0x1b8] sm:$0xff]
        %v3372 = vld [vmem:[#allocation10 + $0x1c0] sm:$0xff]
        %v3373 = vld [vmem:[#allocation10 + $0x1c8] sm:$0xff]
        %v3374 = vld [vmem:[#allocation10 + $0x1d0] sm:$0xff]
        %v3375 = vld [vmem:[#allocation10 + $0x1d8] sm:$0xff]
        %v3376 = vld [vmem:[#allocation10 + $0x1e0] sm:$0xff]
        %v3377 = vld [vmem:[#allocation10 + $0x1e8] sm:$0xff]
        %v3378 = vld [vmem:[#allocation10 + $0x1f0] sm:$0xff]
        %v3379 = vld [vmem:[#allocation10 + $0x1f8] sm:$0xff]
        %v3380 = vld [vmem:[#allocation10 + $0x200] sm:$0xff]
        %v3381 = vld [vmem:[#allocation10 + $0x208] sm:$0xff]
        %v3382 = vld [vmem:[#allocation10 + $0x210] sm:$0xff]
        %v3383 = vld [vmem:[#allocation10 + $0x218] sm:$0xff]
        %v3384 = vld [vmem:[#allocation10 + $0x220] sm:$0xff]
        %v3385 = vld [vmem:[#allocation10 + $0x228] sm:$0xff]
        %v3386 = vld [vmem:[#allocation10 + $0x230] sm:$0xff]
        %v3387 = vld [vmem:[#allocation10 + $0x238] sm:$0xff]
        %v3388 = vld [vmem:[#allocation10 + $0x240] sm:$0xff]
        %v3389 = vld [vmem:[#allocation10 + $0x248] sm:$0xff]
        %v3390 = vld [vmem:[#allocation10 + $0x250] sm:$0xff]
        %v3391 = vld [vmem:[#allocation10 + $0x258] sm:$0xff]
        %v3392 = vld [vmem:[#allocation10 + $0x260] sm:$0xff]
        %v3393 = vld [vmem:[#allocation10 + $0x268] sm:$0xff]
        %v3394 = vld [vmem:[#allocation10 + $0x270] sm:$0xff]
        %v3395 = vld [vmem:[#allocation10 + $0x278] sm:$0xff]
        %v3396 = vld [vmem:[#allocation10 + $0x280] sm:$0xff]
        %v3397 = vld [vmem:[#allocation10 + $0x288] sm:$0xff]
        %v3398 = vld [vmem:[#allocation10 + $0x290] sm:$0xff]
        %v3399 = vld [vmem:[#allocation10 + $0x298] sm:$0xff]
        %v3400 = vld [vmem:[#allocation10 + $0x2a0] sm:$0xff]
        %v3401 = vld [vmem:[#allocation10 + $0x2a8] sm:$0xff]
        %v3402 = vld [vmem:[#allocation10 + $0x2b0] sm:$0xff]
        %v3403 = vld [vmem:[#allocation10 + $0x2b8] sm:$0xff]
        %v3404 = vld [vmem:[#allocation10 + $0x2c0] sm:$0xff]
        %v3405 = vld [vmem:[#allocation10 + $0x2c8] sm:$0xff]
        %v3406 = vld [vmem:[#allocation10 + $0x2d0] sm:$0xff]
        %v3407 = vld [vmem:[#allocation10 + $0x2d8] sm:$0xff]
        %v3408 = vld [vmem:[#allocation10 + $0x2e0] sm:$0xff]
        %v3409 = vld [vmem:[#allocation10 + $0x2e8] sm:$0xff]
        %v3410 = vld [vmem:[#allocation10 + $0x2f0] sm:$0xff]
        %v3411 = vld [vmem:[#allocation10 + $0x2f8] sm:$0xff]
        %v3412 = vld [vmem:[#allocation10 + $0x300] sm:$0xff]
        %v3413 = vld [vmem:[#allocation10 + $0x308] sm:$0xff]
        %v3414 = vld [vmem:[#allocation10 + $0x310] sm:$0xff]
        %v3415 = vld [vmem:[#allocation10 + $0x318] sm:$0xff]
        %v3416 = vld [vmem:[#allocation10 + $0x320] sm:$0xff]
        %v3417 = vld [vmem:[#allocation10 + $0x328] sm:$0xff]
        %v3418 = vld [vmem:[#allocation10 + $0x330] sm:$0xff]
        %v3419 = vld [vmem:[#allocation10 + $0x338] sm:$0xff]
        %v3420 = vld [vmem:[#allocation10 + $0x340] sm:$0xff]
        %v3421 = vld [vmem:[#allocation10 + $0x348] sm:$0xff]
        %v3422 = vld [vmem:[#allocation10 + $0x350] sm:$0xff]
        %v3423 = vld [vmem:[#allocation10 + $0x358] sm:$0xff]
        %v3424 = vld [vmem:[#allocation10 + $0x360] sm:$0xff]
        %v3425 = vld [vmem:[#allocation10 + $0x368] sm:$0xff]
        %v3426 = vld [vmem:[#allocation10 + $0x370] sm:$0xff]
        %v3427 = vld [vmem:[#allocation10 + $0x378] sm:$0xff]
        %v3428 = vld [vmem:[#allocation10 + $0x380] sm:$0xff]
        %v3429 = vld [vmem:[#allocation10 + $0x388] sm:$0xff]
        %v3430 = vld [vmem:[#allocation10 + $0x390] sm:$0xff]
        %v3431 = vld [vmem:[#allocation10 + $0x398] sm:$0xff]
        %v3432 = vld [vmem:[#allocation10 + $0x3a0] sm:$0xff]
        %v3433 = vld [vmem:[#allocation10 + $0x3a8] sm:$0xff]
        %v3434 = vld [vmem:[#allocation10 + $0x3b0] sm:$0xff]
        %v3435 = vld [vmem:[#allocation10 + $0x3b8] sm:$0xff]
        %v3436 = vld [vmem:[#allocation10 + $0x3c0] sm:$0xff]
        %v3437 = vld [vmem:[#allocation10 + $0x3c8] sm:$0xff]
        %v3438 = vld [vmem:[#allocation10 + $0x3d0] sm:$0xff]
        %v3439 = vld [vmem:[#allocation10 + $0x3d8] sm:$0xff]
        %v3440 = vld [vmem:[#allocation10 + $0x3e0] sm:$0xff]
        %v3441 = vld [vmem:[#allocation10 + $0x3e8] sm:$0xff]
        %v3442 = vld [vmem:[#allocation10 + $0x3f0] sm:$0xff]
        %v3443 = vld [vmem:[#allocation10 + $0x3f8] sm:$0xff]
        %v3444 = vld [vmem:[#allocation10 + $0x400] sm:$0xff]
        %v3445 = vld [vmem:[#allocation10 + $0x408] sm:$0xff]
        %v3446 = vld [vmem:[#allocation10 + $0x410] sm:$0xff]
        %v3447 = vld [vmem:[#allocation10 + $0x418] sm:$0xff]
        %v3448 = vld [vmem:[#allocation10 + $0x420] sm:$0xff]
        %v3449 = vld [vmem:[#allocation10 + $0x428] sm:$0xff]
        %v3450 = vld [vmem:[#allocation10 + $0x430] sm:$0xff]
        %v3451 = vld [vmem:[#allocation10 + $0x438] sm:$0xff]
        %v3452 = vld [vmem:[#allocation10 + $0x440] sm:$0xff]
        %v3453 = vld [vmem:[#allocation10 + $0x448] sm:$0xff]
        %v3454 = vld [vmem:[#allocation10 + $0x450] sm:$0xff]
        %v3455 = vld [vmem:[#allocation10 + $0x458] sm:$0xff]
        %v3456 = vld [vmem:[#allocation10 + $0x460] sm:$0xff]
        %v3457 = vld [vmem:[#allocation10 + $0x468] sm:$0xff]
        %v3458 = vld [vmem:[#allocation10 + $0x470] sm:$0xff]
        %v3459 = vld [vmem:[#allocation10 + $0x478] sm:$0xff]
        %v3500 = vunpack.c.l.b16 %v3276
        %v3501 = vunpack.c.h.b16 %v3276
        %v3502 = vunpack.c.l.b16 %v3277
        %v3503 = vunpack.c.h.b16 %v3277
        %v3504 = vunpack.c.l.b16 %v3278
        %v3505 = vunpack.c.h.b16 %v3278
        %v3506 = vunpack.c.l.b16 %v3279
        %v3507 = vunpack.c.h.b16 %v3279
        %v3508 = vunpack.c.l.b16 %v3280
        %v3509 = vunpack.c.l.b16 %v3281
        %v3510 = vunpack.c.h.b16 %v3281
        %v3511 = vunpack.c.l.b16 %v3282
        %v3512 = vunpack.c.h.b16 %v3282
        %v3513 = vunpack.c.l.b16 %v3283
        %v3514 = vunpack.c.h.b16 %v3283
        %v3515 = vunpack.c.l.b16 %v3284
        %v3516 = vunpack.c.h.b16 %v3284
        %v3517 = vunpack.c.l.b16 %v3285
        %v3518 = vunpack.c.l.b16 %v3286
        %v3519 = vunpack.c.h.b16 %v3286
        %v3520 = vunpack.c.l.b16 %v3287
        %v3521 = vunpack.c.h.b16 %v3287
        %v3522 = vunpack.c.l.b16 %v3288
        %v3523 = vunpack.c.h.b16 %v3288
        %v3524 = vunpack.c.l.b16 %v3289
        %v3525 = vunpack.c.h.b16 %v3289
        %v3526 = vunpack.c.l.b16 %v3290
        %v3527 = vunpack.c.l.b16 %v3291
        %v3528 = vunpack.c.h.b16 %v3291
        %v3529 = vunpack.c.l.b16 %v3292
        %v3530 = vunpack.c.h.b16 %v3292
        %v3531 = vunpack.c.l.b16 %v3293
        %v3532 = vunpack.c.h.b16 %v3293
        %v3533 = vunpack.c.l.b16 %v3294
        %v3534 = vunpack.c.h.b16 %v3294
        %v3535 = vunpack.c.l.b16 %v3295
        %v3536 = vunpack.c.l.b16 %v3296
        %v3537 = vunpack.c.h.b16 %v3296
        %v3538 = vunpack.c.l.b16 %v3297
        %v3539 = vunpack.c.h.b16 %v3297
        %v3540 = vunpack.c.l.b16 %v3298
        %v3541 = vunpack.c.h.b16 %v3298
        %v3542 = vunpack.c.l.b16 %v3299
        %v3543 = vunpack.c.h.b16 %v3299
        %v3544 = vunpack.c.l.b16 %v3300
        %v3545 = vunpack.c.l.b16 %v3301
        %v3546 = vunpack.c.h.b16 %v3301
        %v3547 = vunpack.c.l.b16 %v3302
        %v3548 = vunpack.c.h.b16 %v3302
        %v3549 = vunpack.c.l.b16 %v3303
        %v3550 = vunpack.c.h.b16 %v3303
        %v3551 = vunpack.c.l.b16 %v3304
        %v3552 = vunpack.c.h.b16 %v3304
        %v3553 = vunpack.c.l.b16 %v3305
        %v3554 = vunpack.c.l.b16 %v3306
        %v3555 = vunpack.c.h.b16 %v3306
        %v3556 = vunpack.c.l.b16 %v3307
        %v3557 = vunpack.c.h.b16 %v3307
        %v3558 = vunpack.c.l.b16 %v3308
        %v3559 = vunpack.c.h.b16 %v3308
        %v3560 = vunpack.c.l.b16 %v3309
        %v3561 = vunpack.c.h.b16 %v3309
        %v3562 = vunpack.c.l.b16 %v3310
        %v3563 = vunpack.c.l.b16 %v3311
        %v3564 = vunpack.c.h.b16 %v3311
        %v3565 = vunpack.c.l.b16 %v3312
        %v3566 = vunpack.c.h.b16 %v3312
        %v3567 = vunpack.c.l.b16 %v3313
        %v3568 = vunpack.c.h.b16 %v3313
        %v3569 = vunpack.c.l.b16 %v3314
        %v3570 = vunpack.c.h.b16 %v3314
        %v3571 = vunpack.c.l.b16 %v3315
        %v3572 = vpack.c.b16 %v3509, %v3500
        %v3573 = vpack.c.b16 %v3510, %v3501
        %v3574 = vpack.c.b16 %v3511, %v3502
        %v3575 = vpack.c.b16 %v3512, %v3503
        %v3576 = vpack.c.b16 %v3513, %v3504
        %v3577 = vpack.c.b16 %v3514, %v3505
        %v3578 = vpack.c.b16 %v3515, %v3506
        %v3579 = vpack.c.b16 %v3516, %v3507
        %v3580 = vpack.c.b16 %v3517, %v3508
        %v3581 = vpack.c.b16 %v3527, %v3518
        %v3582 = vpack.c.b16 %v3528, %v3519
        %v3583 = vpack.c.b16 %v3529, %v3520
        %v3584 = vpack.c.b16 %v3530, %v3521
        %v3585 = vpack.c.b16 %v3531, %v3522
        %v3586 = vpack.c.b16 %v3532, %v3523
        %v3587 = vpack.c.b16 %v3533, %v3524
        %v3588 = vpack.c.b16 %v3534, %v3525
        %v3589 = vpack.c.b16 %v3535, %v3526
        %v3590 = vpack.c.b16 %v3545, %v3536
        %v3591 = vpack.c.b16 %v3546, %v3537
        %v3592 = vpack.c.b16 %v3547, %v3538
        %v3593 = vpack.c.b16 %v3548, %v3539
        %v3594 = vpack.c.b16 %v3549, %v3540
        %v3595 = vpack.c.b16 %v3550, %v3541
        %v3596 = vpack.c.b16 %v3551, %v3542
        %v3597 = vpack.c.b16 %v3552, %v3543
        %v3598 = vpack.c.b16 %v3553, %v3544
        %v3599 = vpack.c.b16 %v3563, %v3554
        %v3600 = vpack.c.b16 %v3564, %v3555
        %v3601 = vpack.c.b16 %v3565, %v3556
        %v3602 = vpack.c.b16 %v3566, %v3557
        %v3603 = vpack.c.b16 %v3567, %v3558
        %v3604 = vpack.c.b16 %v3568, %v3559
        %v3605 = vpack.c.b16 %v3569, %v3560
        %v3606 = vpack.c.b16 %v3570, %v3561
        %v3607 = vpack.c.b16 %v3571, %v3562
        %v3788 = vunpack.c.l.b16 %v3316
        %v3789 = vunpack.c.h.b16 %v3316
        %v3790 = vunpack.c.l.b16 %v3317
        %v3791 = vunpack.c.h.b16 %v3317
        %v3792 = vunpack.c.l.b16 %v3318
        %v3793 = vunpack.c.h.b16 %v3318
        %v3794 = vunpack.c.l.b16 %v3319
        %v3795 = vunpack.c.h.b16 %v3319
        %v3796 = vunpack.c.l.b16 %v3320
        %v3797 = vunpack.c.h.b16 %v3320
        %v3798 = vunpack.c.l.b16 %v3321
        %v3799 = vunpack.c.h.b16 %v3321
        %v3800 = vunpack.c.l.b16 %v3322
        %v3801 = vunpack.c.h.b16 %v3322
        %v3802 = vunpack.c.l.b16 %v3323
        %v3803 = vunpack.c.h.b16 %v3323
        %v3804 = vunpack.c.l.b16 %v3324
        %v3805 = vunpack.c.h.b16 %v3324
        %v3806 = vunpack.c.l.b16 %v3325
        %v3807 = vunpack.c.h.b16 %v3325
        %v3808 = vunpack.c.l.b16 %v3326
        %v3809 = vunpack.c.h.b16 %v3326
        %v3810 = vunpack.c.l.b16 %v3327
        %v3811 = vunpack.c.h.b16 %v3327
        %v3812 = vunpack.c.l.b16 %v3328
        %v3813 = vunpack.c.h.b16 %v3328
        %v3814 = vunpack.c.l.b16 %v3329
        %v3815 = vunpack.c.h.b16 %v3329
        %v3816 = vunpack.c.l.b16 %v3330
        %v3817 = vunpack.c.h.b16 %v3330
        %v3818 = vunpack.c.l.b16 %v3331
        %v3819 = vunpack.c.h.b16 %v3331
        %v3820 = vunpack.c.l.b16 %v3332
        %v3821 = vunpack.c.h.b16 %v3332
        %v3822 = vunpack.c.l.b16 %v3333
        %v3823 = vunpack.c.h.b16 %v3333
        %v3824 = vunpack.c.l.b16 %v3334
        %v3825 = vunpack.c.h.b16 %v3334
        %v3826 = vunpack.c.l.b16 %v3335
        %v3827 = vunpack.c.h.b16 %v3335
        %v3828 = vunpack.c.l.b16 %v3336
        %v3829 = vunpack.c.h.b16 %v3336
        %v3830 = vunpack.c.l.b16 %v3337
        %v3831 = vunpack.c.h.b16 %v3337
        %v3832 = vunpack.c.l.b16 %v3338
        %v3833 = vunpack.c.h.b16 %v3338
        %v3834 = vunpack.c.l.b16 %v3339
        %v3835 = vunpack.c.h.b16 %v3339
        %v3836 = vunpack.c.l.b16 %v3340
        %v3837 = vunpack.c.h.b16 %v3340
        %v3838 = vunpack.c.l.b16 %v3341
        %v3839 = vunpack.c.h.b16 %v3341
        %v3840 = vunpack.c.l.b16 %v3342
        %v3841 = vunpack.c.h.b16 %v3342
        %v3842 = vunpack.c.l.b16 %v3343
        %v3843 = vunpack.c.h.b16 %v3343
        %v3844 = vunpack.c.l.b16 %v3344
        %v3845 = vunpack.c.h.b16 %v3344
        %v3846 = vunpack.c.l.b16 %v3345
        %v3847 = vunpack.c.h.b16 %v3345
        %v3848 = vunpack.c.l.b16 %v3346
        %v3849 = vunpack.c.h.b16 %v3346
        %v3850 = vunpack.c.l.b16 %v3347
        %v3851 = vunpack.c.h.b16 %v3347
        %v3852 = vunpack.c.l.b16 %v3348
        %v3853 = vunpack.c.h.b16 %v3348
        %v3854 = vunpack.c.l.b16 %v3349
        %v3855 = vunpack.c.h.b16 %v3349
        %v3856 = vunpack.c.l.b16 %v3350
        %v3857 = vunpack.c.h.b16 %v3350
        %v3858 = vunpack.c.l.b16 %v3351
        %v3859 = vunpack.c.h.b16 %v3351
        %v3860 = vunpack.c.l.b16 %v3352
        %v3861 = vunpack.c.h.b16 %v3352
        %v3862 = vunpack.c.l.b16 %v3353
        %v3863 = vunpack.c.h.b16 %v3353
        %v3864 = vunpack.c.l.b16 %v3354
        %v3865 = vunpack.c.h.b16 %v3354
        %v3866 = vunpack.c.l.b16 %v3355
        %v3867 = vunpack.c.h.b16 %v3355
        %v3868 = vunpack.c.l.b16 %v3356
        %v3869 = vunpack.c.h.b16 %v3356
        %v3870 = vunpack.c.l.b16 %v3357
        %v3871 = vunpack.c.h.b16 %v3357
        %v3872 = vunpack.c.l.b16 %v3358
        %v3873 = vunpack.c.h.b16 %v3358
        %v3874 = vunpack.c.l.b16 %v3359
        %v3875 = vunpack.c.h.b16 %v3359
        %v3876 = vunpack.c.l.b16 %v3360
        %v3877 = vunpack.c.h.b16 %v3360
        %v3878 = vunpack.c.l.b16 %v3361
        %v3879 = vunpack.c.h.b16 %v3361
        %v3880 = vunpack.c.l.b16 %v3362
        %v3881 = vunpack.c.h.b16 %v3362
        %v3882 = vunpack.c.l.b16 %v3363
        %v3883 = vunpack.c.h.b16 %v3363
        %v3884 = vunpack.c.l.b16 %v3364
        %v3885 = vunpack.c.h.b16 %v3364
        %v3886 = vunpack.c.l.b16 %v3365
        %v3887 = vunpack.c.h.b16 %v3365
        %v3888 = vunpack.c.l.b16 %v3366
        %v3889 = vunpack.c.h.b16 %v3366
        %v3890 = vunpack.c.l.b16 %v3367
        %v3891 = vunpack.c.h.b16 %v3367
        %v3892 = vunpack.c.l.b16 %v3368
        %v3893 = vunpack.c.h.b16 %v3368
        %v3894 = vunpack.c.l.b16 %v3369
        %v3895 = vunpack.c.h.b16 %v3369
        %v3896 = vunpack.c.l.b16 %v3370
        %v3897 = vunpack.c.h.b16 %v3370
        %v3898 = vunpack.c.l.b16 %v3371
        %v3899 = vunpack.c.h.b16 %v3371
        %v3900 = vunpack.c.l.b16 %v3372
        %v3901 = vunpack.c.h.b16 %v3372
        %v3902 = vunpack.c.l.b16 %v3373
        %v3903 = vunpack.c.h.b16 %v3373
        %v3904 = vunpack.c.l.b16 %v3374
        %v3905 = vunpack.c.h.b16 %v3374
        %v3906 = vunpack.c.l.b16 %v3375
        %v3907 = vunpack.c.h.b16 %v3375
        %v3908 = vunpack.c.l.b16 %v3376
        %v3909 = vunpack.c.h.b16 %v3376
        %v3910 = vunpack.c.l.b16 %v3377
        %v3911 = vunpack.c.h.b16 %v3377
        %v3912 = vunpack.c.l.b16 %v3378
        %v3913 = vunpack.c.h.b16 %v3378
        %v3914 = vunpack.c.l.b16 %v3379
        %v3915 = vunpack.c.h.b16 %v3379
        %v3916 = vunpack.c.l.b16 %v3380
        %v3917 = vunpack.c.h.b16 %v3380
        %v3918 = vunpack.c.l.b16 %v3381
        %v3919 = vunpack.c.h.b16 %v3381
        %v3920 = vunpack.c.l.b16 %v3382
        %v3921 = vunpack.c.h.b16 %v3382
        %v3922 = vunpack.c.l.b16 %v3383
        %v3923 = vunpack.c.h.b16 %v3383
        %v3924 = vunpack.c.l.b16 %v3384
        %v3925 = vunpack.c.h.b16 %v3384
        %v3926 = vunpack.c.l.b16 %v3385
        %v3927 = vunpack.c.h.b16 %v3385
        %v3928 = vunpack.c.l.b16 %v3386
        %v3929 = vunpack.c.h.b16 %v3386
        %v3930 = vunpack.c.l.b16 %v3387
        %v3931 = vunpack.c.h.b16 %v3387
        %v3932 = vunpack.c.l.b16 %v3388
        %v3933 = vunpack.c.h.b16 %v3388
        %v3934 = vunpack.c.l.b16 %v3389
        %v3935 = vunpack.c.h.b16 %v3389
        %v3936 = vunpack.c.l.b16 %v3390
        %v3937 = vunpack.c.h.b16 %v3390
        %v3938 = vunpack.c.l.b16 %v3391
        %v3939 = vunpack.c.h.b16 %v3391
        %v3940 = vunpack.c.l.b16 %v3392
        %v3941 = vunpack.c.h.b16 %v3392
        %v3942 = vunpack.c.l.b16 %v3393
        %v3943 = vunpack.c.h.b16 %v3393
        %v3944 = vunpack.c.l.b16 %v3394
        %v3945 = vunpack.c.h.b16 %v3394
        %v3946 = vunpack.c.l.b16 %v3395
        %v3947 = vunpack.c.h.b16 %v3395
        %v3948 = vunpack.c.l.b16 %v3396
        %v3949 = vunpack.c.h.b16 %v3396
        %v3950 = vunpack.c.l.b16 %v3397
        %v3951 = vunpack.c.h.b16 %v3397
        %v3952 = vunpack.c.l.b16 %v3398
        %v3953 = vunpack.c.h.b16 %v3398
        %v3954 = vunpack.c.l.b16 %v3399
        %v3955 = vunpack.c.h.b16 %v3399
        %v3956 = vunpack.c.l.b16 %v3400
        %v3957 = vunpack.c.h.b16 %v3400
        %v3958 = vunpack.c.l.b16 %v3401
        %v3959 = vunpack.c.h.b16 %v3401
        %v3960 = vunpack.c.l.b16 %v3402
        %v3961 = vunpack.c.h.b16 %v3402
        %v3962 = vunpack.c.l.b16 %v3403
        %v3963 = vunpack.c.h.b16 %v3403
        %v3964 = vunpack.c.l.b16 %v3404
        %v3965 = vunpack.c.h.b16 %v3404
        %v3966 = vunpack.c.l.b16 %v3405
        %v3967 = vunpack.c.h.b16 %v3405
        %v3968 = vunpack.c.l.b16 %v3406
        %v3969 = vunpack.c.h.b16 %v3406
        %v3970 = vunpack.c.l.b16 %v3407
        %v3971 = vunpack.c.h.b16 %v3407
        %v3972 = vunpack.c.l.b16 %v3408
        %v3973 = vunpack.c.h.b16 %v3408
        %v3974 = vunpack.c.l.b16 %v3409
        %v3975 = vunpack.c.h.b16 %v3409
        %v3976 = vunpack.c.l.b16 %v3410
        %v3977 = vunpack.c.h.b16 %v3410
        %v3978 = vunpack.c.l.b16 %v3411
        %v3979 = vunpack.c.h.b16 %v3411
        %v3980 = vunpack.c.l.b16 %v3412
        %v3981 = vunpack.c.h.b16 %v3412
        %v3982 = vunpack.c.l.b16 %v3413
        %v3983 = vunpack.c.h.b16 %v3413
        %v3984 = vunpack.c.l.b16 %v3414
        %v3985 = vunpack.c.h.b16 %v3414
        %v3986 = vunpack.c.l.b16 %v3415
        %v3987 = vunpack.c.h.b16 %v3415
        %v3988 = vunpack.c.l.b16 %v3416
        %v3989 = vunpack.c.h.b16 %v3416
        %v3990 = vunpack.c.l.b16 %v3417
        %v3991 = vunpack.c.h.b16 %v3417
        %v3992 = vunpack.c.l.b16 %v3418
        %v3993 = vunpack.c.h.b16 %v3418
        %v3994 = vunpack.c.l.b16 %v3419
        %v3995 = vunpack.c.h.b16 %v3419
        %v3996 = vunpack.c.l.b16 %v3420
        %v3997 = vunpack.c.h.b16 %v3420
        %v3998 = vunpack.c.l.b16 %v3421
        %v3999 = vunpack.c.h.b16 %v3421
        %v4000 = vunpack.c.l.b16 %v3422
        %v4001 = vunpack.c.h.b16 %v3422
        %v4002 = vunpack.c.l.b16 %v3423
        %v4003 = vunpack.c.h.b16 %v3423
        %v4004 = vunpack.c.l.b16 %v3424
        %v4005 = vunpack.c.h.b16 %v3424
        %v4006 = vunpack.c.l.b16 %v3425
        %v4007 = vunpack.c.h.b16 %v3425
        %v4008 = vunpack.c.l.b16 %v3426
        %v4009 = vunpack.c.h.b16 %v3426
        %v4010 = vunpack.c.l.b16 %v3427
        %v4011 = vunpack.c.h.b16 %v3427
        %v4012 = vunpack.c.l.b16 %v3428
        %v4013 = vunpack.c.h.b16 %v3428
        %v4014 = vunpack.c.l.b16 %v3429
        %v4015 = vunpack.c.h.b16 %v3429
        %v4016 = vunpack.c.l.b16 %v3430
        %v4017 = vunpack.c.h.b16 %v3430
        %v4018 = vunpack.c.l.b16 %v3431
        %v4019 = vunpack.c.h.b16 %v3431
        %v4020 = vunpack.c.l.b16 %v3432
        %v4021 = vunpack.c.h.b16 %v3432
        %v4022 = vunpack.c.l.b16 %v3433
        %v4023 = vunpack.c.h.b16 %v3433
        %v4024 = vunpack.c.l.b16 %v3434
        %v4025 = vunpack.c.h.b16 %v3434
        %v4026 = vunpack.c.l.b16 %v3435
        %v4027 = vunpack.c.h.b16 %v3435
        %v4028 = vunpack.c.l.b16 %v3436
        %v4029 = vunpack.c.h.b16 %v3436
        %v4030 = vunpack.c.l.b16 %v3437
        %v4031 = vunpack.c.h.b16 %v3437
        %v4032 = vunpack.c.l.b16 %v3438
        %v4033 = vunpack.c.h.b16 %v3438
        %v4034 = vunpack.c.l.b16 %v3439
        %v4035 = vunpack.c.h.b16 %v3439
        %v4036 = vunpack.c.l.b16 %v3440
        %v4037 = vunpack.c.h.b16 %v3440
        %v4038 = vunpack.c.l.b16 %v3441
        %v4039 = vunpack.c.h.b16 %v3441
        %v4040 = vunpack.c.l.b16 %v3442
        %v4041 = vunpack.c.h.b16 %v3442
        %v4042 = vunpack.c.l.b16 %v3443
        %v4043 = vunpack.c.h.b16 %v3443
        %v4044 = vunpack.c.l.b16 %v3444
        %v4045 = vunpack.c.h.b16 %v3444
        %v4046 = vunpack.c.l.b16 %v3445
        %v4047 = vunpack.c.h.b16 %v3445
        %v4048 = vunpack.c.l.b16 %v3446
        %v4049 = vunpack.c.h.b16 %v3446
        %v4050 = vunpack.c.l.b16 %v3447
        %v4051 = vunpack.c.h.b16 %v3447
        %v4052 = vunpack.c.l.b16 %v3448
        %v4053 = vunpack.c.h.b16 %v3448
        %v4054 = vunpack.c.l.b16 %v3449
        %v4055 = vunpack.c.h.b16 %v3449
        %v4056 = vunpack.c.l.b16 %v3450
        %v4057 = vunpack.c.h.b16 %v3450
        %v4058 = vunpack.c.l.b16 %v3451
        %v4059 = vunpack.c.h.b16 %v3451
        %v4060 = vunpack.c.l.b16 %v3452
        %v4061 = vunpack.c.h.b16 %v3452
        %v4062 = vunpack.c.l.b16 %v3453
        %v4063 = vunpack.c.h.b16 %v3453
        %v4064 = vunpack.c.l.b16 %v3454
        %v4065 = vunpack.c.h.b16 %v3454
        %v4066 = vunpack.c.l.b16 %v3455
        %v4067 = vunpack.c.h.b16 %v3455
        %v4068 = vunpack.c.l.b16 %v3456
        %v4069 = vunpack.c.h.b16 %v3456
        %v4070 = vunpack.c.l.b16 %v3457
        %v4071 = vunpack.c.h.b16 %v3457
        %v4072 = vunpack.c.l.b16 %v3458
        %v4073 = vunpack.c.h.b16 %v3458
        %v4074 = vunpack.c.l.b16 %v3459
        %v4075 = vunpack.c.h.b16 %v3459
        %v4076 = vpack.c.b16 %v3790, %v3788
        %v4077 = vpack.c.b16 %v3791, %v3789
        %v4078 = vpack.c.b16 %v3794, %v3792
        %v4079 = vpack.c.b16 %v3795, %v3793
        %v4080 = vpack.c.b16 %v3798, %v3796
        %v4081 = vpack.c.b16 %v3799, %v3797
        %v4082 = vpack.c.b16 %v3802, %v3800
        %v4083 = vpack.c.b16 %v3803, %v3801
        %v4084 = vpack.c.b16 %v3806, %v3804
        %v4085 = vpack.c.b16 %v3807, %v3805
        %v4086 = vpack.c.b16 %v3810, %v3808
        %v4087 = vpack.c.b16 %v3811, %v3809
        %v4088 = vpack.c.b16 %v3814, %v3812
        %v4089 = vpack.c.b16 %v3815, %v3813
        %v4090 = vpack.c.b16 %v3818, %v3816
        %v4091 = vpack.c.b16 %v3819, %v3817
        %v4092 = vpack.c.b16 %v3822, %v3820
        %v4093 = vpack.c.b16 %v3823, %v3821
        %v4094 = vpack.c.b16 %v3826, %v3824
        %v4095 = vpack.c.b16 %v3827, %v3825
        %v4096 = vpack.c.b16 %v3830, %v3828
        %v4097 = vpack.c.b16 %v3831, %v3829
        %v4098 = vpack.c.b16 %v3834, %v3832
        %v4099 = vpack.c.b16 %v3835, %v3833
        %v4100 = vpack.c.b16 %v3838, %v3836
        %v4101 = vpack.c.b16 %v3839, %v3837
        %v4102 = vpack.c.b16 %v3842, %v3840
        %v4103 = vpack.c.b16 %v3843, %v3841
        %v4104 = vpack.c.b16 %v3846, %v3844
        %v4105 = vpack.c.b16 %v3847, %v3845
        %v4106 = vpack.c.b16 %v3850, %v3848
        %v4107 = vpack.c.b16 %v3851, %v3849
        %v4108 = vpack.c.b16 %v3854, %v3852
        %v4109 = vpack.c.b16 %v3855, %v3853
        %v4110 = vpack.c.b16 %v3858, %v3856
        %v4111 = vpack.c.b16 %v3859, %v3857
        %v4112 = vpack.c.b16 %v3862, %v3860
        %v4113 = vpack.c.b16 %v3863, %v3861
        %v4114 = vpack.c.b16 %v3866, %v3864
        %v4115 = vpack.c.b16 %v3867, %v3865
        %v4116 = vpack.c.b16 %v3870, %v3868
        %v4117 = vpack.c.b16 %v3871, %v3869
        %v4118 = vpack.c.b16 %v3874, %v3872
        %v4119 = vpack.c.b16 %v3875, %v3873
        %v4120 = vpack.c.b16 %v3878, %v3876
        %v4121 = vpack.c.b16 %v3879, %v3877
        %v4122 = vpack.c.b16 %v3882, %v3880
        %v4123 = vpack.c.b16 %v3883, %v3881
        %v4124 = vpack.c.b16 %v3886, %v3884
        %v4125 = vpack.c.b16 %v3887, %v3885
        %v4126 = vpack.c.b16 %v3890, %v3888
        %v4127 = vpack.c.b16 %v3891, %v3889
        %v4128 = vpack.c.b16 %v3894, %v3892
        %v4129 = vpack.c.b16 %v3895, %v3893
        %v4130 = vpack.c.b16 %v3898, %v3896
        %v4131 = vpack.c.b16 %v3899, %v3897
        %v4132 = vpack.c.b16 %v3902, %v3900
        %v4133 = vpack.c.b16 %v3903, %v3901
        %v4134 = vpack.c.b16 %v3906, %v3904
        %v4135 = vpack.c.b16 %v3907, %v3905
        %v4136 = vpack.c.b16 %v3910, %v3908
        %v4137 = vpack.c.b16 %v3911, %v3909
        %v4138 = vpack.c.b16 %v3914, %v3912
        %v4139 = vpack.c.b16 %v3915, %v3913
        %v4140 = vpack.c.b16 %v3918, %v3916
        %v4141 = vpack.c.b16 %v3919, %v3917
        %v4142 = vpack.c.b16 %v3922, %v3920
        %v4143 = vpack.c.b16 %v3923, %v3921
        %v4144 = vpack.c.b16 %v3926, %v3924
        %v4145 = vpack.c.b16 %v3927, %v3925
        %v4146 = vpack.c.b16 %v3930, %v3928
        %v4147 = vpack.c.b16 %v3931, %v3929
        %v4148 = vpack.c.b16 %v3934, %v3932
        %v4149 = vpack.c.b16 %v3935, %v3933
        %v4150 = vpack.c.b16 %v3938, %v3936
        %v4151 = vpack.c.b16 %v3939, %v3937
        %v4152 = vpack.c.b16 %v3942, %v3940
        %v4153 = vpack.c.b16 %v3943, %v3941
        %v4154 = vpack.c.b16 %v3946, %v3944
        %v4155 = vpack.c.b16 %v3947, %v3945
        %v4156 = vpack.c.b16 %v3950, %v3948
        %v4157 = vpack.c.b16 %v3951, %v3949
        %v4158 = vpack.c.b16 %v3954, %v3952
        %v4159 = vpack.c.b16 %v3955, %v3953
        %v4160 = vpack.c.b16 %v3958, %v3956
        %v4161 = vpack.c.b16 %v3959, %v3957
        %v4162 = vpack.c.b16 %v3962, %v3960
        %v4163 = vpack.c.b16 %v3963, %v3961
        %v4164 = vpack.c.b16 %v3966, %v3964
        %v4165 = vpack.c.b16 %v3967, %v3965
        %v4166 = vpack.c.b16 %v3970, %v3968
        %v4167 = vpack.c.b16 %v3971, %v3969
        %v4168 = vpack.c.b16 %v3974, %v3972
        %v4169 = vpack.c.b16 %v3975, %v3973
        %v4170 = vpack.c.b16 %v3978, %v3976
        %v4171 = vpack.c.b16 %v3979, %v3977
        %v4172 = vpack.c.b16 %v3982, %v3980
        %v4173 = vpack.c.b16 %v3983, %v3981
        %v4174 = vpack.c.b16 %v3986, %v3984
        %v4175 = vpack.c.b16 %v3987, %v3985
        %v4176 = vpack.c.b16 %v3990, %v3988
        %v4177 = vpack.c.b16 %v3991, %v3989
        %v4178 = vpack.c.b16 %v3994, %v3992
        %v4179 = vpack.c.b16 %v3995, %v3993
        %v4180 = vpack.c.b16 %v3998, %v3996
        %v4181 = vpack.c.b16 %v3999, %v3997
        %v4182 = vpack.c.b16 %v4002, %v4000
        %v4183 = vpack.c.b16 %v4003, %v4001
        %v4184 = vpack.c.b16 %v4006, %v4004
        %v4185 = vpack.c.b16 %v4007, %v4005
        %v4186 = vpack.c.b16 %v4010, %v4008
        %v4187 = vpack.c.b16 %v4011, %v4009
        %v4188 = vpack.c.b16 %v4014, %v4012
        %v4189 = vpack.c.b16 %v4015, %v4013
        %v4190 = vpack.c.b16 %v4018, %v4016
        %v4191 = vpack.c.b16 %v4019, %v4017
        %v4192 = vpack.c.b16 %v4022, %v4020
        %v4193 = vpack.c.b16 %v4023, %v4021
        %v4194 = vpack.c.b16 %v4026, %v4024
        %v4195 = vpack.c.b16 %v4027, %v4025
        %v4196 = vpack.c.b16 %v4030, %v4028
        %v4197 = vpack.c.b16 %v4031, %v4029
        %v4198 = vpack.c.b16 %v4034, %v4032
        %v4199 = vpack.c.b16 %v4035, %v4033
        %v4200 = vpack.c.b16 %v4038, %v4036
        %v4201 = vpack.c.b16 %v4039, %v4037
        %v4202 = vpack.c.b16 %v4042, %v4040
        %v4203 = vpack.c.b16 %v4043, %v4041
        %v4204 = vpack.c.b16 %v4046, %v4044
        %v4205 = vpack.c.b16 %v4047, %v4045
        %v4206 = vpack.c.b16 %v4050, %v4048
        %v4207 = vpack.c.b16 %v4051, %v4049
        %v4208 = vpack.c.b16 %v4054, %v4052
        %v4209 = vpack.c.b16 %v4055, %v4053
        %v4210 = vpack.c.b16 %v4058, %v4056
        %v4211 = vpack.c.b16 %v4059, %v4057
        %v4212 = vpack.c.b16 %v4062, %v4060
        %v4213 = vpack.c.b16 %v4063, %v4061
        %v4214 = vpack.c.b16 %v4066, %v4064
        %v4215 = vpack.c.b16 %v4067, %v4065
        %v4216 = vpack.c.b16 %v4070, %v4068
        %v4217 = vpack.c.b16 %v4071, %v4069
        %v4218 = vpack.c.b16 %v4074, %v4072
        %v4219 = vpack.c.b16 %v4075, %v4073
        %4364 = vmatpush.bf16.msra.mxu0 %v4090
        %4365 = vmatpush.bf16.msra.mxu0 %v4088
        %4366 = vmatpush.bf16.msra.mxu0 %v4086
        %4367 = vmatpush.bf16.msra.mxu0 %v4084
        %4368 = vmatpush.bf16.msra.mxu0 %v4082
        %4369 = vmatpush.bf16.msra.mxu0 %v4080
        %4370 = vmatpush.bf16.msra.mxu0 %v4078
        %4371 = vmatpush.bf16.msra.mxu0 %v4076
        %4372 = vmatmul.bf16.gmra.mxu0 %v3572
        %v4373 = vpop.f32.mrf.mxu0
        %v4374 = vadd.f32 0.0, %v4373
        %v4375 = vpop.f32.mrf.mxu0
        %v4376 = vadd.f32 0.0, %v4375
        %4377 = vmatmul.bf16.gmra.mxu0 %v3581
        %v4378 = vpop.f32.mrf.mxu0
        %v4379 = vadd.f32 0.0, %v4378
        %v4380 = vpop.f32.mrf.mxu0
        %v4381 = vadd.f32 0.0, %v4380
        %4382 = vmatmul.bf16.gmra.mxu0 %v3590
        %v4383 = vpop.f32.mrf.mxu0
        %v4384 = vadd.f32 0.0, %v4383
        %v4385 = vpop.f32.mrf.mxu0
        %v4386 = vadd.f32 0.0, %v4385
        %4387 = vmatmul.bf16.gmra.mxu0 %v3599
        %v4388 = vpop.f32.mrf.mxu0
        %v4389 = vadd.f32 0.0, %v4388
        %v4390 = vpop.f32.mrf.mxu0
        %v4391 = vadd.f32 0.0, %v4390
        %4392 = vdwg.mxu0
        %4393 = vmatpush.bf16.msra.mxu0 %v4106
        %4394 = vmatpush.bf16.msra.mxu0 %v4104
        %4395 = vmatpush.bf16.msra.mxu0 %v4102
        %4396 = vmatpush.bf16.msra.mxu0 %v4100
        %4397 = vmatpush.bf16.msra.mxu0 %v4098
        %4398 = vmatpush.bf16.msra.mxu0 %v4096
        %4399 = vmatpush.bf16.msra.mxu0 %v4094
        %4400 = vmatpush.bf16.msra.mxu0 %v4092
        %4401 = vmatmul.bf16.gmra.mxu0 %v3573
        %v4402 = vpop.f32.mrf.mxu0
        %v4403 = vadd.f32 %v4374, %v4402
        %v4404 = vpop.f32.mrf.mxu0
        %v4405 = vadd.f32 %v4376, %v4404
        %4406 = vmatmul.bf16.gmra.mxu0 %v3582
        %v4407 = vpop.f32.mrf.mxu0
        %v4408 = vadd.f32 %v4379, %v4407
        %v4409 = vpop.f32.mrf.mxu0
        %v4410 = vadd.f32 %v4381, %v4409
        %4411 = vmatmul.bf16.gmra.mxu0 %v3591
        %v4412 = vpop.f32.mrf.mxu0
        %v4413 = vadd.f32 %v4384, %v4412
        %v4414 = vpop.f32.mrf.mxu0
        %v4415 = vadd.f32 %v4386, %v4414
        %4416 = vmatmul.bf16.gmra.mxu0 %v3600
        %v4417 = vpop.f32.mrf.mxu0
        %v4418 = vadd.f32 %v4389, %v4417
        %v4419 = vpop.f32.mrf.mxu0
        %v4420 = vadd.f32 %v4391, %v4419
        %4421 = vdwg.mxu0
        %4422 = vmatpush.bf16.msra.mxu0 %v4122
        %4423 = vmatpush.bf16.msra.mxu0 %v4120
        %4424 = vmatpush.bf16.msra.mxu0 %v4118
        %4425 = vmatpush.bf16.msra.mxu0 %v4116
        %4426 = vmatpush.bf16.msra.mxu0 %v4114
        %4427 = vmatpush.bf16.msra.mxu0 %v4112
        %4428 = vmatpush.bf16.msra.mxu0 %v4110
        %4429 = vmatpush.bf16.msra.mxu0 %v4108
        %4430 = vmatmul.bf16.gmra.mxu0 %v3574
        %v4431 = vpop.f32.mrf.mxu0
        %v4432 = vadd.f32 %v4403, %v4431
        %v4433 = vpop.f32.mrf.mxu0
        %v4434 = vadd.f32 %v4405, %v4433
        %4435 = vmatmul.bf16.gmra.mxu0 %v3583
        %v4436 = vpop.f32.mrf.mxu0
        %v4437 = vadd.f32 %v4408, %v4436
        %v4438 = vpop.f32.mrf.mxu0
        %v4439 = vadd.f32 %v4410, %v4438
        %4440 = vmatmul.bf16.gmra.mxu0 %v3592
        %v4441 = vpop.f32.mrf.mxu0
        %v4442 = vadd.f32 %v4413, %v4441
        %v4443 = vpop.f32.mrf.mxu0
        %v4444 = vadd.f32 %v4415, %v4443
        %4445 = vmatmul.bf16.gmra.mxu0 %v3601
        %v4446 = vpop.f32.mrf.mxu0
        %v4447 = vadd.f32 %v4418, %v4446
        %v4448 = vpop.f32.mrf.mxu0
        %v4449 = vadd.f32 %v4420, %v4448
        %4450 = vdwg.mxu0
        %4451 = vmatpush.bf16.msra.mxu0 %v4138
        %4452 = vmatpush.bf16.msra.mxu0 %v4136
        %4453 = vmatpush.bf16.msra.mxu0 %v4134
        %4454 = vmatpush.bf16.msra.mxu0 %v4132
        %4455 = vmatpush.bf16.msra.mxu0 %v4130
        %4456 = vmatpush.bf16.msra.mxu0 %v4128
        %4457 = vmatpush.bf16.msra.mxu0 %v4126
        %4458 = vmatpush.bf16.msra.mxu0 %v4124
        %4459 = vmatmul.bf16.gmra.mxu0 %v3575
        %v4460 = vpop.f32.mrf.mxu0
        %v4461 = vadd.f32 %v4432, %v4460
        %v4462 = vpop.f32.mrf.mxu0
        %v4463 = vadd.f32 %v4434, %v4462
        %4464 = vmatmul.bf16.gmra.mxu0 %v3584
        %v4465 = vpop.f32.mrf.mxu0
        %v4466 = vadd.f32 %v4437, %v4465
        %v4467 = vpop.f32.mrf.mxu0
        %v4468 = vadd.f32 %v4439, %v4467
        %4469 = vmatmul.bf16.gmra.mxu0 %v3593
        %v4470 = vpop.f32.mrf.mxu0
        %v4471 = vadd.f32 %v4442, %v4470
        %v4472 = vpop.f32.mrf.mxu0
        %v4473 = vadd.f32 %v4444, %v4472
        %4474 = vmatmul.bf16.gmra.mxu0 %v3602
        %v4475 = vpop.f32.mrf.mxu0
        %v4476 = vadd.f32 %v4447, %v4475
        %v4477 = vpop.f32.mrf.mxu0
        %v4478 = vadd.f32 %v4449, %v4477
        %4479 = vdwg.mxu0
        %4480 = vmatpush.bf16.msra.mxu0 %v4154
        %4481 = vmatpush.bf16.msra.mxu0 %v4152
        %4482 = vmatpush.bf16.msra.mxu0 %v4150
        %4483 = vmatpush.bf16.msra.mxu0 %v4148
        %4484 = vmatpush.bf16.msra.mxu0 %v4146
        %4485 = vmatpush.bf16.msra.mxu0 %v4144
        %4486 = vmatpush.bf16.msra.mxu0 %v4142
        %4487 = vmatpush.bf16.msra.mxu0 %v4140
        %4488 = vmatmul.bf16.gmra.mxu0 %v3576
        %v4489 = vpop.f32.mrf.mxu0
        %v4490 = vadd.f32 %v4461, %v4489
        %v4491 = vpop.f32.mrf.mxu0
        %v4492 = vadd.f32 %v4463, %v4491
        %4493 = vmatmul.bf16.gmra.mxu0 %v3585
        %v4494 = vpop.f32.mrf.mxu0
        %v4495 = vadd.f32 %v4466, %v4494
        %v4496 = vpop.f32.mrf.mxu0
        %v4497 = vadd.f32 %v4468, %v4496
        %4498 = vmatmul.bf16.gmra.mxu0 %v3594
        %v4499 = vpop.f32.mrf.mxu0
        %v4500 = vadd.f32 %v4471, %v4499
        %v4501 = vpop.f32.mrf.mxu0
        %v4502 = vadd.f32 %v4473, %v4501
        %4503 = vmatmul.bf16.gmra.mxu0 %v3603
        %v4504 = vpop.f32.mrf.mxu0
        %v4505 = vadd.f32 %v4476, %v4504
        %v4506 = vpop.f32.mrf.mxu0
        %v4507 = vadd.f32 %v4478, %v4506
        %4508 = vdwg.mxu0
        %4509 = vmatpush.bf16.msra.mxu0 %v4170
        %4510 = vmatpush.bf16.msra.mxu0 %v4168
        %4511 = vmatpush.bf16.msra.mxu0 %v4166
        %4512 = vmatpush.bf16.msra.mxu0 %v4164
        %4513 = vmatpush.bf16.msra.mxu0 %v4162
        %4514 = vmatpush.bf16.msra.mxu0 %v4160
        %4515 = vmatpush.bf16.msra.mxu0 %v4158
        %4516 = vmatpush.bf16.msra.mxu0 %v4156
        %4517 = vmatmul.bf16.gmra.mxu0 %v3577
        %v4518 = vpop.f32.mrf.mxu0
        %v4519 = vadd.f32 %v4490, %v4518
        %v4520 = vpop.f32.mrf.mxu0
        %v4521 = vadd.f32 %v4492, %v4520
        %4522 = vmatmul.bf16.gmra.mxu0 %v3586
        %v4523 = vpop.f32.mrf.mxu0
        %v4524 = vadd.f32 %v4495, %v4523
        %v4525 = vpop.f32.mrf.mxu0
        %v4526 = vadd.f32 %v4497, %v4525
        %4527 = vmatmul.bf16.gmra.mxu0 %v3595
        %v4528 = vpop.f32.mrf.mxu0
        %v4529 = vadd.f32 %v4500, %v4528
        %v4530 = vpop.f32.mrf.mxu0
        %v4531 = vadd.f32 %v4502, %v4530
        %4532 = vmatmul.bf16.gmra.mxu0 %v3604
        %v4533 = vpop.f32.mrf.mxu0
        %v4534 = vadd.f32 %v4505, %v4533
        %v4535 = vpop.f32.mrf.mxu0
        %v4536 = vadd.f32 %v4507, %v4535
        %4537 = vdwg.mxu0
        %4538 = vmatpush.bf16.msra.mxu0 %v4186
        %4539 = vmatpush.bf16.msra.mxu0 %v4184
        %4540 = vmatpush.bf16.msra.mxu0 %v4182
        %4541 = vmatpush.bf16.msra.mxu0 %v4180
        %4542 = vmatpush.bf16.msra.mxu0 %v4178
        %4543 = vmatpush.bf16.msra.mxu0 %v4176
        %4544 = vmatpush.bf16.msra.mxu0 %v4174
        %4545 = vmatpush.bf16.msra.mxu0 %v4172
        %4546 = vmatmul.bf16.gmra.mxu0 %v3578
        %v4547 = vpop.f32.mrf.mxu0
        %v4548 = vadd.f32 %v4519, %v4547
        %v4549 = vpop.f32.mrf.mxu0
        %v4550 = vadd.f32 %v4521, %v4549
        %4551 = vmatmul.bf16.gmra.mxu0 %v3587
        %v4552 = vpop.f32.mrf.mxu0
        %v4553 = vadd.f32 %v4524, %v4552
        %v4554 = vpop.f32.mrf.mxu0
        %v4555 = vadd.f32 %v4526, %v4554
        %4556 = vmatmul.bf16.gmra.mxu0 %v3596
        %v4557 = vpop.f32.mrf.mxu0
        %v4558 = vadd.f32 %v4529, %v4557
        %v4559 = vpop.f32.mrf.mxu0
        %v4560 = vadd.f32 %v4531, %v4559
        %4561 = vmatmul.bf16.gmra.mxu0 %v3605
        %v4562 = vpop.f32.mrf.mxu0
        %v4563 = vadd.f32 %v4534, %v4562
        %v4564 = vpop.f32.mrf.mxu0
        %v4565 = vadd.f32 %v4536, %v4564
        %4566 = vdwg.mxu0
        %4567 = vmatpush.bf16.msra.mxu0 %v4202
        %4568 = vmatpush.bf16.msra.mxu0 %v4200
        %4569 = vmatpush.bf16.msra.mxu0 %v4198
        %4570 = vmatpush.bf16.msra.mxu0 %v4196
        %4571 = vmatpush.bf16.msra.mxu0 %v4194
        %4572 = vmatpush.bf16.msra.mxu0 %v4192
        %4573 = vmatpush.bf16.msra.mxu0 %v4190
        %4574 = vmatpush.bf16.msra.mxu0 %v4188
        %4575 = vmatmul.bf16.gmra.mxu0 %v3579
        %v4576 = vpop.f32.mrf.mxu0
        %v4577 = vadd.f32 %v4548, %v4576
        %v4578 = vpop.f32.mrf.mxu0
        %v4579 = vadd.f32 %v4550, %v4578
        %4580 = vmatmul.bf16.gmra.mxu0 %v3588
        %v4581 = vpop.f32.mrf.mxu0
        %v4582 = vadd.f32 %v4553, %v4581
        %v4583 = vpop.f32.mrf.mxu0
        %v4584 = vadd.f32 %v4555, %v4583
        %4585 = vmatmul.bf16.gmra.mxu0 %v3597
        %v4586 = vpop.f32.mrf.mxu0
        %v4587 = vadd.f32 %v4558, %v4586
        %v4588 = vpop.f32.mrf.mxu0
        %v4589 = vadd.f32 %v4560, %v4588
        %4590 = vmatmul.bf16.gmra.mxu0 %v3606
        %v4591 = vpop.f32.mrf.mxu0
        %v4592 = vadd.f32 %v4563, %v4591
        %v4593 = vpop.f32.mrf.mxu0
        %v4594 = vadd.f32 %v4565, %v4593
        %4595 = vdwg.mxu0
        %4596 = vmatpush.bf16.msra.mxu0 %v4218
        %4597 = vmatpush.bf16.msra.mxu0 %v4216
        %4598 = vmatpush.bf16.msra.mxu0 %v4214
        %4599 = vmatpush.bf16.msra.mxu0 %v4212
        %4600 = vmatpush.bf16.msra.mxu0 %v4210
        %4601 = vmatpush.bf16.msra.mxu0 %v4208
        %4602 = vmatpush.bf16.msra.mxu0 %v4206
        %4603 = vmatpush.bf16.msra.mxu0 %v4204
        %4604 = vmatmul.bf16.gmra.mxu0 %v3580
        %v4605 = vpop.f32.mrf.mxu0
        %v4606 = vadd.f32 %v4577, %v4605
        %v4607 = vpop.f32.mrf.mxu0
        %v4608 = vadd.f32 %v4579, %v4607
        %4609 = vmatmul.bf16.gmra.mxu0 %v3589
        %v4610 = vpop.f32.mrf.mxu0
        %v4611 = vadd.f32 %v4582, %v4610
        %v4612 = vpop.f32.mrf.mxu0
        %v4613 = vadd.f32 %v4584, %v4612
        %4614 = vmatmul.bf16.gmra.mxu0 %v3598
        %v4615 = vpop.f32.mrf.mxu0
        %v4616 = vadd.f32 %v4587, %v4615
        %v4617 = vpop.f32.mrf.mxu0
        %v4618 = vadd.f32 %v4589, %v4617
        %4619 = vmatmul.bf16.gmra.mxu0 %v3607
        %v4620 = vpop.f32.mrf.mxu0
        %v4621 = vadd.f32 %v4592, %v4620
        %v4622 = vpop.f32.mrf.mxu0
        %v4623 = vadd.f32 %v4594, %v4622
        %4624 = vdwg.mxu0
        %4625 = vmatpush.bf16.msra.mxu0 %v4091
        %4626 = vmatpush.bf16.msra.mxu0 %v4089
        %4627 = vmatpush.bf16.msra.mxu0 %v4087
        %4628 = vmatpush.bf16.msra.mxu0 %v4085
        %4629 = vmatpush.bf16.msra.mxu0 %v4083
        %4630 = vmatpush.bf16.msra.mxu0 %v4081
        %4631 = vmatpush.bf16.msra.mxu0 %v4079
        %4632 = vmatpush.bf16.msra.mxu0 %v4077
        %4633 = vmatmul.bf16.gmra.mxu0 %v3572
        %v4634 = vpop.f32.mrf.mxu0
        %v4635 = vadd.f32 0.0, %v4634
        %v4636 = vpop.f32.mrf.mxu0
        %v4637 = vadd.f32 0.0, %v4636
        %4638 = vmatmul.bf16.gmra.mxu0 %v3581
        %v4639 = vpop.f32.mrf.mxu0
        %v4640 = vadd.f32 0.0, %v4639
        %v4641 = vpop.f32.mrf.mxu0
        %v4642 = vadd.f32 0.0, %v4641
        %4643 = vmatmul.bf16.gmra.mxu0 %v3590
        %v4644 = vpop.f32.mrf.mxu0
        %v4645 = vadd.f32 0.0, %v4644
        %v4646 = vpop.f32.mrf.mxu0
        %v4647 = vadd.f32 0.0, %v4646
        %4648 = vmatmul.bf16.gmra.mxu0 %v3599
        %v4649 = vpop.f32.mrf.mxu0
        %v4650 = vadd.f32 0.0, %v4649
        %v4651 = vpop.f32.mrf.mxu0
        %v4652 = vadd.f32 0.0, %v4651
        %4653 = vdwg.mxu0
        %4654 = vmatpush.bf16.msra.mxu0 %v4107
        %4655 = vmatpush.bf16.msra.mxu0 %v4105
        %4656 = vmatpush.bf16.msra.mxu0 %v4103
        %4657 = vmatpush.bf16.msra.mxu0 %v4101
        %4658 = vmatpush.bf16.msra.mxu0 %v4099
        %4659 = vmatpush.bf16.msra.mxu0 %v4097
        %4660 = vmatpush.bf16.msra.mxu0 %v4095
        %4661 = vmatpush.bf16.msra.mxu0 %v4093
        %4662 = vmatmul.bf16.gmra.mxu0 %v3573
        %v4663 = vpop.f32.mrf.mxu0
        %v4664 = vadd.f32 %v4635, %v4663
        %v4665 = vpop.f32.mrf.mxu0
        %v4666 = vadd.f32 %v4637, %v4665
        %4667 = vmatmul.bf16.gmra.mxu0 %v3582
        %v4668 = vpop.f32.mrf.mxu0
        %v4669 = vadd.f32 %v4640, %v4668
        %v4670 = vpop.f32.mrf.mxu0
        %v4671 = vadd.f32 %v4642, %v4670
        %4672 = vmatmul.bf16.gmra.mxu0 %v3591
        %v4673 = vpop.f32.mrf.mxu0
        %v4674 = vadd.f32 %v4645, %v4673
        %v4675 = vpop.f32.mrf.mxu0
        %v4676 = vadd.f32 %v4647, %v4675
        %4677 = vmatmul.bf16.gmra.mxu0 %v3600
        %v4678 = vpop.f32.mrf.mxu0
        %v4679 = vadd.f32 %v4650, %v4678
        %v4680 = vpop.f32.mrf.mxu0
        %v4681 = vadd.f32 %v4652, %v4680
        %4682 = vdwg.mxu0
        %4683 = vmatpush.bf16.msra.mxu0 %v4123
        %4684 = vmatpush.bf16.msra.mxu0 %v4121
        %4685 = vmatpush.bf16.msra.mxu0 %v4119
        %4686 = vmatpush.bf16.msra.mxu0 %v4117
        %4687 = vmatpush.bf16.msra.mxu0 %v4115
        %4688 = vmatpush.bf16.msra.mxu0 %v4113
        %4689 = vmatpush.bf16.msra.mxu0 %v4111
        %4690 = vmatpush.bf16.msra.mxu0 %v4109
        %4691 = vmatmul.bf16.gmra.mxu0 %v3574
        %v4692 = vpop.f32.mrf.mxu0
        %v4693 = vadd.f32 %v4664, %v4692
        %v4694 = vpop.f32.mrf.mxu0
        %v4695 = vadd.f32 %v4666, %v4694
        %4696 = vmatmul.bf16.gmra.mxu0 %v3583
        %v4697 = vpop.f32.mrf.mxu0
        %v4698 = vadd.f32 %v4669, %v4697
        %v4699 = vpop.f32.mrf.mxu0
        %v4700 = vadd.f32 %v4671, %v4699
        %4701 = vmatmul.bf16.gmra.mxu0 %v3592
        %v4702 = vpop.f32.mrf.mxu0
        %v4703 = vadd.f32 %v4674, %v4702
        %v4704 = vpop.f32.mrf.mxu0
        %v4705 = vadd.f32 %v4676, %v4704
        %4706 = vmatmul.bf16.gmra.mxu0 %v3601
        %v4707 = vpop.f32.mrf.mxu0
        %v4708 = vadd.f32 %v4679, %v4707
        %v4709 = vpop.f32.mrf.mxu0
        %v4710 = vadd.f32 %v4681, %v4709
        %4711 = vdwg.mxu0
        %4712 = vmatpush.bf16.msra.mxu0 %v4139
        %4713 = vmatpush.bf16.msra.mxu0 %v4137
        %4714 = vmatpush.bf16.msra.mxu0 %v4135
        %4715 = vmatpush.bf16.msra.mxu0 %v4133
        %4716 = vmatpush.bf16.msra.mxu0 %v4131
        %4717 = vmatpush.bf16.msra.mxu0 %v4129
        %4718 = vmatpush.bf16.msra.mxu0 %v4127
        %4719 = vmatpush.bf16.msra.mxu0 %v4125
        %4720 = vmatmul.bf16.gmra.mxu0 %v3575
        %v4721 = vpop.f32.mrf.mxu0
        %v4722 = vadd.f32 %v4693, %v4721
        %v4723 = vpop.f32.mrf.mxu0
        %v4724 = vadd.f32 %v4695, %v4723
        %4725 = vmatmul.bf16.gmra.mxu0 %v3584
        %v4726 = vpop.f32.mrf.mxu0
        %v4727 = vadd.f32 %v4698, %v4726
        %v4728 = vpop.f32.mrf.mxu0
        %v4729 = vadd.f32 %v4700, %v4728
        %4730 = vmatmul.bf16.gmra.mxu0 %v3593
        %v4731 = vpop.f32.mrf.mxu0
        %v4732 = vadd.f32 %v4703, %v4731
        %v4733 = vpop.f32.mrf.mxu0
        %v4734 = vadd.f32 %v4705, %v4733
        %4735 = vmatmul.bf16.gmra.mxu0 %v3602
        %v4736 = vpop.f32.mrf.mxu0
        %v4737 = vadd.f32 %v4708, %v4736
        %v4738 = vpop.f32.mrf.mxu0
        %v4739 = vadd.f32 %v4710, %v4738
        %4740 = vdwg.mxu0
        %4741 = vmatpush.bf16.msra.mxu0 %v4155
        %4742 = vmatpush.bf16.msra.mxu0 %v4153
        %4743 = vmatpush.bf16.msra.mxu0 %v4151
        %4744 = vmatpush.bf16.msra.mxu0 %v4149
        %4745 = vmatpush.bf16.msra.mxu0 %v4147
        %4746 = vmatpush.bf16.msra.mxu0 %v4145
        %4747 = vmatpush.bf16.msra.mxu0 %v4143
        %4748 = vmatpush.bf16.msra.mxu0 %v4141
        %4749 = vmatmul.bf16.gmra.mxu0 %v3576
        %v4750 = vpop.f32.mrf.mxu0
        %v4751 = vadd.f32 %v4722, %v4750
        %v4752 = vpop.f32.mrf.mxu0
        %v4753 = vadd.f32 %v4724, %v4752
        %4754 = vmatmul.bf16.gmra.mxu0 %v3585
        %v4755 = vpop.f32.mrf.mxu0
        %v4756 = vadd.f32 %v4727, %v4755
        %v4757 = vpop.f32.mrf.mxu0
        %v4758 = vadd.f32 %v4729, %v4757
        %4759 = vmatmul.bf16.gmra.mxu0 %v3594
        %v4760 = vpop.f32.mrf.mxu0
        %v4761 = vadd.f32 %v4732, %v4760
        %v4762 = vpop.f32.mrf.mxu0
        %v4763 = vadd.f32 %v4734, %v4762
        %4764 = vmatmul.bf16.gmra.mxu0 %v3603
        %v4765 = vpop.f32.mrf.mxu0
        %v4766 = vadd.f32 %v4737, %v4765
        %v4767 = vpop.f32.mrf.mxu0
        %v4768 = vadd.f32 %v4739, %v4767
        %4769 = vdwg.mxu0
        %4770 = vmatpush.bf16.msra.mxu0 %v4171
        %4771 = vmatpush.bf16.msra.mxu0 %v4169
        %4772 = vmatpush.bf16.msra.mxu0 %v4167
        %4773 = vmatpush.bf16.msra.mxu0 %v4165
        %4774 = vmatpush.bf16.msra.mxu0 %v4163
        %4775 = vmatpush.bf16.msra.mxu0 %v4161
        %4776 = vmatpush.bf16.msra.mxu0 %v4159
        %4777 = vmatpush.bf16.msra.mxu0 %v4157
        %4778 = vmatmul.bf16.gmra.mxu0 %v3577
        %v4779 = vpop.f32.mrf.mxu0
        %v4780 = vadd.f32 %v4751, %v4779
        %v4781 = vpop.f32.mrf.mxu0
        %v4782 = vadd.f32 %v4753, %v4781
        %4783 = vmatmul.bf16.gmra.mxu0 %v3586
        %v4784 = vpop.f32.mrf.mxu0
        %v4785 = vadd.f32 %v4756, %v4784
        %v4786 = vpop.f32.mrf.mxu0
        %v4787 = vadd.f32 %v4758, %v4786
        %4788 = vmatmul.bf16.gmra.mxu0 %v3595
        %v4789 = vpop.f32.mrf.mxu0
        %v4790 = vadd.f32 %v4761, %v4789
        %v4791 = vpop.f32.mrf.mxu0
        %v4792 = vadd.f32 %v4763, %v4791
        %4793 = vmatmul.bf16.gmra.mxu0 %v3604
        %v4794 = vpop.f32.mrf.mxu0
        %v4795 = vadd.f32 %v4766, %v4794
        %v4796 = vpop.f32.mrf.mxu0
        %v4797 = vadd.f32 %v4768, %v4796
        %4798 = vdwg.mxu0
        %4799 = vmatpush.bf16.msra.mxu0 %v4187
        %4800 = vmatpush.bf16.msra.mxu0 %v4185
        %4801 = vmatpush.bf16.msra.mxu0 %v4183
        %4802 = vmatpush.bf16.msra.mxu0 %v4181
        %4803 = vmatpush.bf16.msra.mxu0 %v4179
        %4804 = vmatpush.bf16.msra.mxu0 %v4177
        %4805 = vmatpush.bf16.msra.mxu0 %v4175
        %4806 = vmatpush.bf16.msra.mxu0 %v4173
        %4807 = vmatmul.bf16.gmra.mxu0 %v3578
        %v4808 = vpop.f32.mrf.mxu0
        %v4809 = vadd.f32 %v4780, %v4808
        %v4810 = vpop.f32.mrf.mxu0
        %v4811 = vadd.f32 %v4782, %v4810
        %4812 = vmatmul.bf16.gmra.mxu0 %v3587
        %v4813 = vpop.f32.mrf.mxu0
        %v4814 = vadd.f32 %v4785, %v4813
        %v4815 = vpop.f32.mrf.mxu0
        %v4816 = vadd.f32 %v4787, %v4815
        %4817 = vmatmul.bf16.gmra.mxu0 %v3596
        %v4818 = vpop.f32.mrf.mxu0
        %v4819 = vadd.f32 %v4790, %v4818
        %v4820 = vpop.f32.mrf.mxu0
        %v4821 = vadd.f32 %v4792, %v4820
        %4822 = vmatmul.bf16.gmra.mxu0 %v3605
        %v4823 = vpop.f32.mrf.mxu0
        %v4824 = vadd.f32 %v4795, %v4823
        %v4825 = vpop.f32.mrf.mxu0
        %v4826 = vadd.f32 %v4797, %v4825
        %4827 = vdwg.mxu0
        %4828 = vmatpush.bf16.msra.mxu0 %v4203
        %4829 = vmatpush.bf16.msra.mxu0 %v4201
        %4830 = vmatpush.bf16.msra.mxu0 %v4199
        %4831 = vmatpush.bf16.msra.mxu0 %v4197
        %4832 = vmatpush.bf16.msra.mxu0 %v4195
        %4833 = vmatpush.bf16.msra.mxu0 %v4193
        %4834 = vmatpush.bf16.msra.mxu0 %v4191
        %4835 = vmatpush.bf16.msra.mxu0 %v4189
        %4836 = vmatmul.bf16.gmra.mxu0 %v3579
        %v4837 = vpop.f32.mrf.mxu0
        %v4838 = vadd.f32 %v4809, %v4837
        %v4839 = vpop.f32.mrf.mxu0
        %v4840 = vadd.f32 %v4811, %v4839
        %4841 = vmatmul.bf16.gmra.mxu0 %v3588
        %v4842 = vpop.f32.mrf.mxu0
        %v4843 = vadd.f32 %v4814, %v4842
        %v4844 = vpop.f32.mrf.mxu0
        %v4845 = vadd.f32 %v4816, %v4844
        %4846 = vmatmul.bf16.gmra.mxu0 %v3597
        %v4847 = vpop.f32.mrf.mxu0
        %v4848 = vadd.f32 %v4819, %v4847
        %v4849 = vpop.f32.mrf.mxu0
        %v4850 = vadd.f32 %v4821, %v4849
        %4851 = vmatmul.bf16.gmra.mxu0 %v3606
        %v4852 = vpop.f32.mrf.mxu0
        %v4853 = vadd.f32 %v4824, %v4852
        %v4854 = vpop.f32.mrf.mxu0
        %v4855 = vadd.f32 %v4826, %v4854
        %4856 = vdwg.mxu0
        %4857 = vmatpush.bf16.msra.mxu0 %v4219
        %4858 = vmatpush.bf16.msra.mxu0 %v4217
        %4859 = vmatpush.bf16.msra.mxu0 %v4215
        %4860 = vmatpush.bf16.msra.mxu0 %v4213
        %4861 = vmatpush.bf16.msra.mxu0 %v4211
        %4862 = vmatpush.bf16.msra.mxu0 %v4209
        %4863 = vmatpush.bf16.msra.mxu0 %v4207
        %4864 = vmatpush.bf16.msra.mxu0 %v4205
        %4865 = vmatmul.bf16.gmra.mxu0 %v3580
        %v4866 = vpop.f32.mrf.mxu0
        %v4867 = vadd.f32 %v4838, %v4866
        %v4868 = vpop.f32.mrf.mxu0
        %v4869 = vadd.f32 %v4840, %v4868
        %4870 = vmatmul.bf16.gmra.mxu0 %v3589
        %v4871 = vpop.f32.mrf.mxu0
        %v4872 = vadd.f32 %v4843, %v4871
        %v4873 = vpop.f32.mrf.mxu0
        %v4874 = vadd.f32 %v4845, %v4873
        %4875 = vmatmul.bf16.gmra.mxu0 %v3598
        %v4876 = vpop.f32.mrf.mxu0
        %v4877 = vadd.f32 %v4848, %v4876
        %v4878 = vpop.f32.mrf.mxu0
        %v4879 = vadd.f32 %v4850, %v4878
        %4880 = vmatmul.bf16.gmra.mxu0 %v3607
        %v4881 = vpop.f32.mrf.mxu0
        %v4882 = vadd.f32 %v4853, %v4881
        %v4883 = vpop.f32.mrf.mxu0
        %v4884 = vadd.f32 %v4855, %v4883
        %4885 = vdwg.mxu0
        %v4886 = vmul.f32 %v4606, 0.1
        %v4887 = vmul.f32 %v4867, 0.1
        %v4888 = vmul.f32 %v4608, 0.1
        %v4889 = vmul.f32 %v4869, 0.1
        %v4890 = vmul.f32 %v4611, 0.1
        %v4891 = vmul.f32 %v4872, 0.1
        %v4892 = vmul.f32 %v4613, 0.1
        %v4893 = vmul.f32 %v4874, 0.1
        %v4894 = vmul.f32 %v4616, 0.1
        %v4895 = vmul.f32 %v4877, 0.1
        %v4896 = vmul.f32 %v4618, 0.1
        %v4897 = vmul.f32 %v4879, 0.1
        %v4898 = vmul.f32 %v4621, 0.1
        %v4899 = vmul.f32 %v4882, 0.1
        %v4900 = vmul.f32 %v4623, 0.1
        %v4901 = vmul.f32 %v4884, 0.1
        %v4902 = vmax.f32 %v4606, %v4886
        %v4903 = vmax.f32 %v4867, %v4887
        %v4904 = vmax.f32 %v4608, %v4888
        %v4905 = vmax.f32 %v4869, %v4889
        %v4906 = vmax.f32 %v4611, %v4890
        %v4907 = vmax.f32 %v4872, %v4891
        %v4908 = vmax.f32 %v4613, %v4892
        %v4909 = vmax.f32 %v4874, %v4893
        %v4910 = vmax.f32 %v4616, %v4894
        %v4911 = vmax.f32 %v4877, %v4895
        %v4912 = vmax.f32 %v4618, %v4896
        %v4913 = vmax.f32 %v4879, %v4897
        %v4914 = vmax.f32 %v4621, %v4898
        %v4915 = vmax.f32 %v4882, %v4899
        %v4916 = vmax.f32 %v4623, %v4900
        %v4917 = vmax.f32 %v4884, %v4901
        %s4918 = scalar_lea.vmem [#allocation3], 16
        %4919 = vst.msk [vmem:[%s4918 + $0x1] sm:$0xff] %vm350, %v4902
        %4920 = vst.msk [vmem:[%s4918 + $0x11] sm:$0xff] %vm350, %v4904
        %4921 = vst.msk [vmem:[%s4918 + $0x21] sm:$0xff] %vm350, %v4906
        %4922 = vst.msk [vmem:[%s4918 + $0x31] sm:$0xff] %vm350, %v4908
        %4923 = vst.msk [vmem:[%s4918 + $0x41] sm:$0xff] %vm350, %v4910
        %4924 = vst.msk [vmem:[%s4918 + $0x51] sm:$0xff] %vm350, %v4912
        %4925 = vst.msk [vmem:[%s4918 + $0x61] sm:$0xff] %vm350, %v4914
        %4926 = vst.msk [vmem:[%s4918 + $0x71] sm:$0xff] %vm350, %v4916
        %4935 = vrot.lane.b32.xlu0 %v4902, 64
        %v4936 = vpop.permute.xlu0 %4935
        %4937 = vrot.lane.b32.xlu0 %v4904, 64
        %v4938 = vpop.permute.xlu0 %4937
        %4939 = vrot.lane.b32.xlu0 %v4906, 64
        %v4940 = vpop.permute.xlu0 %4939
        %4941 = vrot.lane.b32.xlu0 %v4908, 64
        %v4942 = vpop.permute.xlu0 %4941
        %4943 = vrot.lane.b32.xlu0 %v4910, 64
        %v4944 = vpop.permute.xlu0 %4943
        %4945 = vrot.lane.b32.xlu0 %v4912, 64
        %v4946 = vpop.permute.xlu0 %4945
        %4947 = vrot.lane.b32.xlu0 %v4914, 64
        %v4948 = vpop.permute.xlu0 %4947
        %4949 = vrot.lane.b32.xlu0 %v4916, 64
        %v4950 = vpop.permute.xlu0 %4949
        %s4959 = scalar_lea.vmem [#allocation3], 176
        %4960 = vst.msk [vmem:[%s4959 + $0x1] sm:$0xff] %vm350, %v4936
        %4961 = vst.msk [vmem:[%s4959 + $0x11] sm:$0xff] %vm350, %v4938
        %4962 = vst.msk [vmem:[%s4959 + $0x21] sm:$0xff] %vm350, %v4940
        %4963 = vst.msk [vmem:[%s4959 + $0x31] sm:$0xff] %vm350, %v4942
        %4964 = vst.msk [vmem:[%s4959 + $0x41] sm:$0xff] %vm350, %v4944
        %4965 = vst.msk [vmem:[%s4959 + $0x51] sm:$0xff] %vm350, %v4946
        %4966 = vst.msk [vmem:[%s4959 + $0x61] sm:$0xff] %vm350, %v4948
        %4967 = vst.msk [vmem:[%s4959 + $0x71] sm:$0xff] %vm350, %v4950
        %s4968 = scalar_lea.vmem [#allocation3], 336
        %4969 = vst.msk [vmem:[%s4968 + $0x1] sm:$0xff] %vm350, %v4903
        %4970 = vst.msk [vmem:[%s4968 + $0x11] sm:$0xff] %vm350, %v4905
        %4971 = vst.msk [vmem:[%s4968 + $0x21] sm:$0xff] %vm350, %v4907
        %4972 = vst.msk [vmem:[%s4968 + $0x31] sm:$0xff] %vm350, %v4909
        %4973 = vst.msk [vmem:[%s4968 + $0x41] sm:$0xff] %vm350, %v4911
        %4974 = vst.msk [vmem:[%s4968 + $0x51] sm:$0xff] %vm350, %v4913
        %4975 = vst.msk [vmem:[%s4968 + $0x61] sm:$0xff] %vm350, %v4915
        %4976 = vst.msk [vmem:[%s4968 + $0x71] sm:$0xff] %vm350, %v4917
        %4985 = vrot.lane.b32.xlu0 %v4903, 64
        %v4986 = vpop.permute.xlu0 %4985
        %4987 = vrot.lane.b32.xlu0 %v4905, 64
        %v4988 = vpop.permute.xlu0 %4987
        %4989 = vrot.lane.b32.xlu0 %v4907, 64
        %v4990 = vpop.permute.xlu0 %4989
        %4991 = vrot.lane.b32.xlu0 %v4909, 64
        %v4992 = vpop.permute.xlu0 %4991
        %4993 = vrot.lane.b32.xlu0 %v4911, 64
        %v4994 = vpop.permute.xlu0 %4993
        %4995 = vrot.lane.b32.xlu0 %v4913, 64
        %v4996 = vpop.permute.xlu0 %4995
        %4997 = vrot.lane.b32.xlu0 %v4915, 64
        %v4998 = vpop.permute.xlu0 %4997
        %4999 = vrot.lane.b32.xlu0 %v4917, 64
        %v5000 = vpop.permute.xlu0 %4999
        %s5009 = scalar_lea.vmem [#allocation3], 496
        %5010 = vst.msk [vmem:[%s5009 + $0x1] sm:$0xff] %vm350, %v4986
        %5011 = vst.msk [vmem:[%s5009 + $0x11] sm:$0xff] %vm350, %v4988
        %5012 = vst.msk [vmem:[%s5009 + $0x21] sm:$0xff] %vm350, %v4990
        %5013 = vst.msk [vmem:[%s5009 + $0x31] sm:$0xff] %vm350, %v4992
        %5014 = vst.msk [vmem:[%s5009 + $0x41] sm:$0xff] %vm350, %v4994
        %5015 = vst.msk [vmem:[%s5009 + $0x51] sm:$0xff] %vm350, %v4996
        %5016 = vst.msk [vmem:[%s5009 + $0x61] sm:$0xff] %vm350, %v4998
        %5017 = vst.msk [vmem:[%s5009 + $0x71] sm:$0xff] %vm350, %v5000
        %s5018 = scalar_lea.vmem [#allocation3], 480
        %v5019 = vld [vmem:[%s5018] sm:$0xff]
        %v5020 = vld [vmem:[%s5018 + $0x10] sm:$0xff]
        %v5021 = vld [vmem:[%s5018 + $0x20] sm:$0xff]
        %v5022 = vld [vmem:[%s5018 + $0x30] sm:$0xff]
        %v5023 = vld [vmem:[%s5018 + $0x40] sm:$0xff]
        %v5024 = vld [vmem:[%s5018 + $0x50] sm:$0xff]
        %v5025 = vld [vmem:[%s5018 + $0x60] sm:$0xff]
        %v5026 = vld [vmem:[%s5018 + $0x70] sm:$0xff]
        %v5027 = vpack.c.bf16 %v5019, %v5019
        %v5028 = vpack.c.bf16 %v5020, %v5020
        %v5029 = vpack.c.bf16 %v5021, %v5021
        %v5030 = vpack.c.bf16 %v5022, %v5022
        %v5031 = vpack.c.bf16 %v5023, %v5023
        %v5032 = vpack.c.bf16 %v5024, %v5024
        %v5033 = vpack.c.bf16 %v5025, %v5025
        %v5034 = vpack.c.bf16 %v5026, %v5026
        %vm5035 = vcmask 519168
        %5036 = vst.msk [vmem:[#allocation5] sm:$0xf] %vm5035, %v5027
        %5037 = vst.msk [vmem:[#allocation5 + $0x14] sm:$0xf] %vm5035, %v5028
        %5038 = vst.msk [vmem:[#allocation5 + $0x28] sm:$0xf] %vm5035, %v5029
        %5039 = vst.msk [vmem:[#allocation5 + $0x3c] sm:$0xf] %vm5035, %v5030
        %5040 = vst.msk [vmem:[#allocation5 + $0x50] sm:$0xf] %vm5035, %v5031
        %5041 = vst.msk [vmem:[#allocation5 + $0x64] sm:$0xf] %vm5035, %v5032
        %5042 = vst.msk [vmem:[#allocation5 + $0x78] sm:$0xf] %vm5035, %v5033
        %5043 = vst.msk [vmem:[#allocation5 + $0x8c] sm:$0xf] %vm5035, %v5034
        %s5044 = scalar_lea.vmem [#allocation3], 320
        %v5045 = vld [vmem:[%s5044 + $0x1] sm:$0xff]
        %v5046 = vld [vmem:[%s5044 + $0x11] sm:$0xff]
        %v5047 = vld [vmem:[%s5044 + $0x21] sm:$0xff]
        %v5048 = vld [vmem:[%s5044 + $0x31] sm:$0xff]
        %v5049 = vld [vmem:[%s5044 + $0x41] sm:$0xff]
        %v5050 = vld [vmem:[%s5044 + $0x51] sm:$0xff]
        %v5051 = vld [vmem:[%s5044 + $0x61] sm:$0xff]
        %v5052 = vld [vmem:[%s5044 + $0x71] sm:$0xff]
        %v5053 = vpack.c.bf16 %v5045, %v5045
        %v5054 = vpack.c.bf16 %v5046, %v5046
        %v5055 = vpack.c.bf16 %v5047, %v5047
        %v5056 = vpack.c.bf16 %v5048, %v5048
        %v5057 = vpack.c.bf16 %v5049, %v5049
        %v5058 = vpack.c.bf16 %v5050, %v5050
        %v5059 = vpack.c.bf16 %v5051, %v5051
        %v5060 = vpack.c.bf16 %v5052, %v5052
        %5069 = vrot.lane.b32.xlu0 %v5053, 64
        %v5070 = vpop.permute.xlu0 %5069
        %5071 = vrot.lane.b32.xlu0 %v5054, 64
        %v5072 = vpop.permute.xlu0 %5071
        %5073 = vrot.lane.b32.xlu0 %v5055, 64
        %v5074 = vpop.permute.xlu0 %5073
        %5075 = vrot.lane.b32.xlu0 %v5056, 64
        %v5076 = vpop.permute.xlu0 %5075
        %5077 = vrot.lane.b32.xlu0 %v5057, 64
        %v5078 = vpop.permute.xlu0 %5077
        %5079 = vrot.lane.b32.xlu0 %v5058, 64
        %v5080 = vpop.permute.xlu0 %5079
        %5081 = vrot.lane.b32.xlu0 %v5059, 64
        %v5082 = vpop.permute.xlu0 %5081
        %5083 = vrot.lane.b32.xlu0 %v5060, 64
        %v5084 = vpop.permute.xlu0 %5083
        %vm5093 = vcmask 1043968
        %5094 = vst.msk [vmem:[#allocation5] sm:$0xf] %vm5093, %v5070
        %5095 = vst.msk [vmem:[#allocation5 + $0x14] sm:$0xf] %vm5093, %v5072
        %5096 = vst.msk [vmem:[#allocation5 + $0x28] sm:$0xf] %vm5093, %v5074
        %5097 = vst.msk [vmem:[#allocation5 + $0x3c] sm:$0xf] %vm5093, %v5076
        %5098 = vst.msk [vmem:[#allocation5 + $0x50] sm:$0xf] %vm5093, %v5078
        %5099 = vst.msk [vmem:[#allocation5 + $0x64] sm:$0xf] %vm5093, %v5080
        %5100 = vst.msk [vmem:[#allocation5 + $0x78] sm:$0xf] %vm5093, %v5082
        %5101 = vst.msk [vmem:[#allocation5 + $0x8c] sm:$0xf] %vm5093, %v5084
        %v5102 = vld [vmem:[%s5018 + $0x1] sm:$0xff]
        %v5103 = vld [vmem:[%s5018 + $0x11] sm:$0xff]
        %v5104 = vld [vmem:[%s5018 + $0x21] sm:$0xff]
        %v5105 = vld [vmem:[%s5018 + $0x31] sm:$0xff]
        %v5106 = vld [vmem:[%s5018 + $0x41] sm:$0xff]
        %v5107 = vld [vmem:[%s5018 + $0x51] sm:$0xff]
        %v5108 = vld [vmem:[%s5018 + $0x61] sm:$0xff]
        %v5109 = vld [vmem:[%s5018 + $0x71] sm:$0xff]
        %v5110 = vpack.c.bf16 %v5102, %v5102
        %v5111 = vpack.c.bf16 %v5103, %v5103
        %v5112 = vpack.c.bf16 %v5104, %v5104
        %v5113 = vpack.c.bf16 %v5105, %v5105
        %v5114 = vpack.c.bf16 %v5106, %v5106
        %v5115 = vpack.c.bf16 %v5107, %v5107
        %v5116 = vpack.c.bf16 %v5108, %v5108
        %v5117 = vpack.c.bf16 %v5109, %v5109
        %5118 = vst.msk [vmem:[#allocation5 + $0x4] sm:$0xf] %vm5035, %v5110
        %5119 = vst.msk [vmem:[#allocation5 + $0x18] sm:$0xf] %vm5035, %v5111
        %5120 = vst.msk [vmem:[#allocation5 + $0x2c] sm:$0xf] %vm5035, %v5112
        %5121 = vst.msk [vmem:[#allocation5 + $0x40] sm:$0xf] %vm5035, %v5113
        %5122 = vst.msk [vmem:[#allocation5 + $0x54] sm:$0xf] %vm5035, %v5114
        %5123 = vst.msk [vmem:[#allocation5 + $0x68] sm:$0xf] %vm5035, %v5115
        %5124 = vst.msk [vmem:[#allocation5 + $0x7c] sm:$0xf] %vm5035, %v5116
        %5125 = vst.msk [vmem:[#allocation5 + $0x90] sm:$0xf] %vm5035, %v5117
        %v5126 = vld [vmem:[%s4959] sm:$0xff]
        %v5127 = vld [vmem:[%s4959 + $0x10] sm:$0xff]
        %v5128 = vld [vmem:[%s4959 + $0x20] sm:$0xff]
        %v5129 = vld [vmem:[%s4959 + $0x30] sm:$0xff]
        %v5130 = vld [vmem:[%s4959 + $0x40] sm:$0xff]
        %v5131 = vld [vmem:[%s4959 + $0x50] sm:$0xff]
        %v5132 = vld [vmem:[%s4959 + $0x60] sm:$0xff]
        %v5133 = vld [vmem:[%s4959 + $0x70] sm:$0xff]
        %v5134 = vpack.c.bf16 %v5126, %v5126
        %v5135 = vpack.c.bf16 %v5127, %v5127
        %v5136 = vpack.c.bf16 %v5128, %v5128
        %v5137 = vpack.c.bf16 %v5129, %v5129
        %v5138 = vpack.c.bf16 %v5130, %v5130
        %v5139 = vpack.c.bf16 %v5131, %v5131
        %v5140 = vpack.c.bf16 %v5132, %v5132
        %v5141 = vpack.c.bf16 %v5133, %v5133
        %5150 = vrot.lane.b32.xlu0 %v5134, 64
        %v5151 = vpop.permute.xlu0 %5150
        %5152 = vrot.lane.b32.xlu0 %v5135, 64
        %v5153 = vpop.permute.xlu0 %5152
        %5154 = vrot.lane.b32.xlu0 %v5136, 64
        %v5155 = vpop.permute.xlu0 %5154
        %5156 = vrot.lane.b32.xlu0 %v5137, 64
        %v5157 = vpop.permute.xlu0 %5156
        %5158 = vrot.lane.b32.xlu0 %v5138, 64
        %v5159 = vpop.permute.xlu0 %5158
        %5160 = vrot.lane.b32.xlu0 %v5139, 64
        %v5161 = vpop.permute.xlu0 %5160
        %5162 = vrot.lane.b32.xlu0 %v5140, 64
        %v5163 = vpop.permute.xlu0 %5162
        %5164 = vrot.lane.b32.xlu0 %v5141, 64
        %v5165 = vpop.permute.xlu0 %5164
        %5174 = vst.msk [vmem:[#allocation5 + $0x4] sm:$0xf] %vm5093, %v5151
        %5175 = vst.msk [vmem:[#allocation5 + $0x18] sm:$0xf] %vm5093, %v5153
        %5176 = vst.msk [vmem:[#allocation5 + $0x2c] sm:$0xf] %vm5093, %v5155
        %5177 = vst.msk [vmem:[#allocation5 + $0x40] sm:$0xf] %vm5093, %v5157
        %5178 = vst.msk [vmem:[#allocation5 + $0x54] sm:$0xf] %vm5093, %v5159
        %5179 = vst.msk [vmem:[#allocation5 + $0x68] sm:$0xf] %vm5093, %v5161
        %5180 = vst.msk [vmem:[#allocation5 + $0x7c] sm:$0xf] %vm5093, %v5163
        %5181 = vst.msk [vmem:[#allocation5 + $0x90] sm:$0xf] %vm5093, %v5165
        %v5182 = vld [vmem:[%s4918 + $0x1] sm:$0xff]
        %v5183 = vld [vmem:[%s4918 + $0x11] sm:$0xff]
        %v5184 = vld [vmem:[%s4918 + $0x21] sm:$0xff]
        %v5185 = vld [vmem:[%s4918 + $0x31] sm:$0xff]
        %v5186 = vld [vmem:[%s4918 + $0x41] sm:$0xff]
        %v5187 = vld [vmem:[%s4918 + $0x51] sm:$0xff]
        %v5188 = vld [vmem:[%s4918 + $0x61] sm:$0xff]
        %v5189 = vld [vmem:[%s4918 + $0x71] sm:$0xff]
        %v5190 = vpack.c.bf16 %v5182, %v5182
        %v5191 = vpack.c.bf16 %v5183, %v5183
        %v5192 = vpack.c.bf16 %v5184, %v5184
        %v5193 = vpack.c.bf16 %v5185, %v5185
        %v5194 = vpack.c.bf16 %v5186, %v5186
        %v5195 = vpack.c.bf16 %v5187, %v5187
        %v5196 = vpack.c.bf16 %v5188, %v5188
        %v5197 = vpack.c.bf16 %v5189, %v5189
        %5198 = vst.msk [vmem:[#allocation5 + $0x8] sm:$0xf] %vm5035, %v5190
        %5199 = vst.msk [vmem:[#allocation5 + $0x1c] sm:$0xf] %vm5035, %v5191
        %5200 = vst.msk [vmem:[#allocation5 + $0x30] sm:$0xf] %vm5035, %v5192
        %5201 = vst.msk [vmem:[#allocation5 + $0x44] sm:$0xf] %vm5035, %v5193
        %5202 = vst.msk [vmem:[#allocation5 + $0x58] sm:$0xf] %vm5035, %v5194
        %5203 = vst.msk [vmem:[#allocation5 + $0x6c] sm:$0xf] %vm5035, %v5195
        %5204 = vst.msk [vmem:[#allocation5 + $0x80] sm:$0xf] %vm5035, %v5196
        %5205 = vst.msk [vmem:[#allocation5 + $0x94] sm:$0xf] %vm5035, %v5197
        %v5206 = vld [vmem:[%s4959 + $0x1] sm:$0xff]
        %v5207 = vld [vmem:[%s4959 + $0x11] sm:$0xff]
        %v5208 = vld [vmem:[%s4959 + $0x21] sm:$0xff]
        %v5209 = vld [vmem:[%s4959 + $0x31] sm:$0xff]
        %v5210 = vld [vmem:[%s4959 + $0x41] sm:$0xff]
        %v5211 = vld [vmem:[%s4959 + $0x51] sm:$0xff]
        %v5212 = vld [vmem:[%s4959 + $0x61] sm:$0xff]
        %v5213 = vld [vmem:[%s4959 + $0x71] sm:$0xff]
        %v5214 = vpack.c.bf16 %v5206, %v5206
        %v5215 = vpack.c.bf16 %v5207, %v5207
        %v5216 = vpack.c.bf16 %v5208, %v5208
        %v5217 = vpack.c.bf16 %v5209, %v5209
        %v5218 = vpack.c.bf16 %v5210, %v5210
        %v5219 = vpack.c.bf16 %v5211, %v5211
        %v5220 = vpack.c.bf16 %v5212, %v5212
        %v5221 = vpack.c.bf16 %v5213, %v5213
        %5230 = vrot.lane.b32.xlu0 %v5214, 64
        %v5231 = vpop.permute.xlu0 %5230
        %5232 = vrot.lane.b32.xlu0 %v5215, 64
        %v5233 = vpop.permute.xlu0 %5232
        %5234 = vrot.lane.b32.xlu0 %v5216, 64
        %v5235 = vpop.permute.xlu0 %5234
        %5236 = vrot.lane.b32.xlu0 %v5217, 64
        %v5237 = vpop.permute.xlu0 %5236
        %5238 = vrot.lane.b32.xlu0 %v5218, 64
        %v5239 = vpop.permute.xlu0 %5238
        %5240 = vrot.lane.b32.xlu0 %v5219, 64
        %v5241 = vpop.permute.xlu0 %5240
        %5242 = vrot.lane.b32.xlu0 %v5220, 64
        %v5243 = vpop.permute.xlu0 %5242
        %5244 = vrot.lane.b32.xlu0 %v5221, 64
        %v5245 = vpop.permute.xlu0 %5244
        %5254 = vst.msk [vmem:[#allocation5 + $0x8] sm:$0xf] %vm5093, %v5231
        %5255 = vst.msk [vmem:[#allocation5 + $0x1c] sm:$0xf] %vm5093, %v5233
        %5256 = vst.msk [vmem:[#allocation5 + $0x30] sm:$0xf] %vm5093, %v5235
        %5257 = vst.msk [vmem:[#allocation5 + $0x44] sm:$0xf] %vm5093, %v5237
        %5258 = vst.msk [vmem:[#allocation5 + $0x58] sm:$0xf] %vm5093, %v5239
        %5259 = vst.msk [vmem:[#allocation5 + $0x6c] sm:$0xf] %vm5093, %v5241
        %5260 = vst.msk [vmem:[#allocation5 + $0x80] sm:$0xf] %vm5093, %v5243
        %5261 = vst.msk [vmem:[#allocation5 + $0x94] sm:$0xf] %vm5093, %v5245
        %v5262 = vld [vmem:[%s5009] sm:$0xff]
        %v5263 = vld [vmem:[%s5009 + $0x10] sm:$0xff]
        %v5264 = vld [vmem:[%s5009 + $0x20] sm:$0xff]
        %v5265 = vld [vmem:[%s5009 + $0x30] sm:$0xff]
        %v5266 = vld [vmem:[%s5009 + $0x40] sm:$0xff]
        %v5267 = vld [vmem:[%s5009 + $0x50] sm:$0xff]
        %v5268 = vld [vmem:[%s5009 + $0x60] sm:$0xff]
        %v5269 = vld [vmem:[%s5009 + $0x70] sm:$0xff]
        %v5270 = vpack.c.bf16 %v5262, %v5262
        %v5271 = vpack.c.bf16 %v5263, %v5263
        %v5272 = vpack.c.bf16 %v5264, %v5264
        %v5273 = vpack.c.bf16 %v5265, %v5265
        %v5274 = vpack.c.bf16 %v5266, %v5266
        %v5275 = vpack.c.bf16 %v5267, %v5267
        %v5276 = vpack.c.bf16 %v5268, %v5268
        %v5277 = vpack.c.bf16 %v5269, %v5269
        %5278 = vst.msk [vmem:[#allocation5 + $0xc] sm:$0xf] %vm5035, %v5270
        %5279 = vst.msk [vmem:[#allocation5 + $0x20] sm:$0xf] %vm5035, %v5271
        %5280 = vst.msk [vmem:[#allocation5 + $0x34] sm:$0xf] %vm5035, %v5272
        %5281 = vst.msk [vmem:[#allocation5 + $0x48] sm:$0xf] %vm5035, %v5273
        %5282 = vst.msk [vmem:[#allocation5 + $0x5c] sm:$0xf] %vm5035, %v5274
        %5283 = vst.msk [vmem:[#allocation5 + $0x70] sm:$0xf] %vm5035, %v5275
        %5284 = vst.msk [vmem:[#allocation5 + $0x84] sm:$0xf] %vm5035, %v5276
        %5285 = vst.msk [vmem:[#allocation5 + $0x98] sm:$0xf] %vm5035, %v5277
        %v5286 = vld [vmem:[%s4968 + $0x1] sm:$0xff]
        %v5287 = vld [vmem:[%s4968 + $0x11] sm:$0xff]
        %v5288 = vld [vmem:[%s4968 + $0x21] sm:$0xff]
        %v5289 = vld [vmem:[%s4968 + $0x31] sm:$0xff]
        %v5290 = vld [vmem:[%s4968 + $0x41] sm:$0xff]
        %v5291 = vld [vmem:[%s4968 + $0x51] sm:$0xff]
        %v5292 = vld [vmem:[%s4968 + $0x61] sm:$0xff]
        %v5293 = vld [vmem:[%s4968 + $0x71] sm:$0xff]
        %v5294 = vpack.c.bf16 %v5286, %v5286
        %v5295 = vpack.c.bf16 %v5287, %v5287
        %v5296 = vpack.c.bf16 %v5288, %v5288
        %v5297 = vpack.c.bf16 %v5289, %v5289
        %v5298 = vpack.c.bf16 %v5290, %v5290
        %v5299 = vpack.c.bf16 %v5291, %v5291
        %v5300 = vpack.c.bf16 %v5292, %v5292
        %v5301 = vpack.c.bf16 %v5293, %v5293
        %5310 = vrot.lane.b32.xlu0 %v5294, 64
        %v5311 = vpop.permute.xlu0 %5310
        %5312 = vrot.lane.b32.xlu0 %v5295, 64
        %v5313 = vpop.permute.xlu0 %5312
        %5314 = vrot.lane.b32.xlu0 %v5296, 64
        %v5315 = vpop.permute.xlu0 %5314
        %5316 = vrot.lane.b32.xlu0 %v5297, 64
        %v5317 = vpop.permute.xlu0 %5316
        %5318 = vrot.lane.b32.xlu0 %v5298, 64
        %v5319 = vpop.permute.xlu0 %5318
        %5320 = vrot.lane.b32.xlu0 %v5299, 64
        %v5321 = vpop.permute.xlu0 %5320
        %5322 = vrot.lane.b32.xlu0 %v5300, 64
        %v5323 = vpop.permute.xlu0 %5322
        %5324 = vrot.lane.b32.xlu0 %v5301, 64
        %v5325 = vpop.permute.xlu0 %5324
        %5334 = vst.msk [vmem:[#allocation5 + $0xc] sm:$0xf] %vm5093, %v5311
        %5335 = vst.msk [vmem:[#allocation5 + $0x20] sm:$0xf] %vm5093, %v5313
        %5336 = vst.msk [vmem:[#allocation5 + $0x34] sm:$0xf] %vm5093, %v5315
        %5337 = vst.msk [vmem:[#allocation5 + $0x48] sm:$0xf] %vm5093, %v5317
        %5338 = vst.msk [vmem:[#allocation5 + $0x5c] sm:$0xf] %vm5093, %v5319
        %5339 = vst.msk [vmem:[#allocation5 + $0x70] sm:$0xf] %vm5093, %v5321
        %5340 = vst.msk [vmem:[#allocation5 + $0x84] sm:$0xf] %vm5093, %v5323
        %5341 = vst.msk [vmem:[#allocation5 + $0x98] sm:$0xf] %vm5093, %v5325
        %v5342 = vld [vmem:[%s5009 + $0x1] sm:$0xff]
        %v5343 = vld [vmem:[%s5009 + $0x11] sm:$0xff]
        %v5344 = vld [vmem:[%s5009 + $0x21] sm:$0xff]
        %v5345 = vld [vmem:[%s5009 + $0x31] sm:$0xff]
        %v5346 = vld [vmem:[%s5009 + $0x41] sm:$0xff]
        %v5347 = vld [vmem:[%s5009 + $0x51] sm:$0xff]
        %v5348 = vld [vmem:[%s5009 + $0x61] sm:$0xff]
        %v5349 = vld [vmem:[%s5009 + $0x71] sm:$0xff]
        %v5350 = vpack.c.bf16 %v5342, %v5342
        %v5351 = vpack.c.bf16 %v5343, %v5343
        %v5352 = vpack.c.bf16 %v5344, %v5344
        %v5353 = vpack.c.bf16 %v5345, %v5345
        %v5354 = vpack.c.bf16 %v5346, %v5346
        %v5355 = vpack.c.bf16 %v5347, %v5347
        %v5356 = vpack.c.bf16 %v5348, %v5348
        %v5357 = vpack.c.bf16 %v5349, %v5349
        %5358 = vst.msk [vmem:[#allocation5 + $0x10] sm:$0xf] %vm5035, %v5350
        %5359 = vst.msk [vmem:[#allocation5 + $0x24] sm:$0xf] %vm5035, %v5351
        %5360 = vst.msk [vmem:[#allocation5 + $0x38] sm:$0xf] %vm5035, %v5352
        %5361 = vst.msk [vmem:[#allocation5 + $0x4c] sm:$0xf] %vm5035, %v5353
        %5362 = vst.msk [vmem:[#allocation5 + $0x60] sm:$0xf] %vm5035, %v5354
        %5363 = vst.msk [vmem:[#allocation5 + $0x74] sm:$0xf] %vm5035, %v5355
        %5364 = vst.msk [vmem:[#allocation5 + $0x88] sm:$0xf] %vm5035, %v5356
        %5365 = vst.msk [vmem:[#allocation5 + $0x9c] sm:$0xf] %vm5035, %v5357
        %v5366 = vld [vmem:[%s5044 + $0x1] sm:$0xff]
        %v5367 = vld [vmem:[%s5044 + $0x11] sm:$0xff]
        %v5368 = vld [vmem:[%s5044 + $0x21] sm:$0xff]
        %v5369 = vld [vmem:[%s5044 + $0x31] sm:$0xff]
        %v5370 = vld [vmem:[%s5044 + $0x41] sm:$0xff]
        %v5371 = vld [vmem:[%s5044 + $0x51] sm:$0xff]
        %v5372 = vld [vmem:[%s5044 + $0x61] sm:$0xff]
        %v5373 = vld [vmem:[%s5044 + $0x71] sm:$0xff]
        %v5374 = vpack.c.bf16 %v5366, %v5366
        %v5375 = vpack.c.bf16 %v5367, %v5367
        %v5376 = vpack.c.bf16 %v5368, %v5368
        %v5377 = vpack.c.bf16 %v5369, %v5369
        %v5378 = vpack.c.bf16 %v5370, %v5370
        %v5379 = vpack.c.bf16 %v5371, %v5371
        %v5380 = vpack.c.bf16 %v5372, %v5372
        %v5381 = vpack.c.bf16 %v5373, %v5373
        %5382 = vst.msk [vmem:[#allocation5 + $0xa0] sm:$0xf] %vm5035, %v5374
        %5383 = vst.msk [vmem:[#allocation5 + $0xb4] sm:$0xf] %vm5035, %v5375
        %5384 = vst.msk [vmem:[#allocation5 + $0xc8] sm:$0xf] %vm5035, %v5376
        %5385 = vst.msk [vmem:[#allocation5 + $0xdc] sm:$0xf] %vm5035, %v5377
        %5386 = vst.msk [vmem:[#allocation5 + $0xf0] sm:$0xf] %vm5035, %v5378
        %5387 = vst.msk [vmem:[#allocation5 + $0x104] sm:$0xf] %vm5035, %v5379
        %5388 = vst.msk [vmem:[#allocation5 + $0x118] sm:$0xf] %vm5035, %v5380
        %5389 = vst.msk [vmem:[#allocation5 + $0x12c] sm:$0xf] %vm5035, %v5381
        %v5390 = vld [vmem:[%s5018 + $0x1] sm:$0xff]
        %v5391 = vld [vmem:[%s5018 + $0x11] sm:$0xff]
        %v5392 = vld [vmem:[%s5018 + $0x21] sm:$0xff]
        %v5393 = vld [vmem:[%s5018 + $0x31] sm:$0xff]
        %v5394 = vld [vmem:[%s5018 + $0x41] sm:$0xff]
        %v5395 = vld [vmem:[%s5018 + $0x51] sm:$0xff]
        %v5396 = vld [vmem:[%s5018 + $0x61] sm:$0xff]
        %v5397 = vld [vmem:[%s5018 + $0x71] sm:$0xff]
        %v5398 = vpack.c.bf16 %v5390, %v5390
        %v5399 = vpack.c.bf16 %v5391, %v5391
        %v5400 = vpack.c.bf16 %v5392, %v5392
        %v5401 = vpack.c.bf16 %v5393, %v5393
        %v5402 = vpack.c.bf16 %v5394, %v5394
        %v5403 = vpack.c.bf16 %v5395, %v5395
        %v5404 = vpack.c.bf16 %v5396, %v5396
        %v5405 = vpack.c.bf16 %v5397, %v5397
        %5414 = vrot.lane.b32.xlu0 %v5398, 64
        %v5415 = vpop.permute.xlu0 %5414
        %5416 = vrot.lane.b32.xlu0 %v5399, 64
        %v5417 = vpop.permute.xlu0 %5416
        %5418 = vrot.lane.b32.xlu0 %v5400, 64
        %v5419 = vpop.permute.xlu0 %5418
        %5420 = vrot.lane.b32.xlu0 %v5401, 64
        %v5421 = vpop.permute.xlu0 %5420
        %5422 = vrot.lane.b32.xlu0 %v5402, 64
        %v5423 = vpop.permute.xlu0 %5422
        %5424 = vrot.lane.b32.xlu0 %v5403, 64
        %v5425 = vpop.permute.xlu0 %5424
        %5426 = vrot.lane.b32.xlu0 %v5404, 64
        %v5427 = vpop.permute.xlu0 %5426
        %5428 = vrot.lane.b32.xlu0 %v5405, 64
        %v5429 = vpop.permute.xlu0 %5428
        %5438 = vst.msk [vmem:[#allocation5 + $0xa0] sm:$0xf] %vm5093, %v5415
        %5439 = vst.msk [vmem:[#allocation5 + $0xb4] sm:$0xf] %vm5093, %v5417
        %5440 = vst.msk [vmem:[#allocation5 + $0xc8] sm:$0xf] %vm5093, %v5419
        %5441 = vst.msk [vmem:[#allocation5 + $0xdc] sm:$0xf] %vm5093, %v5421
        %5442 = vst.msk [vmem:[#allocation5 + $0xf0] sm:$0xf] %vm5093, %v5423
        %5443 = vst.msk [vmem:[#allocation5 + $0x104] sm:$0xf] %vm5093, %v5425
        %5444 = vst.msk [vmem:[#allocation5 + $0x118] sm:$0xf] %vm5093, %v5427
        %5445 = vst.msk [vmem:[#allocation5 + $0x12c] sm:$0xf] %vm5093, %v5429
        %v5446 = vld [vmem:[%s5044 + $0x2] sm:$0xff]
        %v5447 = vld [vmem:[%s5044 + $0x12] sm:$0xff]
        %v5448 = vld [vmem:[%s5044 + $0x22] sm:$0xff]
        %v5449 = vld [vmem:[%s5044 + $0x32] sm:$0xff]
        %v5450 = vld [vmem:[%s5044 + $0x42] sm:$0xff]
        %v5451 = vld [vmem:[%s5044 + $0x52] sm:$0xff]
        %v5452 = vld [vmem:[%s5044 + $0x62] sm:$0xff]
        %v5453 = vld [vmem:[%s5044 + $0x72] sm:$0xff]
        %v5454 = vpack.c.bf16 %v5446, %v5446
        %v5455 = vpack.c.bf16 %v5447, %v5447
        %v5456 = vpack.c.bf16 %v5448, %v5448
        %v5457 = vpack.c.bf16 %v5449, %v5449
        %v5458 = vpack.c.bf16 %v5450, %v5450
        %v5459 = vpack.c.bf16 %v5451, %v5451
        %v5460 = vpack.c.bf16 %v5452, %v5452
        %v5461 = vpack.c.bf16 %v5453, %v5453
        %5462 = vst.msk [vmem:[#allocation5 + $0xa4] sm:$0xf] %vm5035, %v5454
        %5463 = vst.msk [vmem:[#allocation5 + $0xb8] sm:$0xf] %vm5035, %v5455
        %5464 = vst.msk [vmem:[#allocation5 + $0xcc] sm:$0xf] %vm5035, %v5456
        %5465 = vst.msk [vmem:[#allocation5 + $0xe0] sm:$0xf] %vm5035, %v5457
        %5466 = vst.msk [vmem:[#allocation5 + $0xf4] sm:$0xf] %vm5035, %v5458
        %5467 = vst.msk [vmem:[#allocation5 + $0x108] sm:$0xf] %vm5035, %v5459
        %5468 = vst.msk [vmem:[#allocation5 + $0x11c] sm:$0xf] %vm5035, %v5460
        %5469 = vst.msk [vmem:[#allocation5 + $0x130] sm:$0xf] %vm5035, %v5461
        %v5470 = vld [vmem:[%s4918 + $0x1] sm:$0xff]
        %v5471 = vld [vmem:[%s4918 + $0x11] sm:$0xff]
        %v5472 = vld [vmem:[%s4918 + $0x21] sm:$0xff]
        %v5473 = vld [vmem:[%s4918 + $0x31] sm:$0xff]
        %v5474 = vld [vmem:[%s4918 + $0x41] sm:$0xff]
        %v5475 = vld [vmem:[%s4918 + $0x51] sm:$0xff]
        %v5476 = vld [vmem:[%s4918 + $0x61] sm:$0xff]
        %v5477 = vld [vmem:[%s4918 + $0x71] sm:$0xff]
        %v5478 = vpack.c.bf16 %v5470, %v5470
        %v5479 = vpack.c.bf16 %v5471, %v5471
        %v5480 = vpack.c.bf16 %v5472, %v5472
        %v5481 = vpack.c.bf16 %v5473, %v5473
        %v5482 = vpack.c.bf16 %v5474, %v5474
        %v5483 = vpack.c.bf16 %v5475, %v5475
        %v5484 = vpack.c.bf16 %v5476, %v5476
        %v5485 = vpack.c.bf16 %v5477, %v5477
        %5494 = vrot.lane.b32.xlu0 %v5478, 64
        %v5495 = vpop.permute.xlu0 %5494
        %5496 = vrot.lane.b32.xlu0 %v5479, 64
        %v5497 = vpop.permute.xlu0 %5496
        %5498 = vrot.lane.b32.xlu0 %v5480, 64
        %v5499 = vpop.permute.xlu0 %5498
        %5500 = vrot.lane.b32.xlu0 %v5481, 64
        %v5501 = vpop.permute.xlu0 %5500
        %5502 = vrot.lane.b32.xlu0 %v5482, 64
        %v5503 = vpop.permute.xlu0 %5502
        %5504 = vrot.lane.b32.xlu0 %v5483, 64
        %v5505 = vpop.permute.xlu0 %5504
        %5506 = vrot.lane.b32.xlu0 %v5484, 64
        %v5507 = vpop.permute.xlu0 %5506
        %5508 = vrot.lane.b32.xlu0 %v5485, 64
        %v5509 = vpop.permute.xlu0 %5508
        %5518 = vst.msk [vmem:[#allocation5 + $0xa4] sm:$0xf] %vm5093, %v5495
        %5519 = vst.msk [vmem:[#allocation5 + $0xb8] sm:$0xf] %vm5093, %v5497
        %5520 = vst.msk [vmem:[#allocation5 + $0xcc] sm:$0xf] %vm5093, %v5499
        %5521 = vst.msk [vmem:[#allocation5 + $0xe0] sm:$0xf] %vm5093, %v5501
        %5522 = vst.msk [vmem:[#allocation5 + $0xf4] sm:$0xf] %vm5093, %v5503
        %5523 = vst.msk [vmem:[#allocation5 + $0x108] sm:$0xf] %vm5093, %v5505
        %5524 = vst.msk [vmem:[#allocation5 + $0x11c] sm:$0xf] %vm5093, %v5507
        %5525 = vst.msk [vmem:[#allocation5 + $0x130] sm:$0xf] %vm5093, %v5509
        %v5526 = vld [vmem:[%s4959 + $0x1] sm:$0xff]
        %v5527 = vld [vmem:[%s4959 + $0x11] sm:$0xff]
        %v5528 = vld [vmem:[%s4959 + $0x21] sm:$0xff]
        %v5529 = vld [vmem:[%s4959 + $0x31] sm:$0xff]
        %v5530 = vld [vmem:[%s4959 + $0x41] sm:$0xff]
        %v5531 = vld [vmem:[%s4959 + $0x51] sm:$0xff]
        %v5532 = vld [vmem:[%s4959 + $0x61] sm:$0xff]
        %v5533 = vld [vmem:[%s4959 + $0x71] sm:$0xff]
        %v5534 = vpack.c.bf16 %v5526, %v5526
        %v5535 = vpack.c.bf16 %v5527, %v5527
        %v5536 = vpack.c.bf16 %v5528, %v5528
        %v5537 = vpack.c.bf16 %v5529, %v5529
        %v5538 = vpack.c.bf16 %v5530, %v5530
        %v5539 = vpack.c.bf16 %v5531, %v5531
        %v5540 = vpack.c.bf16 %v5532, %v5532
        %v5541 = vpack.c.bf16 %v5533, %v5533
        %5542 = vst.msk [vmem:[#allocation5 + $0xa8] sm:$0xf] %vm5035, %v5534
        %5543 = vst.msk [vmem:[#allocation5 + $0xbc] sm:$0xf] %vm5035, %v5535
        %5544 = vst.msk [vmem:[#allocation5 + $0xd0] sm:$0xf] %vm5035, %v5536
        %5545 = vst.msk [vmem:[#allocation5 + $0xe4] sm:$0xf] %vm5035, %v5537
        %5546 = vst.msk [vmem:[#allocation5 + $0xf8] sm:$0xf] %vm5035, %v5538
        %5547 = vst.msk [vmem:[#allocation5 + $0x10c] sm:$0xf] %vm5035, %v5539
        %5548 = vst.msk [vmem:[#allocation5 + $0x120] sm:$0xf] %vm5035, %v5540
        %5549 = vst.msk [vmem:[#allocation5 + $0x134] sm:$0xf] %vm5035, %v5541
        %v5550 = vld [vmem:[%s4918 + $0x2] sm:$0xff]
        %v5551 = vld [vmem:[%s4918 + $0x12] sm:$0xff]
        %v5552 = vld [vmem:[%s4918 + $0x22] sm:$0xff]
        %v5553 = vld [vmem:[%s4918 + $0x32] sm:$0xff]
        %v5554 = vld [vmem:[%s4918 + $0x42] sm:$0xff]
        %v5555 = vld [vmem:[%s4918 + $0x52] sm:$0xff]
        %v5556 = vld [vmem:[%s4918 + $0x62] sm:$0xff]
        %v5557 = vld [vmem:[%s4918 + $0x72] sm:$0xff]
        %v5558 = vpack.c.bf16 %v5550, %v5550
        %v5559 = vpack.c.bf16 %v5551, %v5551
        %v5560 = vpack.c.bf16 %v5552, %v5552
        %v5561 = vpack.c.bf16 %v5553, %v5553
        %v5562 = vpack.c.bf16 %v5554, %v5554
        %v5563 = vpack.c.bf16 %v5555, %v5555
        %v5564 = vpack.c.bf16 %v5556, %v5556
        %v5565 = vpack.c.bf16 %v5557, %v5557
        %5574 = vrot.lane.b32.xlu0 %v5558, 64
        %v5575 = vpop.permute.xlu0 %5574
        %5576 = vrot.lane.b32.xlu0 %v5559, 64
        %v5577 = vpop.permute.xlu0 %5576
        %5578 = vrot.lane.b32.xlu0 %v5560, 64
        %v5579 = vpop.permute.xlu0 %5578
        %5580 = vrot.lane.b32.xlu0 %v5561, 64
        %v5581 = vpop.permute.xlu0 %5580
        %5582 = vrot.lane.b32.xlu0 %v5562, 64
        %v5583 = vpop.permute.xlu0 %5582
        %5584 = vrot.lane.b32.xlu0 %v5563, 64
        %v5585 = vpop.permute.xlu0 %5584
        %5586 = vrot.lane.b32.xlu0 %v5564, 64
        %v5587 = vpop.permute.xlu0 %5586
        %5588 = vrot.lane.b32.xlu0 %v5565, 64
        %v5589 = vpop.permute.xlu0 %5588
        %5598 = vst.msk [vmem:[#allocation5 + $0xa8] sm:$0xf] %vm5093, %v5575
        %5599 = vst.msk [vmem:[#allocation5 + $0xbc] sm:$0xf] %vm5093, %v5577
        %5600 = vst.msk [vmem:[#allocation5 + $0xd0] sm:$0xf] %vm5093, %v5579
        %5601 = vst.msk [vmem:[#allocation5 + $0xe4] sm:$0xf] %vm5093, %v5581
        %5602 = vst.msk [vmem:[#allocation5 + $0xf8] sm:$0xf] %vm5093, %v5583
        %5603 = vst.msk [vmem:[#allocation5 + $0x10c] sm:$0xf] %vm5093, %v5585
        %5604 = vst.msk [vmem:[#allocation5 + $0x120] sm:$0xf] %vm5093, %v5587
        %5605 = vst.msk [vmem:[#allocation5 + $0x134] sm:$0xf] %vm5093, %v5589
        %v5606 = vld [vmem:[%s4968 + $0x1] sm:$0xff]
        %v5607 = vld [vmem:[%s4968 + $0x11] sm:$0xff]
        %v5608 = vld [vmem:[%s4968 + $0x21] sm:$0xff]
        %v5609 = vld [vmem:[%s4968 + $0x31] sm:$0xff]
        %v5610 = vld [vmem:[%s4968 + $0x41] sm:$0xff]
        %v5611 = vld [vmem:[%s4968 + $0x51] sm:$0xff]
        %v5612 = vld [vmem:[%s4968 + $0x61] sm:$0xff]
        %v5613 = vld [vmem:[%s4968 + $0x71] sm:$0xff]
        %v5614 = vpack.c.bf16 %v5606, %v5606
        %v5615 = vpack.c.bf16 %v5607, %v5607
        %v5616 = vpack.c.bf16 %v5608, %v5608
        %v5617 = vpack.c.bf16 %v5609, %v5609
        %v5618 = vpack.c.bf16 %v5610, %v5610
        %v5619 = vpack.c.bf16 %v5611, %v5611
        %v5620 = vpack.c.bf16 %v5612, %v5612
        %v5621 = vpack.c.bf16 %v5613, %v5613
        %5622 = vst.msk [vmem:[#allocation5 + $0xac] sm:$0xf] %vm5035, %v5614
        %5623 = vst.msk [vmem:[#allocation5 + $0xc0] sm:$0xf] %vm5035, %v5615
        %5624 = vst.msk [vmem:[#allocation5 + $0xd4] sm:$0xf] %vm5035, %v5616
        %5625 = vst.msk [vmem:[#allocation5 + $0xe8] sm:$0xf] %vm5035, %v5617
        %5626 = vst.msk [vmem:[#allocation5 + $0xfc] sm:$0xf] %vm5035, %v5618
        %5627 = vst.msk [vmem:[#allocation5 + $0x110] sm:$0xf] %vm5035, %v5619
        %5628 = vst.msk [vmem:[#allocation5 + $0x124] sm:$0xf] %vm5035, %v5620
        %5629 = vst.msk [vmem:[#allocation5 + $0x138] sm:$0xf] %vm5035, %v5621
        %v5630 = vld [vmem:[%s5009 + $0x1] sm:$0xff]
        %v5631 = vld [vmem:[%s5009 + $0x11] sm:$0xff]
        %v5632 = vld [vmem:[%s5009 + $0x21] sm:$0xff]
        %v5633 = vld [vmem:[%s5009 + $0x31] sm:$0xff]
        %v5634 = vld [vmem:[%s5009 + $0x41] sm:$0xff]
        %v5635 = vld [vmem:[%s5009 + $0x51] sm:$0xff]
        %v5636 = vld [vmem:[%s5009 + $0x61] sm:$0xff]
        %v5637 = vld [vmem:[%s5009 + $0x71] sm:$0xff]
        %v5638 = vpack.c.bf16 %v5630, %v5630
        %v5639 = vpack.c.bf16 %v5631, %v5631
        %v5640 = vpack.c.bf16 %v5632, %v5632
        %v5641 = vpack.c.bf16 %v5633, %v5633
        %v5642 = vpack.c.bf16 %v5634, %v5634
        %v5643 = vpack.c.bf16 %v5635, %v5635
        %v5644 = vpack.c.bf16 %v5636, %v5636
        %v5645 = vpack.c.bf16 %v5637, %v5637
        %5654 = vrot.lane.b32.xlu0 %v5638, 64
        %v5655 = vpop.permute.xlu0 %5654
        %5656 = vrot.lane.b32.xlu0 %v5639, 64
        %v5657 = vpop.permute.xlu0 %5656
        %5658 = vrot.lane.b32.xlu0 %v5640, 64
        %v5659 = vpop.permute.xlu0 %5658
        %5660 = vrot.lane.b32.xlu0 %v5641, 64
        %v5661 = vpop.permute.xlu0 %5660
        %5662 = vrot.lane.b32.xlu0 %v5642, 64
        %v5663 = vpop.permute.xlu0 %5662
        %5664 = vrot.lane.b32.xlu0 %v5643, 64
        %v5665 = vpop.permute.xlu0 %5664
        %5666 = vrot.lane.b32.xlu0 %v5644, 64
        %v5667 = vpop.permute.xlu0 %5666
        %5668 = vrot.lane.b32.xlu0 %v5645, 64
        %v5669 = vpop.permute.xlu0 %5668
        %5678 = vst.msk [vmem:[#allocation5 + $0xac] sm:$0xf] %vm5093, %v5655
        %5679 = vst.msk [vmem:[#allocation5 + $0xc0] sm:$0xf] %vm5093, %v5657
        %5680 = vst.msk [vmem:[#allocation5 + $0xd4] sm:$0xf] %vm5093, %v5659
        %5681 = vst.msk [vmem:[#allocation5 + $0xe8] sm:$0xf] %vm5093, %v5661
        %5682 = vst.msk [vmem:[#allocation5 + $0xfc] sm:$0xf] %vm5093, %v5663
        %5683 = vst.msk [vmem:[#allocation5 + $0x110] sm:$0xf] %vm5093, %v5665
        %5684 = vst.msk [vmem:[#allocation5 + $0x124] sm:$0xf] %vm5093, %v5667
        %5685 = vst.msk [vmem:[#allocation5 + $0x138] sm:$0xf] %vm5093, %v5669
        %v5686 = vld [vmem:[%s4968 + $0x2] sm:$0xff]
        %v5687 = vld [vmem:[%s4968 + $0x12] sm:$0xff]
        %v5688 = vld [vmem:[%s4968 + $0x22] sm:$0xff]
        %v5689 = vld [vmem:[%s4968 + $0x32] sm:$0xff]
        %v5690 = vld [vmem:[%s4968 + $0x42] sm:$0xff]
        %v5691 = vld [vmem:[%s4968 + $0x52] sm:$0xff]
        %v5692 = vld [vmem:[%s4968 + $0x62] sm:$0xff]
        %v5693 = vld [vmem:[%s4968 + $0x72] sm:$0xff]
        %v5694 = vpack.c.bf16 %v5686, %v5686
        %v5695 = vpack.c.bf16 %v5687, %v5687
        %v5696 = vpack.c.bf16 %v5688, %v5688
        %v5697 = vpack.c.bf16 %v5689, %v5689
        %v5698 = vpack.c.bf16 %v5690, %v5690
        %v5699 = vpack.c.bf16 %v5691, %v5691
        %v5700 = vpack.c.bf16 %v5692, %v5692
        %v5701 = vpack.c.bf16 %v5693, %v5693
        %5702 = vst.msk [vmem:[#allocation5 + $0xb0] sm:$0xf] %vm5035, %v5694
        %5703 = vst.msk [vmem:[#allocation5 + $0xc4] sm:$0xf] %vm5035, %v5695
        %5704 = vst.msk [vmem:[#allocation5 + $0xd8] sm:$0xf] %vm5035, %v5696
        %5705 = vst.msk [vmem:[#allocation5 + $0xec] sm:$0xf] %vm5035, %v5697
        %5706 = vst.msk [vmem:[#allocation5 + $0x100] sm:$0xf] %vm5035, %v5698
        %5707 = vst.msk [vmem:[#allocation5 + $0x114] sm:$0xf] %vm5035, %v5699
        %5708 = vst.msk [vmem:[#allocation5 + $0x128] sm:$0xf] %vm5035, %v5700
        %5709 = vst.msk [vmem:[#allocation5 + $0x13c] sm:$0xf] %vm5035, %v5701
        %v5710 = vld [vmem:[%s4959] sm:$0xff]
        %v5711 = vld [vmem:[%s4959 + $0x10] sm:$0xff]
        %v5712 = vld [vmem:[%s4959 + $0x20] sm:$0xff]
        %v5713 = vld [vmem:[%s4959 + $0x30] sm:$0xff]
        %v5714 = vld [vmem:[%s4959 + $0x40] sm:$0xff]
        %v5715 = vld [vmem:[%s4959 + $0x50] sm:$0xff]
        %v5716 = vld [vmem:[%s4959 + $0x60] sm:$0xff]
        %v5717 = vld [vmem:[%s4959 + $0x70] sm:$0xff]
        %v5718 = vpack.c.bf16 %v5710, %v5710
        %v5719 = vpack.c.bf16 %v5711, %v5711
        %v5720 = vpack.c.bf16 %v5712, %v5712
        %v5721 = vpack.c.bf16 %v5713, %v5713
        %v5722 = vpack.c.bf16 %v5714, %v5714
        %v5723 = vpack.c.bf16 %v5715, %v5715
        %v5724 = vpack.c.bf16 %v5716, %v5716
        %v5725 = vpack.c.bf16 %v5717, %v5717
        %5726 = vst.msk [vmem:[#allocation5 + $0x140] sm:$0xf] %vm5035, %v5718
        %5727 = vst.msk [vmem:[#allocation5 + $0x154] sm:$0xf] %vm5035, %v5719
        %5728 = vst.msk [vmem:[#allocation5 + $0x168] sm:$0xf] %vm5035, %v5720
        %5729 = vst.msk [vmem:[#allocation5 + $0x17c] sm:$0xf] %vm5035, %v5721
        %5730 = vst.msk [vmem:[#allocation5 + $0x190] sm:$0xf] %vm5035, %v5722
        %5731 = vst.msk [vmem:[#allocation5 + $0x1a4] sm:$0xf] %vm5035, %v5723
        %5732 = vst.msk [vmem:[#allocation5 + $0x1b8] sm:$0xf] %vm5035, %v5724
        %5733 = vst.msk [vmem:[#allocation5 + $0x1cc] sm:$0xf] %vm5035, %v5725
        %v5734 = vld [vmem:[%s4918 + $0x1] sm:$0xff]
        %v5735 = vld [vmem:[%s4918 + $0x11] sm:$0xff]
        %v5736 = vld [vmem:[%s4918 + $0x21] sm:$0xff]
        %v5737 = vld [vmem:[%s4918 + $0x31] sm:$0xff]
        %v5738 = vld [vmem:[%s4918 + $0x41] sm:$0xff]
        %v5739 = vld [vmem:[%s4918 + $0x51] sm:$0xff]
        %v5740 = vld [vmem:[%s4918 + $0x61] sm:$0xff]
        %v5741 = vld [vmem:[%s4918 + $0x71] sm:$0xff]
        %v5742 = vpack.c.bf16 %v5734, %v5734
        %v5743 = vpack.c.bf16 %v5735, %v5735
        %v5744 = vpack.c.bf16 %v5736, %v5736
        %v5745 = vpack.c.bf16 %v5737, %v5737
        %v5746 = vpack.c.bf16 %v5738, %v5738
        %v5747 = vpack.c.bf16 %v5739, %v5739
        %v5748 = vpack.c.bf16 %v5740, %v5740
        %v5749 = vpack.c.bf16 %v5741, %v5741
        %5758 = vrot.lane.b32.xlu0 %v5742, 64
        %v5759 = vpop.permute.xlu0 %5758
        %5760 = vrot.lane.b32.xlu0 %v5743, 64
        %v5761 = vpop.permute.xlu0 %5760
        %5762 = vrot.lane.b32.xlu0 %v5744, 64
        %v5763 = vpop.permute.xlu0 %5762
        %5764 = vrot.lane.b32.xlu0 %v5745, 64
        %v5765 = vpop.permute.xlu0 %5764
        %5766 = vrot.lane.b32.xlu0 %v5746, 64
        %v5767 = vpop.permute.xlu0 %5766
        %5768 = vrot.lane.b32.xlu0 %v5747, 64
        %v5769 = vpop.permute.xlu0 %5768
        %5770 = vrot.lane.b32.xlu0 %v5748, 64
        %v5771 = vpop.permute.xlu0 %5770
        %5772 = vrot.lane.b32.xlu0 %v5749, 64
        %v5773 = vpop.permute.xlu0 %5772
        %5782 = vst.msk [vmem:[#allocation5 + $0x140] sm:$0xf] %vm5093, %v5759
        %5783 = vst.msk [vmem:[#allocation5 + $0x154] sm:$0xf] %vm5093, %v5761
        %5784 = vst.msk [vmem:[#allocation5 + $0x168] sm:$0xf] %vm5093, %v5763
        %5785 = vst.msk [vmem:[#allocation5 + $0x17c] sm:$0xf] %vm5093, %v5765
        %5786 = vst.msk [vmem:[#allocation5 + $0x190] sm:$0xf] %vm5093, %v5767
        %5787 = vst.msk [vmem:[#allocation5 + $0x1a4] sm:$0xf] %vm5093, %v5769
        %5788 = vst.msk [vmem:[#allocation5 + $0x1b8] sm:$0xf] %vm5093, %v5771
        %5789 = vst.msk [vmem:[#allocation5 + $0x1cc] sm:$0xf] %vm5093, %v5773
        %v5790 = vld [vmem:[%s4959 + $0x1] sm:$0xff]
        %v5791 = vld [vmem:[%s4959 + $0x11] sm:$0xff]
        %v5792 = vld [vmem:[%s4959 + $0x21] sm:$0xff]
        %v5793 = vld [vmem:[%s4959 + $0x31] sm:$0xff]
        %v5794 = vld [vmem:[%s4959 + $0x41] sm:$0xff]
        %v5795 = vld [vmem:[%s4959 + $0x51] sm:$0xff]
        %v5796 = vld [vmem:[%s4959 + $0x61] sm:$0xff]
        %v5797 = vld [vmem:[%s4959 + $0x71] sm:$0xff]
        %v5798 = vpack.c.bf16 %v5790, %v5790
        %v5799 = vpack.c.bf16 %v5791, %v5791
        %v5800 = vpack.c.bf16 %v5792, %v5792
        %v5801 = vpack.c.bf16 %v5793, %v5793
        %v5802 = vpack.c.bf16 %v5794, %v5794
        %v5803 = vpack.c.bf16 %v5795, %v5795
        %v5804 = vpack.c.bf16 %v5796, %v5796
        %v5805 = vpack.c.bf16 %v5797, %v5797
        %5806 = vst.msk [vmem:[#allocation5 + $0x144] sm:$0xf] %vm5035, %v5798
        %5807 = vst.msk [vmem:[#allocation5 + $0x158] sm:$0xf] %vm5035, %v5799
        %5808 = vst.msk [vmem:[#allocation5 + $0x16c] sm:$0xf] %vm5035, %v5800
        %5809 = vst.msk [vmem:[#allocation5 + $0x180] sm:$0xf] %vm5035, %v5801
        %5810 = vst.msk [vmem:[#allocation5 + $0x194] sm:$0xf] %vm5035, %v5802
        %5811 = vst.msk [vmem:[#allocation5 + $0x1a8] sm:$0xf] %vm5035, %v5803
        %5812 = vst.msk [vmem:[#allocation5 + $0x1bc] sm:$0xf] %vm5035, %v5804
        %5813 = vst.msk [vmem:[#allocation5 + $0x1d0] sm:$0xf] %vm5035, %v5805
        %v5814 = vld [vmem:[%s5009] sm:$0xff]
        %v5815 = vld [vmem:[%s5009 + $0x10] sm:$0xff]
        %v5816 = vld [vmem:[%s5009 + $0x20] sm:$0xff]
        %v5817 = vld [vmem:[%s5009 + $0x30] sm:$0xff]
        %v5818 = vld [vmem:[%s5009 + $0x40] sm:$0xff]
        %v5819 = vld [vmem:[%s5009 + $0x50] sm:$0xff]
        %v5820 = vld [vmem:[%s5009 + $0x60] sm:$0xff]
        %v5821 = vld [vmem:[%s5009 + $0x70] sm:$0xff]
        %v5822 = vpack.c.bf16 %v5814, %v5814
        %v5823 = vpack.c.bf16 %v5815, %v5815
        %v5824 = vpack.c.bf16 %v5816, %v5816
        %v5825 = vpack.c.bf16 %v5817, %v5817
        %v5826 = vpack.c.bf16 %v5818, %v5818
        %v5827 = vpack.c.bf16 %v5819, %v5819
        %v5828 = vpack.c.bf16 %v5820, %v5820
        %v5829 = vpack.c.bf16 %v5821, %v5821
        %5838 = vrot.lane.b32.xlu0 %v5822, 64
        %v5839 = vpop.permute.xlu0 %5838
        %5840 = vrot.lane.b32.xlu0 %v5823, 64
        %v5841 = vpop.permute.xlu0 %5840
        %5842 = vrot.lane.b32.xlu0 %v5824, 64
        %v5843 = vpop.permute.xlu0 %5842
        %5844 = vrot.lane.b32.xlu0 %v5825, 64
        %v5845 = vpop.permute.xlu0 %5844
        %5846 = vrot.lane.b32.xlu0 %v5826, 64
        %v5847 = vpop.permute.xlu0 %5846
        %5848 = vrot.lane.b32.xlu0 %v5827, 64
        %v5849 = vpop.permute.xlu0 %5848
        %5850 = vrot.lane.b32.xlu0 %v5828, 64
        %v5851 = vpop.permute.xlu0 %5850
        %5852 = vrot.lane.b32.xlu0 %v5829, 64
        %v5853 = vpop.permute.xlu0 %5852
        %5862 = vst.msk [vmem:[#allocation5 + $0x144] sm:$0xf] %vm5093, %v5839
        %5863 = vst.msk [vmem:[#allocation5 + $0x158] sm:$0xf] %vm5093, %v5841
        %5864 = vst.msk [vmem:[#allocation5 + $0x16c] sm:$0xf] %vm5093, %v5843
        %5865 = vst.msk [vmem:[#allocation5 + $0x180] sm:$0xf] %vm5093, %v5845
        %5866 = vst.msk [vmem:[#allocation5 + $0x194] sm:$0xf] %vm5093, %v5847
        %5867 = vst.msk [vmem:[#allocation5 + $0x1a8] sm:$0xf] %vm5093, %v5849
        %5868 = vst.msk [vmem:[#allocation5 + $0x1bc] sm:$0xf] %vm5093, %v5851
        %5869 = vst.msk [vmem:[#allocation5 + $0x1d0] sm:$0xf] %vm5093, %v5853
        %v5870 = vld [vmem:[%s4968 + $0x1] sm:$0xff]
        %v5871 = vld [vmem:[%s4968 + $0x11] sm:$0xff]
        %v5872 = vld [vmem:[%s4968 + $0x21] sm:$0xff]
        %v5873 = vld [vmem:[%s4968 + $0x31] sm:$0xff]
        %v5874 = vld [vmem:[%s4968 + $0x41] sm:$0xff]
        %v5875 = vld [vmem:[%s4968 + $0x51] sm:$0xff]
        %v5876 = vld [vmem:[%s4968 + $0x61] sm:$0xff]
        %v5877 = vld [vmem:[%s4968 + $0x71] sm:$0xff]
        %v5878 = vpack.c.bf16 %v5870, %v5870
        %v5879 = vpack.c.bf16 %v5871, %v5871
        %v5880 = vpack.c.bf16 %v5872, %v5872
        %v5881 = vpack.c.bf16 %v5873, %v5873
        %v5882 = vpack.c.bf16 %v5874, %v5874
        %v5883 = vpack.c.bf16 %v5875, %v5875
        %v5884 = vpack.c.bf16 %v5876, %v5876
        %v5885 = vpack.c.bf16 %v5877, %v5877
        %5886 = vst.msk [vmem:[#allocation5 + $0x148] sm:$0xf] %vm5035, %v5878
        %5887 = vst.msk [vmem:[#allocation5 + $0x15c] sm:$0xf] %vm5035, %v5879
        %5888 = vst.msk [vmem:[#allocation5 + $0x170] sm:$0xf] %vm5035, %v5880
        %5889 = vst.msk [vmem:[#allocation5 + $0x184] sm:$0xf] %vm5035, %v5881
        %5890 = vst.msk [vmem:[#allocation5 + $0x198] sm:$0xf] %vm5035, %v5882
        %5891 = vst.msk [vmem:[#allocation5 + $0x1ac] sm:$0xf] %vm5035, %v5883
        %5892 = vst.msk [vmem:[#allocation5 + $0x1c0] sm:$0xf] %vm5035, %v5884
        %5893 = vst.msk [vmem:[#allocation5 + $0x1d4] sm:$0xf] %vm5035, %v5885
        %v5894 = vld [vmem:[%s5009 + $0x1] sm:$0xff]
        %v5895 = vld [vmem:[%s5009 + $0x11] sm:$0xff]
        %v5896 = vld [vmem:[%s5009 + $0x21] sm:$0xff]
        %v5897 = vld [vmem:[%s5009 + $0x31] sm:$0xff]
        %v5898 = vld [vmem:[%s5009 + $0x41] sm:$0xff]
        %v5899 = vld [vmem:[%s5009 + $0x51] sm:$0xff]
        %v5900 = vld [vmem:[%s5009 + $0x61] sm:$0xff]
        %v5901 = vld [vmem:[%s5009 + $0x71] sm:$0xff]
        %v5902 = vpack.c.bf16 %v5894, %v5894
        %v5903 = vpack.c.bf16 %v5895, %v5895
        %v5904 = vpack.c.bf16 %v5896, %v5896
        %v5905 = vpack.c.bf16 %v5897, %v5897
        %v5906 = vpack.c.bf16 %v5898, %v5898
        %v5907 = vpack.c.bf16 %v5899, %v5899
        %v5908 = vpack.c.bf16 %v5900, %v5900
        %v5909 = vpack.c.bf16 %v5901, %v5901
        %5918 = vrot.lane.b32.xlu0 %v5902, 64
        %v5919 = vpop.permute.xlu0 %5918
        %5920 = vrot.lane.b32.xlu0 %v5903, 64
        %v5921 = vpop.permute.xlu0 %5920
        %5922 = vrot.lane.b32.xlu0 %v5904, 64
        %v5923 = vpop.permute.xlu0 %5922
        %5924 = vrot.lane.b32.xlu0 %v5905, 64
        %v5925 = vpop.permute.xlu0 %5924
        %5926 = vrot.lane.b32.xlu0 %v5906, 64
        %v5927 = vpop.permute.xlu0 %5926
        %5928 = vrot.lane.b32.xlu0 %v5907, 64
        %v5929 = vpop.permute.xlu0 %5928
        %5930 = vrot.lane.b32.xlu0 %v5908, 64
        %v5931 = vpop.permute.xlu0 %5930
        %5932 = vrot.lane.b32.xlu0 %v5909, 64
        %v5933 = vpop.permute.xlu0 %5932
        %5942 = vst.msk [vmem:[#allocation5 + $0x148] sm:$0xf] %vm5093, %v5919
        %5943 = vst.msk [vmem:[#allocation5 + $0x15c] sm:$0xf] %vm5093, %v5921
        %5944 = vst.msk [vmem:[#allocation5 + $0x170] sm:$0xf] %vm5093, %v5923
        %5945 = vst.msk [vmem:[#allocation5 + $0x184] sm:$0xf] %vm5093, %v5925
        %5946 = vst.msk [vmem:[#allocation5 + $0x198] sm:$0xf] %vm5093, %v5927
        %5947 = vst.msk [vmem:[#allocation5 + $0x1ac] sm:$0xf] %vm5093, %v5929
        %5948 = vst.msk [vmem:[#allocation5 + $0x1c0] sm:$0xf] %vm5093, %v5931
        %5949 = vst.msk [vmem:[#allocation5 + $0x1d4] sm:$0xf] %vm5093, %v5933
        %s5950 = scalar_lea.vmem [#allocation3], 192
        %v5951 = vld [vmem:[%s5950] sm:$0xff]
        %v5952 = vld [vmem:[%s5950 + $0x10] sm:$0xff]
        %v5953 = vld [vmem:[%s5950 + $0x20] sm:$0xff]
        %v5954 = vld [vmem:[%s5950 + $0x30] sm:$0xff]
        %v5955 = vld [vmem:[%s5950 + $0x40] sm:$0xff]
        %v5956 = vld [vmem:[%s5950 + $0x50] sm:$0xff]
        %v5957 = vld [vmem:[%s5950 + $0x60] sm:$0xff]
        %v5958 = vld [vmem:[%s5950 + $0x70] sm:$0xff]
        %v5959 = vpack.c.bf16 %v5951, %v5951
        %v5960 = vpack.c.bf16 %v5952, %v5952
        %v5961 = vpack.c.bf16 %v5953, %v5953
        %v5962 = vpack.c.bf16 %v5954, %v5954
        %v5963 = vpack.c.bf16 %v5955, %v5955
        %v5964 = vpack.c.bf16 %v5956, %v5956
        %v5965 = vpack.c.bf16 %v5957, %v5957
        %v5966 = vpack.c.bf16 %v5958, %v5958
        %5967 = vst.msk [vmem:[#allocation5 + $0x14c] sm:$0xf] %vm5035, %v5959
        %5968 = vst.msk [vmem:[#allocation5 + $0x160] sm:$0xf] %vm5035, %v5960
        %5969 = vst.msk [vmem:[#allocation5 + $0x174] sm:$0xf] %vm5035, %v5961
        %5970 = vst.msk [vmem:[#allocation5 + $0x188] sm:$0xf] %vm5035, %v5962
        %5971 = vst.msk [vmem:[#allocation5 + $0x19c] sm:$0xf] %vm5035, %v5963
        %5972 = vst.msk [vmem:[#allocation5 + $0x1b0] sm:$0xf] %vm5035, %v5964
        %5973 = vst.msk [vmem:[#allocation5 + $0x1c4] sm:$0xf] %vm5035, %v5965
        %5974 = vst.msk [vmem:[#allocation5 + $0x1d8] sm:$0xf] %vm5035, %v5966
        %s5975 = scalar_lea.vmem [#allocation3], 32
        %v5976 = vld [vmem:[%s5975 + $0x1] sm:$0xff]
        %v5977 = vld [vmem:[%s5975 + $0x11] sm:$0xff]
        %v5978 = vld [vmem:[%s5975 + $0x21] sm:$0xff]
        %v5979 = vld [vmem:[%s5975 + $0x31] sm:$0xff]
        %v5980 = vld [vmem:[%s5975 + $0x41] sm:$0xff]
        %v5981 = vld [vmem:[%s5975 + $0x51] sm:$0xff]
        %v5982 = vld [vmem:[%s5975 + $0x61] sm:$0xff]
        %v5983 = vld [vmem:[%s5975 + $0x71] sm:$0xff]
        %v5984 = vpack.c.bf16 %v5976, %v5976
        %v5985 = vpack.c.bf16 %v5977, %v5977
        %v5986 = vpack.c.bf16 %v5978, %v5978
        %v5987 = vpack.c.bf16 %v5979, %v5979
        %v5988 = vpack.c.bf16 %v5980, %v5980
        %v5989 = vpack.c.bf16 %v5981, %v5981
        %v5990 = vpack.c.bf16 %v5982, %v5982
        %v5991 = vpack.c.bf16 %v5983, %v5983
        %6000 = vrot.lane.b32.xlu0 %v5984, 64
        %v6001 = vpop.permute.xlu0 %6000
        %6002 = vrot.lane.b32.xlu0 %v5985, 64
        %v6003 = vpop.permute.xlu0 %6002
        %6004 = vrot.lane.b32.xlu0 %v5986, 64
        %v6005 = vpop.permute.xlu0 %6004
        %6006 = vrot.lane.b32.xlu0 %v5987, 64
        %v6007 = vpop.permute.xlu0 %6006
        %6008 = vrot.lane.b32.xlu0 %v5988, 64
        %v6009 = vpop.permute.xlu0 %6008
        %6010 = vrot.lane.b32.xlu0 %v5989, 64
        %v6011 = vpop.permute.xlu0 %6010
        %6012 = vrot.lane.b32.xlu0 %v5990, 64
        %v6013 = vpop.permute.xlu0 %6012
        %6014 = vrot.lane.b32.xlu0 %v5991, 64
        %v6015 = vpop.permute.xlu0 %6014
        %6024 = vst.msk [vmem:[#allocation5 + $0x14c] sm:$0xf] %vm5093, %v6001
        %6025 = vst.msk [vmem:[#allocation5 + $0x160] sm:$0xf] %vm5093, %v6003
        %6026 = vst.msk [vmem:[#allocation5 + $0x174] sm:$0xf] %vm5093, %v6005
        %6027 = vst.msk [vmem:[#allocation5 + $0x188] sm:$0xf] %vm5093, %v6007
        %6028 = vst.msk [vmem:[#allocation5 + $0x19c] sm:$0xf] %vm5093, %v6009
        %6029 = vst.msk [vmem:[#allocation5 + $0x1b0] sm:$0xf] %vm5093, %v6011
        %6030 = vst.msk [vmem:[#allocation5 + $0x1c4] sm:$0xf] %vm5093, %v6013
        %6031 = vst.msk [vmem:[#allocation5 + $0x1d8] sm:$0xf] %vm5093, %v6015
        %v6032 = vld [vmem:[%s5950 + $0x1] sm:$0xff]
        %v6033 = vld [vmem:[%s5950 + $0x11] sm:$0xff]
        %v6034 = vld [vmem:[%s5950 + $0x21] sm:$0xff]
        %v6035 = vld [vmem:[%s5950 + $0x31] sm:$0xff]
        %v6036 = vld [vmem:[%s5950 + $0x41] sm:$0xff]
        %v6037 = vld [vmem:[%s5950 + $0x51] sm:$0xff]
        %v6038 = vld [vmem:[%s5950 + $0x61] sm:$0xff]
        %v6039 = vld [vmem:[%s5950 + $0x71] sm:$0xff]
        %v6040 = vpack.c.bf16 %v6032, %v6032
        %v6041 = vpack.c.bf16 %v6033, %v6033
        %v6042 = vpack.c.bf16 %v6034, %v6034
        %v6043 = vpack.c.bf16 %v6035, %v6035
        %v6044 = vpack.c.bf16 %v6036, %v6036
        %v6045 = vpack.c.bf16 %v6037, %v6037
        %v6046 = vpack.c.bf16 %v6038, %v6038
        %v6047 = vpack.c.bf16 %v6039, %v6039
        %6048 = vst.msk [vmem:[#allocation5 + $0x150] sm:$0xf] %vm5035, %v6040
        %6049 = vst.msk [vmem:[#allocation5 + $0x164] sm:$0xf] %vm5035, %v6041
        %6050 = vst.msk [vmem:[#allocation5 + $0x178] sm:$0xf] %vm5035, %v6042
        %6051 = vst.msk [vmem:[#allocation5 + $0x18c] sm:$0xf] %vm5035, %v6043
        %6052 = vst.msk [vmem:[#allocation5 + $0x1a0] sm:$0xf] %vm5035, %v6044
        %6053 = vst.msk [vmem:[#allocation5 + $0x1b4] sm:$0xf] %vm5035, %v6045
        %6054 = vst.msk [vmem:[#allocation5 + $0x1c8] sm:$0xf] %vm5035, %v6046
        %6055 = vst.msk [vmem:[#allocation5 + $0x1dc] sm:$0xf] %vm5035, %v6047
        %v6056 = vld [vmem:[%s4918 + $0x1] sm:$0xff]
        %v6057 = vld [vmem:[%s4918 + $0x11] sm:$0xff]
        %v6058 = vld [vmem:[%s4918 + $0x21] sm:$0xff]
        %v6059 = vld [vmem:[%s4918 + $0x31] sm:$0xff]
        %v6060 = vld [vmem:[%s4918 + $0x41] sm:$0xff]
        %v6061 = vld [vmem:[%s4918 + $0x51] sm:$0xff]
        %v6062 = vld [vmem:[%s4918 + $0x61] sm:$0xff]
        %v6063 = vld [vmem:[%s4918 + $0x71] sm:$0xff]
        %v6064 = vpack.c.bf16 %v6056, %v6056
        %v6065 = vpack.c.bf16 %v6057, %v6057
        %v6066 = vpack.c.bf16 %v6058, %v6058
        %v6067 = vpack.c.bf16 %v6059, %v6059
        %v6068 = vpack.c.bf16 %v6060, %v6060
        %v6069 = vpack.c.bf16 %v6061, %v6061
        %v6070 = vpack.c.bf16 %v6062, %v6062
        %v6071 = vpack.c.bf16 %v6063, %v6063
        %6072 = vst.msk [vmem:[#allocation5 + $0x1e0] sm:$0xf] %vm5035, %v6064
        %6073 = vst.msk [vmem:[#allocation5 + $0x1f4] sm:$0xf] %vm5035, %v6065
        %6074 = vst.msk [vmem:[#allocation5 + $0x208] sm:$0xf] %vm5035, %v6066
        %6075 = vst.msk [vmem:[#allocation5 + $0x21c] sm:$0xf] %vm5035, %v6067
        %6076 = vst.msk [vmem:[#allocation5 + $0x230] sm:$0xf] %vm5035, %v6068
        %6077 = vst.msk [vmem:[#allocation5 + $0x244] sm:$0xf] %vm5035, %v6069
        %6078 = vst.msk [vmem:[#allocation5 + $0x258] sm:$0xf] %vm5035, %v6070
        %6079 = vst.msk [vmem:[#allocation5 + $0x26c] sm:$0xf] %vm5035, %v6071
        %v6080 = vld [vmem:[%s4959 + $0x1] sm:$0xff]
        %v6081 = vld [vmem:[%s4959 + $0x11] sm:$0xff]
        %v6082 = vld [vmem:[%s4959 + $0x21] sm:$0xff]
        %v6083 = vld [vmem:[%s4959 + $0x31] sm:$0xff]
        %v6084 = vld [vmem:[%s4959 + $0x41] sm:$0xff]
        %v6085 = vld [vmem:[%s4959 + $0x51] sm:$0xff]
        %v6086 = vld [vmem:[%s4959 + $0x61] sm:$0xff]
        %v6087 = vld [vmem:[%s4959 + $0x71] sm:$0xff]
        %v6088 = vpack.c.bf16 %v6080, %v6080
        %v6089 = vpack.c.bf16 %v6081, %v6081
        %v6090 = vpack.c.bf16 %v6082, %v6082
        %v6091 = vpack.c.bf16 %v6083, %v6083
        %v6092 = vpack.c.bf16 %v6084, %v6084
        %v6093 = vpack.c.bf16 %v6085, %v6085
        %v6094 = vpack.c.bf16 %v6086, %v6086
        %v6095 = vpack.c.bf16 %v6087, %v6087
        %6104 = vrot.lane.b32.xlu0 %v6088, 64
        %v6105 = vpop.permute.xlu0 %6104
        %6106 = vrot.lane.b32.xlu0 %v6089, 64
        %v6107 = vpop.permute.xlu0 %6106
        %6108 = vrot.lane.b32.xlu0 %v6090, 64
        %v6109 = vpop.permute.xlu0 %6108
        %6110 = vrot.lane.b32.xlu0 %v6091, 64
        %v6111 = vpop.permute.xlu0 %6110
        %6112 = vrot.lane.b32.xlu0 %v6092, 64
        %v6113 = vpop.permute.xlu0 %6112
        %6114 = vrot.lane.b32.xlu0 %v6093, 64
        %v6115 = vpop.permute.xlu0 %6114
        %6116 = vrot.lane.b32.xlu0 %v6094, 64
        %v6117 = vpop.permute.xlu0 %6116
        %6118 = vrot.lane.b32.xlu0 %v6095, 64
        %v6119 = vpop.permute.xlu0 %6118
        %6128 = vst.msk [vmem:[#allocation5 + $0x1e0] sm:$0xf] %vm5093, %v6105
        %6129 = vst.msk [vmem:[#allocation5 + $0x1f4] sm:$0xf] %vm5093, %v6107
        %6130 = vst.msk [vmem:[#allocation5 + $0x208] sm:$0xf] %vm5093, %v6109
        %6131 = vst.msk [vmem:[#allocation5 + $0x21c] sm:$0xf] %vm5093, %v6111
        %6132 = vst.msk [vmem:[#allocation5 + $0x230] sm:$0xf] %vm5093, %v6113
        %6133 = vst.msk [vmem:[#allocation5 + $0x244] sm:$0xf] %vm5093, %v6115
        %6134 = vst.msk [vmem:[#allocation5 + $0x258] sm:$0xf] %vm5093, %v6117
        %6135 = vst.msk [vmem:[#allocation5 + $0x26c] sm:$0xf] %vm5093, %v6119
        %v6136 = vld [vmem:[%s4918 + $0x2] sm:$0xff]
        %v6137 = vld [vmem:[%s4918 + $0x12] sm:$0xff]
        %v6138 = vld [vmem:[%s4918 + $0x22] sm:$0xff]
        %v6139 = vld [vmem:[%s4918 + $0x32] sm:$0xff]
        %v6140 = vld [vmem:[%s4918 + $0x42] sm:$0xff]
        %v6141 = vld [vmem:[%s4918 + $0x52] sm:$0xff]
        %v6142 = vld [vmem:[%s4918 + $0x62] sm:$0xff]
        %v6143 = vld [vmem:[%s4918 + $0x72] sm:$0xff]
        %v6144 = vpack.c.bf16 %v6136, %v6136
        %v6145 = vpack.c.bf16 %v6137, %v6137
        %v6146 = vpack.c.bf16 %v6138, %v6138
        %v6147 = vpack.c.bf16 %v6139, %v6139
        %v6148 = vpack.c.bf16 %v6140, %v6140
        %v6149 = vpack.c.bf16 %v6141, %v6141
        %v6150 = vpack.c.bf16 %v6142, %v6142
        %v6151 = vpack.c.bf16 %v6143, %v6143
        %6152 = vst.msk [vmem:[#allocation5 + $0x1e4] sm:$0xf] %vm5035, %v6144
        %6153 = vst.msk [vmem:[#allocation5 + $0x1f8] sm:$0xf] %vm5035, %v6145
        %6154 = vst.msk [vmem:[#allocation5 + $0x20c] sm:$0xf] %vm5035, %v6146
        %6155 = vst.msk [vmem:[#allocation5 + $0x220] sm:$0xf] %vm5035, %v6147
        %6156 = vst.msk [vmem:[#allocation5 + $0x234] sm:$0xf] %vm5035, %v6148
        %6157 = vst.msk [vmem:[#allocation5 + $0x248] sm:$0xf] %vm5035, %v6149
        %6158 = vst.msk [vmem:[#allocation5 + $0x25c] sm:$0xf] %vm5035, %v6150
        %6159 = vst.msk [vmem:[#allocation5 + $0x270] sm:$0xf] %vm5035, %v6151
        %v6160 = vld [vmem:[%s4968 + $0x1] sm:$0xff]
        %v6161 = vld [vmem:[%s4968 + $0x11] sm:$0xff]
        %v6162 = vld [vmem:[%s4968 + $0x21] sm:$0xff]
        %v6163 = vld [vmem:[%s4968 + $0x31] sm:$0xff]
        %v6164 = vld [vmem:[%s4968 + $0x41] sm:$0xff]
        %v6165 = vld [vmem:[%s4968 + $0x51] sm:$0xff]
        %v6166 = vld [vmem:[%s4968 + $0x61] sm:$0xff]
        %v6167 = vld [vmem:[%s4968 + $0x71] sm:$0xff]
        %v6168 = vpack.c.bf16 %v6160, %v6160
        %v6169 = vpack.c.bf16 %v6161, %v6161
        %v6170 = vpack.c.bf16 %v6162, %v6162
        %v6171 = vpack.c.bf16 %v6163, %v6163
        %v6172 = vpack.c.bf16 %v6164, %v6164
        %v6173 = vpack.c.bf16 %v6165, %v6165
        %v6174 = vpack.c.bf16 %v6166, %v6166
        %v6175 = vpack.c.bf16 %v6167, %v6167
        %6184 = vrot.lane.b32.xlu0 %v6168, 64
        %v6185 = vpop.permute.xlu0 %6184
        %6186 = vrot.lane.b32.xlu0 %v6169, 64
        %v6187 = vpop.permute.xlu0 %6186
        %6188 = vrot.lane.b32.xlu0 %v6170, 64
        %v6189 = vpop.permute.xlu0 %6188
        %6190 = vrot.lane.b32.xlu0 %v6171, 64
        %v6191 = vpop.permute.xlu0 %6190
        %6192 = vrot.lane.b32.xlu0 %v6172, 64
        %v6193 = vpop.permute.xlu0 %6192
        %6194 = vrot.lane.b32.xlu0 %v6173, 64
        %v6195 = vpop.permute.xlu0 %6194
        %6196 = vrot.lane.b32.xlu0 %v6174, 64
        %v6197 = vpop.permute.xlu0 %6196
        %6198 = vrot.lane.b32.xlu0 %v6175, 64
        %v6199 = vpop.permute.xlu0 %6198
        %6208 = vst.msk [vmem:[#allocation5 + $0x1e4] sm:$0xf] %vm5093, %v6185
        %6209 = vst.msk [vmem:[#allocation5 + $0x1f8] sm:$0xf] %vm5093, %v6187
        %6210 = vst.msk [vmem:[#allocation5 + $0x20c] sm:$0xf] %vm5093, %v6189
        %6211 = vst.msk [vmem:[#allocation5 + $0x220] sm:$0xf] %vm5093, %v6191
        %6212 = vst.msk [vmem:[#allocation5 + $0x234] sm:$0xf] %vm5093, %v6193
        %6213 = vst.msk [vmem:[#allocation5 + $0x248] sm:$0xf] %vm5093, %v6195
        %6214 = vst.msk [vmem:[#allocation5 + $0x25c] sm:$0xf] %vm5093, %v6197
        %6215 = vst.msk [vmem:[#allocation5 + $0x270] sm:$0xf] %vm5093, %v6199
        %v6216 = vld [vmem:[%s5009 + $0x1] sm:$0xff]
        %v6217 = vld [vmem:[%s5009 + $0x11] sm:$0xff]
        %v6218 = vld [vmem:[%s5009 + $0x21] sm:$0xff]
        %v6219 = vld [vmem:[%s5009 + $0x31] sm:$0xff]
        %v6220 = vld [vmem:[%s5009 + $0x41] sm:$0xff]
        %v6221 = vld [vmem:[%s5009 + $0x51] sm:$0xff]
        %v6222 = vld [vmem:[%s5009 + $0x61] sm:$0xff]
        %v6223 = vld [vmem:[%s5009 + $0x71] sm:$0xff]
        %v6224 = vpack.c.bf16 %v6216, %v6216
        %v6225 = vpack.c.bf16 %v6217, %v6217
        %v6226 = vpack.c.bf16 %v6218, %v6218
        %v6227 = vpack.c.bf16 %v6219, %v6219
        %v6228 = vpack.c.bf16 %v6220, %v6220
        %v6229 = vpack.c.bf16 %v6221, %v6221
        %v6230 = vpack.c.bf16 %v6222, %v6222
        %v6231 = vpack.c.bf16 %v6223, %v6223
        %6232 = vst.msk [vmem:[#allocation5 + $0x1e8] sm:$0xf] %vm5035, %v6224
        %6233 = vst.msk [vmem:[#allocation5 + $0x1fc] sm:$0xf] %vm5035, %v6225
        %6234 = vst.msk [vmem:[#allocation5 + $0x210] sm:$0xf] %vm5035, %v6226
        %6235 = vst.msk [vmem:[#allocation5 + $0x224] sm:$0xf] %vm5035, %v6227
        %6236 = vst.msk [vmem:[#allocation5 + $0x238] sm:$0xf] %vm5035, %v6228
        %6237 = vst.msk [vmem:[#allocation5 + $0x24c] sm:$0xf] %vm5035, %v6229
        %6238 = vst.msk [vmem:[#allocation5 + $0x260] sm:$0xf] %vm5035, %v6230
        %6239 = vst.msk [vmem:[#allocation5 + $0x274] sm:$0xf] %vm5035, %v6231
        %v6240 = vld [vmem:[%s4968 + $0x2] sm:$0xff]
        %v6241 = vld [vmem:[%s4968 + $0x12] sm:$0xff]
        %v6242 = vld [vmem:[%s4968 + $0x22] sm:$0xff]
        %v6243 = vld [vmem:[%s4968 + $0x32] sm:$0xff]
        %v6244 = vld [vmem:[%s4968 + $0x42] sm:$0xff]
        %v6245 = vld [vmem:[%s4968 + $0x52] sm:$0xff]
        %v6246 = vld [vmem:[%s4968 + $0x62] sm:$0xff]
        %v6247 = vld [vmem:[%s4968 + $0x72] sm:$0xff]
        %v6248 = vpack.c.bf16 %v6240, %v6240
        %v6249 = vpack.c.bf16 %v6241, %v6241
        %v6250 = vpack.c.bf16 %v6242, %v6242
        %v6251 = vpack.c.bf16 %v6243, %v6243
        %v6252 = vpack.c.bf16 %v6244, %v6244
        %v6253 = vpack.c.bf16 %v6245, %v6245
        %v6254 = vpack.c.bf16 %v6246, %v6246
        %v6255 = vpack.c.bf16 %v6247, %v6247
        %6264 = vrot.lane.b32.xlu0 %v6248, 64
        %v6265 = vpop.permute.xlu0 %6264
        %6266 = vrot.lane.b32.xlu0 %v6249, 64
        %v6267 = vpop.permute.xlu0 %6266
        %6268 = vrot.lane.b32.xlu0 %v6250, 64
        %v6269 = vpop.permute.xlu0 %6268
        %6270 = vrot.lane.b32.xlu0 %v6251, 64
        %v6271 = vpop.permute.xlu0 %6270
        %6272 = vrot.lane.b32.xlu0 %v6252, 64
        %v6273 = vpop.permute.xlu0 %6272
        %6274 = vrot.lane.b32.xlu0 %v6253, 64
        %v6275 = vpop.permute.xlu0 %6274
        %6276 = vrot.lane.b32.xlu0 %v6254, 64
        %v6277 = vpop.permute.xlu0 %6276
        %6278 = vrot.lane.b32.xlu0 %v6255, 64
        %v6279 = vpop.permute.xlu0 %6278
        %6288 = vst.msk [vmem:[#allocation5 + $0x1e8] sm:$0xf] %vm5093, %v6265
        %6289 = vst.msk [vmem:[#allocation5 + $0x1fc] sm:$0xf] %vm5093, %v6267
        %6290 = vst.msk [vmem:[#allocation5 + $0x210] sm:$0xf] %vm5093, %v6269
        %6291 = vst.msk [vmem:[#allocation5 + $0x224] sm:$0xf] %vm5093, %v6271
        %6292 = vst.msk [vmem:[#allocation5 + $0x238] sm:$0xf] %vm5093, %v6273
        %6293 = vst.msk [vmem:[#allocation5 + $0x24c] sm:$0xf] %vm5093, %v6275
        %6294 = vst.msk [vmem:[#allocation5 + $0x260] sm:$0xf] %vm5093, %v6277
        %6295 = vst.msk [vmem:[#allocation5 + $0x274] sm:$0xf] %vm5093, %v6279
        %v6296 = vld [vmem:[%s5975 + $0x1] sm:$0xff]
        %v6297 = vld [vmem:[%s5975 + $0x11] sm:$0xff]
        %v6298 = vld [vmem:[%s5975 + $0x21] sm:$0xff]
        %v6299 = vld [vmem:[%s5975 + $0x31] sm:$0xff]
        %v6300 = vld [vmem:[%s5975 + $0x41] sm:$0xff]
        %v6301 = vld [vmem:[%s5975 + $0x51] sm:$0xff]
        %v6302 = vld [vmem:[%s5975 + $0x61] sm:$0xff]
        %v6303 = vld [vmem:[%s5975 + $0x71] sm:$0xff]
        %v6304 = vpack.c.bf16 %v6296, %v6296
        %v6305 = vpack.c.bf16 %v6297, %v6297
        %v6306 = vpack.c.bf16 %v6298, %v6298
        %v6307 = vpack.c.bf16 %v6299, %v6299
        %v6308 = vpack.c.bf16 %v6300, %v6300
        %v6309 = vpack.c.bf16 %v6301, %v6301
        %v6310 = vpack.c.bf16 %v6302, %v6302
        %v6311 = vpack.c.bf16 %v6303, %v6303
        %6312 = vst.msk [vmem:[#allocation5 + $0x1ec] sm:$0xf] %vm5035, %v6304
        %6313 = vst.msk [vmem:[#allocation5 + $0x200] sm:$0xf] %vm5035, %v6305
        %6314 = vst.msk [vmem:[#allocation5 + $0x214] sm:$0xf] %vm5035, %v6306
        %6315 = vst.msk [vmem:[#allocation5 + $0x228] sm:$0xf] %vm5035, %v6307
        %6316 = vst.msk [vmem:[#allocation5 + $0x23c] sm:$0xf] %vm5035, %v6308
        %6317 = vst.msk [vmem:[#allocation5 + $0x250] sm:$0xf] %vm5035, %v6309
        %6318 = vst.msk [vmem:[#allocation5 + $0x264] sm:$0xf] %vm5035, %v6310
        %6319 = vst.msk [vmem:[#allocation5 + $0x278] sm:$0xf] %vm5035, %v6311
        %v6320 = vld [vmem:[%s5950 + $0x1] sm:$0xff]
        %v6321 = vld [vmem:[%s5950 + $0x11] sm:$0xff]
        %v6322 = vld [vmem:[%s5950 + $0x21] sm:$0xff]
        %v6323 = vld [vmem:[%s5950 + $0x31] sm:$0xff]
        %v6324 = vld [vmem:[%s5950 + $0x41] sm:$0xff]
        %v6325 = vld [vmem:[%s5950 + $0x51] sm:$0xff]
        %v6326 = vld [vmem:[%s5950 + $0x61] sm:$0xff]
        %v6327 = vld [vmem:[%s5950 + $0x71] sm:$0xff]
        %v6328 = vpack.c.bf16 %v6320, %v6320
        %v6329 = vpack.c.bf16 %v6321, %v6321
        %v6330 = vpack.c.bf16 %v6322, %v6322
        %v6331 = vpack.c.bf16 %v6323, %v6323
        %v6332 = vpack.c.bf16 %v6324, %v6324
        %v6333 = vpack.c.bf16 %v6325, %v6325
        %v6334 = vpack.c.bf16 %v6326, %v6326
        %v6335 = vpack.c.bf16 %v6327, %v6327
        %6344 = vrot.lane.b32.xlu0 %v6328, 64
        %v6345 = vpop.permute.xlu0 %6344
        %6346 = vrot.lane.b32.xlu0 %v6329, 64
        %v6347 = vpop.permute.xlu0 %6346
        %6348 = vrot.lane.b32.xlu0 %v6330, 64
        %v6349 = vpop.permute.xlu0 %6348
        %6350 = vrot.lane.b32.xlu0 %v6331, 64
        %v6351 = vpop.permute.xlu0 %6350
        %6352 = vrot.lane.b32.xlu0 %v6332, 64
        %v6353 = vpop.permute.xlu0 %6352
        %6354 = vrot.lane.b32.xlu0 %v6333, 64
        %v6355 = vpop.permute.xlu0 %6354
        %6356 = vrot.lane.b32.xlu0 %v6334, 64
        %v6357 = vpop.permute.xlu0 %6356
        %6358 = vrot.lane.b32.xlu0 %v6335, 64
        %v6359 = vpop.permute.xlu0 %6358
        %6368 = vst.msk [vmem:[#allocation5 + $0x1ec] sm:$0xf] %vm5093, %v6345
        %6369 = vst.msk [vmem:[#allocation5 + $0x200] sm:$0xf] %vm5093, %v6347
        %6370 = vst.msk [vmem:[#allocation5 + $0x214] sm:$0xf] %vm5093, %v6349
        %6371 = vst.msk [vmem:[#allocation5 + $0x228] sm:$0xf] %vm5093, %v6351
        %6372 = vst.msk [vmem:[#allocation5 + $0x23c] sm:$0xf] %vm5093, %v6353
        %6373 = vst.msk [vmem:[#allocation5 + $0x250] sm:$0xf] %vm5093, %v6355
        %6374 = vst.msk [vmem:[#allocation5 + $0x264] sm:$0xf] %vm5093, %v6357
        %6375 = vst.msk [vmem:[#allocation5 + $0x278] sm:$0xf] %vm5093, %v6359
        %v6376 = vld [vmem:[%s5975 + $0x2] sm:$0xff]
        %v6377 = vld [vmem:[%s5975 + $0x12] sm:$0xff]
        %v6378 = vld [vmem:[%s5975 + $0x22] sm:$0xff]
        %v6379 = vld [vmem:[%s5975 + $0x32] sm:$0xff]
        %v6380 = vld [vmem:[%s5975 + $0x42] sm:$0xff]
        %v6381 = vld [vmem:[%s5975 + $0x52] sm:$0xff]
        %v6382 = vld [vmem:[%s5975 + $0x62] sm:$0xff]
        %v6383 = vld [vmem:[%s5975 + $0x72] sm:$0xff]
        %v6384 = vpack.c.bf16 %v6376, %v6376
        %v6385 = vpack.c.bf16 %v6377, %v6377
        %v6386 = vpack.c.bf16 %v6378, %v6378
        %v6387 = vpack.c.bf16 %v6379, %v6379
        %v6388 = vpack.c.bf16 %v6380, %v6380
        %v6389 = vpack.c.bf16 %v6381, %v6381
        %v6390 = vpack.c.bf16 %v6382, %v6382
        %v6391 = vpack.c.bf16 %v6383, %v6383
        %6392 = vst.msk [vmem:[#allocation5 + $0x1f0] sm:$0xf] %vm5035, %v6384
        %6393 = vst.msk [vmem:[#allocation5 + $0x204] sm:$0xf] %vm5035, %v6385
        %6394 = vst.msk [vmem:[#allocation5 + $0x218] sm:$0xf] %vm5035, %v6386
        %6395 = vst.msk [vmem:[#allocation5 + $0x22c] sm:$0xf] %vm5035, %v6387
        %6396 = vst.msk [vmem:[#allocation5 + $0x240] sm:$0xf] %vm5035, %v6388
        %6397 = vst.msk [vmem:[#allocation5 + $0x254] sm:$0xf] %vm5035, %v6389
        %6398 = vst.msk [vmem:[#allocation5 + $0x268] sm:$0xf] %vm5035, %v6390
        %6399 = vst.msk [vmem:[#allocation5 + $0x27c] sm:$0xf] %vm5035, %v6391
        %v6400 = vld [vmem:[#allocation5] sm:$0xff]
        %v6401 = vld [vmem:[#allocation5 + $0x8] sm:$0xff]
        %v6402 = vld [vmem:[#allocation5 + $0x10] sm:$0xf]
        %v6403 = vld [vmem:[#allocation5 + $0x14] sm:$0xff]
        %v6404 = vld [vmem:[#allocation5 + $0x1c] sm:$0xff]
        %v6405 = vld [vmem:[#allocation5 + $0x24] sm:$0xf]
        %v6406 = vld [vmem:[#allocation5 + $0x28] sm:$0xff]
        %v6407 = vld [vmem:[#allocation5 + $0x30] sm:$0xff]
        %v6408 = vld [vmem:[#allocation5 + $0x38] sm:$0xf]
        %v6409 = vld [vmem:[#allocation5 + $0x3c] sm:$0xff]
        %v6410 = vld [vmem:[#allocation5 + $0x44] sm:$0xff]
        %v6411 = vld [vmem:[#allocation5 + $0x4c] sm:$0xf]
        %v6412 = vld [vmem:[#allocation5 + $0x50] sm:$0xff]
        %v6413 = vld [vmem:[#allocation5 + $0x58] sm:$0xff]
        %v6414 = vld [vmem:[#allocation5 + $0x60] sm:$0xf]
        %v6415 = vld [vmem:[#allocation5 + $0x64] sm:$0xff]
        %v6416 = vld [vmem:[#allocation5 + $0x6c] sm:$0xff]
        %v6417 = vld [vmem:[#allocation5 + $0x74] sm:$0xf]
        %v6418 = vld [vmem:[#allocation5 + $0x78] sm:$0xff]
        %v6419 = vld [vmem:[#allocation5 + $0x80] sm:$0xff]
        %v6420 = vld [vmem:[#allocation5 + $0x88] sm:$0xf]
        %v6421 = vld [vmem:[#allocation5 + $0x8c] sm:$0xff]
        %v6422 = vld [vmem:[#allocation5 + $0x94] sm:$0xff]
        %v6423 = vld [vmem:[#allocation5 + $0x9c] sm:$0xf]
        %v6424 = vld [vmem:[#allocation5 + $0xa0] sm:$0xff]
        %v6425 = vld [vmem:[#allocation5 + $0xa8] sm:$0xff]
        %v6426 = vld [vmem:[#allocation5 + $0xb0] sm:$0xf]
        %v6427 = vld [vmem:[#allocation5 + $0xb4] sm:$0xff]
        %v6428 = vld [vmem:[#allocation5 + $0xbc] sm:$0xff]
        %v6429 = vld [vmem:[#allocation5 + $0xc4] sm:$0xf]
        %v6430 = vld [vmem:[#allocation5 + $0xc8] sm:$0xff]
        %v6431 = vld [vmem:[#allocation5 + $0xd0] sm:$0xff]
        %v6432 = vld [vmem:[#allocation5 + $0xd8] sm:$0xf]
        %v6433 = vld [vmem:[#allocation5 + $0xdc] sm:$0xff]
        %v6434 = vld [vmem:[#allocation5 + $0xe4] sm:$0xff]
        %v6435 = vld [vmem:[#allocation5 + $0xec] sm:$0xf]
        %v6436 = vld [vmem:[#allocation5 + $0xf0] sm:$0xff]
        %v6437 = vld [vmem:[#allocation5 + $0xf8] sm:$0xff]
        %v6438 = vld [vmem:[#allocation5 + $0x100] sm:$0xf]
        %v6439 = vld [vmem:[#allocation5 + $0x104] sm:$0xff]
        %v6440 = vld [vmem:[#allocation5 + $0x10c] sm:$0xff]
        %v6441 = vld [vmem:[#allocation5 + $0x114] sm:$0xf]
        %v6442 = vld [vmem:[#allocation5 + $0x118] sm:$0xff]
        %v6443 = vld [vmem:[#allocation5 + $0x120] sm:$0xff]
        %v6444 = vld [vmem:[#allocation5 + $0x128] sm:$0xf]
        %v6445 = vld [vmem:[#allocation5 + $0x12c] sm:$0xff]
        %v6446 = vld [vmem:[#allocation5 + $0x134] sm:$0xff]
        %v6447 = vld [vmem:[#allocation5 + $0x13c] sm:$0xf]
        %v6448 = vld [vmem:[#allocation5 + $0x140] sm:$0xff]
        %v6449 = vld [vmem:[#allocation5 + $0x148] sm:$0xff]
        %v6450 = vld [vmem:[#allocation5 + $0x150] sm:$0xf]
        %v6451 = vld [vmem:[#allocation5 + $0x154] sm:$0xff]
        %v6452 = vld [vmem:[#allocation5 + $0x15c] sm:$0xff]
        %v6453 = vld [vmem:[#allocation5 + $0x164] sm:$0xf]
        %v6454 = vld [vmem:[#allocation5 + $0x168] sm:$0xff]
        %v6455 = vld [vmem:[#allocation5 + $0x170] sm:$0xff]
        %v6456 = vld [vmem:[#allocation5 + $0x178] sm:$0xf]
        %v6457 = vld [vmem:[#allocation5 + $0x17c] sm:$0xff]
        %v6458 = vld [vmem:[#allocation5 + $0x184] sm:$0xff]
        %v6459 = vld [vmem:[#allocation5 + $0x18c] sm:$0xf]
        %v6460 = vld [vmem:[#allocation5 + $0x190] sm:$0xff]
        %v6461 = vld [vmem:[#allocation5 + $0x198] sm:$0xff]
        %v6462 = vld [vmem:[#allocation5 + $0x1a0] sm:$0xf]
        %v6463 = vld [vmem:[#allocation5 + $0x1a4] sm:$0xff]
        %v6464 = vld [vmem:[#allocation5 + $0x1ac] sm:$0xff]
        %v6465 = vld [vmem:[#allocation5 + $0x1b4] sm:$0xf]
        %v6466 = vld [vmem:[#allocation5 + $0x1b8] sm:$0xff]
        %v6467 = vld [vmem:[#allocation5 + $0x1c0] sm:$0xff]
        %v6468 = vld [vmem:[#allocation5 + $0x1c8] sm:$0xf]
        %v6469 = vld [vmem:[#allocation5 + $0x1cc] sm:$0xff]
        %v6470 = vld [vmem:[#allocation5 + $0x1d4] sm:$0xff]
        %v6471 = vld [vmem:[#allocation5 + $0x1dc] sm:$0xf]
        %v6472 = vld [vmem:[#allocation5 + $0x1e0] sm:$0xff]
        %v6473 = vld [vmem:[#allocation5 + $0x1e8] sm:$0xff]
        %v6474 = vld [vmem:[#allocation5 + $0x1f0] sm:$0xf]
        %v6475 = vld [vmem:[#allocation5 + $0x1f4] sm:$0xff]
        %v6476 = vld [vmem:[#allocation5 + $0x1fc] sm:$0xff]
        %v6477 = vld [vmem:[#allocation5 + $0x204] sm:$0xf]
        %v6478 = vld [vmem:[#allocation5 + $0x208] sm:$0xff]
        %v6479 = vld [vmem:[#allocation5 + $0x210] sm:$0xff]
        %v6480 = vld [vmem:[#allocation5 + $0x218] sm:$0xf]
        %v6481 = vld [vmem:[#allocation5 + $0x21c] sm:$0xff]
        %v6482 = vld [vmem:[#allocation5 + $0x224] sm:$0xff]
        %v6483 = vld [vmem:[#allocation5 + $0x22c] sm:$0xf]
        %v6484 = vld [vmem:[#allocation5 + $0x230] sm:$0xff]
        %v6485 = vld [vmem:[#allocation5 + $0x238] sm:$0xff]
        %v6486 = vld [vmem:[#allocation5 + $0x240] sm:$0xf]
        %v6487 = vld [vmem:[#allocation5 + $0x244] sm:$0xff]
        %v6488 = vld [vmem:[#allocation5 + $0x24c] sm:$0xff]
        %v6489 = vld [vmem:[#allocation5 + $0x254] sm:$0xf]
        %v6490 = vld [vmem:[#allocation5 + $0x258] sm:$0xff]
        %v6491 = vld [vmem:[#allocation5 + $0x260] sm:$0xff]
        %v6492 = vld [vmem:[#allocation5 + $0x268] sm:$0xf]
        %v6493 = vld [vmem:[#allocation5 + $0x26c] sm:$0xff]
        %v6494 = vld [vmem:[#allocation5 + $0x274] sm:$0xff]
        %v6495 = vld [vmem:[#allocation5 + $0x27c] sm:$0xf]
        %v6496 = vld [vmem:[%s6] sm:$0xf]
        %v6497 = vld [vmem:[%s6 + $0x4] sm:$0xf]
        %v6498 = vld [vmem:[%s6 + $0x8] sm:$0xf]
        %v6499 = vld [vmem:[%s6 + $0xc] sm:$0xf]
        %v6500 = vld [vmem:[%s6 + $0x10] sm:$0xf]
        %v6501 = vld [vmem:[%s6 + $0x14] sm:$0xf]
        %v6502 = vld [vmem:[%s6 + $0x18] sm:$0xf]
        %v6503 = vld [vmem:[%s6 + $0x1c] sm:$0xf]
        %v6504 = vld [vmem:[%s6 + $0x20] sm:$0xf]
        %v6505 = vld [vmem:[%s6 + $0x24] sm:$0xf]
        %v6506 = vld [vmem:[%s6 + $0x28] sm:$0xf]
        %v6507 = vld [vmem:[%s6 + $0x2c] sm:$0xf]
        %v6508 = vld [vmem:[%s6 + $0x30] sm:$0xf]
        %v6509 = vld [vmem:[%s6 + $0x34] sm:$0xf]
        %v6510 = vld [vmem:[%s6 + $0x38] sm:$0xf]
        %v6511 = vld [vmem:[%s6 + $0x3c] sm:$0xf]
        %v6512 = vld [vmem:[%s6 + $0x40] sm:$0xf]
        %v6513 = vld [vmem:[%s6 + $0x44] sm:$0xf]
        %v6514 = vld [vmem:[%s6 + $0x48] sm:$0xf]
        %v6515 = vld [vmem:[%s6 + $0x4c] sm:$0xf]
        %v6516 = vld [vmem:[%s6 + $0x50] sm:$0xf]
        %v6517 = vld [vmem:[%s6 + $0x54] sm:$0xf]
        %v6518 = vld [vmem:[%s6 + $0x58] sm:$0xf]
        %v6519 = vld [vmem:[%s6 + $0x5c] sm:$0xf]
        %v6520 = vld [vmem:[%s6 + $0x60] sm:$0xf]
        %v6521 = vld [vmem:[%s6 + $0x64] sm:$0xf]
        %v6522 = vld [vmem:[%s6 + $0x68] sm:$0xf]
        %v6523 = vld [vmem:[%s6 + $0x6c] sm:$0xf]
        %v6524 = vld [vmem:[%s6 + $0x70] sm:$0xf]
        %v6525 = vld [vmem:[%s6 + $0x74] sm:$0xf]
        %v6526 = vld [vmem:[%s6 + $0x78] sm:$0xf]
        %v6527 = vld [vmem:[%s6 + $0x7c] sm:$0xf]
        %v6528 = vld [vmem:[%s6 + $0x80] sm:$0xf]
        %v6529 = vld [vmem:[%s6 + $0x84] sm:$0xf]
        %v6530 = vld [vmem:[%s6 + $0x88] sm:$0xf]
        %v6531 = vld [vmem:[%s6 + $0x8c] sm:$0xf]
        %v6532 = vld [vmem:[%s6 + $0x90] sm:$0xf]
        %v6533 = vld [vmem:[%s6 + $0x94] sm:$0xf]
        %v6534 = vld [vmem:[%s6 + $0x98] sm:$0xf]
        %v6535 = vld [vmem:[%s6 + $0x9c] sm:$0xf]
        %v6536 = vld [vmem:[%s6 + $0xa0] sm:$0xf]
        %v6537 = vld [vmem:[%s6 + $0xa4] sm:$0xf]
        %v6538 = vld [vmem:[%s6 + $0xa8] sm:$0xf]
        %v6539 = vld [vmem:[%s6 + $0xac] sm:$0xf]
        %v6540 = vld [vmem:[%s6 + $0xb0] sm:$0xf]
        %v6541 = vld [vmem:[%s6 + $0xb4] sm:$0xf]
        %v6542 = vld [vmem:[%s6 + $0xb8] sm:$0xf]
        %v6543 = vld [vmem:[%s6 + $0xbc] sm:$0xf]
        %v6544 = vld [vmem:[%s6 + $0xc0] sm:$0xf]
        %v6545 = vld [vmem:[%s6 + $0xc4] sm:$0xf]
        %v6546 = vld [vmem:[%s6 + $0xc8] sm:$0xf]
        %v6547 = vld [vmem:[%s6 + $0xcc] sm:$0xf]
        %v6548 = vld [vmem:[%s6 + $0xd0] sm:$0xf]
        %v6549 = vld [vmem:[%s6 + $0xd4] sm:$0xf]
        %v6550 = vld [vmem:[%s6 + $0xd8] sm:$0xf]
        %v6551 = vld [vmem:[%s6 + $0xdc] sm:$0xf]
        %v6552 = vld [vmem:[%s6 + $0xe0] sm:$0xf]
        %v6553 = vld [vmem:[%s6 + $0xe4] sm:$0xf]
        %v6554 = vld [vmem:[%s6 + $0xe8] sm:$0xf]
        %v6555 = vld [vmem:[%s6 + $0xec] sm:$0xf]
        %v6556 = vld [vmem:[%s6 + $0xf0] sm:$0xf]
        %v6557 = vld [vmem:[%s6 + $0xf4] sm:$0xf]
        %v6558 = vld [vmem:[%s6 + $0xf8] sm:$0xf]
        %v6559 = vld [vmem:[%s6 + $0xfc] sm:$0xf]
        %v6560 = vld [vmem:[%s6 + $0x100] sm:$0xf]
        %v6561 = vld [vmem:[%s6 + $0x104] sm:$0xf]
        %v6562 = vld [vmem:[%s6 + $0x108] sm:$0xf]
        %v6563 = vld [vmem:[%s6 + $0x10c] sm:$0xf]
        %v6564 = vld [vmem:[%s6 + $0x110] sm:$0xf]
        %v6565 = vld [vmem:[%s6 + $0x114] sm:$0xf]
        %v6566 = vld [vmem:[%s6 + $0x118] sm:$0xf]
        %v6567 = vld [vmem:[%s6 + $0x11c] sm:$0xf]
        %v6664 = vunpack.c.l.b16 %v6400
        %v6665 = vunpack.c.h.b16 %v6400
        %v6666 = vunpack.c.l.b16 %v6401
        %v6667 = vunpack.c.h.b16 %v6401
        %v6668 = vunpack.c.l.b16 %v6402
        %v6669 = vunpack.c.l.b16 %v6403
        %v6670 = vunpack.c.h.b16 %v6403
        %v6671 = vunpack.c.l.b16 %v6404
        %v6672 = vunpack.c.h.b16 %v6404
        %v6673 = vunpack.c.l.b16 %v6405
        %v6674 = vunpack.c.l.b16 %v6406
        %v6675 = vunpack.c.h.b16 %v6406
        %v6676 = vunpack.c.l.b16 %v6407
        %v6677 = vunpack.c.h.b16 %v6407
        %v6678 = vunpack.c.l.b16 %v6408
        %v6679 = vunpack.c.l.b16 %v6409
        %v6680 = vunpack.c.h.b16 %v6409
        %v6681 = vunpack.c.l.b16 %v6410
        %v6682 = vunpack.c.h.b16 %v6410
        %v6683 = vunpack.c.l.b16 %v6411
        %v6684 = vunpack.c.l.b16 %v6412
        %v6685 = vunpack.c.h.b16 %v6412
        %v6686 = vunpack.c.l.b16 %v6413
        %v6687 = vunpack.c.h.b16 %v6413
        %v6688 = vunpack.c.l.b16 %v6414
        %v6689 = vunpack.c.l.b16 %v6415
        %v6690 = vunpack.c.h.b16 %v6415
        %v6691 = vunpack.c.l.b16 %v6416
        %v6692 = vunpack.c.h.b16 %v6416
        %v6693 = vunpack.c.l.b16 %v6417
        %v6694 = vunpack.c.l.b16 %v6418
        %v6695 = vunpack.c.h.b16 %v6418
        %v6696 = vunpack.c.l.b16 %v6419
        %v6697 = vunpack.c.h.b16 %v6419
        %v6698 = vunpack.c.l.b16 %v6420
        %v6699 = vunpack.c.l.b16 %v6421
        %v6700 = vunpack.c.h.b16 %v6421
        %v6701 = vunpack.c.l.b16 %v6422
        %v6702 = vunpack.c.h.b16 %v6422
        %v6703 = vunpack.c.l.b16 %v6423
        %v6704 = vunpack.c.l.b16 %v6424
        %v6705 = vunpack.c.h.b16 %v6424
        %v6706 = vunpack.c.l.b16 %v6425
        %v6707 = vunpack.c.h.b16 %v6425
        %v6708 = vunpack.c.l.b16 %v6426
        %v6709 = vunpack.c.l.b16 %v6427
        %v6710 = vunpack.c.h.b16 %v6427
        %v6711 = vunpack.c.l.b16 %v6428
        %v6712 = vunpack.c.h.b16 %v6428
        %v6713 = vunpack.c.l.b16 %v6429
        %v6714 = vunpack.c.l.b16 %v6430
        %v6715 = vunpack.c.h.b16 %v6430
        %v6716 = vunpack.c.l.b16 %v6431
        %v6717 = vunpack.c.h.b16 %v6431
        %v6718 = vunpack.c.l.b16 %v6432
        %v6719 = vunpack.c.l.b16 %v6433
        %v6720 = vunpack.c.h.b16 %v6433
        %v6721 = vunpack.c.l.b16 %v6434
        %v6722 = vunpack.c.h.b16 %v6434
        %v6723 = vunpack.c.l.b16 %v6435
        %v6724 = vunpack.c.l.b16 %v6436
        %v6725 = vunpack.c.h.b16 %v6436
        %v6726 = vunpack.c.l.b16 %v6437
        %v6727 = vunpack.c.h.b16 %v6437
        %v6728 = vunpack.c.l.b16 %v6438
        %v6729 = vunpack.c.l.b16 %v6439
        %v6730 = vunpack.c.h.b16 %v6439
        %v6731 = vunpack.c.l.b16 %v6440
        %v6732 = vunpack.c.h.b16 %v6440
        %v6733 = vunpack.c.l.b16 %v6441
        %v6734 = vunpack.c.l.b16 %v6442
        %v6735 = vunpack.c.h.b16 %v6442
        %v6736 = vunpack.c.l.b16 %v6443
        %v6737 = vunpack.c.h.b16 %v6443
        %v6738 = vunpack.c.l.b16 %v6444
        %v6739 = vunpack.c.l.b16 %v6445
        %v6740 = vunpack.c.h.b16 %v6445
        %v6741 = vunpack.c.l.b16 %v6446
        %v6742 = vunpack.c.h.b16 %v6446
        %v6743 = vunpack.c.l.b16 %v6447
        %v6744 = vunpack.c.l.b16 %v6448
        %v6745 = vunpack.c.h.b16 %v6448
        %v6746 = vunpack.c.l.b16 %v6449
        %v6747 = vunpack.c.h.b16 %v6449
        %v6748 = vunpack.c.l.b16 %v6450
        %v6749 = vunpack.c.l.b16 %v6451
        %v6750 = vunpack.c.h.b16 %v6451
        %v6751 = vunpack.c.l.b16 %v6452
        %v6752 = vunpack.c.h.b16 %v6452
        %v6753 = vunpack.c.l.b16 %v6453
        %v6754 = vunpack.c.l.b16 %v6454
        %v6755 = vunpack.c.h.b16 %v6454
        %v6756 = vunpack.c.l.b16 %v6455
        %v6757 = vunpack.c.h.b16 %v6455
        %v6758 = vunpack.c.l.b16 %v6456
        %v6759 = vunpack.c.l.b16 %v6457
        %v6760 = vunpack.c.h.b16 %v6457
        %v6761 = vunpack.c.l.b16 %v6458
        %v6762 = vunpack.c.h.b16 %v6458
        %v6763 = vunpack.c.l.b16 %v6459
        %v6764 = vunpack.c.l.b16 %v6460
        %v6765 = vunpack.c.h.b16 %v6460
        %v6766 = vunpack.c.l.b16 %v6461
        %v6767 = vunpack.c.h.b16 %v6461
        %v6768 = vunpack.c.l.b16 %v6462
        %v6769 = vunpack.c.l.b16 %v6463
        %v6770 = vunpack.c.h.b16 %v6463
        %v6771 = vunpack.c.l.b16 %v6464
        %v6772 = vunpack.c.h.b16 %v6464
        %v6773 = vunpack.c.l.b16 %v6465
        %v6774 = vunpack.c.l.b16 %v6466
        %v6775 = vunpack.c.h.b16 %v6466
        %v6776 = vunpack.c.l.b16 %v6467
        %v6777 = vunpack.c.h.b16 %v6467
        %v6778 = vunpack.c.l.b16 %v6468
        %v6779 = vunpack.c.l.b16 %v6469
        %v6780 = vunpack.c.h.b16 %v6469
        %v6781 = vunpack.c.l.b16 %v6470
        %v6782 = vunpack.c.h.b16 %v6470
        %v6783 = vunpack.c.l.b16 %v6471
        %v6784 = vunpack.c.l.b16 %v6472
        %v6785 = vunpack.c.h.b16 %v6472
        %v6786 = vunpack.c.l.b16 %v6473
        %v6787 = vunpack.c.h.b16 %v6473
        %v6788 = vunpack.c.l.b16 %v6474
        %v6789 = vunpack.c.l.b16 %v6475
        %v6790 = vunpack.c.h.b16 %v6475
        %v6791 = vunpack.c.l.b16 %v6476
        %v6792 = vunpack.c.h.b16 %v6476
        %v6793 = vunpack.c.l.b16 %v6477
        %v6794 = vunpack.c.l.b16 %v6478
        %v6795 = vunpack.c.h.b16 %v6478
        %v6796 = vunpack.c.l.b16 %v6479
        %v6797 = vunpack.c.h.b16 %v6479
        %v6798 = vunpack.c.l.b16 %v6480
        %v6799 = vunpack.c.l.b16 %v6481
        %v6800 = vunpack.c.h.b16 %v6481
        %v6801 = vunpack.c.l.b16 %v6482
        %v6802 = vunpack.c.h.b16 %v6482
        %v6803 = vunpack.c.l.b16 %v6483
        %v6804 = vunpack.c.l.b16 %v6484
        %v6805 = vunpack.c.h.b16 %v6484
        %v6806 = vunpack.c.l.b16 %v6485
        %v6807 = vunpack.c.h.b16 %v6485
        %v6808 = vunpack.c.l.b16 %v6486
        %v6809 = vunpack.c.l.b16 %v6487
        %v6810 = vunpack.c.h.b16 %v6487
        %v6811 = vunpack.c.l.b16 %v6488
        %v6812 = vunpack.c.h.b16 %v6488
        %v6813 = vunpack.c.l.b16 %v6489
        %v6814 = vunpack.c.l.b16 %v6490
        %v6815 = vunpack.c.h.b16 %v6490
        %v6816 = vunpack.c.l.b16 %v6491
        %v6817 = vunpack.c.h.b16 %v6491
        %v6818 = vunpack.c.l.b16 %v6492
        %v6819 = vunpack.c.l.b16 %v6493
        %v6820 = vunpack.c.h.b16 %v6493
        %v6821 = vunpack.c.l.b16 %v6494
        %v6822 = vunpack.c.h.b16 %v6494
        %v6823 = vunpack.c.l.b16 %v6495
        %v6824 = vpack.c.b16 %v6669, %v6664
        %v6825 = vpack.c.b16 %v6670, %v6665
        %v6826 = vpack.c.b16 %v6671, %v6666
        %v6827 = vpack.c.b16 %v6672, %v6667
        %v6828 = vpack.c.b16 %v6673, %v6668
        %v6829 = vpack.c.b16 %v6679, %v6674
        %v6830 = vpack.c.b16 %v6680, %v6675
        %v6831 = vpack.c.b16 %v6681, %v6676
        %v6832 = vpack.c.b16 %v6682, %v6677
        %v6833 = vpack.c.b16 %v6683, %v6678
        %v6834 = vpack.c.b16 %v6689, %v6684
        %v6835 = vpack.c.b16 %v6690, %v6685
        %v6836 = vpack.c.b16 %v6691, %v6686
        %v6837 = vpack.c.b16 %v6692, %v6687
        %v6838 = vpack.c.b16 %v6693, %v6688
        %v6839 = vpack.c.b16 %v6699, %v6694
        %v6840 = vpack.c.b16 %v6700, %v6695
        %v6841 = vpack.c.b16 %v6701, %v6696
        %v6842 = vpack.c.b16 %v6702, %v6697
        %v6843 = vpack.c.b16 %v6703, %v6698
        %v6844 = vpack.c.b16 %v6709, %v6704
        %v6845 = vpack.c.b16 %v6710, %v6705
        %v6846 = vpack.c.b16 %v6711, %v6706
        %v6847 = vpack.c.b16 %v6712, %v6707
        %v6848 = vpack.c.b16 %v6713, %v6708
        %v6849 = vpack.c.b16 %v6719, %v6714
        %v6850 = vpack.c.b16 %v6720, %v6715
        %v6851 = vpack.c.b16 %v6721, %v6716
        %v6852 = vpack.c.b16 %v6722, %v6717
        %v6853 = vpack.c.b16 %v6723, %v6718
        %v6854 = vpack.c.b16 %v6729, %v6724
        %v6855 = vpack.c.b16 %v6730, %v6725
        %v6856 = vpack.c.b16 %v6731, %v6726
        %v6857 = vpack.c.b16 %v6732, %v6727
        %v6858 = vpack.c.b16 %v6733, %v6728
        %v6859 = vpack.c.b16 %v6739, %v6734
        %v6860 = vpack.c.b16 %v6740, %v6735
        %v6861 = vpack.c.b16 %v6741, %v6736
        %v6862 = vpack.c.b16 %v6742, %v6737
        %v6863 = vpack.c.b16 %v6743, %v6738
        %v6864 = vpack.c.b16 %v6749, %v6744
        %v6865 = vpack.c.b16 %v6750, %v6745
        %v6866 = vpack.c.b16 %v6751, %v6746
        %v6867 = vpack.c.b16 %v6752, %v6747
        %v6868 = vpack.c.b16 %v6753, %v6748
        %v6869 = vpack.c.b16 %v6759, %v6754
        %v6870 = vpack.c.b16 %v6760, %v6755
        %v6871 = vpack.c.b16 %v6761, %v6756
        %v6872 = vpack.c.b16 %v6762, %v6757
        %v6873 = vpack.c.b16 %v6763, %v6758
        %v6874 = vpack.c.b16 %v6769, %v6764
        %v6875 = vpack.c.b16 %v6770, %v6765
        %v6876 = vpack.c.b16 %v6771, %v6766
        %v6877 = vpack.c.b16 %v6772, %v6767
        %v6878 = vpack.c.b16 %v6773, %v6768
        %v6879 = vpack.c.b16 %v6779, %v6774
        %v6880 = vpack.c.b16 %v6780, %v6775
        %v6881 = vpack.c.b16 %v6781, %v6776
        %v6882 = vpack.c.b16 %v6782, %v6777
        %v6883 = vpack.c.b16 %v6783, %v6778
        %v6884 = vpack.c.b16 %v6789, %v6784
        %v6885 = vpack.c.b16 %v6790, %v6785
        %v6886 = vpack.c.b16 %v6791, %v6786
        %v6887 = vpack.c.b16 %v6792, %v6787
        %v6888 = vpack.c.b16 %v6793, %v6788
        %v6889 = vpack.c.b16 %v6799, %v6794
        %v6890 = vpack.c.b16 %v6800, %v6795
        %v6891 = vpack.c.b16 %v6801, %v6796
        %v6892 = vpack.c.b16 %v6802, %v6797
        %v6893 = vpack.c.b16 %v6803, %v6798
        %v6894 = vpack.c.b16 %v6809, %v6804
        %v6895 = vpack.c.b16 %v6810, %v6805
        %v6896 = vpack.c.b16 %v6811, %v6806
        %v6897 = vpack.c.b16 %v6812, %v6807
        %v6898 = vpack.c.b16 %v6813, %v6808
        %v6899 = vpack.c.b16 %v6819, %v6814
        %v6900 = vpack.c.b16 %v6820, %v6815
        %v6901 = vpack.c.b16 %v6821, %v6816
        %v6902 = vpack.c.b16 %v6822, %v6817
        %v6903 = vpack.c.b16 %v6823, %v6818
        %v7040 = vunpack.c.l.b16 %v6496
        %v7041 = vunpack.c.l.b16 %v6497
        %v7042 = vunpack.c.l.b16 %v6498
        %v7043 = vunpack.c.l.b16 %v6499
        %v7044 = vunpack.c.l.b16 %v6500
        %v7045 = vunpack.c.l.b16 %v6501
        %v7046 = vunpack.c.l.b16 %v6502
        %v7047 = vunpack.c.l.b16 %v6503
        %v7048 = vunpack.c.l.b16 %v6504
        %v7049 = vunpack.c.l.b16 %v6505
        %v7050 = vunpack.c.l.b16 %v6506
        %v7051 = vunpack.c.l.b16 %v6507
        %v7052 = vunpack.c.l.b16 %v6508
        %v7053 = vunpack.c.l.b16 %v6509
        %v7054 = vunpack.c.l.b16 %v6510
        %v7055 = vunpack.c.l.b16 %v6511
        %v7056 = vunpack.c.l.b16 %v6512
        %v7057 = vunpack.c.l.b16 %v6513
        %v7058 = vunpack.c.l.b16 %v6514
        %v7059 = vunpack.c.l.b16 %v6515
        %v7060 = vunpack.c.l.b16 %v6516
        %v7061 = vunpack.c.l.b16 %v6517
        %v7062 = vunpack.c.l.b16 %v6518
        %v7063 = vunpack.c.l.b16 %v6519
        %v7064 = vunpack.c.l.b16 %v6520
        %v7065 = vunpack.c.l.b16 %v6521
        %v7066 = vunpack.c.l.b16 %v6522
        %v7067 = vunpack.c.l.b16 %v6523
        %v7068 = vunpack.c.l.b16 %v6524
        %v7069 = vunpack.c.l.b16 %v6525
        %v7070 = vunpack.c.l.b16 %v6526
        %v7071 = vunpack.c.l.b16 %v6527
        %v7072 = vunpack.c.l.b16 %v6528
        %v7073 = vunpack.c.l.b16 %v6529
        %v7074 = vunpack.c.l.b16 %v6530
        %v7075 = vunpack.c.l.b16 %v6531
        %v7076 = vunpack.c.l.b16 %v6532
        %v7077 = vunpack.c.l.b16 %v6533
        %v7078 = vunpack.c.l.b16 %v6534
        %v7079 = vunpack.c.l.b16 %v6535
        %v7080 = vunpack.c.l.b16 %v6536
        %v7081 = vunpack.c.l.b16 %v6537
        %v7082 = vunpack.c.l.b16 %v6538
        %v7083 = vunpack.c.l.b16 %v6539
        %v7084 = vunpack.c.l.b16 %v6540
        %v7085 = vunpack.c.l.b16 %v6541
        %v7086 = vunpack.c.l.b16 %v6542
        %v7087 = vunpack.c.l.b16 %v6543
        %v7088 = vunpack.c.l.b16 %v6544
        %v7089 = vunpack.c.l.b16 %v6545
        %v7090 = vunpack.c.l.b16 %v6546
        %v7091 = vunpack.c.l.b16 %v6547
        %v7092 = vunpack.c.l.b16 %v6548
        %v7093 = vunpack.c.l.b16 %v6549
        %v7094 = vunpack.c.l.b16 %v6550
        %v7095 = vunpack.c.l.b16 %v6551
        %v7096 = vunpack.c.l.b16 %v6552
        %v7097 = vunpack.c.l.b16 %v6553
        %v7098 = vunpack.c.l.b16 %v6554
        %v7099 = vunpack.c.l.b16 %v6555
        %v7100 = vunpack.c.l.b16 %v6556
        %v7101 = vunpack.c.l.b16 %v6557
        %v7102 = vunpack.c.l.b16 %v6558
        %v7103 = vunpack.c.l.b16 %v6559
        %v7104 = vunpack.c.l.b16 %v6560
        %v7105 = vunpack.c.l.b16 %v6561
        %v7106 = vunpack.c.l.b16 %v6562
        %v7107 = vunpack.c.l.b16 %v6563
        %v7108 = vunpack.c.l.b16 %v6564
        %v7109 = vunpack.c.l.b16 %v6565
        %v7110 = vunpack.c.l.b16 %v6566
        %v7111 = vunpack.c.l.b16 %v6567
        %v7112 = vpack.c.b16 %v7041, %v7040
        %v7113 = vpack.c.b16 %v7043, %v7042
        %v7114 = vpack.c.b16 %v7045, %v7044
        %v7115 = vpack.c.b16 %v7047, %v7046
        %v7116 = vpack.c.b16 %v7049, %v7048
        %v7117 = vpack.c.b16 %v7051, %v7050
        %v7118 = vpack.c.b16 %v7053, %v7052
        %v7119 = vpack.c.b16 %v7055, %v7054
        %v7120 = vpack.c.b16 %v7057, %v7056
        %v7121 = vpack.c.b16 %v7059, %v7058
        %v7122 = vpack.c.b16 %v7061, %v7060
        %v7123 = vpack.c.b16 %v7063, %v7062
        %v7124 = vpack.c.b16 %v7065, %v7064
        %v7125 = vpack.c.b16 %v7067, %v7066
        %v7126 = vpack.c.b16 %v7069, %v7068
        %v7127 = vpack.c.b16 %v7071, %v7070
        %v7128 = vpack.c.b16 %v7073, %v7072
        %v7129 = vpack.c.b16 %v7075, %v7074
        %v7130 = vpack.c.b16 %v7077, %v7076
        %v7131 = vpack.c.b16 %v7079, %v7078
        %v7132 = vpack.c.b16 %v7081, %v7080
        %v7133 = vpack.c.b16 %v7083, %v7082
        %v7134 = vpack.c.b16 %v7085, %v7084
        %v7135 = vpack.c.b16 %v7087, %v7086
        %v7136 = vpack.c.b16 %v7089, %v7088
        %v7137 = vpack.c.b16 %v7091, %v7090
        %v7138 = vpack.c.b16 %v7093, %v7092
        %v7139 = vpack.c.b16 %v7095, %v7094
        %v7140 = vpack.c.b16 %v7097, %v7096
        %v7141 = vpack.c.b16 %v7099, %v7098
        %v7142 = vpack.c.b16 %v7101, %v7100
        %v7143 = vpack.c.b16 %v7103, %v7102
        %v7144 = vpack.c.b16 %v7105, %v7104
        %v7145 = vpack.c.b16 %v7107, %v7106
        %v7146 = vpack.c.b16 %v7109, %v7108
        %v7147 = vpack.c.b16 %v7111, %v7110
        %v7185 = vsel %vm350, %v6828, 0
        %v7188 = vsel %vm350, %v6833, 0
        %v7191 = vsel %vm350, %v6838, 0
        %v7194 = vsel %vm350, %v6843, 0
        %v7197 = vsel %vm350, %v6848, 0
        %v7200 = vsel %vm350, %v6853, 0
        %v7203 = vsel %vm350, %v6858, 0
        %v7206 = vsel %vm350, %v6863, 0
        %v7209 = vsel %vm350, %v6868, 0
        %v7212 = vsel %vm350, %v6873, 0
        %v7215 = vsel %vm350, %v6878, 0
        %v7218 = vsel %vm350, %v6883, 0
        %v7221 = vsel %vm350, %v6888, 0
        %v7224 = vsel %vm350, %v6893, 0
        %v7227 = vsel %vm350, %v6898, 0
        %v7230 = vsel %vm350, %v6903, 0
        %7232 = vmatpush.bf16.msra.mxu0 %v7119
        %7233 = vmatpush.bf16.msra.mxu0 %v7118
        %7234 = vmatpush.bf16.msra.mxu0 %v7117
        %7235 = vmatpush.bf16.msra.mxu0 %v7116
        %7236 = vmatpush.bf16.msra.mxu0 %v7115
        %7237 = vmatpush.bf16.msra.mxu0 %v7114
        %7238 = vmatpush.bf16.msra.mxu0 %v7113
        %7239 = vmatpush.bf16.msra.mxu0 %v7112
        %7240 = vmatmul.bf16.gmra.mxu0 %v6824
        %v7241 = vpop.f32.mrf.mxu0
        %v7242 = vadd.f32 0.0, %v7241
        %v7243 = vpop.f32.mrf.mxu0
        %v7244 = vadd.f32 0.0, %v7243
        %7245 = vmatmul.bf16.gmra.mxu0 %v6829
        %v7246 = vpop.f32.mrf.mxu0
        %v7247 = vadd.f32 0.0, %v7246
        %v7248 = vpop.f32.mrf.mxu0
        %v7249 = vadd.f32 0.0, %v7248
        %7250 = vmatmul.bf16.gmra.mxu0 %v6834
        %v7251 = vpop.f32.mrf.mxu0
        %v7252 = vadd.f32 0.0, %v7251
        %v7253 = vpop.f32.mrf.mxu0
        %v7254 = vadd.f32 0.0, %v7253
        %7255 = vmatmul.bf16.gmra.mxu0 %v6839
        %v7256 = vpop.f32.mrf.mxu0
        %v7257 = vadd.f32 0.0, %v7256
        %v7258 = vpop.f32.mrf.mxu0
        %v7259 = vadd.f32 0.0, %v7258
        %7260 = vmatmul.bf16.gmra.mxu0 %v6844
        %v7261 = vpop.f32.mrf.mxu0
        %v7262 = vadd.f32 0.0, %v7261
        %v7263 = vpop.f32.mrf.mxu0
        %v7264 = vadd.f32 0.0, %v7263
        %7265 = vmatmul.bf16.gmra.mxu0 %v6849
        %v7266 = vpop.f32.mrf.mxu0
        %v7267 = vadd.f32 0.0, %v7266
        %v7268 = vpop.f32.mrf.mxu0
        %v7269 = vadd.f32 0.0, %v7268
        %7270 = vmatmul.bf16.gmra.mxu0 %v6854
        %v7271 = vpop.f32.mrf.mxu0
        %v7272 = vadd.f32 0.0, %v7271
        %v7273 = vpop.f32.mrf.mxu0
        %v7274 = vadd.f32 0.0, %v7273
        %7275 = vmatmul.bf16.gmra.mxu0 %v6859
        %v7276 = vpop.f32.mrf.mxu0
        %v7277 = vadd.f32 0.0, %v7276
        %v7278 = vpop.f32.mrf.mxu0
        %v7279 = vadd.f32 0.0, %v7278
        %7280 = vmatmul.bf16.gmra.mxu0 %v6864
        %v7281 = vpop.f32.mrf.mxu0
        %v7282 = vadd.f32 0.0, %v7281
        %v7283 = vpop.f32.mrf.mxu0
        %v7284 = vadd.f32 0.0, %v7283
        %7285 = vmatmul.bf16.gmra.mxu0 %v6869
        %v7286 = vpop.f32.mrf.mxu0
        %v7287 = vadd.f32 0.0, %v7286
        %v7288 = vpop.f32.mrf.mxu0
        %v7289 = vadd.f32 0.0, %v7288
        %7290 = vmatmul.bf16.gmra.mxu0 %v6874
        %v7291 = vpop.f32.mrf.mxu0
        %v7292 = vadd.f32 0.0, %v7291
        %v7293 = vpop.f32.mrf.mxu0
        %v7294 = vadd.f32 0.0, %v7293
        %7295 = vmatmul.bf16.gmra.mxu0 %v6879
        %v7296 = vpop.f32.mrf.mxu0
        %v7297 = vadd.f32 0.0, %v7296
        %v7298 = vpop.f32.mrf.mxu0
        %v7299 = vadd.f32 0.0, %v7298
        %7300 = vmatmul.bf16.gmra.mxu0 %v6884
        %v7301 = vpop.f32.mrf.mxu0
        %v7302 = vadd.f32 0.0, %v7301
        %v7303 = vpop.f32.mrf.mxu0
        %v7304 = vadd.f32 0.0, %v7303
        %7305 = vmatmul.bf16.gmra.mxu0 %v6889
        %v7306 = vpop.f32.mrf.mxu0
        %v7307 = vadd.f32 0.0, %v7306
        %v7308 = vpop.f32.mrf.mxu0
        %v7309 = vadd.f32 0.0, %v7308
        %7310 = vmatmul.bf16.gmra.mxu0 %v6894
        %v7311 = vpop.f32.mrf.mxu0
        %v7312 = vadd.f32 0.0, %v7311
        %v7313 = vpop.f32.mrf.mxu0
        %v7314 = vadd.f32 0.0, %v7313
        %7315 = vmatmul.bf16.gmra.mxu0 %v6899
        %v7316 = vpop.f32.mrf.mxu0
        %v7317 = vadd.f32 0.0, %v7316
        %v7318 = vpop.f32.mrf.mxu0
        %v7319 = vadd.f32 0.0, %v7318
        %7320 = vdwg.mxu0
        %7321 = vmatpush.bf16.msra.mxu0 %v7127
        %7322 = vmatpush.bf16.msra.mxu0 %v7126
        %7323 = vmatpush.bf16.msra.mxu0 %v7125
        %7324 = vmatpush.bf16.msra.mxu0 %v7124
        %7325 = vmatpush.bf16.msra.mxu0 %v7123
        %7326 = vmatpush.bf16.msra.mxu0 %v7122
        %7327 = vmatpush.bf16.msra.mxu0 %v7121
        %7328 = vmatpush.bf16.msra.mxu0 %v7120
        %7329 = vmatmul.bf16.gmra.mxu0 %v6825
        %v7330 = vpop.f32.mrf.mxu0
        %v7331 = vadd.f32 %v7242, %v7330
        %v7332 = vpop.f32.mrf.mxu0
        %v7333 = vadd.f32 %v7244, %v7332
        %7334 = vmatmul.bf16.gmra.mxu0 %v6830
        %v7335 = vpop.f32.mrf.mxu0
        %v7336 = vadd.f32 %v7247, %v7335
        %v7337 = vpop.f32.mrf.mxu0
        %v7338 = vadd.f32 %v7249, %v7337
        %7339 = vmatmul.bf16.gmra.mxu0 %v6835
        %v7340 = vpop.f32.mrf.mxu0
        %v7341 = vadd.f32 %v7252, %v7340
        %v7342 = vpop.f32.mrf.mxu0
        %v7343 = vadd.f32 %v7254, %v7342
        %7344 = vmatmul.bf16.gmra.mxu0 %v6840
        %v7345 = vpop.f32.mrf.mxu0
        %v7346 = vadd.f32 %v7257, %v7345
        %v7347 = vpop.f32.mrf.mxu0
        %v7348 = vadd.f32 %v7259, %v7347
        %7349 = vmatmul.bf16.gmra.mxu0 %v6845
        %v7350 = vpop.f32.mrf.mxu0
        %v7351 = vadd.f32 %v7262, %v7350
        %v7352 = vpop.f32.mrf.mxu0
        %v7353 = vadd.f32 %v7264, %v7352
        %7354 = vmatmul.bf16.gmra.mxu0 %v6850
        %v7355 = vpop.f32.mrf.mxu0
        %v7356 = vadd.f32 %v7267, %v7355
        %v7357 = vpop.f32.mrf.mxu0
        %v7358 = vadd.f32 %v7269, %v7357
        %7359 = vmatmul.bf16.gmra.mxu0 %v6855
        %v7360 = vpop.f32.mrf.mxu0
        %v7361 = vadd.f32 %v7272, %v7360
        %v7362 = vpop.f32.mrf.mxu0
        %v7363 = vadd.f32 %v7274, %v7362
        %7364 = vmatmul.bf16.gmra.mxu0 %v6860
        %v7365 = vpop.f32.mrf.mxu0
        %v7366 = vadd.f32 %v7277, %v7365
        %v7367 = vpop.f32.mrf.mxu0
        %v7368 = vadd.f32 %v7279, %v7367
        %7369 = vmatmul.bf16.gmra.mxu0 %v6865
        %v7370 = vpop.f32.mrf.mxu0
        %v7371 = vadd.f32 %v7282, %v7370
        %v7372 = vpop.f32.mrf.mxu0
        %v7373 = vadd.f32 %v7284, %v7372
        %7374 = vmatmul.bf16.gmra.mxu0 %v6870
        %v7375 = vpop.f32.mrf.mxu0
        %v7376 = vadd.f32 %v7287, %v7375
        %v7377 = vpop.f32.mrf.mxu0
        %v7378 = vadd.f32 %v7289, %v7377
        %7379 = vmatmul.bf16.gmra.mxu0 %v6875
        %v7380 = vpop.f32.mrf.mxu0
        %v7381 = vadd.f32 %v7292, %v7380
        %v7382 = vpop.f32.mrf.mxu0
        %v7383 = vadd.f32 %v7294, %v7382
        %7384 = vmatmul.bf16.gmra.mxu0 %v6880
        %v7385 = vpop.f32.mrf.mxu0
        %v7386 = vadd.f32 %v7297, %v7385
        %v7387 = vpop.f32.mrf.mxu0
        %v7388 = vadd.f32 %v7299, %v7387
        %7389 = vmatmul.bf16.gmra.mxu0 %v6885
        %v7390 = vpop.f32.mrf.mxu0
        %v7391 = vadd.f32 %v7302, %v7390
        %v7392 = vpop.f32.mrf.mxu0
        %v7393 = vadd.f32 %v7304, %v7392
        %7394 = vmatmul.bf16.gmra.mxu0 %v6890
        %v7395 = vpop.f32.mrf.mxu0
        %v7396 = vadd.f32 %v7307, %v7395
        %v7397 = vpop.f32.mrf.mxu0
        %v7398 = vadd.f32 %v7309, %v7397
        %7399 = vmatmul.bf16.gmra.mxu0 %v6895
        %v7400 = vpop.f32.mrf.mxu0
        %v7401 = vadd.f32 %v7312, %v7400
        %v7402 = vpop.f32.mrf.mxu0
        %v7403 = vadd.f32 %v7314, %v7402
        %7404 = vmatmul.bf16.gmra.mxu0 %v6900
        %v7405 = vpop.f32.mrf.mxu0
        %v7406 = vadd.f32 %v7317, %v7405
        %v7407 = vpop.f32.mrf.mxu0
        %v7408 = vadd.f32 %v7319, %v7407
        %7409 = vdwg.mxu0
        %7410 = vmatpush.bf16.msra.mxu0 %v7135
        %7411 = vmatpush.bf16.msra.mxu0 %v7134
        %7412 = vmatpush.bf16.msra.mxu0 %v7133
        %7413 = vmatpush.bf16.msra.mxu0 %v7132
        %7414 = vmatpush.bf16.msra.mxu0 %v7131
        %7415 = vmatpush.bf16.msra.mxu0 %v7130
        %7416 = vmatpush.bf16.msra.mxu0 %v7129
        %7417 = vmatpush.bf16.msra.mxu0 %v7128
        %7418 = vmatmul.bf16.gmra.mxu0 %v6826
        %v7419 = vpop.f32.mrf.mxu0
        %v7420 = vadd.f32 %v7331, %v7419
        %v7421 = vpop.f32.mrf.mxu0
        %v7422 = vadd.f32 %v7333, %v7421
        %7423 = vmatmul.bf16.gmra.mxu0 %v6831
        %v7424 = vpop.f32.mrf.mxu0
        %v7425 = vadd.f32 %v7336, %v7424
        %v7426 = vpop.f32.mrf.mxu0
        %v7427 = vadd.f32 %v7338, %v7426
        %7428 = vmatmul.bf16.gmra.mxu0 %v6836
        %v7429 = vpop.f32.mrf.mxu0
        %v7430 = vadd.f32 %v7341, %v7429
        %v7431 = vpop.f32.mrf.mxu0
        %v7432 = vadd.f32 %v7343, %v7431
        %7433 = vmatmul.bf16.gmra.mxu0 %v6841
        %v7434 = vpop.f32.mrf.mxu0
        %v7435 = vadd.f32 %v7346, %v7434
        %v7436 = vpop.f32.mrf.mxu0
        %v7437 = vadd.f32 %v7348, %v7436
        %7438 = vmatmul.bf16.gmra.mxu0 %v6846
        %v7439 = vpop.f32.mrf.mxu0
        %v7440 = vadd.f32 %v7351, %v7439
        %v7441 = vpop.f32.mrf.mxu0
        %v7442 = vadd.f32 %v7353, %v7441
        %7443 = vmatmul.bf16.gmra.mxu0 %v6851
        %v7444 = vpop.f32.mrf.mxu0
        %v7445 = vadd.f32 %v7356, %v7444
        %v7446 = vpop.f32.mrf.mxu0
        %v7447 = vadd.f32 %v7358, %v7446
        %7448 = vmatmul.bf16.gmra.mxu0 %v6856
        %v7449 = vpop.f32.mrf.mxu0
        %v7450 = vadd.f32 %v7361, %v7449
        %v7451 = vpop.f32.mrf.mxu0
        %v7452 = vadd.f32 %v7363, %v7451
        %7453 = vmatmul.bf16.gmra.mxu0 %v6861
        %v7454 = vpop.f32.mrf.mxu0
        %v7455 = vadd.f32 %v7366, %v7454
        %v7456 = vpop.f32.mrf.mxu0
        %v7457 = vadd.f32 %v7368, %v7456
        %7458 = vmatmul.bf16.gmra.mxu0 %v6866
        %v7459 = vpop.f32.mrf.mxu0
        %v7460 = vadd.f32 %v7371, %v7459
        %v7461 = vpop.f32.mrf.mxu0
        %v7462 = vadd.f32 %v7373, %v7461
        %7463 = vmatmul.bf16.gmra.mxu0 %v6871
        %v7464 = vpop.f32.mrf.mxu0
        %v7465 = vadd.f32 %v7376, %v7464
        %v7466 = vpop.f32.mrf.mxu0
        %v7467 = vadd.f32 %v7378, %v7466
        %7468 = vmatmul.bf16.gmra.mxu0 %v6876
        %v7469 = vpop.f32.mrf.mxu0
        %v7470 = vadd.f32 %v7381, %v7469
        %v7471 = vpop.f32.mrf.mxu0
        %v7472 = vadd.f32 %v7383, %v7471
        %7473 = vmatmul.bf16.gmra.mxu0 %v6881
        %v7474 = vpop.f32.mrf.mxu0
        %v7475 = vadd.f32 %v7386, %v7474
        %v7476 = vpop.f32.mrf.mxu0
        %v7477 = vadd.f32 %v7388, %v7476
        %7478 = vmatmul.bf16.gmra.mxu0 %v6886
        %v7479 = vpop.f32.mrf.mxu0
        %v7480 = vadd.f32 %v7391, %v7479
        %v7481 = vpop.f32.mrf.mxu0
        %v7482 = vadd.f32 %v7393, %v7481
        %7483 = vmatmul.bf16.gmra.mxu0 %v6891
        %v7484 = vpop.f32.mrf.mxu0
        %v7485 = vadd.f32 %v7396, %v7484
        %v7486 = vpop.f32.mrf.mxu0
        %v7487 = vadd.f32 %v7398, %v7486
        %7488 = vmatmul.bf16.gmra.mxu0 %v6896
        %v7489 = vpop.f32.mrf.mxu0
        %v7490 = vadd.f32 %v7401, %v7489
        %v7491 = vpop.f32.mrf.mxu0
        %v7492 = vadd.f32 %v7403, %v7491
        %7493 = vmatmul.bf16.gmra.mxu0 %v6901
        %v7494 = vpop.f32.mrf.mxu0
        %v7495 = vadd.f32 %v7406, %v7494
        %v7496 = vpop.f32.mrf.mxu0
        %v7497 = vadd.f32 %v7408, %v7496
        %7498 = vdwg.mxu0
        %7499 = vmatpush.bf16.msra.mxu0 %v7143
        %7500 = vmatpush.bf16.msra.mxu0 %v7142
        %7501 = vmatpush.bf16.msra.mxu0 %v7141
        %7502 = vmatpush.bf16.msra.mxu0 %v7140
        %7503 = vmatpush.bf16.msra.mxu0 %v7139
        %7504 = vmatpush.bf16.msra.mxu0 %v7138
        %7505 = vmatpush.bf16.msra.mxu0 %v7137
        %7506 = vmatpush.bf16.msra.mxu0 %v7136
        %7507 = vmatmul.bf16.gmra.mxu0 %v6827
        %v7508 = vpop.f32.mrf.mxu0
        %v7509 = vadd.f32 %v7420, %v7508
        %v7510 = vpop.f32.mrf.mxu0
        %v7511 = vadd.f32 %v7422, %v7510
        %7512 = vmatmul.bf16.gmra.mxu0 %v6832
        %v7513 = vpop.f32.mrf.mxu0
        %v7514 = vadd.f32 %v7425, %v7513
        %v7515 = vpop.f32.mrf.mxu0
        %v7516 = vadd.f32 %v7427, %v7515
        %7517 = vmatmul.bf16.gmra.mxu0 %v6837
        %v7518 = vpop.f32.mrf.mxu0
        %v7519 = vadd.f32 %v7430, %v7518
        %v7520 = vpop.f32.mrf.mxu0
        %v7521 = vadd.f32 %v7432, %v7520
        %7522 = vmatmul.bf16.gmra.mxu0 %v6842
        %v7523 = vpop.f32.mrf.mxu0
        %v7524 = vadd.f32 %v7435, %v7523
        %v7525 = vpop.f32.mrf.mxu0
        %v7526 = vadd.f32 %v7437, %v7525
        %7527 = vmatmul.bf16.gmra.mxu0 %v6847
        %v7528 = vpop.f32.mrf.mxu0
        %v7529 = vadd.f32 %v7440, %v7528
        %v7530 = vpop.f32.mrf.mxu0
        %v7531 = vadd.f32 %v7442, %v7530
        %7532 = vmatmul.bf16.gmra.mxu0 %v6852
        %v7533 = vpop.f32.mrf.mxu0
        %v7534 = vadd.f32 %v7445, %v7533
        %v7535 = vpop.f32.mrf.mxu0
        %v7536 = vadd.f32 %v7447, %v7535
        %7537 = vmatmul.bf16.gmra.mxu0 %v6857
        %v7538 = vpop.f32.mrf.mxu0
        %v7539 = vadd.f32 %v7450, %v7538
        %v7540 = vpop.f32.mrf.mxu0
        %v7541 = vadd.f32 %v7452, %v7540
        %7542 = vmatmul.bf16.gmra.mxu0 %v6862
        %v7543 = vpop.f32.mrf.mxu0
        %v7544 = vadd.f32 %v7455, %v7543
        %v7545 = vpop.f32.mrf.mxu0
        %v7546 = vadd.f32 %v7457, %v7545
        %7547 = vmatmul.bf16.gmra.mxu0 %v6867
        %v7548 = vpop.f32.mrf.mxu0
        %v7549 = vadd.f32 %v7460, %v7548
        %v7550 = vpop.f32.mrf.mxu0
        %v7551 = vadd.f32 %v7462, %v7550
        %7552 = vmatmul.bf16.gmra.mxu0 %v6872
        %v7553 = vpop.f32.mrf.mxu0
        %v7554 = vadd.f32 %v7465, %v7553
        %v7555 = vpop.f32.mrf.mxu0
        %v7556 = vadd.f32 %v7467, %v7555
        %7557 = vmatmul.bf16.gmra.mxu0 %v6877
        %v7558 = vpop.f32.mrf.mxu0
        %v7559 = vadd.f32 %v7470, %v7558
        %v7560 = vpop.f32.mrf.mxu0
        %v7561 = vadd.f32 %v7472, %v7560
        %7562 = vmatmul.bf16.gmra.mxu0 %v6882
        %v7563 = vpop.f32.mrf.mxu0
        %v7564 = vadd.f32 %v7475, %v7563
        %v7565 = vpop.f32.mrf.mxu0
        %v7566 = vadd.f32 %v7477, %v7565
        %7567 = vmatmul.bf16.gmra.mxu0 %v6887
        %v7568 = vpop.f32.mrf.mxu0
        %v7569 = vadd.f32 %v7480, %v7568
        %v7570 = vpop.f32.mrf.mxu0
        %v7571 = vadd.f32 %v7482, %v7570
        %7572 = vmatmul.bf16.gmra.mxu0 %v6892
        %v7573 = vpop.f32.mrf.mxu0
        %v7574 = vadd.f32 %v7485, %v7573
        %v7575 = vpop.f32.mrf.mxu0
        %v7576 = vadd.f32 %v7487, %v7575
        %7577 = vmatmul.bf16.gmra.mxu0 %v6897
        %v7578 = vpop.f32.mrf.mxu0
        %v7579 = vadd.f32 %v7490, %v7578
        %v7580 = vpop.f32.mrf.mxu0
        %v7581 = vadd.f32 %v7492, %v7580
        %7582 = vmatmul.bf16.gmra.mxu0 %v6902
        %v7583 = vpop.f32.mrf.mxu0
        %v7584 = vadd.f32 %v7495, %v7583
        %v7585 = vpop.f32.mrf.mxu0
        %v7586 = vadd.f32 %v7497, %v7585
        %7587 = vdwg.mxu0
        %7588 = vmatpush.bf16.msra.mxu0 0
        %7589 = vmatpush.bf16.msra.mxu0 0
        %7590 = vmatpush.bf16.msra.mxu0 0
        %7591 = vmatpush.bf16.msra.mxu0 0
        %7592 = vmatpush.bf16.msra.mxu0 %v7147
        %7593 = vmatpush.bf16.msra.mxu0 %v7146
        %7594 = vmatpush.bf16.msra.mxu0 %v7145
        %7595 = vmatpush.bf16.msra.mxu0 %v7144
        %7596 = vmatmul.bf16.gmra.mxu0 %v7185
        %v7597 = vpop.f32.mrf.mxu0
        %v7598 = vadd.f32 %v7509, %v7597
        %v7599 = vpop.f32.mrf.mxu0
        %v7600 = vadd.f32 %v7511, %v7599
        %7601 = vmatmul.bf16.gmra.mxu0 %v7188
        %v7602 = vpop.f32.mrf.mxu0
        %v7603 = vadd.f32 %v7514, %v7602
        %v7604 = vpop.f32.mrf.mxu0
        %v7605 = vadd.f32 %v7516, %v7604
        %7606 = vmatmul.bf16.gmra.mxu0 %v7191
        %v7607 = vpop.f32.mrf.mxu0
        %v7608 = vadd.f32 %v7519, %v7607
        %v7609 = vpop.f32.mrf.mxu0
        %v7610 = vadd.f32 %v7521, %v7609
        %7611 = vmatmul.bf16.gmra.mxu0 %v7194
        %v7612 = vpop.f32.mrf.mxu0
        %v7613 = vadd.f32 %v7524, %v7612
        %v7614 = vpop.f32.mrf.mxu0
        %v7615 = vadd.f32 %v7526, %v7614
        %7616 = vmatmul.bf16.gmra.mxu0 %v7197
        %v7617 = vpop.f32.mrf.mxu0
        %v7618 = vadd.f32 %v7529, %v7617
        %v7619 = vpop.f32.mrf.mxu0
        %v7620 = vadd.f32 %v7531, %v7619
        %7621 = vmatmul.bf16.gmra.mxu0 %v7200
        %v7622 = vpop.f32.mrf.mxu0
        %v7623 = vadd.f32 %v7534, %v7622
        %v7624 = vpop.f32.mrf.mxu0
        %v7625 = vadd.f32 %v7536, %v7624
        %7626 = vmatmul.bf16.gmra.mxu0 %v7203
        %v7627 = vpop.f32.mrf.mxu0
        %v7628 = vadd.f32 %v7539, %v7627
        %v7629 = vpop.f32.mrf.mxu0
        %v7630 = vadd.f32 %v7541, %v7629
        %7631 = vmatmul.bf16.gmra.mxu0 %v7206
        %v7632 = vpop.f32.mrf.mxu0
        %v7633 = vadd.f32 %v7544, %v7632
        %v7634 = vpop.f32.mrf.mxu0
        %v7635 = vadd.f32 %v7546, %v7634
        %7636 = vmatmul.bf16.gmra.mxu0 %v7209
        %v7637 = vpop.f32.mrf.mxu0
        %v7638 = vadd.f32 %v7549, %v7637
        %v7639 = vpop.f32.mrf.mxu0
        %v7640 = vadd.f32 %v7551, %v7639
        %7641 = vmatmul.bf16.gmra.mxu0 %v7212
        %v7642 = vpop.f32.mrf.mxu0
        %v7643 = vadd.f32 %v7554, %v7642
        %v7644 = vpop.f32.mrf.mxu0
        %v7645 = vadd.f32 %v7556, %v7644
        %7646 = vmatmul.bf16.gmra.mxu0 %v7215
        %v7647 = vpop.f32.mrf.mxu0
        %v7648 = vadd.f32 %v7559, %v7647
        %v7649 = vpop.f32.mrf.mxu0
        %v7650 = vadd.f32 %v7561, %v7649
        %7651 = vmatmul.bf16.gmra.mxu0 %v7218
        %v7652 = vpop.f32.mrf.mxu0
        %v7653 = vadd.f32 %v7564, %v7652
        %v7654 = vpop.f32.mrf.mxu0
        %v7655 = vadd.f32 %v7566, %v7654
        %7656 = vmatmul.bf16.gmra.mxu0 %v7221
        %v7657 = vpop.f32.mrf.mxu0
        %v7658 = vadd.f32 %v7569, %v7657
        %v7659 = vpop.f32.mrf.mxu0
        %v7660 = vadd.f32 %v7571, %v7659
        %7661 = vmatmul.bf16.gmra.mxu0 %v7224
        %v7662 = vpop.f32.mrf.mxu0
        %v7663 = vadd.f32 %v7574, %v7662
        %v7664 = vpop.f32.mrf.mxu0
        %v7665 = vadd.f32 %v7576, %v7664
        %7666 = vmatmul.bf16.gmra.mxu0 %v7227
        %v7667 = vpop.f32.mrf.mxu0
        %v7668 = vadd.f32 %v7579, %v7667
        %v7669 = vpop.f32.mrf.mxu0
        %v7670 = vadd.f32 %v7581, %v7669
        %7671 = vmatmul.bf16.gmra.mxu0 %v7230
        %v7672 = vpop.f32.mrf.mxu0
        %v7673 = vadd.f32 %v7584, %v7672
        %v7674 = vpop.f32.mrf.mxu0
        %v7675 = vadd.f32 %v7586, %v7674
        %7676 = vdwg.mxu0
        %v7677 = vmul.f32 %v7598, %v7598
        %v7678 = vmul.f32 %v7600, %v7600
        %v7679 = vmul.f32 %v7603, %v7603
        %v7680 = vmul.f32 %v7605, %v7605
        %v7681 = vmul.f32 %v7608, %v7608
        %v7682 = vmul.f32 %v7610, %v7610
        %v7683 = vmul.f32 %v7613, %v7613
        %v7684 = vmul.f32 %v7615, %v7615
        %v7685 = vmul.f32 %v7618, %v7618
        %v7686 = vmul.f32 %v7620, %v7620
        %v7687 = vmul.f32 %v7623, %v7623
        %v7688 = vmul.f32 %v7625, %v7625
        %v7689 = vmul.f32 %v7628, %v7628
        %v7690 = vmul.f32 %v7630, %v7630
        %v7691 = vmul.f32 %v7633, %v7633
        %v7692 = vmul.f32 %v7635, %v7635
        %v7693 = vmul.f32 %v7638, %v7638
        %v7694 = vmul.f32 %v7640, %v7640
        %v7695 = vmul.f32 %v7643, %v7643
        %v7696 = vmul.f32 %v7645, %v7645
        %v7697 = vmul.f32 %v7648, %v7648
        %v7698 = vmul.f32 %v7650, %v7650
        %v7699 = vmul.f32 %v7653, %v7653
        %v7700 = vmul.f32 %v7655, %v7655
        %v7701 = vmul.f32 %v7658, %v7658
        %v7702 = vmul.f32 %v7660, %v7660
        %v7703 = vmul.f32 %v7663, %v7663
        %v7704 = vmul.f32 %v7665, %v7665
        %v7705 = vmul.f32 %v7668, %v7668
        %v7706 = vmul.f32 %v7670, %v7670
        %v7707 = vmul.f32 %v7673, %v7673
        %v7708 = vmul.f32 %v7675, %v7675
        %vm7709 = vcmask 23552
        %v7710 = vsel %vm7709, %v7677, 0.0
        %7711 = vadd.xlane.f32.xlu0 %v7710
        %v7712 = vpop.xlane.xlu0 %7711
        %v7713 = vsel %vm7709, %v7678, 0.0
        %7714 = vadd.xlane.f32.xlu0 %v7713
        %v7715 = vpop.xlane.xlu0 %7714
        %v7716 = vsel %vm7709, %v7679, 0.0
        %7717 = vadd.xlane.f32.xlu0 %v7716
        %v7718 = vpop.xlane.xlu0 %7717
        %v7719 = vsel %vm7709, %v7680, 0.0
        %7720 = vadd.xlane.f32.xlu0 %v7719
        %v7721 = vpop.xlane.xlu0 %7720
        %v7722 = vsel %vm7709, %v7681, 0.0
        %7723 = vadd.xlane.f32.xlu0 %v7722
        %v7724 = vpop.xlane.xlu0 %7723
        %v7725 = vsel %vm7709, %v7682, 0.0
        %7726 = vadd.xlane.f32.xlu0 %v7725
        %v7727 = vpop.xlane.xlu0 %7726
        %v7728 = vsel %vm7709, %v7683, 0.0
        %7729 = vadd.xlane.f32.xlu0 %v7728
        %v7730 = vpop.xlane.xlu0 %7729
        %v7731 = vsel %vm7709, %v7684, 0.0
        %7732 = vadd.xlane.f32.xlu0 %v7731
        %v7733 = vpop.xlane.xlu0 %7732
        %v7734 = vsel %vm7709, %v7685, 0.0
        %7735 = vadd.xlane.f32.xlu0 %v7734
        %v7736 = vpop.xlane.xlu0 %7735
        %v7737 = vsel %vm7709, %v7686, 0.0
        %7738 = vadd.xlane.f32.xlu0 %v7737
        %v7739 = vpop.xlane.xlu0 %7738
        %v7740 = vsel %vm7709, %v7687, 0.0
        %7741 = vadd.xlane.f32.xlu0 %v7740
        %v7742 = vpop.xlane.xlu0 %7741
        %v7743 = vsel %vm7709, %v7688, 0.0
        %7744 = vadd.xlane.f32.xlu0 %v7743
        %v7745 = vpop.xlane.xlu0 %7744
        %v7746 = vsel %vm7709, %v7689, 0.0
        %7747 = vadd.xlane.f32.xlu0 %v7746
        %v7748 = vpop.xlane.xlu0 %7747
        %v7749 = vsel %vm7709, %v7690, 0.0
        %7750 = vadd.xlane.f32.xlu0 %v7749
        %v7751 = vpop.xlane.xlu0 %7750
        %v7752 = vsel %vm7709, %v7691, 0.0
        %7753 = vadd.xlane.f32.xlu0 %v7752
        %v7754 = vpop.xlane.xlu0 %7753
        %v7755 = vsel %vm7709, %v7692, 0.0
        %7756 = vadd.xlane.f32.xlu0 %v7755
        %v7757 = vpop.xlane.xlu0 %7756
        %v7758 = vsel %vm7709, %v7693, 0.0
        %7759 = vadd.xlane.f32.xlu0 %v7758
        %v7760 = vpop.xlane.xlu0 %7759
        %v7761 = vsel %vm7709, %v7694, 0.0
        %7762 = vadd.xlane.f32.xlu0 %v7761
        %v7763 = vpop.xlane.xlu0 %7762
        %v7764 = vsel %vm7709, %v7695, 0.0
        %7765 = vadd.xlane.f32.xlu0 %v7764
        %v7766 = vpop.xlane.xlu0 %7765
        %v7767 = vsel %vm7709, %v7696, 0.0
        %7768 = vadd.xlane.f32.xlu0 %v7767
        %v7769 = vpop.xlane.xlu0 %7768
        %v7770 = vsel %vm7709, %v7697, 0.0
        %7771 = vadd.xlane.f32.xlu0 %v7770
        %v7772 = vpop.xlane.xlu0 %7771
        %v7773 = vsel %vm7709, %v7698, 0.0
        %7774 = vadd.xlane.f32.xlu0 %v7773
        %v7775 = vpop.xlane.xlu0 %7774
        %v7776 = vsel %vm7709, %v7699, 0.0
        %7777 = vadd.xlane.f32.xlu0 %v7776
        %v7778 = vpop.xlane.xlu0 %7777
        %v7779 = vsel %vm7709, %v7700, 0.0
        %7780 = vadd.xlane.f32.xlu0 %v7779
        %v7781 = vpop.xlane.xlu0 %7780
        %v7782 = vsel %vm7709, %v7701, 0.0
        %7783 = vadd.xlane.f32.xlu0 %v7782
        %v7784 = vpop.xlane.xlu0 %7783
        %v7785 = vsel %vm7709, %v7702, 0.0
        %7786 = vadd.xlane.f32.xlu0 %v7785
        %v7787 = vpop.xlane.xlu0 %7786
        %v7788 = vsel %vm7709, %v7703, 0.0
        %7789 = vadd.xlane.f32.xlu0 %v7788
        %v7790 = vpop.xlane.xlu0 %7789
        %v7791 = vsel %vm7709, %v7704, 0.0
        %7792 = vadd.xlane.f32.xlu0 %v7791
        %v7793 = vpop.xlane.xlu0 %7792
        %v7794 = vsel %vm7709, %v7705, 0.0
        %7795 = vadd.xlane.f32.xlu0 %v7794
        %v7796 = vpop.xlane.xlu0 %7795
        %v7797 = vsel %vm7709, %v7706, 0.0
        %7798 = vadd.xlane.f32.xlu0 %v7797
        %v7799 = vpop.xlane.xlu0 %7798
        %v7800 = vsel %vm7709, %v7707, 0.0
        %7801 = vadd.xlane.f32.xlu0 %v7800
        %v7802 = vpop.xlane.xlu0 %7801
        %v7803 = vsel %vm7709, %v7708, 0.0
        %7804 = vadd.xlane.f32.xlu0 %v7803
        %v7805 = vpop.xlane.xlu0 %7804
        %v7806 = vmax.f32 %v7712, 1e-24
        %v7807 = vmax.f32 %v7715, 1e-24
        %v7808 = vmax.f32 %v7718, 1e-24
        %v7809 = vmax.f32 %v7721, 1e-24
        %v7810 = vmax.f32 %v7724, 1e-24
        %v7811 = vmax.f32 %v7727, 1e-24
        %v7812 = vmax.f32 %v7730, 1e-24
        %v7813 = vmax.f32 %v7733, 1e-24
        %v7814 = vmax.f32 %v7736, 1e-24
        %v7815 = vmax.f32 %v7739, 1e-24
        %v7816 = vmax.f32 %v7742, 1e-24
        %v7817 = vmax.f32 %v7745, 1e-24
        %v7818 = vmax.f32 %v7748, 1e-24
        %v7819 = vmax.f32 %v7751, 1e-24
        %v7820 = vmax.f32 %v7754, 1e-24
        %v7821 = vmax.f32 %v7757, 1e-24
        %v7822 = vmax.f32 %v7760, 1e-24
        %v7823 = vmax.f32 %v7763, 1e-24
        %v7824 = vmax.f32 %v7766, 1e-24
        %v7825 = vmax.f32 %v7769, 1e-24
        %v7826 = vmax.f32 %v7772, 1e-24
        %v7827 = vmax.f32 %v7775, 1e-24
        %v7828 = vmax.f32 %v7778, 1e-24
        %v7829 = vmax.f32 %v7781, 1e-24
        %v7830 = vmax.f32 %v7784, 1e-24
        %v7831 = vmax.f32 %v7787, 1e-24
        %v7832 = vmax.f32 %v7790, 1e-24
        %v7833 = vmax.f32 %v7793, 1e-24
        %v7834 = vmax.f32 %v7796, 1e-24
        %v7835 = vmax.f32 %v7799, 1e-24
        %v7836 = vmax.f32 %v7802, 1e-24
        %v7837 = vmax.f32 %v7805, 1e-24
        %v7838 = vrsqrt.pop %v7806
        %v7839 = vmul.f32 %v7838, %v7806
        %v7840 = vmul.f32 %v7839, %v7838
        %v7841 = vmul.f32 0.5, %v7840
        %v7842 = vsub.f32 1.5, %v7841
        %v7843 = vmul.f32 %v7838, %v7842
        %vm7844 = vweird.f32 %v7806
        %vm7845 = vweird.f32 %v7838
        %vm7846 = vmor %vm7844, %vm7845
        %v7847 = vsel %vm7846, %v7838, %v7843
        %v7848 = vrsqrt.pop %v7807
        %v7849 = vmul.f32 %v7848, %v7807
        %v7850 = vmul.f32 %v7849, %v7848
        %v7851 = vmul.f32 0.5, %v7850
        %v7852 = vsub.f32 1.5, %v7851
        %v7853 = vmul.f32 %v7848, %v7852
        %vm7854 = vweird.f32 %v7807
        %vm7855 = vweird.f32 %v7848
        %vm7856 = vmor %vm7854, %vm7855
        %v7857 = vsel %vm7856, %v7848, %v7853
        %v7858 = vrsqrt.pop %v7808
        %v7859 = vmul.f32 %v7858, %v7808
        %v7860 = vmul.f32 %v7859, %v7858
        %v7861 = vmul.f32 0.5, %v7860
        %v7862 = vsub.f32 1.5, %v7861
        %v7863 = vmul.f32 %v7858, %v7862
        %vm7864 = vweird.f32 %v7808
        %vm7865 = vweird.f32 %v7858
        %vm7866 = vmor %vm7864, %vm7865
        %v7867 = vsel %vm7866, %v7858, %v7863
        %v7868 = vrsqrt.pop %v7809
        %v7869 = vmul.f32 %v7868, %v7809
        %v7870 = vmul.f32 %v7869, %v7868
        %v7871 = vmul.f32 0.5, %v7870
        %v7872 = vsub.f32 1.5, %v7871
        %v7873 = vmul.f32 %v7868, %v7872
        %vm7874 = vweird.f32 %v7809
        %vm7875 = vweird.f32 %v7868
        %vm7876 = vmor %vm7874, %vm7875
        %v7877 = vsel %vm7876, %v7868, %v7873
        %v7878 = vrsqrt.pop %v7810
        %v7879 = vmul.f32 %v7878, %v7810
        %v7880 = vmul.f32 %v7879, %v7878
        %v7881 = vmul.f32 0.5, %v7880
        %v7882 = vsub.f32 1.5, %v7881
        %v7883 = vmul.f32 %v7878, %v7882
        %vm7884 = vweird.f32 %v7810
        %vm7885 = vweird.f32 %v7878
        %vm7886 = vmor %vm7884, %vm7885
        %v7887 = vsel %vm7886, %v7878, %v7883
        %v7888 = vrsqrt.pop %v7811
        %v7889 = vmul.f32 %v7888, %v7811
        %v7890 = vmul.f32 %v7889, %v7888
        %v7891 = vmul.f32 0.5, %v7890
        %v7892 = vsub.f32 1.5, %v7891
        %v7893 = vmul.f32 %v7888, %v7892
        %vm7894 = vweird.f32 %v7811
        %vm7895 = vweird.f32 %v7888
        %vm7896 = vmor %vm7894, %vm7895
        %v7897 = vsel %vm7896, %v7888, %v7893
        %v7898 = vrsqrt.pop %v7812
        %v7899 = vmul.f32 %v7898, %v7812
        %v7900 = vmul.f32 %v7899, %v7898
        %v7901 = vmul.f32 0.5, %v7900
        %v7902 = vsub.f32 1.5, %v7901
        %v7903 = vmul.f32 %v7898, %v7902
        %vm7904 = vweird.f32 %v7812
        %vm7905 = vweird.f32 %v7898
        %vm7906 = vmor %vm7904, %vm7905
        %v7907 = vsel %vm7906, %v7898, %v7903
        %v7908 = vrsqrt.pop %v7813
        %v7909 = vmul.f32 %v7908, %v7813
        %v7910 = vmul.f32 %v7909, %v7908
        %v7911 = vmul.f32 0.5, %v7910
        %v7912 = vsub.f32 1.5, %v7911
        %v7913 = vmul.f32 %v7908, %v7912
        %vm7914 = vweird.f32 %v7813
        %vm7915 = vweird.f32 %v7908
        %vm7916 = vmor %vm7914, %vm7915
        %v7917 = vsel %vm7916, %v7908, %v7913
        %v7918 = vrsqrt.pop %v7814
        %v7919 = vmul.f32 %v7918, %v7814
        %v7920 = vmul.f32 %v7919, %v7918
        %v7921 = vmul.f32 0.5, %v7920
        %v7922 = vsub.f32 1.5, %v7921
        %v7923 = vmul.f32 %v7918, %v7922
        %vm7924 = vweird.f32 %v7814
        %vm7925 = vweird.f32 %v7918
        %vm7926 = vmor %vm7924, %vm7925
        %v7927 = vsel %vm7926, %v7918, %v7923
        %v7928 = vrsqrt.pop %v7815
        %v7929 = vmul.f32 %v7928, %v7815
        %v7930 = vmul.f32 %v7929, %v7928
        %v7931 = vmul.f32 0.5, %v7930
        %v7932 = vsub.f32 1.5, %v7931
        %v7933 = vmul.f32 %v7928, %v7932
        %vm7934 = vweird.f32 %v7815
        %vm7935 = vweird.f32 %v7928
        %vm7936 = vmor %vm7934, %vm7935
        %v7937 = vsel %vm7936, %v7928, %v7933
        %v7938 = vrsqrt.pop %v7816
        %v7939 = vmul.f32 %v7938, %v7816
        %v7940 = vmul.f32 %v7939, %v7938
        %v7941 = vmul.f32 0.5, %v7940
        %v7942 = vsub.f32 1.5, %v7941
        %v7943 = vmul.f32 %v7938, %v7942
        %vm7944 = vweird.f32 %v7816
        %vm7945 = vweird.f32 %v7938
        %vm7946 = vmor %vm7944, %vm7945
        %v7947 = vsel %vm7946, %v7938, %v7943
        %v7948 = vrsqrt.pop %v7817
        %v7949 = vmul.f32 %v7948, %v7817
        %v7950 = vmul.f32 %v7949, %v7948
        %v7951 = vmul.f32 0.5, %v7950
        %v7952 = vsub.f32 1.5, %v7951
        %v7953 = vmul.f32 %v7948, %v7952
        %vm7954 = vweird.f32 %v7817
        %vm7955 = vweird.f32 %v7948
        %vm7956 = vmor %vm7954, %vm7955
        %v7957 = vsel %vm7956, %v7948, %v7953
        %v7958 = vrsqrt.pop %v7818
        %v7959 = vmul.f32 %v7958, %v7818
        %v7960 = vmul.f32 %v7959, %v7958
        %v7961 = vmul.f32 0.5, %v7960
        %v7962 = vsub.f32 1.5, %v7961
        %v7963 = vmul.f32 %v7958, %v7962
        %vm7964 = vweird.f32 %v7818
        %vm7965 = vweird.f32 %v7958
        %vm7966 = vmor %vm7964, %vm7965
        %v7967 = vsel %vm7966, %v7958, %v7963
        %v7968 = vrsqrt.pop %v7819
        %v7969 = vmul.f32 %v7968, %v7819
        %v7970 = vmul.f32 %v7969, %v7968
        %v7971 = vmul.f32 0.5, %v7970
        %v7972 = vsub.f32 1.5, %v7971
        %v7973 = vmul.f32 %v7968, %v7972
        %vm7974 = vweird.f32 %v7819
        %vm7975 = vweird.f32 %v7968
        %vm7976 = vmor %vm7974, %vm7975
        %v7977 = vsel %vm7976, %v7968, %v7973
        %v7978 = vrsqrt.pop %v7820
        %v7979 = vmul.f32 %v7978, %v7820
        %v7980 = vmul.f32 %v7979, %v7978
        %v7981 = vmul.f32 0.5, %v7980
        %v7982 = vsub.f32 1.5, %v7981
        %v7983 = vmul.f32 %v7978, %v7982
        %vm7984 = vweird.f32 %v7820
        %vm7985 = vweird.f32 %v7978
        %vm7986 = vmor %vm7984, %vm7985
        %v7987 = vsel %vm7986, %v7978, %v7983
        %v7988 = vrsqrt.pop %v7821
        %v7989 = vmul.f32 %v7988, %v7821
        %v7990 = vmul.f32 %v7989, %v7988
        %v7991 = vmul.f32 0.5, %v7990
        %v7992 = vsub.f32 1.5, %v7991
        %v7993 = vmul.f32 %v7988, %v7992
        %vm7994 = vweird.f32 %v7821
        %vm7995 = vweird.f32 %v7988
        %vm7996 = vmor %vm7994, %vm7995
        %v7997 = vsel %vm7996, %v7988, %v7993
        %v7998 = vrsqrt.pop %v7822
        %v7999 = vmul.f32 %v7998, %v7822
        %v8000 = vmul.f32 %v7999, %v7998
        %v8001 = vmul.f32 0.5, %v8000
        %v8002 = vsub.f32 1.5, %v8001
        %v8003 = vmul.f32 %v7998, %v8002
        %vm8004 = vweird.f32 %v7822
        %vm8005 = vweird.f32 %v7998
        %vm8006 = vmor %vm8004, %vm8005
        %v8007 = vsel %vm8006, %v7998, %v8003
        %v8008 = vrsqrt.pop %v7823
        %v8009 = vmul.f32 %v8008, %v7823
        %v8010 = vmul.f32 %v8009, %v8008
        %v8011 = vmul.f32 0.5, %v8010
        %v8012 = vsub.f32 1.5, %v8011
        %v8013 = vmul.f32 %v8008, %v8012
        %vm8014 = vweird.f32 %v7823
        %vm8015 = vweird.f32 %v8008
        %vm8016 = vmor %vm8014, %vm8015
        %v8017 = vsel %vm8016, %v8008, %v8013
        %v8018 = vrsqrt.pop %v7824
        %v8019 = vmul.f32 %v8018, %v7824
        %v8020 = vmul.f32 %v8019, %v8018
        %v8021 = vmul.f32 0.5, %v8020
        %v8022 = vsub.f32 1.5, %v8021
        %v8023 = vmul.f32 %v8018, %v8022
        %vm8024 = vweird.f32 %v7824
        %vm8025 = vweird.f32 %v8018
        %vm8026 = vmor %vm8024, %vm8025
        %v8027 = vsel %vm8026, %v8018, %v8023
        %v8028 = vrsqrt.pop %v7825
        %v8029 = vmul.f32 %v8028, %v7825
        %v8030 = vmul.f32 %v8029, %v8028
        %v8031 = vmul.f32 0.5, %v8030
        %v8032 = vsub.f32 1.5, %v8031
        %v8033 = vmul.f32 %v8028, %v8032
        %vm8034 = vweird.f32 %v7825
        %vm8035 = vweird.f32 %v8028
        %vm8036 = vmor %vm8034, %vm8035
        %v8037 = vsel %vm8036, %v8028, %v8033
        %v8038 = vrsqrt.pop %v7826
        %v8039 = vmul.f32 %v8038, %v7826
        %v8040 = vmul.f32 %v8039, %v8038
        %v8041 = vmul.f32 0.5, %v8040
        %v8042 = vsub.f32 1.5, %v8041
        %v8043 = vmul.f32 %v8038, %v8042
        %vm8044 = vweird.f32 %v7826
        %vm8045 = vweird.f32 %v8038
        %vm8046 = vmor %vm8044, %vm8045
        %v8047 = vsel %vm8046, %v8038, %v8043
        %v8048 = vrsqrt.pop %v7827
        %v8049 = vmul.f32 %v8048, %v7827
        %v8050 = vmul.f32 %v8049, %v8048
        %v8051 = vmul.f32 0.5, %v8050
        %v8052 = vsub.f32 1.5, %v8051
        %v8053 = vmul.f32 %v8048, %v8052
        %vm8054 = vweird.f32 %v7827
        %vm8055 = vweird.f32 %v8048
        %vm8056 = vmor %vm8054, %vm8055
        %v8057 = vsel %vm8056, %v8048, %v8053
        %v8058 = vrsqrt.pop %v7828
        %v8059 = vmul.f32 %v8058, %v7828
        %v8060 = vmul.f32 %v8059, %v8058
        %v8061 = vmul.f32 0.5, %v8060
        %v8062 = vsub.f32 1.5, %v8061
        %v8063 = vmul.f32 %v8058, %v8062
        %vm8064 = vweird.f32 %v7828
        %vm8065 = vweird.f32 %v8058
        %vm8066 = vmor %vm8064, %vm8065
        %v8067 = vsel %vm8066, %v8058, %v8063
        %v8068 = vrsqrt.pop %v7829
        %v8069 = vmul.f32 %v8068, %v7829
        %v8070 = vmul.f32 %v8069, %v8068
        %v8071 = vmul.f32 0.5, %v8070
        %v8072 = vsub.f32 1.5, %v8071
        %v8073 = vmul.f32 %v8068, %v8072
        %vm8074 = vweird.f32 %v7829
        %vm8075 = vweird.f32 %v8068
        %vm8076 = vmor %vm8074, %vm8075
        %v8077 = vsel %vm8076, %v8068, %v8073
        %v8078 = vrsqrt.pop %v7830
        %v8079 = vmul.f32 %v8078, %v7830
        %v8080 = vmul.f32 %v8079, %v8078
        %v8081 = vmul.f32 0.5, %v8080
        %v8082 = vsub.f32 1.5, %v8081
        %v8083 = vmul.f32 %v8078, %v8082
        %vm8084 = vweird.f32 %v7830
        %vm8085 = vweird.f32 %v8078
        %vm8086 = vmor %vm8084, %vm8085
        %v8087 = vsel %vm8086, %v8078, %v8083
        %v8088 = vrsqrt.pop %v7831
        %v8089 = vmul.f32 %v8088, %v7831
        %v8090 = vmul.f32 %v8089, %v8088
        %v8091 = vmul.f32 0.5, %v8090
        %v8092 = vsub.f32 1.5, %v8091
        %v8093 = vmul.f32 %v8088, %v8092
        %vm8094 = vweird.f32 %v7831
        %vm8095 = vweird.f32 %v8088
        %vm8096 = vmor %vm8094, %vm8095
        %v8097 = vsel %vm8096, %v8088, %v8093
        %v8098 = vrsqrt.pop %v7832
        %v8099 = vmul.f32 %v8098, %v7832
        %v8100 = vmul.f32 %v8099, %v8098
        %v8101 = vmul.f32 0.5, %v8100
        %v8102 = vsub.f32 1.5, %v8101
        %v8103 = vmul.f32 %v8098, %v8102
        %vm8104 = vweird.f32 %v7832
        %vm8105 = vweird.f32 %v8098
        %vm8106 = vmor %vm8104, %vm8105
        %v8107 = vsel %vm8106, %v8098, %v8103
        %v8108 = vrsqrt.pop %v7833
        %v8109 = vmul.f32 %v8108, %v7833
        %v8110 = vmul.f32 %v8109, %v8108
        %v8111 = vmul.f32 0.5, %v8110
        %v8112 = vsub.f32 1.5, %v8111
        %v8113 = vmul.f32 %v8108, %v8112
        %vm8114 = vweird.f32 %v7833
        %vm8115 = vweird.f32 %v8108
        %vm8116 = vmor %vm8114, %vm8115
        %v8117 = vsel %vm8116, %v8108, %v8113
        %v8118 = vrsqrt.pop %v7834
        %v8119 = vmul.f32 %v8118, %v7834
        %v8120 = vmul.f32 %v8119, %v8118
        %v8121 = vmul.f32 0.5, %v8120
        %v8122 = vsub.f32 1.5, %v8121
        %v8123 = vmul.f32 %v8118, %v8122
        %vm8124 = vweird.f32 %v7834
        %vm8125 = vweird.f32 %v8118
        %vm8126 = vmor %vm8124, %vm8125
        %v8127 = vsel %vm8126, %v8118, %v8123
        %v8128 = vrsqrt.pop %v7835
        %v8129 = vmul.f32 %v8128, %v7835
        %v8130 = vmul.f32 %v8129, %v8128
        %v8131 = vmul.f32 0.5, %v8130
        %v8132 = vsub.f32 1.5, %v8131
        %v8133 = vmul.f32 %v8128, %v8132
        %vm8134 = vweird.f32 %v7835
        %vm8135 = vweird.f32 %v8128
        %vm8136 = vmor %vm8134, %vm8135
        %v8137 = vsel %vm8136, %v8128, %v8133
        %v8138 = vrsqrt.pop %v7836
        %v8139 = vmul.f32 %v8138, %v7836
        %v8140 = vmul.f32 %v8139, %v8138
        %v8141 = vmul.f32 0.5, %v8140
        %v8142 = vsub.f32 1.5, %v8141
        %v8143 = vmul.f32 %v8138, %v8142
        %vm8144 = vweird.f32 %v7836
        %vm8145 = vweird.f32 %v8138
        %vm8146 = vmor %vm8144, %vm8145
        %v8147 = vsel %vm8146, %v8138, %v8143
        %v8148 = vrsqrt.pop %v7837
        %v8149 = vmul.f32 %v8148, %v7837
        %v8150 = vmul.f32 %v8149, %v8148
        %v8151 = vmul.f32 0.5, %v8150
        %v8152 = vsub.f32 1.5, %v8151
        %v8153 = vmul.f32 %v8148, %v8152
        %vm8154 = vweird.f32 %v7837
        %vm8155 = vweird.f32 %v8148
        %vm8156 = vmor %vm8154, %vm8155
        %v8157 = vsel %vm8156, %v8148, %v8153
        %v8158 = vmul.f32 %v7598, %v7847
        %v8159 = vmul.f32 %v7600, %v7857
        %v8160 = vmul.f32 %v7603, %v7867
        %v8161 = vmul.f32 %v7605, %v7877
        %v8162 = vmul.f32 %v7608, %v7887
        %v8163 = vmul.f32 %v7610, %v7897
        %v8164 = vmul.f32 %v7613, %v7907
        %v8165 = vmul.f32 %v7615, %v7917
        %v8166 = vmul.f32 %v7618, %v7927
        %v8167 = vmul.f32 %v7620, %v7937
        %v8168 = vmul.f32 %v7623, %v7947
        %v8169 = vmul.f32 %v7625, %v7957
        %v8170 = vmul.f32 %v7628, %v7967
        %v8171 = vmul.f32 %v7630, %v7977
        %v8172 = vmul.f32 %v7633, %v7987
        %v8173 = vmul.f32 %v7635, %v7997
        %v8174 = vmul.f32 %v7638, %v8007
        %v8175 = vmul.f32 %v7640, %v8017
        %v8176 = vmul.f32 %v7643, %v8027
        %v8177 = vmul.f32 %v7645, %v8037
        %v8178 = vmul.f32 %v7648, %v8047
        %v8179 = vmul.f32 %v7650, %v8057
        %v8180 = vmul.f32 %v7653, %v8067
        %v8181 = vmul.f32 %v7655, %v8077
        %v8182 = vmul.f32 %v7658, %v8087
        %v8183 = vmul.f32 %v7660, %v8097
        %v8184 = vmul.f32 %v7663, %v8107
        %v8185 = vmul.f32 %v7665, %v8117
        %v8186 = vmul.f32 %v7668, %v8127
        %v8187 = vmul.f32 %v7670, %v8137
        %v8188 = vmul.f32 %v7673, %v8147
        %v8189 = vmul.f32 %v7675, %v8157
        %8190 = vst.msk [vmem:[%s328] sm:$0xff] %vm7709, %v8158
        %8191 = vst.msk [vmem:[%s328 + $0x8] sm:$0xff] %vm7709, %v8159
        %8192 = vst.msk [vmem:[%s328 + $0x10] sm:$0xff] %vm7709, %v8160
        %8193 = vst.msk [vmem:[%s328 + $0x18] sm:$0xff] %vm7709, %v8161
        %8194 = vst.msk [vmem:[%s328 + $0x20] sm:$0xff] %vm7709, %v8162
        %8195 = vst.msk [vmem:[%s328 + $0x28] sm:$0xff] %vm7709, %v8163
        %8196 = vst.msk [vmem:[%s328 + $0x30] sm:$0xff] %vm7709, %v8164
        %8197 = vst.msk [vmem:[%s328 + $0x38] sm:$0xff] %vm7709, %v8165
        %8198 = vst.msk [vmem:[%s328 + $0x40] sm:$0xff] %vm7709, %v8166
        %8199 = vst.msk [vmem:[%s328 + $0x48] sm:$0xff] %vm7709, %v8167
        %8200 = vst.msk [vmem:[%s328 + $0x50] sm:$0xff] %vm7709, %v8168
        %8201 = vst.msk [vmem:[%s328 + $0x58] sm:$0xff] %vm7709, %v8169
        %8202 = vst.msk [vmem:[%s328 + $0x60] sm:$0xff] %vm7709, %v8170
        %8203 = vst.msk [vmem:[%s328 + $0x68] sm:$0xff] %vm7709, %v8171
        %8204 = vst.msk [vmem:[%s328 + $0x70] sm:$0xff] %vm7709, %v8172
        %8205 = vst.msk [vmem:[%s328 + $0x78] sm:$0xff] %vm7709, %v8173
        %8206 = vst.msk [vmem:[%s328 + $0x80] sm:$0xff] %vm7709, %v8174
        %8207 = vst.msk [vmem:[%s328 + $0x88] sm:$0xff] %vm7709, %v8175
        %8208 = vst.msk [vmem:[%s328 + $0x90] sm:$0xff] %vm7709, %v8176
        %8209 = vst.msk [vmem:[%s328 + $0x98] sm:$0xff] %vm7709, %v8177
        %8210 = vst.msk [vmem:[%s328 + $0xa0] sm:$0xff] %vm7709, %v8178
        %8211 = vst.msk [vmem:[%s328 + $0xa8] sm:$0xff] %vm7709, %v8179
        %8212 = vst.msk [vmem:[%s328 + $0xb0] sm:$0xff] %vm7709, %v8180
        %8213 = vst.msk [vmem:[%s328 + $0xb8] sm:$0xff] %vm7709, %v8181
        %8214 = vst.msk [vmem:[%s328 + $0xc0] sm:$0xff] %vm7709, %v8182
        %8215 = vst.msk [vmem:[%s328 + $0xc8] sm:$0xff] %vm7709, %v8183
        %8216 = vst.msk [vmem:[%s328 + $0xd0] sm:$0xff] %vm7709, %v8184
        %8217 = vst.msk [vmem:[%s328 + $0xd8] sm:$0xff] %vm7709, %v8185
        %8218 = vst.msk [vmem:[%s328 + $0xe0] sm:$0xff] %vm7709, %v8186
        %8219 = vst.msk [vmem:[%s328 + $0xe8] sm:$0xff] %vm7709, %v8187
        %8220 = vst.msk [vmem:[%s328 + $0xf0] sm:$0xff] %vm7709, %v8188
        %8221 = vst.msk [vmem:[%s328 + $0xf8] sm:$0xff] %vm7709, %v8189
        %p8222 = scmp.lt.s32.totalorder %s20, 1
        %s8223 = scalar_select %p8222, %s20, 1
        %s8224 = smul.addr %s8223, 32
        %s8225 = smul.addr %s8224, 8
        %s8226 = scalar_lea.vmem %s7, %s8225
        // Predicated region
        $region61: #{regressor_forward.1} parent=47 // pred_check
          %p8227 = pneg %p190
        $region62: #{regressor_forward.1} parent=47 // pred_check_branch
          %8229 = sbr.rel (%p8227) target = $region64
        $region63: #{regressor_forward.1} parent=47 // pred_region
          _
        $region64: #{regressor_forward.1} parent=47 // pred_fallthru
          _
      $region48: #{regressor_forward.1} parent=5 // pred_fallthru
        _
      %p8230 = scmp.le.s32.totalorder 2, %s15
      // Predicated region
      $region65: #{regressor_forward.1} parent=5 // pred_check
        %p8231 = pneg %p8230
      $region66: #{regressor_forward.1} parent=5 // pred_check_branch
        %8233 = sbr.rel (%p8231) target = $region68
      $region67: #{regressor_forward.1} parent=5 // pred_region
        %s8234 = ssub.s32 %s15, 2
        // Predicated region
        $region69: #{regressor_forward.1} parent=67 // pred_check
          %p8235 = pneg %p196
        $region70: #{regressor_forward.1} parent=67 // pred_check_branch
          %8237 = sbr.rel (%p8235) target = $region72
        $region71: #{regressor_forward.1} parent=67 // pred_region
          %p8238 = scmp.lt.s32.totalorder %s21, 1
          %s8239 = scalar_select %p8238, %s21, 1
          %s8240 = smul.addr %s8239, 32
          %s8241 = smul.addr %s8240, 8
          %s8242 = scalar_lea.vmem %s7, %s8241
        $region72: #{regressor_forward.1} parent=67 // pred_fallthru
          _
      $region68: #{regressor_forward.1} parent=5 // pred_fallthru
        _
    $region6: #{regressor_forward.1} parent=1 // loop_footer
      %s19 = sadd.s32 1, %s15
    $region7: #{regressor_forward.1} parent=1 // loop_footer_branch
      %14 = sbr.rel target = $region3
    $region8: #{regressor_forward.1} parent=1 // loop_exit
      _
    %8243 = vsyncpa [#allocation7], 1
    %s8244 = scalar_lea.sflag [#allocation7], 1
    %8245 = vsyncpa %s8244, 1
    %8246 = vsyncpa [#allocation9], 1

</llo_original>
